<compile_context>
chip_gen: v7x
topology: tpu7x:2x2x1
jax: 0.10.0
libtpu: 0.0.40
codegen_flags: <defaults>
</compile_context>

<pallas_src>
import math
import functools
import numpy as np
import jax
import jax.numpy as jnp
from jax.experimental import pallas as pl
from jax.experimental.pallas import tpu as pltpu


# ----------------------------------------------------------------------------
# Pallas kernel: one grid step == `batch_block` batch elements, resident in VMEM.
# ----------------------------------------------------------------------------
def _decoder_block_kernel(
    # batched tensors
    x_ref, key_ref, value_ref, trg_bias_ref, src_bias_ref,
    # self-attention (MultiHead #1) params (QKV fused)
    w_qkv1, b_qkv1, wo1, bo1, norm_g, norm_b,
    # cross-attention (MultiHead #2 inside TransformerBlock) params
    wq2, bq2, wk2, bk2, wv2, bv2, wo2, bo2, norm1_g, norm1_b,
    # feed-forward + final norm params
    wf1, bf1, wf2, bf2, norm2_g, norm2_b,
    # output
    out_ref,
    # scratch
    ctx_ref,
    *, n_head, head_dim, model_dim, seq_q, seq_kv, batch_block, compute_dtype):

  E = model_dim
  Bb, Sq, Sk = batch_block, seq_q, seq_kv
  cdt = compute_dtype
  scale = 1.0 / math.sqrt(model_dim)   # NB: model_dim, not head_dim (matches ref)

  def matmul(a, w_ref, b_ref=None):
    # bf16 operands, f32 accumulation on the MXU.
    y = jnp.dot(a.astype(cdt), w_ref[...].astype(cdt),
                preferred_element_type=jnp.float32)
    if b_ref is not None:
      y = y + b_ref[...]
    return y

  def layer_norm(t, g_ref, b_ref, eps=1e-5):
    mu = jnp.mean(t, axis=-1, keepdims=True)
    var = jnp.mean(jnp.square(t - mu), axis=-1, keepdims=True)
    return (t - mu) * jax.lax.rsqrt(var + eps) * g_ref[...] + b_ref[...]

  def attention(q, k, v, bias_ref, wo_ref, bo_ref, skv):
    """q: (Bb*Sq, E) f32; k, v: (Bb*skv, E) f32; bias_ref: (Bb, Sq, skv)
    pre-scaled additive mask bias; wo_ref: (E, E)."""
    # Cast once (not per-head slice): one VPU pack per operand.
    qc, kc, vc = q.astype(cdt), k.astype(cdt), v.astype(cdt)
    for b in range(batch_block):            # static; Bb is 1 by default
      bias = bias_ref[b]                    # (Sq, skv) f32, already * -1e9/sqrt(E)
      qb = qc[b * Sq:(b + 1) * Sq, :]
      kb = kc[b * skv:(b + 1) * skv, :]
      vb = vc[b * skv:(b + 1) * skv, :]
      # TODO(synk): at real H (=16) convert to lax.fori_loop(..., unroll=True)
      # with pl.ds lane offsets to bound live ranges; static unroll is fine at
      # toy H and the scratch writes below already bound ctx live ranges.
      for h in range(n_head):
        lo = h * head_dim
        qh = qb[:, lo:lo + head_dim]
        kh = kb[:, lo:lo + head_dim]
        vh = vb[:, lo:lo + head_dim]
        # contract dim 1 of both operands -> no kh.T / XLU transpose
        s = jax.lax.dot_general(qh, kh, (((1,), (1,)), ((), ())),
                                preferred_element_type=jnp.float32)  # (Sq,skv)
        s = s * scale + bias
        s = s - jnp.max(s, axis=-1, keepdims=True)
        p = jnp.exp(s)
        p = p * pl.reciprocal(jnp.sum(p, axis=-1, keepdims=True), approx=True)
        # Write this head's context at its lane offset; the head-concat thus
        # materializes in scratch and ONE full-K Wo matmul follows.
        ctx_ref[b * Sq:(b + 1) * Sq, lo:lo + head_dim] = jnp.dot(
            p.astype(cdt), vh, preferred_element_type=jnp.float32)   # (Sq, Dh)
    # Single (Bb*Sq, E) @ (E, E) output projection: full MXU contraction depth.
    return matmul(ctx_ref[...], wo_ref, bo_ref)

  # Flatten batch onto the sublane axis for all dense matmuls.
  x2  = x_ref[...].reshape(Bb * Sq, E)
  k2d = key_ref[...].reshape(Bb * Sk, E)
  v2d = value_ref[...].reshape(Bb * Sk, E)

  # ---- DecoderBlock: masked self-attention (fused QKV) + residual + LN -----
  qkv = matmul(x2, w_qkv1, b_qkv1)                     # (Bb*Sq, 3E), 1 MXU push
  attn = attention(qkv[:, :E], qkv[:, E:2 * E], qkv[:, 2 * E:],
                   trg_bias_ref, wo1, bo1, Sq)
  query = layer_norm(attn + x2, norm_g, norm_b)        # dropout == identity

  # ---- TransformerBlock: cross-attention (q=query, k=key, v=value) ---------
  # key/value are distinct module inputs, so their projections stay separate.
  q2 = matmul(query, wq2, bq2)
  kk = matmul(k2d, wk2, bk2)
  vv = matmul(v2d, wv2, bv2)
  attn2 = attention(q2, kk, vv, src_bias_ref, wo2, bo2, Sk)
  xblk = layer_norm(attn2 + query, norm1_g, norm1_b)

  # ---- Feed forward: Linear -> ReLU -> Linear, residual + LayerNorm --------
  hidden = jnp.maximum(matmul(xblk, wf1, bf1), 0.0)
  ff = matmul(hidden, wf2, bf2)
  out = layer_norm(ff + xblk, norm2_g, norm2_b)

  out_ref[...] = out.reshape(Bb, Sq, E).astype(out_ref.dtype)


# ----------------------------------------------------------------------------
# Wrapper
# ----------------------------------------------------------------------------
def decoder_block_pallas(x, enc_key, enc_value, trg_mask, src_mask, params,
                         *, n_head, batch_block=1,
                         matmul_dtype=jnp.bfloat16):
  (wq1, bq1, wk1, bk1, wv1, bv1, wo1, bo1, ng, nb,
   wq2, bq2, wk2, bk2, wv2, bv2, wo2, bo2, n1g, n1b,
   wf1, bf1, wf2, bf2, n2g, n2b) = params

  B, Sq, E = x.shape
  Sk = enc_key.shape[1]
  FF = wf1.shape[1]
  head_dim = E // n_head

  # Default batch_block=1 -> grid=(B,) "parallel": feeds both v7x TensorCores
  # and keeps per-step activations small; pass a larger batch_block to trade
  # grid steps for bigger matmul tiles on single-TC v5e/v6e.
  assert B % batch_block == 0
  num_blocks = B // batch_block

  wdt = matmul_dtype
  # Fuse the self-attention Q/K/V projections into one (E, 3E) matmul.
  w_qkv1 = jnp.concatenate([wq1, wk1, wv1], axis=1).astype(wdt)
  b_qkv1 = jnp.concatenate([bq1, bk1, bv1], axis=1)        # f32 bias

  weights = (
      w_qkv1, b_qkv1, wo1.astype(wdt), bo1, ng, nb,
      wq2.astype(wdt), bq2, wk2.astype(wdt), bk2, wv2.astype(wdt), bv2,
      wo2.astype(wdt), bo2, n1g, n1b,
      wf1.astype(wdt), bf1, wf2.astype(wdt), bf2, n2g, n2b)

  # Pre-fold masks into additive bias (includes the 1/sqrt(E) score scale),
  # removing the in-kernel mask multiply.
  scale = 1.0 / math.sqrt(E)
  trg_bias = (trg_mask * (-1e9 * scale)).astype(jnp.float32)
  src_bias = (src_mask * (-1e9 * scale)).astype(jnp.float32)

  # Explicit VMEM budget from the actual footprint (2x margin, 64 MiB cap so
  # the same setting is valid on v7x; raise batch/seq tiling before the cap).
  def _nbytes(a):
    return int(np.prod(a.shape)) * jnp.dtype(a.dtype).itemsize
  weight_bytes = sum(_nbytes(w) for w in weights)           # single-buffered
  io_block_bytes = 4 * batch_block * (2 * Sq * E + 2 * Sk * E
                                      + Sq * Sq + Sq * Sk)  # in+out blocks, f32
  interm_bytes = 4 * batch_block * Sq * (3 * E + 8 * E + FF)  # f32 temporaries
  scratch_bytes = 4 * batch_block * Sq * E
  est = weight_bytes + 2 * io_block_bytes + interm_bytes + scratch_bytes
  vmem_limit = int(min(64 * 1024 * 1024, max(8 * 1024 * 1024, 2 * est)))

  kernel = functools.partial(
      _decoder_block_kernel, n_head=n_head, head_dim=head_dim, model_dim=E,
      seq_q=Sq, seq_kv=Sk, batch_block=batch_block, compute_dtype=matmul_dtype)

  def batched_spec(arr):
    rest = arr.shape[1:]
    return pl.BlockSpec((batch_block,) + rest,
                        lambda i, _n=len(rest): (i,) + (0,) * _n)

  def call(single_buffer_weights):
    def weight_spec(arr):
      # Constant index_map across the grid: single-buffer to halve weight VMEM
      # (required at real TrOCR dims, E=1024/FF=4096, on v7x's 64 MiB VMEM).
      kwargs = ({"pipeline_mode": pl.Buffered(1)}
                if single_buffer_weights else {})
      return pl.BlockSpec(arr.shape, lambda i, _n=arr.ndim: (0,) * _n, **kwargs)

    in_specs = ([batched_spec(a) for a in
                 (x, enc_key, enc_value, trg_bias, src_bias)]
                + [weight_spec(w) for w in weights])

    return pl.pallas_call(
        kernel,
        out_shape=jax.ShapeDtypeStruct((B, Sq, E), x.dtype),
        grid=(num_blocks,),
        in_specs=in_specs,
        out_specs=pl.BlockSpec((batch_block, Sq, E), lambda i: (i, 0, 0)),
        scratch_shapes=[pltpu.VMEM((batch_block * Sq, E), jnp.float32)],
        compiler_params=pltpu.CompilerParams(
            dimension_semantics=("parallel",),
            vmem_limit_bytes=vmem_limit),
    )(x, enc_key, enc_value, trg_bias, src_bias, *weights)

  try:
    return call(True)
  except Exception:
    # Compatibility fallback for JAX versions without BlockSpec.pipeline_mode /
    # Buffered(1); identical math, only costs double-buffered weight VMEM.
    return call(False)


# ----------------------------------------------------------------------------
# Pure-JAX reference (mirrors the PyTorch forward exactly, f32 throughout)
# ----------------------------------------------------------------------------
def decoder_block_reference(x, enc_key, enc_value, trg_mask, src_mask, params,
                            *, n_head):
  (wq1, bq1, wk1, bk1, wv1, bv1, wo1, bo1, ng, nb,
   wq2, bq2, wk2, bk2, wv2, bv2, wo2, bo2, n1g, n1b,
   wf1, bf1, wf2, bf2, n2g, n2b) = params
  E = x.shape[-1]
  Dh = E // n_head

  def lin(t, w, b): return t @ w + b

  def ln(t, g, b, eps=1e-5):
    mu = t.mean(-1, keepdims=True)
    var = ((t - mu) ** 2).mean(-1, keepdims=True)
    return (t - mu) / jnp.sqrt(var + eps) * g + b

  def mha(q, k, v, mask, wq, bq, wk, bk, wv, bv, wo, bo):
    B, Sq, _ = q.shape
    Sk = k.shape[1]
    _q = lin(q, wq, bq).reshape(B, Sq, n_head, Dh).transpose(0, 2, 1, 3)
    _k = lin(k, wk, bk).reshape(B, Sk, n_head, Dh).transpose(0, 2, 1, 3)
    _v = lin(v, wv, bv).reshape(B, Sk, n_head, Dh).transpose(0, 2, 1, 3)
    score = jnp.einsum('bhqd,bhkd->bhqk', _q, _k)
    score = score + mask[:, None, :, :] * (-1e9)
    att = jax.nn.softmax(score / math.sqrt(E), axis=-1)
    ctx = jnp.einsum('bhqk,bhkd->bhqd', att, _v)
    ctx = ctx.transpose(0, 2, 1, 3).reshape(B, Sq, E)
    return lin(ctx, wo, bo)

  attn = mha(x, x, x, trg_mask, wq1, bq1, wk1, bk1, wv1, bv1, wo1, bo1)
  query = ln(attn + x, ng, nb)
  attn2 = mha(query, enc_key, enc_value, src_mask,
              wq2, bq2, wk2, bk2, wv2, bv2, wo2, bo2)
  xb = ln(attn2 + query, n1g, n1b)
  ff = lin(jnp.maximum(lin(xb, wf1, bf1), 0.0), wf2, bf2)
  return ln(ff + xb, n2g, n2b)


# ----------------------------------------------------------------------------
if __name__ == "__main__":
  # Small, deterministic configuration.
  B, Sq, Sk = 2, 8, 16
  E, H, FWD = 32, 4, 4       # embed_size, heads, forward_expansion
  FF = FWD * E

  root = jax.random.PRNGKey(0)
  ks = jax.random.split(root, 40)
  kit = iter(range(40))

  def rnd(shape, scale):
    return (jax.random.normal(ks[next(kit)], shape, jnp.float32) * scale)

  def lin_params(fan_in, fan_out):
    s = 1.0 / math.sqrt(fan_in)
    return rnd((fan_in, fan_out), s), rnd((1, fan_out), 0.01)

  # Self-attention params
  wq1, bq1 = lin_params(E, E); wk1, bk1 = lin_params(E, E)
  wv1, bv1 = lin_params(E, E); wo1, bo1 = lin_params(E, E)
  norm_g, norm_b = jnp.ones((1, E), jnp.float32), jnp.zeros((1, E), jnp.float32)
  # Cross-attention params
  wq2, bq2 = lin_params(E, E); wk2, bk2 = lin_params(E, E)
  wv2, bv2 = lin_params(E, E); wo2, bo2 = lin_params(E, E)
  norm1_g, norm1_b = jnp.ones((1, E), jnp.float32), jnp.zeros((1, E), jnp.float32)
  # Feed-forward params + final norm
  wf1, bf1 = lin_params(E, FF); wf2, bf2 = lin_params(FF, E)
  norm2_g, norm2_b = jnp.ones((1, E), jnp.float32), jnp.zeros((1, E), jnp.float32)

  params = (wq1, bq1, wk1, bk1, wv1, bv1, wo1, bo1, norm_g, norm_b,
            wq2, bq2, wk2, bk2, wv2, bv2, wo2, bo2, norm1_g, norm1_b,
            wf1, bf1, wf2, bf2, norm2_g, norm2_b)

  # Inputs
  x       = rnd((B, Sq, E), 1.0)
  enc_key = rnd((B, Sk, E), 1.0)
  enc_val = rnd((B, Sk, E), 1.0)

  # Causal target mask (1.0 == masked), broadcast over batch.
  causal = np.triu(np.ones((Sq, Sq), np.float32), k=1)
  trg_mask = jnp.broadcast_to(jnp.asarray(causal), (B, Sq, Sq)).astype(jnp.float32)
  # Source mask: batch 1 has its last 3 encoder positions masked.
  src_np = np.zeros((B, Sq, Sk), np.float32)
  src_np[1, :, -3:] = 1.0
  src_mask = jnp.asarray(src_np)

  out = decoder_block_pallas(x, enc_key, enc_val, trg_mask, src_mask, params,
                             n_head=H)
  out = jax.block_until_ready(out)

  ref = jax.block_until_ready(
      decoder_block_reference(x, enc_key, enc_val, trg_mask, src_mask, params,
                              n_head=H))

  # Tolerance accounts for bf16 matmul operands (f32 accumulation) and the
  # approx-reciprocal softmax denominator vs the f32 reference.
  if np.allclose(np.asarray(out), np.asarray(ref), atol=5e-2, rtol=5e-2):
    print("KERNEL_OK")
  else:
    print("MISMATCH: max abs err =",
          float(np.max(np.abs(np.asarray(out) - np.asarray(ref)))))
</pallas_src>

<mosaic_0001>
module attributes {stable_mosaic.version = 11 : i64} {
  func.func @_decoder_block_kernel(%arg0: i32, %arg1: memref<1x8x32xf32, #tpu.memory_space<vmem>>, %arg2: memref<1x16x32xf32, #tpu.memory_space<vmem>>, %arg3: memref<1x16x32xf32, #tpu.memory_space<vmem>>, %arg4: memref<1x8x8xf32, #tpu.memory_space<vmem>>, %arg5: memref<1x8x16xf32, #tpu.memory_space<vmem>>, %arg6: memref<32x96xbf16, #tpu.memory_space<vmem>>, %arg7: memref<1x96xf32, #tpu.memory_space<vmem>>, %arg8: memref<32x32xbf16, #tpu.memory_space<vmem>>, %arg9: memref<1x32xf32, #tpu.memory_space<vmem>>, %arg10: memref<1x32xf32, #tpu.memory_space<vmem>>, %arg11: memref<1x32xf32, #tpu.memory_space<vmem>>, %arg12: memref<32x32xbf16, #tpu.memory_space<vmem>>, %arg13: memref<1x32xf32, #tpu.memory_space<vmem>>, %arg14: memref<32x32xbf16, #tpu.memory_space<vmem>>, %arg15: memref<1x32xf32, #tpu.memory_space<vmem>>, %arg16: memref<32x32xbf16, #tpu.memory_space<vmem>>, %arg17: memref<1x32xf32, #tpu.memory_space<vmem>>, %arg18: memref<32x32xbf16, #tpu.memory_space<vmem>>, %arg19: memref<1x32xf32, #tpu.memory_space<vmem>>, %arg20: memref<1x32xf32, #tpu.memory_space<vmem>>, %arg21: memref<1x32xf32, #tpu.memory_space<vmem>>, %arg22: memref<32x128xbf16, #tpu.memory_space<vmem>>, %arg23: memref<1x128xf32, #tpu.memory_space<vmem>>, %arg24: memref<128x32xbf16, #tpu.memory_space<vmem>>, %arg25: memref<1x32xf32, #tpu.memory_space<vmem>>, %arg26: memref<1x32xf32, #tpu.memory_space<vmem>>, %arg27: memref<1x32xf32, #tpu.memory_space<vmem>>, %arg28: memref<1x8x32xf32, #tpu.memory_space<vmem>>, %arg29: memref<8x32xf32, #tpu.memory_space<vmem>>) attributes {dimension_semantics = [#tpu.dimension_semantics<parallel>], iteration_bounds = array<i64: 2>, scalar_prefetch = 0 : i64, scratch_operands = 1 : i64, tpu.core_type = #tpu.core_type<tc>, window_params = [{transform_indices = @transform_0, window_bounds = array<i64: 1, 8, 32>}, {transform_indices = @transform_1, window_bounds = array<i64: 1, 16, 32>}, {transform_indices = @transform_2, window_bounds = array<i64: 1, 16, 32>}, {transform_indices = @transform_3, window_bounds = array<i64: 1, 8, 8>}, {transform_indices = @transform_4, window_bounds = array<i64: 1, 8, 16>}, {pipeline_mode = #tpu.pipeline_mode<synchronous>, transform_indices = @transform_5, window_bounds = array<i64: 32, 96>}, {pipeline_mode = #tpu.pipeline_mode<synchronous>, transform_indices = @transform_6, window_bounds = array<i64: 1, 96>}, {pipeline_mode = #tpu.pipeline_mode<synchronous>, transform_indices = @transform_7, window_bounds = array<i64: 32, 32>}, {pipeline_mode = #tpu.pipeline_mode<synchronous>, transform_indices = @transform_8, window_bounds = array<i64: 1, 32>}, {pipeline_mode = #tpu.pipeline_mode<synchronous>, transform_indices = @transform_9, window_bounds = array<i64: 1, 32>}, {pipeline_mode = #tpu.pipeline_mode<synchronous>, transform_indices = @transform_10, window_bounds = array<i64: 1, 32>}, {pipeline_mode = #tpu.pipeline_mode<synchronous>, transform_indices = @transform_11, window_bounds = array<i64: 32, 32>}, {pipeline_mode = #tpu.pipeline_mode<synchronous>, transform_indices = @transform_12, window_bounds = array<i64: 1, 32>}, {pipeline_mode = #tpu.pipeline_mode<synchronous>, transform_indices = @transform_13, window_bounds = array<i64: 32, 32>}, {pipeline_mode = #tpu.pipeline_mode<synchronous>, transform_indices = @transform_14, window_bounds = array<i64: 1, 32>}, {pipeline_mode = #tpu.pipeline_mode<synchronous>, transform_indices = @transform_15, window_bounds = array<i64: 32, 32>}, {pipeline_mode = #tpu.pipeline_mode<synchronous>, transform_indices = @transform_16, window_bounds = array<i64: 1, 32>}, {pipeline_mode = #tpu.pipeline_mode<synchronous>, transform_indices = @transform_17, window_bounds = array<i64: 32, 32>}, {pipeline_mode = #tpu.pipeline_mode<synchronous>, transform_indices = @transform_18, window_bounds = array<i64: 1, 32>}, {pipeline_mode = #tpu.pipeline_mode<synchronous>, transform_indices = @transform_19, window_bounds = array<i64: 1, 32>}, {pipeline_mode = #tpu.pipeline_mode<synchronous>, transform_indices = @transform_20, window_bounds = array<i64: 1, 32>}, {pipeline_mode = #tpu.pipeline_mode<synchronous>, transform_indices = @transform_21, window_bounds = array<i64: 32, 128>}, {pipeline_mode = #tpu.pipeline_mode<synchronous>, transform_indices = @transform_22, window_bounds = array<i64: 1, 128>}, {pipeline_mode = #tpu.pipeline_mode<synchronous>, transform_indices = @transform_23, window_bounds = array<i64: 128, 32>}, {pipeline_mode = #tpu.pipeline_mode<synchronous>, transform_indices = @transform_24, window_bounds = array<i64: 1, 32>}, {pipeline_mode = #tpu.pipeline_mode<synchronous>, transform_indices = @transform_25, window_bounds = array<i64: 1, 32>}, {pipeline_mode = #tpu.pipeline_mode<synchronous>, transform_indices = @transform_26, window_bounds = array<i64: 1, 32>}, {transform_indices = @transform_27, window_bounds = array<i64: 1, 8, 32>}]} {
    %c0 = arith.constant 0 : index
    %c0_0 = arith.constant 0 : index
    %c0_1 = arith.constant 0 : index
    %0 = vector.load %arg1[%c0, %c0_0, %c0_1] : memref<1x8x32xf32, #tpu.memory_space<vmem>>, vector<1x8x32xf32>
    %1 = vector.shape_cast %0 : vector<1x8x32xf32> to vector<8x32xf32>
    %c0_2 = arith.constant 0 : index
    %c0_3 = arith.constant 0 : index
    %c0_4 = arith.constant 0 : index
    %2 = vector.load %arg2[%c0_2, %c0_3, %c0_4] : memref<1x16x32xf32, #tpu.memory_space<vmem>>, vector<1x16x32xf32>
    %3 = vector.shape_cast %2 : vector<1x16x32xf32> to vector<16x32xf32>
    %c0_5 = arith.constant 0 : index
    %c0_6 = arith.constant 0 : index
    %c0_7 = arith.constant 0 : index
    %4 = vector.load %arg3[%c0_5, %c0_6, %c0_7] : memref<1x16x32xf32, #tpu.memory_space<vmem>>, vector<1x16x32xf32>
    %5 = vector.shape_cast %4 : vector<1x16x32xf32> to vector<16x32xf32>
    %6 = arith.truncf %1 : vector<8x32xf32> to vector<8x32xbf16>
    %c0_8 = arith.constant 0 : index
    %c0_9 = arith.constant 0 : index
    %7 = vector.load %arg6[%c0_8, %c0_9] : memref<32x96xbf16, #tpu.memory_space<vmem>>, vector<32x96xbf16>
    %cst = arith.constant dense<0.000000e+00> : vector<8x96xf32>
    %8 = tpu.matmul %6, %7, %cst {dimension_numbers = #tpu.dot_dimension_numbers<[1], [0], [0], [1], [0, 0, 1, 1], [], []>} : vector<8x32xbf16>, vector<32x96xbf16>, vector<8x96xf32> -> vector<8x96xf32>
    %c0_10 = arith.constant 0 : index
    %c0_11 = arith.constant 0 : index
    %9 = vector.load %arg7[%c0_10, %c0_11] : memref<1x96xf32, #tpu.memory_space<vmem>>, vector<1x96xf32>
    %10 = vector.broadcast %9 : vector<1x96xf32> to vector<8x96xf32>
    %11 = arith.addf %8, %10 : vector<8x96xf32>
    %12 = vector.extract_strided_slice %11 {offsets = [0, 0], sizes = [8, 32], strides = [1, 1]} : vector<8x96xf32> to vector<8x32xf32>
    %13 = vector.extract_strided_slice %11 {offsets = [0, 32], sizes = [8, 32], strides = [1, 1]} : vector<8x96xf32> to vector<8x32xf32>
    %14 = vector.extract_strided_slice %11 {offsets = [0, 64], sizes = [8, 32], strides = [1, 1]} : vector<8x96xf32> to vector<8x32xf32>
    %15 = arith.truncf %12 : vector<8x32xf32> to vector<8x32xbf16>
    %16 = arith.truncf %13 : vector<8x32xf32> to vector<8x32xbf16>
    %17 = arith.truncf %14 : vector<8x32xf32> to vector<8x32xbf16>
    %c0_12 = arith.constant 0 : index
    %c0_13 = arith.constant 0 : index
    %c0_14 = arith.constant 0 : index
    %18 = vector.load %arg4[%c0_12, %c0_13, %c0_14] : memref<1x8x8xf32, #tpu.memory_space<vmem>>, vector<1x8x8xf32>
    %19 = vector.shape_cast %18 : vector<1x8x8xf32> to vector<8x8xf32>
    %20 = vector.extract_strided_slice %15 {offsets = [0, 0], sizes = [8, 8], strides = [1, 1]} : vector<8x32xbf16> to vector<8x8xbf16>
    %21 = vector.extract_strided_slice %16 {offsets = [0, 0], sizes = [8, 8], strides = [1, 1]} : vector<8x32xbf16> to vector<8x8xbf16>
    %22 = vector.extract_strided_slice %17 {offsets = [0, 0], sizes = [8, 8], strides = [1, 1]} : vector<8x32xbf16> to vector<8x8xbf16>
    %cst_15 = arith.constant dense<0.000000e+00> : vector<8x8xf32>
    %23 = tpu.matmul %20, %21, %cst_15 {dimension_numbers = #tpu.dot_dimension_numbers<[1], [1], [0], [0], [0, 0, 1, 0], [], []>} : vector<8x8xbf16>, vector<8x8xbf16>, vector<8x8xf32> -> vector<8x8xf32>
    %cst_16 = arith.constant 0.176776692 : f32
    %24 = vector.broadcast %cst_16 : f32 to vector<8x8xf32>
    %25 = arith.mulf %23, %24 : vector<8x8xf32>
    %26 = arith.addf %25, %19 : vector<8x8xf32>
    %cst_17 = arith.constant dense<0xFF800000> : vector<8xf32>
    %27 = vector.multi_reduction <maximumf>, %26, %cst_17 [1] : vector<8x8xf32> to vector<8xf32>
    %28 = vector.shape_cast %27 : vector<8xf32> to vector<8x1xf32>
    %29 = vector.broadcast %28 : vector<8x1xf32> to vector<8x8xf32>
    %30 = arith.subf %26, %29 : vector<8x8xf32>
    %31 = math.exp %30 : vector<8x8xf32>
    %cst_18 = arith.constant dense<0.000000e+00> : vector<8xf32>
    %32 = vector.multi_reduction <add>, %31, %cst_18 [1] : vector<8x8xf32> to vector<8xf32>
    %33 = vector.shape_cast %32 : vector<8xf32> to vector<8x1xf32>
    %34 = tpu.reciprocal %33 {approx = true} : vector<8x1xf32> -> vector<8x1xf32>
    %35 = vector.broadcast %34 : vector<8x1xf32> to vector<8x8xf32>
    %36 = arith.mulf %31, %35 : vector<8x8xf32>
    %37 = arith.truncf %36 : vector<8x8xf32> to vector<8x8xbf16>
    %cst_19 = arith.constant dense<0.000000e+00> : vector<8x8xf32>
    %38 = tpu.matmul %37, %22, %cst_19 {dimension_numbers = #tpu.dot_dimension_numbers<[1], [0], [0], [1], [0, 0, 1, 1], [], []>} : vector<8x8xbf16>, vector<8x8xbf16>, vector<8x8xf32> -> vector<8x8xf32>
    %c0_20 = arith.constant 0 : index
    %c0_21 = arith.constant 0 : index
    %39 = vector.load %arg29[%c0_20, %c0_21] : memref<8x32xf32, #tpu.memory_space<vmem>>, vector<8x8xf32>
    tpu.vector_store %arg29[%c0_20, %c0_21], %38 {strides = array<i32>} : memref<8x32xf32, #tpu.memory_space<vmem>>, vector<8x8xf32>,
    %40 = vector.extract_strided_slice %15 {offsets = [0, 8], sizes = [8, 8], strides = [1, 1]} : vector<8x32xbf16> to vector<8x8xbf16>
    %41 = vector.extract_strided_slice %16 {offsets = [0, 8], sizes = [8, 8], strides = [1, 1]} : vector<8x32xbf16> to vector<8x8xbf16>
    %42 = vector.extract_strided_slice %17 {offsets = [0, 8], sizes = [8, 8], strides = [1, 1]} : vector<8x32xbf16> to vector<8x8xbf16>
    %cst_22 = arith.constant dense<0.000000e+00> : vector<8x8xf32>
    %43 = tpu.matmul %40, %41, %cst_22 {dimension_numbers = #tpu.dot_dimension_numbers<[1], [1], [0], [0], [0, 0, 1, 0], [], []>} : vector<8x8xbf16>, vector<8x8xbf16>, vector<8x8xf32> -> vector<8x8xf32>
    %cst_23 = arith.constant 0.176776692 : f32
    %44 = vector.broadcast %cst_23 : f32 to vector<8x8xf32>
    %45 = arith.mulf %43, %44 : vector<8x8xf32>
    %46 = arith.addf %45, %19 : vector<8x8xf32>
    %cst_24 = arith.constant dense<0xFF800000> : vector<8xf32>
    %47 = vector.multi_reduction <maximumf>, %46, %cst_24 [1] : vector<8x8xf32> to vector<8xf32>
    %48 = vector.shape_cast %47 : vector<8xf32> to vector<8x1xf32>
    %49 = vector.broadcast %48 : vector<8x1xf32> to vector<8x8xf32>
    %50 = arith.subf %46, %49 : vector<8x8xf32>
    %51 = math.exp %50 : vector<8x8xf32>
    %cst_25 = arith.constant dense<0.000000e+00> : vector<8xf32>
    %52 = vector.multi_reduction <add>, %51, %cst_25 [1] : vector<8x8xf32> to vector<8xf32>
    %53 = vector.shape_cast %52 : vector<8xf32> to vector<8x1xf32>
    %54 = tpu.reciprocal %53 {approx = true} : vector<8x1xf32> -> vector<8x1xf32>
    %55 = vector.broadcast %54 : vector<8x1xf32> to vector<8x8xf32>
    %56 = arith.mulf %51, %55 : vector<8x8xf32>
    %57 = arith.truncf %56 : vector<8x8xf32> to vector<8x8xbf16>
    %cst_26 = arith.constant dense<0.000000e+00> : vector<8x8xf32>
    %58 = tpu.matmul %57, %42, %cst_26 {dimension_numbers = #tpu.dot_dimension_numbers<[1], [0], [0], [1], [0, 0, 1, 1], [], []>} : vector<8x8xbf16>, vector<8x8xbf16>, vector<8x8xf32> -> vector<8x8xf32>
    %c0_27 = arith.constant 0 : index
    %c8 = arith.constant 8 : index
    %59 = vector.load %arg29[%c0_27, %c8] : memref<8x32xf32, #tpu.memory_space<vmem>>, vector<8x8xf32>
    tpu.vector_store %arg29[%c0_27, %c8], %58 {strides = array<i32>} : memref<8x32xf32, #tpu.memory_space<vmem>>, vector<8x8xf32>,
    %60 = vector.extract_strided_slice %15 {offsets = [0, 16], sizes = [8, 8], strides = [1, 1]} : vector<8x32xbf16> to vector<8x8xbf16>
    %61 = vector.extract_strided_slice %16 {offsets = [0, 16], sizes = [8, 8], strides = [1, 1]} : vector<8x32xbf16> to vector<8x8xbf16>
    %62 = vector.extract_strided_slice %17 {offsets = [0, 16], sizes = [8, 8], strides = [1, 1]} : vector<8x32xbf16> to vector<8x8xbf16>
    %cst_28 = arith.constant dense<0.000000e+00> : vector<8x8xf32>
    %63 = tpu.matmul %60, %61, %cst_28 {dimension_numbers = #tpu.dot_dimension_numbers<[1], [1], [0], [0], [0, 0, 1, 0], [], []>} : vector<8x8xbf16>, vector<8x8xbf16>, vector<8x8xf32> -> vector<8x8xf32>
    %cst_29 = arith.constant 0.176776692 : f32
    %64 = vector.broadcast %cst_29 : f32 to vector<8x8xf32>
    %65 = arith.mulf %63, %64 : vector<8x8xf32>
    %66 = arith.addf %65, %19 : vector<8x8xf32>
    %cst_30 = arith.constant dense<0xFF800000> : vector<8xf32>
    %67 = vector.multi_reduction <maximumf>, %66, %cst_30 [1] : vector<8x8xf32> to vector<8xf32>
    %68 = vector.shape_cast %67 : vector<8xf32> to vector<8x1xf32>
    %69 = vector.broadcast %68 : vector<8x1xf32> to vector<8x8xf32>
    %70 = arith.subf %66, %69 : vector<8x8xf32>
    %71 = math.exp %70 : vector<8x8xf32>
    %cst_31 = arith.constant dense<0.000000e+00> : vector<8xf32>
    %72 = vector.multi_reduction <add>, %71, %cst_31 [1] : vector<8x8xf32> to vector<8xf32>
    %73 = vector.shape_cast %72 : vector<8xf32> to vector<8x1xf32>
    %74 = tpu.reciprocal %73 {approx = true} : vector<8x1xf32> -> vector<8x1xf32>
    %75 = vector.broadcast %74 : vector<8x1xf32> to vector<8x8xf32>
    %76 = arith.mulf %71, %75 : vector<8x8xf32>
    %77 = arith.truncf %76 : vector<8x8xf32> to vector<8x8xbf16>
    %cst_32 = arith.constant dense<0.000000e+00> : vector<8x8xf32>
    %78 = tpu.matmul %77, %62, %cst_32 {dimension_numbers = #tpu.dot_dimension_numbers<[1], [0], [0], [1], [0, 0, 1, 1], [], []>} : vector<8x8xbf16>, vector<8x8xbf16>, vector<8x8xf32> -> vector<8x8xf32>
    %c0_33 = arith.constant 0 : index
    %c16 = arith.constant 16 : index
    %79 = vector.load %arg29[%c0_33, %c16] : memref<8x32xf32, #tpu.memory_space<vmem>>, vector<8x8xf32>
    tpu.vector_store %arg29[%c0_33, %c16], %78 {strides = array<i32>} : memref<8x32xf32, #tpu.memory_space<vmem>>, vector<8x8xf32>,
    %80 = vector.extract_strided_slice %15 {offsets = [0, 24], sizes = [8, 8], strides = [1, 1]} : vector<8x32xbf16> to vector<8x8xbf16>
    %81 = vector.extract_strided_slice %16 {offsets = [0, 24], sizes = [8, 8], strides = [1, 1]} : vector<8x32xbf16> to vector<8x8xbf16>
    %82 = vector.extract_strided_slice %17 {offsets = [0, 24], sizes = [8, 8], strides = [1, 1]} : vector<8x32xbf16> to vector<8x8xbf16>
    %cst_34 = arith.constant dense<0.000000e+00> : vector<8x8xf32>
    %83 = tpu.matmul %80, %81, %cst_34 {dimension_numbers = #tpu.dot_dimension_numbers<[1], [1], [0], [0], [0, 0, 1, 0], [], []>} : vector<8x8xbf16>, vector<8x8xbf16>, vector<8x8xf32> -> vector<8x8xf32>
    %cst_35 = arith.constant 0.176776692 : f32
    %84 = vector.broadcast %cst_35 : f32 to vector<8x8xf32>
    %85 = arith.mulf %83, %84 : vector<8x8xf32>
    %86 = arith.addf %85, %19 : vector<8x8xf32>
    %cst_36 = arith.constant dense<0xFF800000> : vector<8xf32>
    %87 = vector.multi_reduction <maximumf>, %86, %cst_36 [1] : vector<8x8xf32> to vector<8xf32>
    %88 = vector.shape_cast %87 : vector<8xf32> to vector<8x1xf32>
    %89 = vector.broadcast %88 : vector<8x1xf32> to vector<8x8xf32>
    %90 = arith.subf %86, %89 : vector<8x8xf32>
    %91 = math.exp %90 : vector<8x8xf32>
    %cst_37 = arith.constant dense<0.000000e+00> : vector<8xf32>
    %92 = vector.multi_reduction <add>, %91, %cst_37 [1] : vector<8x8xf32> to vector<8xf32>
    %93 = vector.shape_cast %92 : vector<8xf32> to vector<8x1xf32>
    %94 = tpu.reciprocal %93 {approx = true} : vector<8x1xf32> -> vector<8x1xf32>
    %95 = vector.broadcast %94 : vector<8x1xf32> to vector<8x8xf32>
    %96 = arith.mulf %91, %95 : vector<8x8xf32>
    %97 = arith.truncf %96 : vector<8x8xf32> to vector<8x8xbf16>
    %cst_38 = arith.constant dense<0.000000e+00> : vector<8x8xf32>
    %98 = tpu.matmul %97, %82, %cst_38 {dimension_numbers = #tpu.dot_dimension_numbers<[1], [0], [0], [1], [0, 0, 1, 1], [], []>} : vector<8x8xbf16>, vector<8x8xbf16>, vector<8x8xf32> -> vector<8x8xf32>
    %c0_39 = arith.constant 0 : index
    %c24 = arith.constant 24 : index
    %99 = vector.load %arg29[%c0_39, %c24] : memref<8x32xf32, #tpu.memory_space<vmem>>, vector<8x8xf32>
    tpu.vector_store %arg29[%c0_39, %c24], %98 {strides = array<i32>} : memref<8x32xf32, #tpu.memory_space<vmem>>, vector<8x8xf32>,
    %c0_40 = arith.constant 0 : index
    %c0_41 = arith.constant 0 : index
    %100 = vector.load %arg29[%c0_40, %c0_41] : memref<8x32xf32, #tpu.memory_space<vmem>>, vector<8x32xf32>
    %101 = arith.truncf %100 : vector<8x32xf32> to vector<8x32xbf16>
    %c0_42 = arith.constant 0 : index
    %c0_43 = arith.constant 0 : index
    %102 = vector.load %arg8[%c0_42, %c0_43] : memref<32x32xbf16, #tpu.memory_space<vmem>>, vector<32x32xbf16>
    %cst_44 = arith.constant dense<0.000000e+00> : vector<8x32xf32>
    %103 = tpu.matmul %101, %102, %cst_44 {dimension_numbers = #tpu.dot_dimension_numbers<[1], [0], [0], [1], [0, 0, 1, 1], [], []>} : vector<8x32xbf16>, vector<32x32xbf16>, vector<8x32xf32> -> vector<8x32xf32>
    %c0_45 = arith.constant 0 : index
    %c0_46 = arith.constant 0 : index
    %104 = vector.load %arg9[%c0_45, %c0_46] : memref<1x32xf32, #tpu.memory_space<vmem>>, vector<1x32xf32>
    %105 = vector.broadcast %104 : vector<1x32xf32> to vector<8x32xf32>
    %106 = arith.addf %103, %105 : vector<8x32xf32>
    %107 = arith.addf %106, %1 : vector<8x32xf32>
    %cst_47 = arith.constant dense<0.000000e+00> : vector<8xf32>
    %108 = vector.multi_reduction <add>, %107, %cst_47 [1] : vector<8x32xf32> to vector<8xf32>
    %109 = vector.shape_cast %108 : vector<8xf32> to vector<8x1xf32>
    %cst_48 = arith.constant 3.200000e+01 : f32
    %110 = vector.broadcast %cst_48 : f32 to vector<8x1xf32>
    %111 = arith.divf %109, %110 : vector<8x1xf32>
    %112 = vector.broadcast %111 : vector<8x1xf32> to vector<8x32xf32>
    %113 = arith.subf %107, %112 : vector<8x32xf32>
    %114 = arith.mulf %113, %113 : vector<8x32xf32>
    %cst_49 = arith.constant dense<0.000000e+00> : vector<8xf32>
    %115 = vector.multi_reduction <add>, %114, %cst_49 [1] : vector<8x32xf32> to vector<8xf32>
    %116 = vector.shape_cast %115 : vector<8xf32> to vector<8x1xf32>
    %cst_50 = arith.constant 3.200000e+01 : f32
    %117 = vector.broadcast %cst_50 : f32 to vector<8x1xf32>
    %118 = arith.divf %116, %117 : vector<8x1xf32>
    %119 = vector.broadcast %111 : vector<8x1xf32> to vector<8x32xf32>
    %120 = arith.subf %107, %119 : vector<8x32xf32>
    %cst_51 = arith.constant 9.99999974E-6 : f32
    %121 = vector.broadcast %cst_51 : f32 to vector<8x1xf32>
    %122 = arith.addf %118, %121 : vector<8x1xf32>
    %123 = math.rsqrt %122 : vector<8x1xf32>
    %124 = vector.broadcast %123 : vector<8x1xf32> to vector<8x32xf32>
    %125 = arith.mulf %120, %124 : vector<8x32xf32>
    %c0_52 = arith.constant 0 : index
    %c0_53 = arith.constant 0 : index
    %126 = vector.load %arg10[%c0_52, %c0_53] : memref<1x32xf32, #tpu.memory_space<vmem>>, vector<1x32xf32>
    %127 = vector.broadcast %126 : vector<1x32xf32> to vector<8x32xf32>
    %128 = arith.mulf %125, %127 : vector<8x32xf32>
    %c0_54 = arith.constant 0 : index
    %c0_55 = arith.constant 0 : index
    %129 = vector.load %arg11[%c0_54, %c0_55] : memref<1x32xf32, #tpu.memory_space<vmem>>, vector<1x32xf32>
    %130 = vector.broadcast %129 : vector<1x32xf32> to vector<8x32xf32>
    %131 = arith.addf %128, %130 : vector<8x32xf32>
    %132 = arith.truncf %131 : vector<8x32xf32> to vector<8x32xbf16>
    %c0_56 = arith.constant 0 : index
    %c0_57 = arith.constant 0 : index
    %133 = vector.load %arg12[%c0_56, %c0_57] : memref<32x32xbf16, #tpu.memory_space<vmem>>, vector<32x32xbf16>
    %cst_58 = arith.constant dense<0.000000e+00> : vector<8x32xf32>
    %134 = tpu.matmul %132, %133, %cst_58 {dimension_numbers = #tpu.dot_dimension_numbers<[1], [0], [0], [1], [0, 0, 1, 1], [], []>} : vector<8x32xbf16>, vector<32x32xbf16>, vector<8x32xf32> -> vector<8x32xf32>
    %c0_59 = arith.constant 0 : index
    %c0_60 = arith.constant 0 : index
    %135 = vector.load %arg13[%c0_59, %c0_60] : memref<1x32xf32, #tpu.memory_space<vmem>>, vector<1x32xf32>
    %136 = vector.broadcast %135 : vector<1x32xf32> to vector<8x32xf32>
    %137 = arith.addf %134, %136 : vector<8x32xf32>
    %138 = arith.truncf %3 : vector<16x32xf32> to vector<16x32xbf16>
    %c0_61 = arith.constant 0 : index
    %c0_62 = arith.constant 0 : index
    %139 = vector.load %arg14[%c0_61, %c0_62] : memref<32x32xbf16, #tpu.memory_space<vmem>>, vector<32x32xbf16>
    %cst_63 = arith.constant dense<0.000000e+00> : vector<16x32xf32>
    %140 = tpu.matmul %138, %139, %cst_63 {dimension_numbers = #tpu.dot_dimension_numbers<[1], [0], [0], [1], [0, 0, 1, 1], [], []>} : vector<16x32xbf16>, vector<32x32xbf16>, vector<16x32xf32> -> vector<16x32xf32>
    %c0_64 = arith.constant 0 : index
    %c0_65 = arith.constant 0 : index
    %141 = vector.load %arg15[%c0_64, %c0_65] : memref<1x32xf32, #tpu.memory_space<vmem>>, vector<1x32xf32>
    %142 = vector.broadcast %141 : vector<1x32xf32> to vector<16x32xf32>
    %143 = arith.addf %140, %142 : vector<16x32xf32>
    %144 = arith.truncf %5 : vector<16x32xf32> to vector<16x32xbf16>
    %c0_66 = arith.constant 0 : index
    %c0_67 = arith.constant 0 : index
    %145 = vector.load %arg16[%c0_66, %c0_67] : memref<32x32xbf16, #tpu.memory_space<vmem>>, vector<32x32xbf16>
    %cst_68 = arith.constant dense<0.000000e+00> : vector<16x32xf32>
    %146 = tpu.matmul %144, %145, %cst_68 {dimension_numbers = #tpu.dot_dimension_numbers<[1], [0], [0], [1], [0, 0, 1, 1], [], []>} : vector<16x32xbf16>, vector<32x32xbf16>, vector<16x32xf32> -> vector<16x32xf32>
    %c0_69 = arith.constant 0 : index
    %c0_70 = arith.constant 0 : index
    %147 = vector.load %arg17[%c0_69, %c0_70] : memref<1x32xf32, #tpu.memory_space<vmem>>, vector<1x32xf32>
    %148 = vector.broadcast %147 : vector<1x32xf32> to vector<16x32xf32>
    %149 = arith.addf %146, %148 : vector<16x32xf32>
    %150 = arith.truncf %137 : vector<8x32xf32> to vector<8x32xbf16>
    %151 = arith.truncf %143 : vector<16x32xf32> to vector<16x32xbf16>
    %152 = arith.truncf %149 : vector<16x32xf32> to vector<16x32xbf16>
    %c0_71 = arith.constant 0 : index
    %c0_72 = arith.constant 0 : index
    %c0_73 = arith.constant 0 : index
    %153 = vector.load %arg5[%c0_71, %c0_72, %c0_73] : memref<1x8x16xf32, #tpu.memory_space<vmem>>, vector<1x8x16xf32>
    %154 = vector.shape_cast %153 : vector<1x8x16xf32> to vector<8x16xf32>
    %155 = vector.extract_strided_slice %150 {offsets = [0, 0], sizes = [8, 8], strides = [1, 1]} : vector<8x32xbf16> to vector<8x8xbf16>
    %156 = vector.extract_strided_slice %151 {offsets = [0, 0], sizes = [16, 8], strides = [1, 1]} : vector<16x32xbf16> to vector<16x8xbf16>
    %157 = vector.extract_strided_slice %152 {offsets = [0, 0], sizes = [16, 8], strides = [1, 1]} : vector<16x32xbf16> to vector<16x8xbf16>
    %cst_74 = arith.constant dense<0.000000e+00> : vector<8x16xf32>
    %158 = tpu.matmul %155, %156, %cst_74 {dimension_numbers = #tpu.dot_dimension_numbers<[1], [1], [0], [0], [0, 0, 1, 0], [], []>} : vector<8x8xbf16>, vector<16x8xbf16>, vector<8x16xf32> -> vector<8x16xf32>
    %cst_75 = arith.constant 0.176776692 : f32
    %159 = vector.broadcast %cst_75 : f32 to vector<8x16xf32>
    %160 = arith.mulf %158, %159 : vector<8x16xf32>
    %161 = arith.addf %160, %154 : vector<8x16xf32>
    %cst_76 = arith.constant dense<0xFF800000> : vector<8xf32>
    %162 = vector.multi_reduction <maximumf>, %161, %cst_76 [1] : vector<8x16xf32> to vector<8xf32>
    %163 = vector.shape_cast %162 : vector<8xf32> to vector<8x1xf32>
    %164 = vector.broadcast %163 : vector<8x1xf32> to vector<8x16xf32>
    %165 = arith.subf %161, %164 : vector<8x16xf32>
    %166 = math.exp %165 : vector<8x16xf32>
    %cst_77 = arith.constant dense<0.000000e+00> : vector<8xf32>
    %167 = vector.multi_reduction <add>, %166, %cst_77 [1] : vector<8x16xf32> to vector<8xf32>
    %168 = vector.shape_cast %167 : vector<8xf32> to vector<8x1xf32>
    %169 = tpu.reciprocal %168 {approx = true} : vector<8x1xf32> -> vector<8x1xf32>
    %170 = vector.broadcast %169 : vector<8x1xf32> to vector<8x16xf32>
    %171 = arith.mulf %166, %170 : vector<8x16xf32>
    %172 = arith.truncf %171 : vector<8x16xf32> to vector<8x16xbf16>
    %cst_78 = arith.constant dense<0.000000e+00> : vector<8x8xf32>
    %173 = tpu.matmul %172, %157, %cst_78 {dimension_numbers = #tpu.dot_dimension_numbers<[1], [0], [0], [1], [0, 0, 1, 1], [], []>} : vector<8x16xbf16>, vector<16x8xbf16>, vector<8x8xf32> -> vector<8x8xf32>
    %c0_79 = arith.constant 0 : index
    %c0_80 = arith.constant 0 : index
    %174 = vector.load %arg29[%c0_79, %c0_80] : memref<8x32xf32, #tpu.memory_space<vmem>>, vector<8x8xf32>
    tpu.vector_store %arg29[%c0_79, %c0_80], %173 {strides = array<i32>} : memref<8x32xf32, #tpu.memory_space<vmem>>, vector<8x8xf32>,
    %175 = vector.extract_strided_slice %150 {offsets = [0, 8], sizes = [8, 8], strides = [1, 1]} : vector<8x32xbf16> to vector<8x8xbf16>
    %176 = vector.extract_strided_slice %151 {offsets = [0, 8], sizes = [16, 8], strides = [1, 1]} : vector<16x32xbf16> to vector<16x8xbf16>
    %177 = vector.extract_strided_slice %152 {offsets = [0, 8], sizes = [16, 8], strides = [1, 1]} : vector<16x32xbf16> to vector<16x8xbf16>
    %cst_81 = arith.constant dense<0.000000e+00> : vector<8x16xf32>
    %178 = tpu.matmul %175, %176, %cst_81 {dimension_numbers = #tpu.dot_dimension_numbers<[1], [1], [0], [0], [0, 0, 1, 0], [], []>} : vector<8x8xbf16>, vector<16x8xbf16>, vector<8x16xf32> -> vector<8x16xf32>
    %cst_82 = arith.constant 0.176776692 : f32
    %179 = vector.broadcast %cst_82 : f32 to vector<8x16xf32>
    %180 = arith.mulf %178, %179 : vector<8x16xf32>
    %181 = arith.addf %180, %154 : vector<8x16xf32>
    %cst_83 = arith.constant dense<0xFF800000> : vector<8xf32>
    %182 = vector.multi_reduction <maximumf>, %181, %cst_83 [1] : vector<8x16xf32> to vector<8xf32>
    %183 = vector.shape_cast %182 : vector<8xf32> to vector<8x1xf32>
    %184 = vector.broadcast %183 : vector<8x1xf32> to vector<8x16xf32>
    %185 = arith.subf %181, %184 : vector<8x16xf32>
    %186 = math.exp %185 : vector<8x16xf32>
    %cst_84 = arith.constant dense<0.000000e+00> : vector<8xf32>
    %187 = vector.multi_reduction <add>, %186, %cst_84 [1] : vector<8x16xf32> to vector<8xf32>
    %188 = vector.shape_cast %187 : vector<8xf32> to vector<8x1xf32>
    %189 = tpu.reciprocal %188 {approx = true} : vector<8x1xf32> -> vector<8x1xf32>
    %190 = vector.broadcast %189 : vector<8x1xf32> to vector<8x16xf32>
    %191 = arith.mulf %186, %190 : vector<8x16xf32>
    %192 = arith.truncf %191 : vector<8x16xf32> to vector<8x16xbf16>
    %cst_85 = arith.constant dense<0.000000e+00> : vector<8x8xf32>
    %193 = tpu.matmul %192, %177, %cst_85 {dimension_numbers = #tpu.dot_dimension_numbers<[1], [0], [0], [1], [0, 0, 1, 1], [], []>} : vector<8x16xbf16>, vector<16x8xbf16>, vector<8x8xf32> -> vector<8x8xf32>
    %c0_86 = arith.constant 0 : index
    %c8_87 = arith.constant 8 : index
    %194 = vector.load %arg29[%c0_86, %c8_87] : memref<8x32xf32, #tpu.memory_space<vmem>>, vector<8x8xf32>
    tpu.vector_store %arg29[%c0_86, %c8_87], %193 {strides = array<i32>} : memref<8x32xf32, #tpu.memory_space<vmem>>, vector<8x8xf32>,
    %195 = vector.extract_strided_slice %150 {offsets = [0, 16], sizes = [8, 8], strides = [1, 1]} : vector<8x32xbf16> to vector<8x8xbf16>
    %196 = vector.extract_strided_slice %151 {offsets = [0, 16], sizes = [16, 8], strides = [1, 1]} : vector<16x32xbf16> to vector<16x8xbf16>
    %197 = vector.extract_strided_slice %152 {offsets = [0, 16], sizes = [16, 8], strides = [1, 1]} : vector<16x32xbf16> to vector<16x8xbf16>
    %cst_88 = arith.constant dense<0.000000e+00> : vector<8x16xf32>
    %198 = tpu.matmul %195, %196, %cst_88 {dimension_numbers = #tpu.dot_dimension_numbers<[1], [1], [0], [0], [0, 0, 1, 0], [], []>} : vector<8x8xbf16>, vector<16x8xbf16>, vector<8x16xf32> -> vector<8x16xf32>
    %cst_89 = arith.constant 0.176776692 : f32
    %199 = vector.broadcast %cst_89 : f32 to vector<8x16xf32>
    %200 = arith.mulf %198, %199 : vector<8x16xf32>
    %201 = arith.addf %200, %154 : vector<8x16xf32>
    %cst_90 = arith.constant dense<0xFF800000> : vector<8xf32>
    %202 = vector.multi_reduction <maximumf>, %201, %cst_90 [1] : vector<8x16xf32> to vector<8xf32>
    %203 = vector.shape_cast %202 : vector<8xf32> to vector<8x1xf32>
    %204 = vector.broadcast %203 : vector<8x1xf32> to vector<8x16xf32>
    %205 = arith.subf %201, %204 : vector<8x16xf32>
    %206 = math.exp %205 : vector<8x16xf32>
    %cst_91 = arith.constant dense<0.000000e+00> : vector<8xf32>
    %207 = vector.multi_reduction <add>, %206, %cst_91 [1] : vector<8x16xf32> to vector<8xf32>
    %208 = vector.shape_cast %207 : vector<8xf32> to vector<8x1xf32>
    %209 = tpu.reciprocal %208 {approx = true} : vector<8x1xf32> -> vector<8x1xf32>
    %210 = vector.broadcast %209 : vector<8x1xf32> to vector<8x16xf32>
    %211 = arith.mulf %206, %210 : vector<8x16xf32>
    %212 = arith.truncf %211 : vector<8x16xf32> to vector<8x16xbf16>
    %cst_92 = arith.constant dense<0.000000e+00> : vector<8x8xf32>
    %213 = tpu.matmul %212, %197, %cst_92 {dimension_numbers = #tpu.dot_dimension_numbers<[1], [0], [0], [1], [0, 0, 1, 1], [], []>} : vector<8x16xbf16>, vector<16x8xbf16>, vector<8x8xf32> -> vector<8x8xf32>
    %c0_93 = arith.constant 0 : index
    %c16_94 = arith.constant 16 : index
    %214 = vector.load %arg29[%c0_93, %c16_94] : memref<8x32xf32, #tpu.memory_space<vmem>>, vector<8x8xf32>
    tpu.vector_store %arg29[%c0_93, %c16_94], %213 {strides = array<i32>} : memref<8x32xf32, #tpu.memory_space<vmem>>, vector<8x8xf32>,
    %215 = vector.extract_strided_slice %150 {offsets = [0, 24], sizes = [8, 8], strides = [1, 1]} : vector<8x32xbf16> to vector<8x8xbf16>
    %216 = vector.extract_strided_slice %151 {offsets = [0, 24], sizes = [16, 8], strides = [1, 1]} : vector<16x32xbf16> to vector<16x8xbf16>
    %217 = vector.extract_strided_slice %152 {offsets = [0, 24], sizes = [16, 8], strides = [1, 1]} : vector<16x32xbf16> to vector<16x8xbf16>
    %cst_95 = arith.constant dense<0.000000e+00> : vector<8x16xf32>
    %218 = tpu.matmul %215, %216, %cst_95 {dimension_numbers = #tpu.dot_dimension_numbers<[1], [1], [0], [0], [0, 0, 1, 0], [], []>} : vector<8x8xbf16>, vector<16x8xbf16>, vector<8x16xf32> -> vector<8x16xf32>
    %cst_96 = arith.constant 0.176776692 : f32
    %219 = vector.broadcast %cst_96 : f32 to vector<8x16xf32>
    %220 = arith.mulf %218, %219 : vector<8x16xf32>
    %221 = arith.addf %220, %154 : vector<8x16xf32>
    %cst_97 = arith.constant dense<0xFF800000> : vector<8xf32>
    %222 = vector.multi_reduction <maximumf>, %221, %cst_97 [1] : vector<8x16xf32> to vector<8xf32>
    %223 = vector.shape_cast %222 : vector<8xf32> to vector<8x1xf32>
    %224 = vector.broadcast %223 : vector<8x1xf32> to vector<8x16xf32>
    %225 = arith.subf %221, %224 : vector<8x16xf32>
    %226 = math.exp %225 : vector<8x16xf32>
    %cst_98 = arith.constant dense<0.000000e+00> : vector<8xf32>
    %227 = vector.multi_reduction <add>, %226, %cst_98 [1] : vector<8x16xf32> to vector<8xf32>
    %228 = vector.shape_cast %227 : vector<8xf32> to vector<8x1xf32>
    %229 = tpu.reciprocal %228 {approx = true} : vector<8x1xf32> -> vector<8x1xf32>
    %230 = vector.broadcast %229 : vector<8x1xf32> to vector<8x16xf32>
    %231 = arith.mulf %226, %230 : vector<8x16xf32>
    %232 = arith.truncf %231 : vector<8x16xf32> to vector<8x16xbf16>
    %cst_99 = arith.constant dense<0.000000e+00> : vector<8x8xf32>
    %233 = tpu.matmul %232, %217, %cst_99 {dimension_numbers = #tpu.dot_dimension_numbers<[1], [0], [0], [1], [0, 0, 1, 1], [], []>} : vector<8x16xbf16>, vector<16x8xbf16>, vector<8x8xf32> -> vector<8x8xf32>
    %c0_100 = arith.constant 0 : index
    %c24_101 = arith.constant 24 : index
    %234 = vector.load %arg29[%c0_100, %c24_101] : memref<8x32xf32, #tpu.memory_space<vmem>>, vector<8x8xf32>
    tpu.vector_store %arg29[%c0_100, %c24_101], %233 {strides = array<i32>} : memref<8x32xf32, #tpu.memory_space<vmem>>, vector<8x8xf32>,
    %c0_102 = arith.constant 0 : index
    %c0_103 = arith.constant 0 : index
    %235 = vector.load %arg29[%c0_102, %c0_103] : memref<8x32xf32, #tpu.memory_space<vmem>>, vector<8x32xf32>
    %236 = arith.truncf %235 : vector<8x32xf32> to vector<8x32xbf16>
    %c0_104 = arith.constant 0 : index
    %c0_105 = arith.constant 0 : index
    %237 = vector.load %arg18[%c0_104, %c0_105] : memref<32x32xbf16, #tpu.memory_space<vmem>>, vector<32x32xbf16>
    %cst_106 = arith.constant dense<0.000000e+00> : vector<8x32xf32>
    %238 = tpu.matmul %236, %237, %cst_106 {dimension_numbers = #tpu.dot_dimension_numbers<[1], [0], [0], [1], [0, 0, 1, 1], [], []>} : vector<8x32xbf16>, vector<32x32xbf16>, vector<8x32xf32> -> vector<8x32xf32>
    %c0_107 = arith.constant 0 : index
    %c0_108 = arith.constant 0 : index
    %239 = vector.load %arg19[%c0_107, %c0_108] : memref<1x32xf32, #tpu.memory_space<vmem>>, vector<1x32xf32>
    %240 = vector.broadcast %239 : vector<1x32xf32> to vector<8x32xf32>
    %241 = arith.addf %238, %240 : vector<8x32xf32>
    %242 = arith.addf %241, %131 : vector<8x32xf32>
    %cst_109 = arith.constant dense<0.000000e+00> : vector<8xf32>
    %243 = vector.multi_reduction <add>, %242, %cst_109 [1] : vector<8x32xf32> to vector<8xf32>
    %244 = vector.shape_cast %243 : vector<8xf32> to vector<8x1xf32>
    %cst_110 = arith.constant 3.200000e+01 : f32
    %245 = vector.broadcast %cst_110 : f32 to vector<8x1xf32>
    %246 = arith.divf %244, %245 : vector<8x1xf32>
    %247 = vector.broadcast %246 : vector<8x1xf32> to vector<8x32xf32>
    %248 = arith.subf %242, %247 : vector<8x32xf32>
    %249 = arith.mulf %248, %248 : vector<8x32xf32>
    %cst_111 = arith.constant dense<0.000000e+00> : vector<8xf32>
    %250 = vector.multi_reduction <add>, %249, %cst_111 [1] : vector<8x32xf32> to vector<8xf32>
    %251 = vector.shape_cast %250 : vector<8xf32> to vector<8x1xf32>
    %cst_112 = arith.constant 3.200000e+01 : f32
    %252 = vector.broadcast %cst_112 : f32 to vector<8x1xf32>
    %253 = arith.divf %251, %252 : vector<8x1xf32>
    %254 = vector.broadcast %246 : vector<8x1xf32> to vector<8x32xf32>
    %255 = arith.subf %242, %254 : vector<8x32xf32>
    %cst_113 = arith.constant 9.99999974E-6 : f32
    %256 = vector.broadcast %cst_113 : f32 to vector<8x1xf32>
    %257 = arith.addf %253, %256 : vector<8x1xf32>
    %258 = math.rsqrt %257 : vector<8x1xf32>
    %259 = vector.broadcast %258 : vector<8x1xf32> to vector<8x32xf32>
    %260 = arith.mulf %255, %259 : vector<8x32xf32>
    %c0_114 = arith.constant 0 : index
    %c0_115 = arith.constant 0 : index
    %261 = vector.load %arg20[%c0_114, %c0_115] : memref<1x32xf32, #tpu.memory_space<vmem>>, vector<1x32xf32>
    %262 = vector.broadcast %261 : vector<1x32xf32> to vector<8x32xf32>
    %263 = arith.mulf %260, %262 : vector<8x32xf32>
    %c0_116 = arith.constant 0 : index
    %c0_117 = arith.constant 0 : index
    %264 = vector.load %arg21[%c0_116, %c0_117] : memref<1x32xf32, #tpu.memory_space<vmem>>, vector<1x32xf32>
    %265 = vector.broadcast %264 : vector<1x32xf32> to vector<8x32xf32>
    %266 = arith.addf %263, %265 : vector<8x32xf32>
    %267 = arith.truncf %266 : vector<8x32xf32> to vector<8x32xbf16>
    %c0_118 = arith.constant 0 : index
    %c0_119 = arith.constant 0 : index
    %268 = vector.load %arg22[%c0_118, %c0_119] : memref<32x128xbf16, #tpu.memory_space<vmem>>, vector<32x128xbf16>
    %cst_120 = arith.constant dense<0.000000e+00> : vector<8x128xf32>
    %269 = tpu.matmul %267, %268, %cst_120 {dimension_numbers = #tpu.dot_dimension_numbers<[1], [0], [0], [1], [0, 0, 1, 1], [], []>} : vector<8x32xbf16>, vector<32x128xbf16>, vector<8x128xf32> -> vector<8x128xf32>
    %c0_121 = arith.constant 0 : index
    %c0_122 = arith.constant 0 : index
    %270 = vector.load %arg23[%c0_121, %c0_122] : memref<1x128xf32, #tpu.memory_space<vmem>>, vector<1x128xf32>
    %271 = vector.broadcast %270 : vector<1x128xf32> to vector<8x128xf32>
    %272 = arith.addf %269, %271 : vector<8x128xf32>
    %cst_123 = arith.constant 0.000000e+00 : f32
    %273 = vector.broadcast %cst_123 : f32 to vector<8x128xf32>
    %274 = arith.maximumf %272, %273 : vector<8x128xf32>
    %275 = arith.truncf %274 : vector<8x128xf32> to vector<8x128xbf16>
    %c0_124 = arith.constant 0 : index
    %c0_125 = arith.constant 0 : index
    %276 = vector.load %arg24[%c0_124, %c0_125] : memref<128x32xbf16, #tpu.memory_space<vmem>>, vector<128x32xbf16>
    %cst_126 = arith.constant dense<0.000000e+00> : vector<8x32xf32>
    %277 = tpu.matmul %275, %276, %cst_126 {dimension_numbers = #tpu.dot_dimension_numbers<[1], [0], [0], [1], [0, 0, 1, 1], [], []>} : vector<8x128xbf16>, vector<128x32xbf16>, vector<8x32xf32> -> vector<8x32xf32>
    %c0_127 = arith.constant 0 : index
    %c0_128 = arith.constant 0 : index
    %278 = vector.load %arg25[%c0_127, %c0_128] : memref<1x32xf32, #tpu.memory_space<vmem>>, vector<1x32xf32>
    %279 = vector.broadcast %278 : vector<1x32xf32> to vector<8x32xf32>
    %280 = arith.addf %277, %279 : vector<8x32xf32>
    %281 = arith.addf %280, %266 : vector<8x32xf32>
    %cst_129 = arith.constant dense<0.000000e+00> : vector<8xf32>
    %282 = vector.multi_reduction <add>, %281, %cst_129 [1] : vector<8x32xf32> to vector<8xf32>
    %283 = vector.shape_cast %282 : vector<8xf32> to vector<8x1xf32>
    %cst_130 = arith.constant 3.200000e+01 : f32
    %284 = vector.broadcast %cst_130 : f32 to vector<8x1xf32>
    %285 = arith.divf %283, %284 : vector<8x1xf32>
    %286 = vector.broadcast %285 : vector<8x1xf32> to vector<8x32xf32>
    %287 = arith.subf %281, %286 : vector<8x32xf32>
    %288 = arith.mulf %287, %287 : vector<8x32xf32>
    %cst_131 = arith.constant dense<0.000000e+00> : vector<8xf32>
    %289 = vector.multi_reduction <add>, %288, %cst_131 [1] : vector<8x32xf32> to vector<8xf32>
    %290 = vector.shape_cast %289 : vector<8xf32> to vector<8x1xf32>
    %cst_132 = arith.constant 3.200000e+01 : f32
    %291 = vector.broadcast %cst_132 : f32 to vector<8x1xf32>
    %292 = arith.divf %290, %291 : vector<8x1xf32>
    %293 = vector.broadcast %285 : vector<8x1xf32> to vector<8x32xf32>
    %294 = arith.subf %281, %293 : vector<8x32xf32>
    %cst_133 = arith.constant 9.99999974E-6 : f32
    %295 = vector.broadcast %cst_133 : f32 to vector<8x1xf32>
    %296 = arith.addf %292, %295 : vector<8x1xf32>
    %297 = math.rsqrt %296 : vector<8x1xf32>
    %298 = vector.broadcast %297 : vector<8x1xf32> to vector<8x32xf32>
    %299 = arith.mulf %294, %298 : vector<8x32xf32>
    %c0_134 = arith.constant 0 : index
    %c0_135 = arith.constant 0 : index
    %300 = vector.load %arg26[%c0_134, %c0_135] : memref<1x32xf32, #tpu.memory_space<vmem>>, vector<1x32xf32>
    %301 = vector.broadcast %300 : vector<1x32xf32> to vector<8x32xf32>
    %302 = arith.mulf %299, %301 : vector<8x32xf32>
    %c0_136 = arith.constant 0 : index
    %c0_137 = arith.constant 0 : index
    %303 = vector.load %arg27[%c0_136, %c0_137] : memref<1x32xf32, #tpu.memory_space<vmem>>, vector<1x32xf32>
    %304 = vector.broadcast %303 : vector<1x32xf32> to vector<8x32xf32>
    %305 = arith.addf %302, %304 : vector<8x32xf32>
    %306 = vector.shape_cast %305 : vector<8x32xf32> to vector<1x8x32xf32>
    %c0_138 = arith.constant 0 : index
    %c0_139 = arith.constant 0 : index
    %c0_140 = arith.constant 0 : index
    %307 = vector.load %arg28[%c0_138, %c0_139, %c0_140] : memref<1x8x32xf32, #tpu.memory_space<vmem>>, vector<1x8x32xf32>
    tpu.vector_store %arg28[%c0_138, %c0_139, %c0_140], %306 {strides = array<i32>} : memref<1x8x32xf32, #tpu.memory_space<vmem>>, vector<1x8x32xf32>,
    return
  }
  func.func @transform_0(%arg0: i32) -> (i32, i32, i32) {
    %c0_i32 = arith.constant 0 : i32
    %c0_i32_0 = arith.constant 0 : i32
    %c0_i32_1 = arith.constant 0 : i32
    return %arg0, %c0_i32, %c0_i32_0 : i32, i32, i32
  }
  func.func @transform_1(%arg0: i32) -> (i32, i32, i32) {
    %c0_i32 = arith.constant 0 : i32
    %c0_i32_0 = arith.constant 0 : i32
    %c0_i32_1 = arith.constant 0 : i32
    return %arg0, %c0_i32, %c0_i32_0 : i32, i32, i32
  }
  func.func @transform_2(%arg0: i32) -> (i32, i32, i32) {
    %c0_i32 = arith.constant 0 : i32
    %c0_i32_0 = arith.constant 0 : i32
    %c0_i32_1 = arith.constant 0 : i32
    return %arg0, %c0_i32, %c0_i32_0 : i32, i32, i32
  }
  func.func @transform_3(%arg0: i32) -> (i32, i32, i32) {
    %c0_i32 = arith.constant 0 : i32
    %c0_i32_0 = arith.constant 0 : i32
    %c0_i32_1 = arith.constant 0 : i32
    return %arg0, %c0_i32, %c0_i32_0 : i32, i32, i32
  }
  func.func @transform_4(%arg0: i32) -> (i32, i32, i32) {
    %c0_i32 = arith.constant 0 : i32
    %c0_i32_0 = arith.constant 0 : i32
    %c0_i32_1 = arith.constant 0 : i32
    return %arg0, %c0_i32, %c0_i32_0 : i32, i32, i32
  }
  func.func @transform_5(%arg0: i32) -> (i32, i32) {
    %c0_i32 = arith.constant 0 : i32
    %c0_i32_0 = arith.constant 0 : i32
    %c0_i32_1 = arith.constant 0 : i32
    return %c0_i32, %c0_i32_0 : i32, i32
  }
  func.func @transform_6(%arg0: i32) -> (i32, i32) {
    %c0_i32 = arith.constant 0 : i32
    %c0_i32_0 = arith.constant 0 : i32
    %c0_i32_1 = arith.constant 0 : i32
    return %c0_i32, %c0_i32_0 : i32, i32
  }
  func.func @transform_7(%arg0: i32) -> (i32, i32) {
    %c0_i32 = arith.constant 0 : i32
    %c0_i32_0 = arith.constant 0 : i32
    %c0_i32_1 = arith.constant 0 : i32
    return %c0_i32, %c0_i32_0 : i32, i32
  }
  func.func @transform_8(%arg0: i32) -> (i32, i32) {
    %c0_i32 = arith.constant 0 : i32
    %c0_i32_0 = arith.constant 0 : i32
    %c0_i32_1 = arith.constant 0 : i32
    return %c0_i32, %c0_i32_0 : i32, i32
  }
  func.func @transform_9(%arg0: i32) -> (i32, i32) {
    %c0_i32 = arith.constant 0 : i32
    %c0_i32_0 = arith.constant 0 : i32
    %c0_i32_1 = arith.constant 0 : i32
    return %c0_i32, %c0_i32_0 : i32, i32
  }
  func.func @transform_10(%arg0: i32) -> (i32, i32) {
    %c0_i32 = arith.constant 0 : i32
    %c0_i32_0 = arith.constant 0 : i32
    %c0_i32_1 = arith.constant 0 : i32
    return %c0_i32, %c0_i32_0 : i32, i32
  }
  func.func @transform_11(%arg0: i32) -> (i32, i32) {
    %c0_i32 = arith.constant 0 : i32
    %c0_i32_0 = arith.constant 0 : i32
    %c0_i32_1 = arith.constant 0 : i32
    return %c0_i32, %c0_i32_0 : i32, i32
  }
  func.func @transform_12(%arg0: i32) -> (i32, i32) {
    %c0_i32 = arith.constant 0 : i32
    %c0_i32_0 = arith.constant 0 : i32
    %c0_i32_1 = arith.constant 0 : i32
    return %c0_i32, %c0_i32_0 : i32, i32
  }
  func.func @transform_13(%arg0: i32) -> (i32, i32) {
    %c0_i32 = arith.constant 0 : i32
    %c0_i32_0 = arith.constant 0 : i32
    %c0_i32_1 = arith.constant 0 : i32
    return %c0_i32, %c0_i32_0 : i32, i32
  }
  func.func @transform_14(%arg0: i32) -> (i32, i32) {
    %c0_i32 = arith.constant 0 : i32
    %c0_i32_0 = arith.constant 0 : i32
    %c0_i32_1 = arith.constant 0 : i32
    return %c0_i32, %c0_i32_0 : i32, i32
  }
  func.func @transform_15(%arg0: i32) -> (i32, i32) {
    %c0_i32 = arith.constant 0 : i32
    %c0_i32_0 = arith.constant 0 : i32
    %c0_i32_1 = arith.constant 0 : i32
    return %c0_i32, %c0_i32_0 : i32, i32
  }
  func.func @transform_16(%arg0: i32) -> (i32, i32) {
    %c0_i32 = arith.constant 0 : i32
    %c0_i32_0 = arith.constant 0 : i32
    %c0_i32_1 = arith.constant 0 : i32
    return %c0_i32, %c0_i32_0 : i32, i32
  }
  func.func @transform_17(%arg0: i32) -> (i32, i32) {
    %c0_i32 = arith.constant 0 : i32
    %c0_i32_0 = arith.constant 0 : i32
    %c0_i32_1 = arith.constant 0 : i32
    return %c0_i32, %c0_i32_0 : i32, i32
  }
  func.func @transform_18(%arg0: i32) -> (i32, i32) {
    %c0_i32 = arith.constant 0 : i32
    %c0_i32_0 = arith.constant 0 : i32
    %c0_i32_1 = arith.constant 0 : i32
    return %c0_i32, %c0_i32_0 : i32, i32
  }
  func.func @transform_19(%arg0: i32) -> (i32, i32) {
    %c0_i32 = arith.constant 0 : i32
    %c0_i32_0 = arith.constant 0 : i32
    %c0_i32_1 = arith.constant 0 : i32
    return %c0_i32, %c0_i32_0 : i32, i32
  }
  func.func @transform_20(%arg0: i32) -> (i32, i32) {
    %c0_i32 = arith.constant 0 : i32
    %c0_i32_0 = arith.constant 0 : i32
    %c0_i32_1 = arith.constant 0 : i32
    return %c0_i32, %c0_i32_0 : i32, i32
  }
  func.func @transform_21(%arg0: i32) -> (i32, i32) {
    %c0_i32 = arith.constant 0 : i32
    %c0_i32_0 = arith.constant 0 : i32
    %c0_i32_1 = arith.constant 0 : i32
    return %c0_i32, %c0_i32_0 : i32, i32
  }
  func.func @transform_22(%arg0: i32) -> (i32, i32) {
    %c0_i32 = arith.constant 0 : i32
    %c0_i32_0 = arith.constant 0 : i32
    %c0_i32_1 = arith.constant 0 : i32
    return %c0_i32, %c0_i32_0 : i32, i32
  }
  func.func @transform_23(%arg0: i32) -> (i32, i32) {
    %c0_i32 = arith.constant 0 : i32
    %c0_i32_0 = arith.constant 0 : i32
    %c0_i32_1 = arith.constant 0 : i32
    return %c0_i32, %c0_i32_0 : i32, i32
  }
  func.func @transform_24(%arg0: i32) -> (i32, i32) {
    %c0_i32 = arith.constant 0 : i32
    %c0_i32_0 = arith.constant 0 : i32
    %c0_i32_1 = arith.constant 0 : i32
    return %c0_i32, %c0_i32_0 : i32, i32
  }
  func.func @transform_25(%arg0: i32) -> (i32, i32) {
    %c0_i32 = arith.constant 0 : i32
    %c0_i32_0 = arith.constant 0 : i32
    %c0_i32_1 = arith.constant 0 : i32
    return %c0_i32, %c0_i32_0 : i32, i32
  }
  func.func @transform_26(%arg0: i32) -> (i32, i32) {
    %c0_i32 = arith.constant 0 : i32
    %c0_i32_0 = arith.constant 0 : i32
    %c0_i32_1 = arith.constant 0 : i32
    return %c0_i32, %c0_i32_0 : i32, i32
  }
  func.func @transform_27(%arg0: i32) -> (i32, i32, i32) {
    %c0_i32 = arith.constant 0 : i32
    %c0_i32_0 = arith.constant 0 : i32
    %c0_i32_1 = arith.constant 0 : i32
    return %arg0, %c0_i32, %c0_i32_0 : i32, i32, i32
  }
}

module attributes {stable_mosaic.version = 11 : i64} {
  func.func @_decoder_block_kernel(%arg0: i32, %arg1: memref<1x8x32xf32, #tpu.memory_space<vmem>>, %arg2: memref<1x16x32xf32, #tpu.memory_space<vmem>>, %arg3: memref<1x16x32xf32, #tpu.memory_space<vmem>>, %arg4: memref<1x8x8xf32, #tpu.memory_space<vmem>>, %arg5: memref<1x8x16xf32, #tpu.memory_space<vmem>>, %arg6: memref<32x96xbf16, #tpu.memory_space<vmem>>, %arg7: memref<1x96xf32, #tpu.memory_space<vmem>>, %arg8: memref<32x32xbf16, #tpu.memory_space<vmem>>, %arg9: memref<1x32xf32, #tpu.memory_space<vmem>>, %arg10: memref<1x32xf32, #tpu.memory_space<vmem>>, %arg11: memref<1x32xf32, #tpu.memory_space<vmem>>, %arg12: memref<32x32xbf16, #tpu.memory_space<vmem>>, %arg13: memref<1x32xf32, #tpu.memory_space<vmem>>, %arg14: memref<32x32xbf16, #tpu.memory_space<vmem>>, %arg15: memref<1x32xf32, #tpu.memory_space<vmem>>, %arg16: memref<32x32xbf16, #tpu.memory_space<vmem>>, %arg17: memref<1x32xf32, #tpu.memory_space<vmem>>, %arg18: memref<32x32xbf16, #tpu.memory_space<vmem>>, %arg19: memref<1x32xf32, #tpu.memory_space<vmem>>, %arg20: memref<1x32xf32, #tpu.memory_space<vmem>>, %arg21: memref<1x32xf32, #tpu.memory_space<vmem>>, %arg22: memref<32x128xbf16, #tpu.memory_space<vmem>>, %arg23: memref<1x128xf32, #tpu.memory_space<vmem>>, %arg24: memref<128x32xbf16, #tpu.memory_space<vmem>>, %arg25: memref<1x32xf32, #tpu.memory_space<vmem>>, %arg26: memref<1x32xf32, #tpu.memory_space<vmem>>, %arg27: memref<1x32xf32, #tpu.memory_space<vmem>>, %arg28: memref<1x8x32xf32, #tpu.memory_space<vmem>>, %arg29: memref<8x32xf32, #tpu.memory_space<vmem>>) attributes {dimension_semantics = [#tpu.dimension_semantics<parallel>], iteration_bounds = array<i64: 2>, scalar_prefetch = 0 : i64, scratch_operands = 1 : i64, tpu.core_type = #tpu.core_type<tc>, window_params = [{transform_indices = @transform_0, window_bounds = array<i64: 1, 8, 32>}, {transform_indices = @transform_1, window_bounds = array<i64: 1, 16, 32>}, {transform_indices = @transform_2, window_bounds = array<i64: 1, 16, 32>}, {transform_indices = @transform_3, window_bounds = array<i64: 1, 8, 8>}, {transform_indices = @transform_4, window_bounds = array<i64: 1, 8, 16>}, {pipeline_mode = #tpu.pipeline_mode<synchronous>, transform_indices = @transform_5, window_bounds = array<i64: 32, 96>}, {pipeline_mode = #tpu.pipeline_mode<synchronous>, transform_indices = @transform_6, window_bounds = array<i64: 1, 96>}, {pipeline_mode = #tpu.pipeline_mode<synchronous>, transform_indices = @transform_7, window_bounds = array<i64: 32, 32>}, {pipeline_mode = #tpu.pipeline_mode<synchronous>, transform_indices = @transform_8, window_bounds = array<i64: 1, 32>}, {pipeline_mode = #tpu.pipeline_mode<synchronous>, transform_indices = @transform_9, window_bounds = array<i64: 1, 32>}, {pipeline_mode = #tpu.pipeline_mode<synchronous>, transform_indices = @transform_10, window_bounds = array<i64: 1, 32>}, {pipeline_mode = #tpu.pipeline_mode<synchronous>, transform_indices = @transform_11, window_bounds = array<i64: 32, 32>}, {pipeline_mode = #tpu.pipeline_mode<synchronous>, transform_indices = @transform_12, window_bounds = array<i64: 1, 32>}, {pipeline_mode = #tpu.pipeline_mode<synchronous>, transform_indices = @transform_13, window_bounds = array<i64: 32, 32>}, {pipeline_mode = #tpu.pipeline_mode<synchronous>, transform_indices = @transform_14, window_bounds = array<i64: 1, 32>}, {pipeline_mode = #tpu.pipeline_mode<synchronous>, transform_indices = @transform_15, window_bounds = array<i64: 32, 32>}, {pipeline_mode = #tpu.pipeline_mode<synchronous>, transform_indices = @transform_16, window_bounds = array<i64: 1, 32>}, {pipeline_mode = #tpu.pipeline_mode<synchronous>, transform_indices = @transform_17, window_bounds = array<i64: 32, 32>}, {pipeline_mode = #tpu.pipeline_mode<synchronous>, transform_indices = @transform_18, window_bounds = array<i64: 1, 32>}, {pipeline_mode = #tpu.pipeline_mode<synchronous>, transform_indices = @transform_19, window_bounds = array<i64: 1, 32>}, {pipeline_mode = #tpu.pipeline_mode<synchronous>, transform_indices = @transform_20, window_bounds = array<i64: 1, 32>}, {pipeline_mode = #tpu.pipeline_mode<synchronous>, transform_indices = @transform_21, window_bounds = array<i64: 32, 128>}, {pipeline_mode = #tpu.pipeline_mode<synchronous>, transform_indices = @transform_22, window_bounds = array<i64: 1, 128>}, {pipeline_mode = #tpu.pipeline_mode<synchronous>, transform_indices = @transform_23, window_bounds = array<i64: 128, 32>}, {pipeline_mode = #tpu.pipeline_mode<synchronous>, transform_indices = @transform_24, window_bounds = array<i64: 1, 32>}, {pipeline_mode = #tpu.pipeline_mode<synchronous>, transform_indices = @transform_25, window_bounds = array<i64: 1, 32>}, {pipeline_mode = #tpu.pipeline_mode<synchronous>, transform_indices = @transform_26, window_bounds = array<i64: 1, 32>}, {transform_indices = @transform_27, window_bounds = array<i64: 1, 8, 32>}]} {
    %c0 = arith.constant 0 : index
    %c0_0 = arith.constant 0 : index
    %c0_1 = arith.constant 0 : index
    %0 = vector.load %arg1[%c0, %c0_0, %c0_1] : memref<1x8x32xf32, #tpu.memory_space<vmem>>, vector<1x8x32xf32>
    %1 = vector.shape_cast %0 : vector<1x8x32xf32> to vector<8x32xf32>
    %c0_2 = arith.constant 0 : index
    %c0_3 = arith.constant 0 : index
    %c0_4 = arith.constant 0 : index
    %2 = vector.load %arg2[%c0_2, %c0_3, %c0_4] : memref<1x16x32xf32, #tpu.memory_space<vmem>>, vector<1x16x32xf32>
    %3 = vector.shape_cast %2 : vector<1x16x32xf32> to vector<16x32xf32>
    %c0_5 = arith.constant 0 : index
    %c0_6 = arith.constant 0 : index
    %c0_7 = arith.constant 0 : index
    %4 = vector.load %arg3[%c0_5, %c0_6, %c0_7] : memref<1x16x32xf32, #tpu.memory_space<vmem>>, vector<1x16x32xf32>
    %5 = vector.shape_cast %4 : vector<1x16x32xf32> to vector<16x32xf32>
    %6 = arith.truncf %1 : vector<8x32xf32> to vector<8x32xbf16>
    %c0_8 = arith.constant 0 : index
    %c0_9 = arith.constant 0 : index
    %7 = vector.load %arg6[%c0_8, %c0_9] : memref<32x96xbf16, #tpu.memory_space<vmem>>, vector<32x96xbf16>
    %cst = arith.constant dense<0.000000e+00> : vector<8x96xf32>
    %8 = tpu.matmul %6, %7, %cst {dimension_numbers = #tpu.dot_dimension_numbers<[1], [0], [0], [1], [0, 0, 1, 1], [], []>} : vector<8x32xbf16>, vector<32x96xbf16>, vector<8x96xf32> -> vector<8x96xf32>
    %c0_10 = arith.constant 0 : index
    %c0_11 = arith.constant 0 : index
    %9 = vector.load %arg7[%c0_10, %c0_11] : memref<1x96xf32, #tpu.memory_space<vmem>>, vector<1x96xf32>
    %10 = vector.broadcast %9 : vector<1x96xf32> to vector<8x96xf32>
    %11 = arith.addf %8, %10 : vector<8x96xf32>
    %12 = vector.extract_strided_slice %11 {offsets = [0, 0], sizes = [8, 32], strides = [1, 1]} : vector<8x96xf32> to vector<8x32xf32>
    %13 = vector.extract_strided_slice %11 {offsets = [0, 32], sizes = [8, 32], strides = [1, 1]} : vector<8x96xf32> to vector<8x32xf32>
    %14 = vector.extract_strided_slice %11 {offsets = [0, 64], sizes = [8, 32], strides = [1, 1]} : vector<8x96xf32> to vector<8x32xf32>
    %15 = arith.truncf %12 : vector<8x32xf32> to vector<8x32xbf16>
    %16 = arith.truncf %13 : vector<8x32xf32> to vector<8x32xbf16>
    %17 = arith.truncf %14 : vector<8x32xf32> to vector<8x32xbf16>
    %c0_12 = arith.constant 0 : index
    %c0_13 = arith.constant 0 : index
    %c0_14 = arith.constant 0 : index
    %18 = vector.load %arg4[%c0_12, %c0_13, %c0_14] : memref<1x8x8xf32, #tpu.memory_space<vmem>>, vector<1x8x8xf32>
    %19 = vector.shape_cast %18 : vector<1x8x8xf32> to vector<8x8xf32>
    %20 = vector.extract_strided_slice %15 {offsets = [0, 0], sizes = [8, 8], strides = [1, 1]} : vector<8x32xbf16> to vector<8x8xbf16>
    %21 = vector.extract_strided_slice %16 {offsets = [0, 0], sizes = [8, 8], strides = [1, 1]} : vector<8x32xbf16> to vector<8x8xbf16>
    %22 = vector.extract_strided_slice %17 {offsets = [0, 0], sizes = [8, 8], strides = [1, 1]} : vector<8x32xbf16> to vector<8x8xbf16>
    %cst_15 = arith.constant dense<0.000000e+00> : vector<8x8xf32>
    %23 = tpu.matmul %20, %21, %cst_15 {dimension_numbers = #tpu.dot_dimension_numbers<[1], [1], [0], [0], [0, 0, 1, 0], [], []>} : vector<8x8xbf16>, vector<8x8xbf16>, vector<8x8xf32> -> vector<8x8xf32>
    %cst_16 = arith.constant 0.176776692 : f32
    %24 = vector.broadcast %cst_16 : f32 to vector<8x8xf32>
    %25 = arith.mulf %23, %24 : vector<8x8xf32>
    %26 = arith.addf %25, %19 : vector<8x8xf32>
    %cst_17 = arith.constant dense<0xFF800000> : vector<8xf32>
    %27 = vector.multi_reduction <maximumf>, %26, %cst_17 [1] : vector<8x8xf32> to vector<8xf32>
    %28 = vector.shape_cast %27 : vector<8xf32> to vector<8x1xf32>
    %29 = vector.broadcast %28 : vector<8x1xf32> to vector<8x8xf32>
    %30 = arith.subf %26, %29 : vector<8x8xf32>
    %31 = math.exp %30 : vector<8x8xf32>
    %cst_18 = arith.constant dense<0.000000e+00> : vector<8xf32>
    %32 = vector.multi_reduction <add>, %31, %cst_18 [1] : vector<8x8xf32> to vector<8xf32>
    %33 = vector.shape_cast %32 : vector<8xf32> to vector<8x1xf32>
    %34 = tpu.reciprocal %33 {approx = true} : vector<8x1xf32> -> vector<8x1xf32>
    %35 = vector.broadcast %34 : vector<8x1xf32> to vector<8x8xf32>
    %36 = arith.mulf %31, %35 : vector<8x8xf32>
    %37 = arith.truncf %36 : vector<8x8xf32> to vector<8x8xbf16>
    %cst_19 = arith.constant dense<0.000000e+00> : vector<8x8xf32>
    %38 = tpu.matmul %37, %22, %cst_19 {dimension_numbers = #tpu.dot_dimension_numbers<[1], [0], [0], [1], [0, 0, 1, 1], [], []>} : vector<8x8xbf16>, vector<8x8xbf16>, vector<8x8xf32> -> vector<8x8xf32>
    %c0_20 = arith.constant 0 : index
    %c0_21 = arith.constant 0 : index
    %39 = vector.load %arg29[%c0_20, %c0_21] : memref<8x32xf32, #tpu.memory_space<vmem>>, vector<8x8xf32>
    tpu.vector_store %arg29[%c0_20, %c0_21], %38 {strides = array<i32>} : memref<8x32xf32, #tpu.memory_space<vmem>>, vector<8x8xf32>,
    %40 = vector.extract_strided_slice %15 {offsets = [0, 8], sizes = [8, 8], strides = [1, 1]} : vector<8x32xbf16> to vector<8x8xbf16>
    %41 = vector.extract_strided_slice %16 {offsets = [0, 8], sizes = [8, 8], strides = [1, 1]} : vector<8x32xbf16> to vector<8x8xbf16>
    %42 = vector.extract_strided_slice %17 {offsets = [0, 8], sizes = [8, 8], strides = [1, 1]} : vector<8x32xbf16> to vector<8x8xbf16>
    %cst_22 = arith.constant dense<0.000000e+00> : vector<8x8xf32>
    %43 = tpu.matmul %40, %41, %cst_22 {dimension_numbers = #tpu.dot_dimension_numbers<[1], [1], [0], [0], [0, 0, 1, 0], [], []>} : vector<8x8xbf16>, vector<8x8xbf16>, vector<8x8xf32> -> vector<8x8xf32>
    %cst_23 = arith.constant 0.176776692 : f32
    %44 = vector.broadcast %cst_23 : f32 to vector<8x8xf32>
    %45 = arith.mulf %43, %44 : vector<8x8xf32>
    %46 = arith.addf %45, %19 : vector<8x8xf32>
    %cst_24 = arith.constant dense<0xFF800000> : vector<8xf32>
    %47 = vector.multi_reduction <maximumf>, %46, %cst_24 [1] : vector<8x8xf32> to vector<8xf32>
    %48 = vector.shape_cast %47 : vector<8xf32> to vector<8x1xf32>
    %49 = vector.broadcast %48 : vector<8x1xf32> to vector<8x8xf32>
    %50 = arith.subf %46, %49 : vector<8x8xf32>
    %51 = math.exp %50 : vector<8x8xf32>
    %cst_25 = arith.constant dense<0.000000e+00> : vector<8xf32>
    %52 = vector.multi_reduction <add>, %51, %cst_25 [1] : vector<8x8xf32> to vector<8xf32>
    %53 = vector.shape_cast %52 : vector<8xf32> to vector<8x1xf32>
    %54 = tpu.reciprocal %53 {approx = true} : vector<8x1xf32> -> vector<8x1xf32>
    %55 = vector.broadcast %54 : vector<8x1xf32> to vector<8x8xf32>
    %56 = arith.mulf %51, %55 : vector<8x8xf32>
    %57 = arith.truncf %56 : vector<8x8xf32> to vector<8x8xbf16>
    %cst_26 = arith.constant dense<0.000000e+00> : vector<8x8xf32>
    %58 = tpu.matmul %57, %42, %cst_26 {dimension_numbers = #tpu.dot_dimension_numbers<[1], [0], [0], [1], [0, 0, 1, 1], [], []>} : vector<8x8xbf16>, vector<8x8xbf16>, vector<8x8xf32> -> vector<8x8xf32>
    %c0_27 = arith.constant 0 : index
    %c8 = arith.constant 8 : index
    %59 = vector.load %arg29[%c0_27, %c8] : memref<8x32xf32, #tpu.memory_space<vmem>>, vector<8x8xf32>
    tpu.vector_store %arg29[%c0_27, %c8], %58 {strides = array<i32>} : memref<8x32xf32, #tpu.memory_space<vmem>>, vector<8x8xf32>,
    %60 = vector.extract_strided_slice %15 {offsets = [0, 16], sizes = [8, 8], strides = [1, 1]} : vector<8x32xbf16> to vector<8x8xbf16>
    %61 = vector.extract_strided_slice %16 {offsets = [0, 16], sizes = [8, 8], strides = [1, 1]} : vector<8x32xbf16> to vector<8x8xbf16>
    %62 = vector.extract_strided_slice %17 {offsets = [0, 16], sizes = [8, 8], strides = [1, 1]} : vector<8x32xbf16> to vector<8x8xbf16>
    %cst_28 = arith.constant dense<0.000000e+00> : vector<8x8xf32>
    %63 = tpu.matmul %60, %61, %cst_28 {dimension_numbers = #tpu.dot_dimension_numbers<[1], [1], [0], [0], [0, 0, 1, 0], [], []>} : vector<8x8xbf16>, vector<8x8xbf16>, vector<8x8xf32> -> vector<8x8xf32>
    %cst_29 = arith.constant 0.176776692 : f32
    %64 = vector.broadcast %cst_29 : f32 to vector<8x8xf32>
    %65 = arith.mulf %63, %64 : vector<8x8xf32>
    %66 = arith.addf %65, %19 : vector<8x8xf32>
    %cst_30 = arith.constant dense<0xFF800000> : vector<8xf32>
    %67 = vector.multi_reduction <maximumf>, %66, %cst_30 [1] : vector<8x8xf32> to vector<8xf32>
    %68 = vector.shape_cast %67 : vector<8xf32> to vector<8x1xf32>
    %69 = vector.broadcast %68 : vector<8x1xf32> to vector<8x8xf32>
    %70 = arith.subf %66, %69 : vector<8x8xf32>
    %71 = math.exp %70 : vector<8x8xf32>
    %cst_31 = arith.constant dense<0.000000e+00> : vector<8xf32>
    %72 = vector.multi_reduction <add>, %71, %cst_31 [1] : vector<8x8xf32> to vector<8xf32>
    %73 = vector.shape_cast %72 : vector<8xf32> to vector<8x1xf32>
    %74 = tpu.reciprocal %73 {approx = true} : vector<8x1xf32> -> vector<8x1xf32>
    %75 = vector.broadcast %74 : vector<8x1xf32> to vector<8x8xf32>
    %76 = arith.mulf %71, %75 : vector<8x8xf32>
    %77 = arith.truncf %76 : vector<8x8xf32> to vector<8x8xbf16>
    %cst_32 = arith.constant dense<0.000000e+00> : vector<8x8xf32>
    %78 = tpu.matmul %77, %62, %cst_32 {dimension_numbers = #tpu.dot_dimension_numbers<[1], [0], [0], [1], [0, 0, 1, 1], [], []>} : vector<8x8xbf16>, vector<8x8xbf16>, vector<8x8xf32> -> vector<8x8xf32>
    %c0_33 = arith.constant 0 : index
    %c16 = arith.constant 16 : index
    %79 = vector.load %arg29[%c0_33, %c16] : memref<8x32xf32, #tpu.memory_space<vmem>>, vector<8x8xf32>
    tpu.vector_store %arg29[%c0_33, %c16], %78 {strides = array<i32>} : memref<8x32xf32, #tpu.memory_space<vmem>>, vector<8x8xf32>,
    %80 = vector.extract_strided_slice %15 {offsets = [0, 24], sizes = [8, 8], strides = [1, 1]} : vector<8x32xbf16> to vector<8x8xbf16>
    %81 = vector.extract_strided_slice %16 {offsets = [0, 24], sizes = [8, 8], strides = [1, 1]} : vector<8x32xbf16> to vector<8x8xbf16>
    %82 = vector.extract_strided_slice %17 {offsets = [0, 24], sizes = [8, 8], strides = [1, 1]} : vector<8x32xbf16> to vector<8x8xbf16>
    %cst_34 = arith.constant dense<0.000000e+00> : vector<8x8xf32>
    %83 = tpu.matmul %80, %81, %cst_34 {dimension_numbers = #tpu.dot_dimension_numbers<[1], [1], [0], [0], [0, 0, 1, 0], [], []>} : vector<8x8xbf16>, vector<8x8xbf16>, vector<8x8xf32> -> vector<8x8xf32>
    %cst_35 = arith.constant 0.176776692 : f32
    %84 = vector.broadcast %cst_35 : f32 to vector<8x8xf32>
    %85 = arith.mulf %83, %84 : vector<8x8xf32>
    %86 = arith.addf %85, %19 : vector<8x8xf32>
    %cst_36 = arith.constant dense<0xFF800000> : vector<8xf32>
    %87 = vector.multi_reduction <maximumf>, %86, %cst_36 [1] : vector<8x8xf32> to vector<8xf32>
    %88 = vector.shape_cast %87 : vector<8xf32> to vector<8x1xf32>
    %89 = vector.broadcast %88 : vector<8x1xf32> to vector<8x8xf32>
    %90 = arith.subf %86, %89 : vector<8x8xf32>
    %91 = math.exp %90 : vector<8x8xf32>
    %cst_37 = arith.constant dense<0.000000e+00> : vector<8xf32>
    %92 = vector.multi_reduction <add>, %91, %cst_37 [1] : vector<8x8xf32> to vector<8xf32>
    %93 = vector.shape_cast %92 : vector<8xf32> to vector<8x1xf32>
    %94 = tpu.reciprocal %93 {approx = true} : vector<8x1xf32> -> vector<8x1xf32>
    %95 = vector.broadcast %94 : vector<8x1xf32> to vector<8x8xf32>
    %96 = arith.mulf %91, %95 : vector<8x8xf32>
    %97 = arith.truncf %96 : vector<8x8xf32> to vector<8x8xbf16>
    %cst_38 = arith.constant dense<0.000000e+00> : vector<8x8xf32>
    %98 = tpu.matmul %97, %82, %cst_38 {dimension_numbers = #tpu.dot_dimension_numbers<[1], [0], [0], [1], [0, 0, 1, 1], [], []>} : vector<8x8xbf16>, vector<8x8xbf16>, vector<8x8xf32> -> vector<8x8xf32>
    %c0_39 = arith.constant 0 : index
    %c24 = arith.constant 24 : index
    %99 = vector.load %arg29[%c0_39, %c24] : memref<8x32xf32, #tpu.memory_space<vmem>>, vector<8x8xf32>
    tpu.vector_store %arg29[%c0_39, %c24], %98 {strides = array<i32>} : memref<8x32xf32, #tpu.memory_space<vmem>>, vector<8x8xf32>,
    %c0_40 = arith.constant 0 : index
    %c0_41 = arith.constant 0 : index
    %100 = vector.load %arg29[%c0_40, %c0_41] : memref<8x32xf32, #tpu.memory_space<vmem>>, vector<8x32xf32>
    %101 = arith.truncf %100 : vector<8x32xf32> to vector<8x32xbf16>
    %c0_42 = arith.constant 0 : index
    %c0_43 = arith.constant 0 : index
    %102 = vector.load %arg8[%c0_42, %c0_43] : memref<32x32xbf16, #tpu.memory_space<vmem>>, vector<32x32xbf16>
    %cst_44 = arith.constant dense<0.000000e+00> : vector<8x32xf32>
    %103 = tpu.matmul %101, %102, %cst_44 {dimension_numbers = #tpu.dot_dimension_numbers<[1], [0], [0], [1], [0, 0, 1, 1], [], []>} : vector<8x32xbf16>, vector<32x32xbf16>, vector<8x32xf32> -> vector<8x32xf32>
    %c0_45 = arith.constant 0 : index
    %c0_46 = arith.constant 0 : index
    %104 = vector.load %arg9[%c0_45, %c0_46] : memref<1x32xf32, #tpu.memory_space<vmem>>, vector<1x32xf32>
    %105 = vector.broadcast %104 : vector<1x32xf32> to vector<8x32xf32>
    %106 = arith.addf %103, %105 : vector<8x32xf32>
    %107 = arith.addf %106, %1 : vector<8x32xf32>
    %cst_47 = arith.constant dense<0.000000e+00> : vector<8xf32>
    %108 = vector.multi_reduction <add>, %107, %cst_47 [1] : vector<8x32xf32> to vector<8xf32>
    %109 = vector.shape_cast %108 : vector<8xf32> to vector<8x1xf32>
    %cst_48 = arith.constant 3.200000e+01 : f32
    %110 = vector.broadcast %cst_48 : f32 to vector<8x1xf32>
    %111 = arith.divf %109, %110 : vector<8x1xf32>
    %112 = vector.broadcast %111 : vector<8x1xf32> to vector<8x32xf32>
    %113 = arith.subf %107, %112 : vector<8x32xf32>
    %114 = arith.mulf %113, %113 : vector<8x32xf32>
    %cst_49 = arith.constant dense<0.000000e+00> : vector<8xf32>
    %115 = vector.multi_reduction <add>, %114, %cst_49 [1] : vector<8x32xf32> to vector<8xf32>
    %116 = vector.shape_cast %115 : vector<8xf32> to vector<8x1xf32>
    %cst_50 = arith.constant 3.200000e+01 : f32
    %117 = vector.broadcast %cst_50 : f32 to vector<8x1xf32>
    %118 = arith.divf %116, %117 : vector<8x1xf32>
    %119 = vector.broadcast %111 : vector<8x1xf32> to vector<8x32xf32>
    %120 = arith.subf %107, %119 : vector<8x32xf32>
    %cst_51 = arith.constant 9.99999974E-6 : f32
    %121 = vector.broadcast %cst_51 : f32 to vector<8x1xf32>
    %122 = arith.addf %118, %121 : vector<8x1xf32>
    %123 = math.rsqrt %122 : vector<8x1xf32>
    %124 = vector.broadcast %123 : vector<8x1xf32> to vector<8x32xf32>
    %125 = arith.mulf %120, %124 : vector<8x32xf32>
    %c0_52 = arith.constant 0 : index
    %c0_53 = arith.constant 0 : index
    %126 = vector.load %arg10[%c0_52, %c0_53] : memref<1x32xf32, #tpu.memory_space<vmem>>, vector<1x32xf32>
    %127 = vector.broadcast %126 : vector<1x32xf32> to vector<8x32xf32>
    %128 = arith.mulf %125, %127 : vector<8x32xf32>
    %c0_54 = arith.constant 0 : index
    %c0_55 = arith.constant 0 : index
    %129 = vector.load %arg11[%c0_54, %c0_55] : memref<1x32xf32, #tpu.memory_space<vmem>>, vector<1x32xf32>
    %130 = vector.broadcast %129 : vector<1x32xf32> to vector<8x32xf32>
    %131 = arith.addf %128, %130 : vector<8x32xf32>
    %132 = arith.truncf %131 : vector<8x32xf32> to vector<8x32xbf16>
    %c0_56 = arith.constant 0 : index
    %c0_57 = arith.constant 0 : index
    %133 = vector.load %arg12[%c0_56, %c0_57] : memref<32x32xbf16, #tpu.memory_space<vmem>>, vector<32x32xbf16>
    %cst_58 = arith.constant dense<0.000000e+00> : vector<8x32xf32>
    %134 = tpu.matmul %132, %133, %cst_58 {dimension_numbers = #tpu.dot_dimension_numbers<[1], [0], [0], [1], [0, 0, 1, 1], [], []>} : vector<8x32xbf16>, vector<32x32xbf16>, vector<8x32xf32> -> vector<8x32xf32>
    %c0_59 = arith.constant 0 : index
    %c0_60 = arith.constant 0 : index
    %135 = vector.load %arg13[%c0_59, %c0_60] : memref<1x32xf32, #tpu.memory_space<vmem>>, vector<1x32xf32>
    %136 = vector.broadcast %135 : vector<1x32xf32> to vector<8x32xf32>
    %137 = arith.addf %134, %136 : vector<8x32xf32>
    %138 = arith.truncf %3 : vector<16x32xf32> to vector<16x32xbf16>
    %c0_61 = arith.constant 0 : index
    %c0_62 = arith.constant 0 : index
    %139 = vector.load %arg14[%c0_61, %c0_62] : memref<32x32xbf16, #tpu.memory_space<vmem>>, vector<32x32xbf16>
    %cst_63 = arith.constant dense<0.000000e+00> : vector<16x32xf32>
    %140 = tpu.matmul %138, %139, %cst_63 {dimension_numbers = #tpu.dot_dimension_numbers<[1], [0], [0], [1], [0, 0, 1, 1], [], []>} : vector<16x32xbf16>, vector<32x32xbf16>, vector<16x32xf32> -> vector<16x32xf32>
    %c0_64 = arith.constant 0 : index
    %c0_65 = arith.constant 0 : index
    %141 = vector.load %arg15[%c0_64, %c0_65] : memref<1x32xf32, #tpu.memory_space<vmem>>, vector<1x32xf32>
    %142 = vector.broadcast %141 : vector<1x32xf32> to vector<16x32xf32>
    %143 = arith.addf %140, %142 : vector<16x32xf32>
    %144 = arith.truncf %5 : vector<16x32xf32> to vector<16x32xbf16>
    %c0_66 = arith.constant 0 : index
    %c0_67 = arith.constant 0 : index
    %145 = vector.load %arg16[%c0_66, %c0_67] : memref<32x32xbf16, #tpu.memory_space<vmem>>, vector<32x32xbf16>
    %cst_68 = arith.constant dense<0.000000e+00> : vector<16x32xf32>
    %146 = tpu.matmul %144, %145, %cst_68 {dimension_numbers = #tpu.dot_dimension_numbers<[1], [0], [0], [1], [0, 0, 1, 1], [], []>} : vector<16x32xbf16>, vector<32x32xbf16>, vector<16x32xf32> -> vector<16x32xf32>
    %c0_69 = arith.constant 0 : index
    %c0_70 = arith.constant 0 : index
    %147 = vector.load %arg17[%c0_69, %c0_70] : memref<1x32xf32, #tpu.memory_space<vmem>>, vector<1x32xf32>
    %148 = vector.broadcast %147 : vector<1x32xf32> to vector<16x32xf32>
    %149 = arith.addf %146, %148 : vector<16x32xf32>
    %150 = arith.truncf %137 : vector<8x32xf32> to vector<8x32xbf16>
    %151 = arith.truncf %143 : vector<16x32xf32> to vector<16x32xbf16>
    %152 = arith.truncf %149 : vector<16x32xf32> to vector<16x32xbf16>
    %c0_71 = arith.constant 0 : index
    %c0_72 = arith.constant 0 : index
    %c0_73 = arith.constant 0 : index
    %153 = vector.load %arg5[%c0_71, %c0_72, %c0_73] : memref<1x8x16xf32, #tpu.memory_space<vmem>>, vector<1x8x16xf32>
    %154 = vector.shape_cast %153 : vector<1x8x16xf32> to vector<8x16xf32>
    %155 = vector.extract_strided_slice %150 {offsets = [0, 0], sizes = [8, 8], strides = [1, 1]} : vector<8x32xbf16> to vector<8x8xbf16>
    %156 = vector.extract_strided_slice %151 {offsets = [0, 0], sizes = [16, 8], strides = [1, 1]} : vector<16x32xbf16> to vector<16x8xbf16>
    %157 = vector.extract_strided_slice %152 {offsets = [0, 0], sizes = [16, 8], strides = [1, 1]} : vector<16x32xbf16> to vector<16x8xbf16>
    %cst_74 = arith.constant dense<0.000000e+00> : vector<8x16xf32>
    %158 = tpu.matmul %155, %156, %cst_74 {dimension_numbers = #tpu.dot_dimension_numbers<[1], [1], [0], [0], [0, 0, 1, 0], [], []>} : vector<8x8xbf16>, vector<16x8xbf16>, vector<8x16xf32> -> vector<8x16xf32>
    %cst_75 = arith.constant 0.176776692 : f32
    %159 = vector.broadcast %cst_75 : f32 to vector<8x16xf32>
    %160 = arith.mulf %158, %159 : vector<8x16xf32>
    %161 = arith.addf %160, %154 : vector<8x16xf32>
    %cst_76 = arith.constant dense<0xFF800000> : vector<8xf32>
    %162 = vector.multi_reduction <maximumf>, %161, %cst_76 [1] : vector<8x16xf32> to vector<8xf32>
    %163 = vector.shape_cast %162 : vector<8xf32> to vector<8x1xf32>
    %164 = vector.broadcast %163 : vector<8x1xf32> to vector<8x16xf32>
    %165 = arith.subf %161, %164 : vector<8x16xf32>
    %166 = math.exp %165 : vector<8x16xf32>
    %cst_77 = arith.constant dense<0.000000e+00> : vector<8xf32>
    %167 = vector.multi_reduction <add>, %166, %cst_77 [1] : vector<8x16xf32> to vector<8xf32>
    %168 = vector.shape_cast %167 : vector<8xf32> to vector<8x1xf32>
    %169 = tpu.reciprocal %168 {approx = true} : vector<8x1xf32> -> vector<8x1xf32>
    %170 = vector.broadcast %169 : vector<8x1xf32> to vector<8x16xf32>
    %171 = arith.mulf %166, %170 : vector<8x16xf32>
    %172 = arith.truncf %171 : vector<8x16xf32> to vector<8x16xbf16>
    %cst_78 = arith.constant dense<0.000000e+00> : vector<8x8xf32>
    %173 = tpu.matmul %172, %157, %cst_78 {dimension_numbers = #tpu.dot_dimension_numbers<[1], [0], [0], [1], [0, 0, 1, 1], [], []>} : vector<8x16xbf16>, vector<16x8xbf16>, vector<8x8xf32> -> vector<8x8xf32>
    %c0_79 = arith.constant 0 : index
    %c0_80 = arith.constant 0 : index
    %174 = vector.load %arg29[%c0_79, %c0_80] : memref<8x32xf32, #tpu.memory_space<vmem>>, vector<8x8xf32>
    tpu.vector_store %arg29[%c0_79, %c0_80], %173 {strides = array<i32>} : memref<8x32xf32, #tpu.memory_space<vmem>>, vector<8x8xf32>,
    %175 = vector.extract_strided_slice %150 {offsets = [0, 8], sizes = [8, 8], strides = [1, 1]} : vector<8x32xbf16> to vector<8x8xbf16>
    %176 = vector.extract_strided_slice %151 {offsets = [0, 8], sizes = [16, 8], strides = [1, 1]} : vector<16x32xbf16> to vector<16x8xbf16>
    %177 = vector.extract_strided_slice %152 {offsets = [0, 8], sizes = [16, 8], strides = [1, 1]} : vector<16x32xbf16> to vector<16x8xbf16>
    %cst_81 = arith.constant dense<0.000000e+00> : vector<8x16xf32>
    %178 = tpu.matmul %175, %176, %cst_81 {dimension_numbers = #tpu.dot_dimension_numbers<[1], [1], [0], [0], [0, 0, 1, 0], [], []>} : vector<8x8xbf16>, vector<16x8xbf16>, vector<8x16xf32> -> vector<8x16xf32>
    %cst_82 = arith.constant 0.176776692 : f32
    %179 = vector.broadcast %cst_82 : f32 to vector<8x16xf32>
    %180 = arith.mulf %178, %179 : vector<8x16xf32>
    %181 = arith.addf %180, %154 : vector<8x16xf32>
    %cst_83 = arith.constant dense<0xFF800000> : vector<8xf32>
    %182 = vector.multi_reduction <maximumf>, %181, %cst_83 [1] : vector<8x16xf32> to vector<8xf32>
    %183 = vector.shape_cast %182 : vector<8xf32> to vector<8x1xf32>
    %184 = vector.broadcast %183 : vector<8x1xf32> to vector<8x16xf32>
    %185 = arith.subf %181, %184 : vector<8x16xf32>
    %186 = math.exp %185 : vector<8x16xf32>
    %cst_84 = arith.constant dense<0.000000e+00> : vector<8xf32>
    %187 = vector.multi_reduction <add>, %186, %cst_84 [1] : vector<8x16xf32> to vector<8xf32>
    %188 = vector.shape_cast %187 : vector<8xf32> to vector<8x1xf32>
    %189 = tpu.reciprocal %188 {approx = true} : vector<8x1xf32> -> vector<8x1xf32>
    %190 = vector.broadcast %189 : vector<8x1xf32> to vector<8x16xf32>
    %191 = arith.mulf %186, %190 : vector<8x16xf32>
    %192 = arith.truncf %191 : vector<8x16xf32> to vector<8x16xbf16>
    %cst_85 = arith.constant dense<0.000000e+00> : vector<8x8xf32>
    %193 = tpu.matmul %192, %177, %cst_85 {dimension_numbers = #tpu.dot_dimension_numbers<[1], [0], [0], [1], [0, 0, 1, 1], [], []>} : vector<8x16xbf16>, vector<16x8xbf16>, vector<8x8xf32> -> vector<8x8xf32>
    %c0_86 = arith.constant 0 : index
    %c8_87 = arith.constant 8 : index
    %194 = vector.load %arg29[%c0_86, %c8_87] : memref<8x32xf32, #tpu.memory_space<vmem>>, vector<8x8xf32>
    tpu.vector_store %arg29[%c0_86, %c8_87], %193 {strides = array<i32>} : memref<8x32xf32, #tpu.memory_space<vmem>>, vector<8x8xf32>,
    %195 = vector.extract_strided_slice %150 {offsets = [0, 16], sizes = [8, 8], strides = [1, 1]} : vector<8x32xbf16> to vector<8x8xbf16>
    %196 = vector.extract_strided_slice %151 {offsets = [0, 16], sizes = [16, 8], strides = [1, 1]} : vector<16x32xbf16> to vector<16x8xbf16>
    %197 = vector.extract_strided_slice %152 {offsets = [0, 16], sizes = [16, 8], strides = [1, 1]} : vector<16x32xbf16> to vector<16x8xbf16>
    %cst_88 = arith.constant dense<0.000000e+00> : vector<8x16xf32>
    %198 = tpu.matmul %195, %196, %cst_88 {dimension_numbers = #tpu.dot_dimension_numbers<[1], [1], [0], [0], [0, 0, 1, 0], [], []>} : vector<8x8xbf16>, vector<16x8xbf16>, vector<8x16xf32> -> vector<8x16xf32>
    %cst_89 = arith.constant 0.176776692 : f32
    %199 = vector.broadcast %cst_89 : f32 to vector<8x16xf32>
    %200 = arith.mulf %198, %199 : vector<8x16xf32>
    %201 = arith.addf %200, %154 : vector<8x16xf32>
    %cst_90 = arith.constant dense<0xFF800000> : vector<8xf32>
    %202 = vector.multi_reduction <maximumf>, %201, %cst_90 [1] : vector<8x16xf32> to vector<8xf32>
    %203 = vector.shape_cast %202 : vector<8xf32> to vector<8x1xf32>
    %204 = vector.broadcast %203 : vector<8x1xf32> to vector<8x16xf32>
    %205 = arith.subf %201, %204 : vector<8x16xf32>
    %206 = math.exp %205 : vector<8x16xf32>
    %cst_91 = arith.constant dense<0.000000e+00> : vector<8xf32>
    %207 = vector.multi_reduction <add>, %206, %cst_91 [1] : vector<8x16xf32> to vector<8xf32>
    %208 = vector.shape_cast %207 : vector<8xf32> to vector<8x1xf32>
    %209 = tpu.reciprocal %208 {approx = true} : vector<8x1xf32> -> vector<8x1xf32>
    %210 = vector.broadcast %209 : vector<8x1xf32> to vector<8x16xf32>
    %211 = arith.mulf %206, %210 : vector<8x16xf32>
    %212 = arith.truncf %211 : vector<8x16xf32> to vector<8x16xbf16>
    %cst_92 = arith.constant dense<0.000000e+00> : vector<8x8xf32>
    %213 = tpu.matmul %212, %197, %cst_92 {dimension_numbers = #tpu.dot_dimension_numbers<[1], [0], [0], [1], [0, 0, 1, 1], [], []>} : vector<8x16xbf16>, vector<16x8xbf16>, vector<8x8xf32> -> vector<8x8xf32>
    %c0_93 = arith.constant 0 : index
    %c16_94 = arith.constant 16 : index
    %214 = vector.load %arg29[%c0_93, %c16_94] : memref<8x32xf32, #tpu.memory_space<vmem>>, vector<8x8xf32>
    tpu.vector_store %arg29[%c0_93, %c16_94], %213 {strides = array<i32>} : memref<8x32xf32, #tpu.memory_space<vmem>>, vector<8x8xf32>,
    %215 = vector.extract_strided_slice %150 {offsets = [0, 24], sizes = [8, 8], strides = [1, 1]} : vector<8x32xbf16> to vector<8x8xbf16>
    %216 = vector.extract_strided_slice %151 {offsets = [0, 24], sizes = [16, 8], strides = [1, 1]} : vector<16x32xbf16> to vector<16x8xbf16>
    %217 = vector.extract_strided_slice %152 {offsets = [0, 24], sizes = [16, 8], strides = [1, 1]} : vector<16x32xbf16> to vector<16x8xbf16>
    %cst_95 = arith.constant dense<0.000000e+00> : vector<8x16xf32>
    %218 = tpu.matmul %215, %216, %cst_95 {dimension_numbers = #tpu.dot_dimension_numbers<[1], [1], [0], [0], [0, 0, 1, 0], [], []>} : vector<8x8xbf16>, vector<16x8xbf16>, vector<8x16xf32> -> vector<8x16xf32>
    %cst_96 = arith.constant 0.176776692 : f32
    %219 = vector.broadcast %cst_96 : f32 to vector<8x16xf32>
    %220 = arith.mulf %218, %219 : vector<8x16xf32>
    %221 = arith.addf %220, %154 : vector<8x16xf32>
    %cst_97 = arith.constant dense<0xFF800000> : vector<8xf32>
    %222 = vector.multi_reduction <maximumf>, %221, %cst_97 [1] : vector<8x16xf32> to vector<8xf32>
    %223 = vector.shape_cast %222 : vector<8xf32> to vector<8x1xf32>
    %224 = vector.broadcast %223 : vector<8x1xf32> to vector<8x16xf32>
    %225 = arith.subf %221, %224 : vector<8x16xf32>
    %226 = math.exp %225 : vector<8x16xf32>
    %cst_98 = arith.constant dense<0.000000e+00> : vector<8xf32>
    %227 = vector.multi_reduction <add>, %226, %cst_98 [1] : vector<8x16xf32> to vector<8xf32>
    %228 = vector.shape_cast %227 : vector<8xf32> to vector<8x1xf32>
    %229 = tpu.reciprocal %228 {approx = true} : vector<8x1xf32> -> vector<8x1xf32>
    %230 = vector.broadcast %229 : vector<8x1xf32> to vector<8x16xf32>
    %231 = arith.mulf %226, %230 : vector<8x16xf32>
    %232 = arith.truncf %231 : vector<8x16xf32> to vector<8x16xbf16>
    %cst_99 = arith.constant dense<0.000000e+00> : vector<8x8xf32>
    %233 = tpu.matmul %232, %217, %cst_99 {dimension_numbers = #tpu.dot_dimension_numbers<[1], [0], [0], [1], [0, 0, 1, 1], [], []>} : vector<8x16xbf16>, vector<16x8xbf16>, vector<8x8xf32> -> vector<8x8xf32>
    %c0_100 = arith.constant 0 : index
    %c24_101 = arith.constant 24 : index
    %234 = vector.load %arg29[%c0_100, %c24_101] : memref<8x32xf32, #tpu.memory_space<vmem>>, vector<8x8xf32>
    tpu.vector_store %arg29[%c0_100, %c24_101], %233 {strides = array<i32>} : memref<8x32xf32, #tpu.memory_space<vmem>>, vector<8x8xf32>,
    %c0_102 = arith.constant 0 : index
    %c0_103 = arith.constant 0 : index
    %235 = vector.load %arg29[%c0_102, %c0_103] : memref<8x32xf32, #tpu.memory_space<vmem>>, vector<8x32xf32>
    %236 = arith.truncf %235 : vector<8x32xf32> to vector<8x32xbf16>
    %c0_104 = arith.constant 0 : index
    %c0_105 = arith.constant 0 : index
    %237 = vector.load %arg18[%c0_104, %c0_105] : memref<32x32xbf16, #tpu.memory_space<vmem>>, vector<32x32xbf16>
    %cst_106 = arith.constant dense<0.000000e+00> : vector<8x32xf32>
    %238 = tpu.matmul %236, %237, %cst_106 {dimension_numbers = #tpu.dot_dimension_numbers<[1], [0], [0], [1], [0, 0, 1, 1], [], []>} : vector<8x32xbf16>, vector<32x32xbf16>, vector<8x32xf32> -> vector<8x32xf32>
    %c0_107 = arith.constant 0 : index
    %c0_108 = arith.constant 0 : index
    %239 = vector.load %arg19[%c0_107, %c0_108] : memref<1x32xf32, #tpu.memory_space<vmem>>, vector<1x32xf32>
    %240 = vector.broadcast %239 : vector<1x32xf32> to vector<8x32xf32>
    %241 = arith.addf %238, %240 : vector<8x32xf32>
    %242 = arith.addf %241, %131 : vector<8x32xf32>
    %cst_109 = arith.constant dense<0.000000e+00> : vector<8xf32>
    %243 = vector.multi_reduction <add>, %242, %cst_109 [1] : vector<8x32xf32> to vector<8xf32>
    %244 = vector.shape_cast %243 : vector<8xf32> to vector<8x1xf32>
    %cst_110 = arith.constant 3.200000e+01 : f32
    %245 = vector.broadcast %cst_110 : f32 to vector<8x1xf32>
    %246 = arith.divf %244, %245 : vector<8x1xf32>
    %247 = vector.broadcast %246 : vector<8x1xf32> to vector<8x32xf32>
    %248 = arith.subf %242, %247 : vector<8x32xf32>
    %249 = arith.mulf %248, %248 : vector<8x32xf32>
    %cst_111 = arith.constant dense<0.000000e+00> : vector<8xf32>
    %250 = vector.multi_reduction <add>, %249, %cst_111 [1] : vector<8x32xf32> to vector<8xf32>
    %251 = vector.shape_cast %250 : vector<8xf32> to vector<8x1xf32>
    %cst_112 = arith.constant 3.200000e+01 : f32
    %252 = vector.broadcast %cst_112 : f32 to vector<8x1xf32>
    %253 = arith.divf %251, %252 : vector<8x1xf32>
    %254 = vector.broadcast %246 : vector<8x1xf32> to vector<8x32xf32>
    %255 = arith.subf %242, %254 : vector<8x32xf32>
    %cst_113 = arith.constant 9.99999974E-6 : f32
    %256 = vector.broadcast %cst_113 : f32 to vector<8x1xf32>
    %257 = arith.addf %253, %256 : vector<8x1xf32>
    %258 = math.rsqrt %257 : vector<8x1xf32>
    %259 = vector.broadcast %258 : vector<8x1xf32> to vector<8x32xf32>
    %260 = arith.mulf %255, %259 : vector<8x32xf32>
    %c0_114 = arith.constant 0 : index
    %c0_115 = arith.constant 0 : index
    %261 = vector.load %arg20[%c0_114, %c0_115] : memref<1x32xf32, #tpu.memory_space<vmem>>, vector<1x32xf32>
    %262 = vector.broadcast %261 : vector<1x32xf32> to vector<8x32xf32>
    %263 = arith.mulf %260, %262 : vector<8x32xf32>
    %c0_116 = arith.constant 0 : index
    %c0_117 = arith.constant 0 : index
    %264 = vector.load %arg21[%c0_116, %c0_117] : memref<1x32xf32, #tpu.memory_space<vmem>>, vector<1x32xf32>
    %265 = vector.broadcast %264 : vector<1x32xf32> to vector<8x32xf32>
    %266 = arith.addf %263, %265 : vector<8x32xf32>
    %267 = arith.truncf %266 : vector<8x32xf32> to vector<8x32xbf16>
    %c0_118 = arith.constant 0 : index
    %c0_119 = arith.constant 0 : index
    %268 = vector.load %arg22[%c0_118, %c0_119] : memref<32x128xbf16, #tpu.memory_space<vmem>>, vector<32x128xbf16>
    %cst_120 = arith.constant dense<0.000000e+00> : vector<8x128xf32>
    %269 = tpu.matmul %267, %268, %cst_120 {dimension_numbers = #tpu.dot_dimension_numbers<[1], [0], [0], [1], [0, 0, 1, 1], [], []>} : vector<8x32xbf16>, vector<32x128xbf16>, vector<8x128xf32> -> vector<8x128xf32>
    %c0_121 = arith.constant 0 : index
    %c0_122 = arith.constant 0 : index
    %270 = vector.load %arg23[%c0_121, %c0_122] : memref<1x128xf32, #tpu.memory_space<vmem>>, vector<1x128xf32>
    %271 = vector.broadcast %270 : vector<1x128xf32> to vector<8x128xf32>
    %272 = arith.addf %269, %271 : vector<8x128xf32>
    %cst_123 = arith.constant 0.000000e+00 : f32
    %273 = vector.broadcast %cst_123 : f32 to vector<8x128xf32>
    %274 = arith.maximumf %272, %273 : vector<8x128xf32>
    %275 = arith.truncf %274 : vector<8x128xf32> to vector<8x128xbf16>
    %c0_124 = arith.constant 0 : index
    %c0_125 = arith.constant 0 : index
    %276 = vector.load %arg24[%c0_124, %c0_125] : memref<128x32xbf16, #tpu.memory_space<vmem>>, vector<128x32xbf16>
    %cst_126 = arith.constant dense<0.000000e+00> : vector<8x32xf32>
    %277 = tpu.matmul %275, %276, %cst_126 {dimension_numbers = #tpu.dot_dimension_numbers<[1], [0], [0], [1], [0, 0, 1, 1], [], []>} : vector<8x128xbf16>, vector<128x32xbf16>, vector<8x32xf32> -> vector<8x32xf32>
    %c0_127 = arith.constant 0 : index
    %c0_128 = arith.constant 0 : index
    %278 = vector.load %arg25[%c0_127, %c0_128] : memref<1x32xf32, #tpu.memory_space<vmem>>, vector<1x32xf32>
    %279 = vector.broadcast %278 : vector<1x32xf32> to vector<8x32xf32>
    %280 = arith.addf %277, %279 : vector<8x32xf32>
    %281 = arith.addf %280, %266 : vector<8x32xf32>
    %cst_129 = arith.constant dense<0.000000e+00> : vector<8xf32>
    %282 = vector.multi_reduction <add>, %281, %cst_129 [1] : vector<8x32xf32> to vector<8xf32>
    %283 = vector.shape_cast %282 : vector<8xf32> to vector<8x1xf32>
    %cst_130 = arith.constant 3.200000e+01 : f32
    %284 = vector.broadcast %cst_130 : f32 to vector<8x1xf32>
    %285 = arith.divf %283, %284 : vector<8x1xf32>
    %286 = vector.broadcast %285 : vector<8x1xf32> to vector<8x32xf32>
    %287 = arith.subf %281, %286 : vector<8x32xf32>
    %288 = arith.mulf %287, %287 : vector<8x32xf32>
    %cst_131 = arith.constant dense<0.000000e+00> : vector<8xf32>
    %289 = vector.multi_reduction <add>, %288, %cst_131 [1] : vector<8x32xf32> to vector<8xf32>
    %290 = vector.shape_cast %289 : vector<8xf32> to vector<8x1xf32>
    %cst_132 = arith.constant 3.200000e+01 : f32
    %291 = vector.broadcast %cst_132 : f32 to vector<8x1xf32>
    %292 = arith.divf %290, %291 : vector<8x1xf32>
    %293 = vector.broadcast %285 : vector<8x1xf32> to vector<8x32xf32>
    %294 = arith.subf %281, %293 : vector<8x32xf32>
    %cst_133 = arith.constant 9.99999974E-6 : f32
    %295 = vector.broadcast %cst_133 : f32 to vector<8x1xf32>
    %296 = arith.addf %292, %295 : vector<8x1xf32>
    %297 = math.rsqrt %296 : vector<8x1xf32>
    %298 = vector.broadcast %297 : vector<8x1xf32> to vector<8x32xf32>
    %299 = arith.mulf %294, %298 : vector<8x32xf32>
    %c0_134 = arith.constant 0 : index
    %c0_135 = arith.constant 0 : index
    %300 = vector.load %arg26[%c0_134, %c0_135] : memref<1x32xf32, #tpu.memory_space<vmem>>, vector<1x32xf32>
    %301 = vector.broadcast %300 : vector<1x32xf32> to vector<8x32xf32>
    %302 = arith.mulf %299, %301 : vector<8x32xf32>
    %c0_136 = arith.constant 0 : index
    %c0_137 = arith.constant 0 : index
    %303 = vector.load %arg27[%c0_136, %c0_137] : memref<1x32xf32, #tpu.memory_space<vmem>>, vector<1x32xf32>
    %304 = vector.broadcast %303 : vector<1x32xf32> to vector<8x32xf32>
    %305 = arith.addf %302, %304 : vector<8x32xf32>
    %306 = vector.shape_cast %305 : vector<8x32xf32> to vector<1x8x32xf32>
    %c0_138 = arith.constant 0 : index
    %c0_139 = arith.constant 0 : index
    %c0_140 = arith.constant 0 : index
    %307 = vector.load %arg28[%c0_138, %c0_139, %c0_140] : memref<1x8x32xf32, #tpu.memory_space<vmem>>, vector<1x8x32xf32>
    tpu.vector_store %arg28[%c0_138, %c0_139, %c0_140], %306 {strides = array<i32>} : memref<1x8x32xf32, #tpu.memory_space<vmem>>, vector<1x8x32xf32>,
    return
  }
  func.func @transform_0(%arg0: i32) -> (i32, i32, i32) {
    %c0_i32 = arith.constant 0 : i32
    %c0_i32_0 = arith.constant 0 : i32
    %c0_i32_1 = arith.constant 0 : i32
    return %arg0, %c0_i32, %c0_i32_0 : i32, i32, i32
  }
  func.func @transform_1(%arg0: i32) -> (i32, i32, i32) {
    %c0_i32 = arith.constant 0 : i32
    %c0_i32_0 = arith.constant 0 : i32
    %c0_i32_1 = arith.constant 0 : i32
    return %arg0, %c0_i32, %c0_i32_0 : i32, i32, i32
  }
  func.func @transform_2(%arg0: i32) -> (i32, i32, i32) {
    %c0_i32 = arith.constant 0 : i32
    %c0_i32_0 = arith.constant 0 : i32
    %c0_i32_1 = arith.constant 0 : i32
    return %arg0, %c0_i32, %c0_i32_0 : i32, i32, i32
  }
  func.func @transform_3(%arg0: i32) -> (i32, i32, i32) {
    %c0_i32 = arith.constant 0 : i32
    %c0_i32_0 = arith.constant 0 : i32
    %c0_i32_1 = arith.constant 0 : i32
    return %arg0, %c0_i32, %c0_i32_0 : i32, i32, i32
  }
  func.func @transform_4(%arg0: i32) -> (i32, i32, i32) {
    %c0_i32 = arith.constant 0 : i32
    %c0_i32_0 = arith.constant 0 : i32
    %c0_i32_1 = arith.constant 0 : i32
    return %arg0, %c0_i32, %c0_i32_0 : i32, i32, i32
  }
  func.func @transform_5(%arg0: i32) -> (i32, i32) {
    %c0_i32 = arith.constant 0 : i32
    %c0_i32_0 = arith.constant 0 : i32
    %c0_i32_1 = arith.constant 0 : i32
    return %c0_i32, %c0_i32_0 : i32, i32
  }
  func.func @transform_6(%arg0: i32) -> (i32, i32) {
    %c0_i32 = arith.constant 0 : i32
    %c0_i32_0 = arith.constant 0 : i32
    %c0_i32_1 = arith.constant 0 : i32
    return %c0_i32, %c0_i32_0 : i32, i32
  }
  func.func @transform_7(%arg0: i32) -> (i32, i32) {
    %c0_i32 = arith.constant 0 : i32
    %c0_i32_0 = arith.constant 0 : i32
    %c0_i32_1 = arith.constant 0 : i32
    return %c0_i32, %c0_i32_0 : i32, i32
  }
  func.func @transform_8(%arg0: i32) -> (i32, i32) {
    %c0_i32 = arith.constant 0 : i32
    %c0_i32_0 = arith.constant 0 : i32
    %c0_i32_1 = arith.constant 0 : i32
    return %c0_i32, %c0_i32_0 : i32, i32
  }
  func.func @transform_9(%arg0: i32) -> (i32, i32) {
    %c0_i32 = arith.constant 0 : i32
    %c0_i32_0 = arith.constant 0 : i32
    %c0_i32_1 = arith.constant 0 : i32
    return %c0_i32, %c0_i32_0 : i32, i32
  }
  func.func @transform_10(%arg0: i32) -> (i32, i32) {
    %c0_i32 = arith.constant 0 : i32
    %c0_i32_0 = arith.constant 0 : i32
    %c0_i32_1 = arith.constant 0 : i32
    return %c0_i32, %c0_i32_0 : i32, i32
  }
  func.func @transform_11(%arg0: i32) -> (i32, i32) {
    %c0_i32 = arith.constant 0 : i32
    %c0_i32_0 = arith.constant 0 : i32
    %c0_i32_1 = arith.constant 0 : i32
    return %c0_i32, %c0_i32_0 : i32, i32
  }
  func.func @transform_12(%arg0: i32) -> (i32, i32) {
    %c0_i32 = arith.constant 0 : i32
    %c0_i32_0 = arith.constant 0 : i32
    %c0_i32_1 = arith.constant 0 : i32
    return %c0_i32, %c0_i32_0 : i32, i32
  }
  func.func @transform_13(%arg0: i32) -> (i32, i32) {
    %c0_i32 = arith.constant 0 : i32
    %c0_i32_0 = arith.constant 0 : i32
    %c0_i32_1 = arith.constant 0 : i32
    return %c0_i32, %c0_i32_0 : i32, i32
  }
  func.func @transform_14(%arg0: i32) -> (i32, i32) {
    %c0_i32 = arith.constant 0 : i32
    %c0_i32_0 = arith.constant 0 : i32
    %c0_i32_1 = arith.constant 0 : i32
    return %c0_i32, %c0_i32_0 : i32, i32
  }
  func.func @transform_15(%arg0: i32) -> (i32, i32) {
    %c0_i32 = arith.constant 0 : i32
    %c0_i32_0 = arith.constant 0 : i32
    %c0_i32_1 = arith.constant 0 : i32
    return %c0_i32, %c0_i32_0 : i32, i32
  }
  func.func @transform_16(%arg0: i32) -> (i32, i32) {
    %c0_i32 = arith.constant 0 : i32
    %c0_i32_0 = arith.constant 0 : i32
    %c0_i32_1 = arith.constant 0 : i32
    return %c0_i32, %c0_i32_0 : i32, i32
  }
  func.func @transform_17(%arg0: i32) -> (i32, i32) {
    %c0_i32 = arith.constant 0 : i32
    %c0_i32_0 = arith.constant 0 : i32
    %c0_i32_1 = arith.constant 0 : i32
    return %c0_i32, %c0_i32_0 : i32, i32
  }
  func.func @transform_18(%arg0: i32) -> (i32, i32) {
    %c0_i32 = arith.constant 0 : i32
    %c0_i32_0 = arith.constant 0 : i32
    %c0_i32_1 = arith.constant 0 : i32
    return %c0_i32, %c0_i32_0 : i32, i32
  }
  func.func @transform_19(%arg0: i32) -> (i32, i32) {
    %c0_i32 = arith.constant 0 : i32
    %c0_i32_0 = arith.constant 0 : i32
    %c0_i32_1 = arith.constant 0 : i32
    return %c0_i32, %c0_i32_0 : i32, i32
  }
  func.func @transform_20(%arg0: i32) -> (i32, i32) {
    %c0_i32 = arith.constant 0 : i32
    %c0_i32_0 = arith.constant 0 : i32
    %c0_i32_1 = arith.constant 0 : i32
    return %c0_i32, %c0_i32_0 : i32, i32
  }
  func.func @transform_21(%arg0: i32) -> (i32, i32) {
    %c0_i32 = arith.constant 0 : i32
    %c0_i32_0 = arith.constant 0 : i32
    %c0_i32_1 = arith.constant 0 : i32
    return %c0_i32, %c0_i32_0 : i32, i32
  }
  func.func @transform_22(%arg0: i32) -> (i32, i32) {
    %c0_i32 = arith.constant 0 : i32
    %c0_i32_0 = arith.constant 0 : i32
    %c0_i32_1 = arith.constant 0 : i32
    return %c0_i32, %c0_i32_0 : i32, i32
  }
  func.func @transform_23(%arg0: i32) -> (i32, i32) {
    %c0_i32 = arith.constant 0 : i32
    %c0_i32_0 = arith.constant 0 : i32
    %c0_i32_1 = arith.constant 0 : i32
    return %c0_i32, %c0_i32_0 : i32, i32
  }
  func.func @transform_24(%arg0: i32) -> (i32, i32) {
    %c0_i32 = arith.constant 0 : i32
    %c0_i32_0 = arith.constant 0 : i32
    %c0_i32_1 = arith.constant 0 : i32
    return %c0_i32, %c0_i32_0 : i32, i32
  }
  func.func @transform_25(%arg0: i32) -> (i32, i32) {
    %c0_i32 = arith.constant 0 : i32
    %c0_i32_0 = arith.constant 0 : i32
    %c0_i32_1 = arith.constant 0 : i32
    return %c0_i32, %c0_i32_0 : i32, i32
  }
  func.func @transform_26(%arg0: i32) -> (i32, i32) {
    %c0_i32 = arith.constant 0 : i32
    %c0_i32_0 = arith.constant 0 : i32
    %c0_i32_1 = arith.constant 0 : i32
    return %c0_i32, %c0_i32_0 : i32, i32
  }
  func.func @transform_27(%arg0: i32) -> (i32, i32, i32) {
    %c0_i32 = arith.constant 0 : i32
    %c0_i32_0 = arith.constant 0 : i32
    %c0_i32_1 = arith.constant 0 : i32
    return %arg0, %c0_i32, %c0_i32_0 : i32, i32, i32
  }
}

</mosaic_0001>

<llo_original>
// kernel: tpu_custom_call.1
$region0: #{tpu_custom_call.1}
  #allocation0 [shape = 'u32[]', space=smem, size = 0x4, offset = 0x4, fixed_abs, tag = 'smem constant byte address 0x4 - core index']
  #allocation1 [shape = 'u32[144,128]{1,0:T(1,128)}', space=vmem, size = 0x12000, scoped, tag = 'internal scratch']
  #allocation2 [shape = 'f32[8,32]{1,0:T(8,128)}', space=vmem, size = 0x1000, scoped, tag = 'scratch operand']
  %s0 = inlined_call_operand.vmem [shape: f32[2,8,32], index: 0, kind: input, shape index: {}]
  %s1 = inlined_call_operand.vmem [shape: f32[2,16,32], index: 1, kind: input, shape index: {}]
  %s2 = inlined_call_operand.vmem [shape: f32[2,16,32], index: 2, kind: input, shape index: {}]
  %s3 = inlined_call_operand.hbm [shape: f32[2,8,8], index: 3, kind: input, shape index: {}]
  %s4 = inlined_call_operand.hbm [shape: f32[2,8,16], index: 4, kind: input, shape index: {}]
  %s5 = inlined_call_operand.hbm [shape: bf16[32,96], index: 5, kind: input, shape index: {}]
  %s6 = inlined_call_operand.hbm [shape: f32[1,96], index: 6, kind: input, shape index: {}]
  %s7 = inlined_call_operand.hbm [shape: bf16[32,32], index: 7, kind: input, shape index: {}]
  %s8 = inlined_call_operand.hbm [shape: f32[1,32], index: 8, kind: input, shape index: {}]
  %s9 = inlined_call_operand.hbm [shape: f32[1,32], index: 9, kind: input, shape index: {}]
  %s10 = inlined_call_operand.hbm [shape: f32[1,32], index: 10, kind: input, shape index: {}]
  %s11 = inlined_call_operand.vmem [shape: bf16[32,32], index: 11, kind: input, shape index: {}]
  %s12 = inlined_call_operand.hbm [shape: f32[1,32], index: 12, kind: input, shape index: {}]
  %s13 = inlined_call_operand.vmem [shape: bf16[32,32], index: 13, kind: input, shape index: {}]
  %s14 = inlined_call_operand.hbm [shape: f32[1,32], index: 14, kind: input, shape index: {}]
  %s15 = inlined_call_operand.hbm [shape: bf16[32,32], index: 15, kind: input, shape index: {}]
  %s16 = inlined_call_operand.hbm [shape: f32[1,32], index: 16, kind: input, shape index: {}]
  %s17 = inlined_call_operand.vmem [shape: bf16[32,32], index: 17, kind: input, shape index: {}]
  %s18 = inlined_call_operand.vmem [shape: f32[1,32], index: 18, kind: input, shape index: {}]
  %s19 = inlined_call_operand.vmem [shape: f32[1,32], index: 19, kind: input, shape index: {}]
  %s20 = inlined_call_operand.vmem [shape: f32[1,32], index: 20, kind: input, shape index: {}]
  %s21 = inlined_call_operand.hbm [shape: bf16[32,128], index: 21, kind: input, shape index: {}]
  %s22 = inlined_call_operand.vmem [shape: f32[1,128], index: 22, kind: input, shape index: {}]
  %s23 = inlined_call_operand.vmem [shape: bf16[128,32], index: 23, kind: input, shape index: {}]
  %s24 = inlined_call_operand.vmem [shape: f32[1,32], index: 24, kind: input, shape index: {}]
  %s25 = inlined_call_operand.vmem [shape: f32[1,32], index: 25, kind: input, shape index: {}]
  %s26 = inlined_call_operand.vmem [shape: f32[1,32], index: 26, kind: input, shape index: {}]
  %s27 = inlined_call_operand.hbm [shape: f32[2,8,32], index: 27, kind: output, shape index: {}]
  %s28 = sld [smem:[#allocation0]]
  $region193: #{tpu_custom_call.1} parent=0
    _
  %s30 = ssub.s32 1, %s28
  %s31 = scalar_select 0, %s30, %s28
  $region1: #{tpu_custom_call.1} parent=0
    #allocation3 [shape = 'u8[8192]{0}', space=vmem, size = 0x2000, scoped, tag = 'input window, operand 3']
    #allocation4 [shape = 's32[2]{0}', space=sflag, size = 0x8, scoped, tag = 'scoped memory for tpu_custom_call.1']
    #allocation5 [shape = 's32[2]{0}', space=sflag, size = 0x8, scoped, tag = 'scoped memory for tpu_custom_call.1']
    #allocation6 [shape = 'u8[8192]{0}', space=vmem, size = 0x2000, scoped, tag = 'input window, operand 4']
    #allocation7 [shape = 's32[2]{0}', space=sflag, size = 0x8, scoped, tag = 'scoped memory for tpu_custom_call.1']
    #allocation8 [shape = 'u8[8192]{0}', space=vmem, size = 0x2000, scoped, tag = 'input window, operand 5, single buffered']
    #allocation9 [shape = 'u8[512]{0}', space=vmem, size = 0x400, scoped, tag = 'input window, operand 6, single buffered']
    #allocation10 [shape = 's32[1]{0}', space=sflag, size = 0x4, scoped, tag = 'scoped memory for tpu_custom_call.1']
    #allocation11 [shape = 'u8[8192]{0}', space=vmem, size = 0x2000, scoped, tag = 'input window, operand 7, single buffered']
    #allocation12 [shape = 'u8[512]{0}', space=vmem, size = 0x400, scoped, tag = 'input window, operand 8, single buffered']
    #allocation13 [shape = 's32[1]{0}', space=sflag, size = 0x4, scoped, tag = 'scoped memory for tpu_custom_call.1']
    #allocation14 [shape = 'u8[512]{0}', space=vmem, size = 0x400, scoped, tag = 'input window, operand 9, single buffered']
    #allocation15 [shape = 'u8[512]{0}', space=vmem, size = 0x400, scoped, tag = 'input window, operand 10, single buffered']
    #allocation16 [shape = 's32[1]{0}', space=sflag, size = 0x4, scoped, tag = 'scoped memory for tpu_custom_call.1']
    #allocation17 [shape = 'u8[512]{0}', space=vmem, size = 0x400, scoped, tag = 'input window, operand 12, single buffered']
    #allocation18 [shape = 'u8[512]{0}', space=vmem, size = 0x400, scoped, tag = 'input window, operand 14, single buffered']
    #allocation19 [shape = 's32[1]{0}', space=sflag, size = 0x4, scoped, tag = 'scoped memory for tpu_custom_call.1']
    #allocation20 [shape = 'u8[8192]{0}', space=vmem, size = 0x2000, scoped, tag = 'input window, operand 15, single buffered']
    #allocation21 [shape = 'u8[512]{0}', space=vmem, size = 0x400, scoped, tag = 'input window, operand 16, single buffered']
    #allocation22 [shape = 's32[1]{0}', space=sflag, size = 0x4, scoped, tag = 'scoped memory for tpu_custom_call.1']
    #allocation23 [shape = 'u8[8192]{0}', space=vmem, size = 0x2000, scoped, tag = 'input window, operand 21, single buffered']
    #allocation24 [shape = 'u8[8192]{0}', space=vmem, size = 0x2000, scoped, tag = 'output window, operand 0']
    %32 = vsyncpa [#allocation4], 0
    %s33 = scalar_lea.sflag [#allocation4], 1
    %34 = vsyncpa %s33, 0
    %35 = vsyncpa [#allocation7], 0
    %s36 = scalar_lea.sflag [#allocation7], 1
    %37 = vsyncpa %s36, 0
    %38 = vsyncpa [#allocation10], 0
    %39 = vsyncpa [#allocation13], 0
    %40 = vsyncpa [#allocation16], 0
    %41 = vsyncpa [#allocation19], 0
    %42 = vsyncpa [#allocation22], 0
    %43 = vsyncpa [#allocation5], 0
    %s44 = scalar_lea.sflag [#allocation5], 1
    %45 = vsyncpa %s44, 0
    loop: start=0, step=1, limit=4
    $region2: #{tpu_custom_call.1} parent=1 // loop_pre_header
      _
    $region3: #{tpu_custom_call.1} parent=1 // loop_header
      %s47 = sphi 0, %s51
      %p48 = scmp.ge.s32.totalorder %s47, 4
      %s57 = sphi 0, %s59
      %s60 = sphi 0, %s57
      %s61 = sphi 0, %s60
      %s77 = sphi 0, %s61
      %s83 = sphi 0, %s85
      %s86 = sphi 0, %s83
      %s87 = sphi 0, %s86
      %s103 = sphi 0, %s87
      %s109 = sphi 0, %s111
      %s112 = sphi 0, %s109
      %s113 = sphi 0, %s112
      %s129 = sphi 0, %s113
      %s135 = sphi 0, %s137
      %s138 = sphi 0, %s135
      %s139 = sphi 0, %s138
      %s155 = sphi 0, %s139
      %s161 = sphi 0, %s163
      %s164 = sphi 0, %s161
      %s165 = sphi 0, %s164
      %s181 = sphi 0, %s165
      %s185 = sphi 0, %s185
      %s187 = sphi 0, %s185
      %s188 = sphi 0, %s187
      %s202 = sphi 0, %s188
      %s206 = sphi 0, %s206
      %s208 = sphi 0, %s206
      %s209 = sphi 0, %s208
      %s223 = sphi 0, %s209
      %s227 = sphi 0, %s227
      %s229 = sphi 0, %s227
      %s230 = sphi 0, %s229
      %s244 = sphi 0, %s230
      %s248 = sphi 0, %s248
      %s250 = sphi 0, %s248
      %s251 = sphi 0, %s250
      %s265 = sphi 0, %s251
      %s269 = sphi 0, %s269
      %s271 = sphi 0, %s269
      %s272 = sphi 0, %s271
      %s286 = sphi 0, %s272
      %s290 = sphi 0, %s290
      %s292 = sphi 0, %s290
      %s293 = sphi 0, %s292
      %s307 = sphi 0, %s293
      %s311 = sphi 0, %s311
      %s313 = sphi 0, %s311
      %s314 = sphi 0, %s313
      %s328 = sphi 0, %s314
      %s332 = sphi 0, %s332
      %s334 = sphi 0, %s332
      %s335 = sphi 0, %s334
      %s349 = sphi 0, %s335
      %s353 = sphi 0, %s353
      %s355 = sphi 0, %s353
      %s356 = sphi 0, %s355
      %s370 = sphi 0, %s356
      %s374 = sphi 0, %s374
      %s376 = sphi 0, %s374
      %s377 = sphi 0, %s376
      %s391 = sphi 0, %s377
      %s395 = sphi 0, %s395
      %s397 = sphi 0, %s395
      %s398 = sphi 0, %s397
      %s412 = sphi 0, %s398
      %s416 = sphi 0, %s416
      %s418 = sphi 0, %s416
      %s419 = sphi 0, %s418
      %s433 = sphi 0, %s419
      %s437 = sphi 0, %s437
      %s439 = sphi 0, %s437
      %s440 = sphi 0, %s439
      %s454 = sphi 0, %s440
      %s458 = sphi 0, %s458
      %s460 = sphi 0, %s458
      %s461 = sphi 0, %s460
      %s475 = sphi 0, %s461
      %s479 = sphi 0, %s479
      %s481 = sphi 0, %s479
      %s482 = sphi 0, %s481
      %s496 = sphi 0, %s482
      %s500 = sphi 0, %s500
      %s502 = sphi 0, %s500
      %s503 = sphi 0, %s502
      %s517 = sphi 0, %s503
      %s521 = sphi 0, %s521
      %s523 = sphi 0, %s521
      %s524 = sphi 0, %s523
      %s538 = sphi 0, %s524
      %s542 = sphi 0, %s542
      %s544 = sphi 0, %s542
      %s545 = sphi 0, %s544
      %s559 = sphi 0, %s545
      %s563 = sphi 0, %s563
      %s565 = sphi 0, %s563
      %s566 = sphi 0, %s565
      %s580 = sphi 0, %s566
      %s584 = sphi 0, %s584
      %s586 = sphi 0, %s584
      %s587 = sphi 0, %s586
      %s601 = sphi 0, %s587
      %s605 = sphi 0, %s605
      %s607 = sphi 0, %s605
      %s608 = sphi 0, %s607
      %s622 = sphi 0, %s608
      %s626 = sphi 0, %s626
      %s628 = sphi 0, %s626
      %s629 = sphi 0, %s628
      %s643 = sphi 0, %s629
      %s649 = sphi 0, %s651
      %s652 = sphi 0, %s649
      %s653 = sphi 0, %s652
      %s669 = sphi 0, %s653
    $region4: #{tpu_custom_call.1} parent=1 // loop_header_branch
      %50 = sbr.rel (%p48) target = $region8
    $region5: #{tpu_custom_call.1} parent=1 // loop_body
      %s52 = ssub.s32 %s47, 1
      %s53 = ssub.s32 %s47, 2
      %s54 = sadd.s32 %s47, 1
      %s55 = ssub.s32 %s47, %s54
      %p56 = scmp.eq.s32.totalorder %s55, 0
      %s58 = sadd.s32 %s57, 1
      %s59 = scalar_select %p56, %s57, %s58
      %p62 = pneg %p56
      %p63 = scmp.eq.s32.totalorder %s47, 1
      %p64 = por %p62, %p63
      %p65 = scmp.ne.s32.totalorder %s57, %s60
      %p66 = scmp.eq.s32.totalorder %s47, 0
      %p67 = por %p65, %p66
      %p68 = scmp.ne.s32.totalorder %s57, %s60
      %p69 = scmp.eq.s32.totalorder %s52, 1
      %p70 = por %p68, %p69
      %p71 = scmp.ne.s32.totalorder %s60, %s61
      %p72 = scmp.eq.s32.totalorder %s52, 0
      %p73 = por %p71, %p72
      %p74 = scmp.ne.s32.totalorder %s60, %s61
      %p75 = scmp.eq.s32.totalorder %s53, 1
      %p76 = por %p74, %p75
      %p78 = scmp.ne.s32.totalorder %s61, %s77
      %p79 = scmp.eq.s32.totalorder %s53, 0
      %p80 = por %p78, %p79
      %s81 = ssub.s32 %s47, %s54
      %p82 = scmp.eq.s32.totalorder %s81, 0
      %s84 = sadd.s32 %s83, 1
      %s85 = scalar_select %p82, %s83, %s84
      %p88 = pneg %p82
      %p89 = scmp.eq.s32.totalorder %s47, 1
      %p90 = por %p88, %p89
      %p91 = scmp.ne.s32.totalorder %s83, %s86
      %p92 = scmp.eq.s32.totalorder %s47, 0
      %p93 = por %p91, %p92
      %p94 = scmp.ne.s32.totalorder %s83, %s86
      %p95 = scmp.eq.s32.totalorder %s52, 1
      %p96 = por %p94, %p95
      %p97 = scmp.ne.s32.totalorder %s86, %s87
      %p98 = scmp.eq.s32.totalorder %s52, 0
      %p99 = por %p97, %p98
      %p100 = scmp.ne.s32.totalorder %s86, %s87
      %p101 = scmp.eq.s32.totalorder %s53, 1
      %p102 = por %p100, %p101
      %p104 = scmp.ne.s32.totalorder %s87, %s103
      %p105 = scmp.eq.s32.totalorder %s53, 0
      %p106 = por %p104, %p105
      %s107 = ssub.s32 %s47, %s54
      %p108 = scmp.eq.s32.totalorder %s107, 0
      %s110 = sadd.s32 %s109, 1
      %s111 = scalar_select %p108, %s109, %s110
      %p114 = pneg %p108
      %p115 = scmp.eq.s32.totalorder %s47, 1
      %p116 = por %p114, %p115
      %p117 = scmp.ne.s32.totalorder %s109, %s112
      %p118 = scmp.eq.s32.totalorder %s47, 0
      %p119 = por %p117, %p118
      %p120 = scmp.ne.s32.totalorder %s109, %s112
      %p121 = scmp.eq.s32.totalorder %s52, 1
      %p122 = por %p120, %p121
      %p123 = scmp.ne.s32.totalorder %s112, %s113
      %p124 = scmp.eq.s32.totalorder %s52, 0
      %p125 = por %p123, %p124
      %p126 = scmp.ne.s32.totalorder %s112, %s113
      %p127 = scmp.eq.s32.totalorder %s53, 1
      %p128 = por %p126, %p127
      %p130 = scmp.ne.s32.totalorder %s113, %s129
      %p131 = scmp.eq.s32.totalorder %s53, 0
      %p132 = por %p130, %p131
      %s133 = ssub.s32 %s47, %s54
      %p134 = scmp.eq.s32.totalorder %s133, 0
      %s136 = sadd.s32 %s135, 1
      %s137 = scalar_select %p134, %s135, %s136
      %p140 = pneg %p134
      %p141 = scmp.eq.s32.totalorder %s47, 1
      %p142 = por %p140, %p141
      %p143 = scmp.ne.s32.totalorder %s135, %s138
      %p144 = scmp.eq.s32.totalorder %s47, 0
      %p145 = por %p143, %p144
      %p146 = scmp.ne.s32.totalorder %s135, %s138
      %p147 = scmp.eq.s32.totalorder %s52, 1
      %p148 = por %p146, %p147
      %p149 = scmp.ne.s32.totalorder %s138, %s139
      %p150 = scmp.eq.s32.totalorder %s52, 0
      %p151 = por %p149, %p150
      %p152 = scmp.ne.s32.totalorder %s138, %s139
      %p153 = scmp.eq.s32.totalorder %s53, 1
      %p154 = por %p152, %p153
      %p156 = scmp.ne.s32.totalorder %s139, %s155
      %p157 = scmp.eq.s32.totalorder %s53, 0
      %p158 = por %p156, %p157
      %s159 = ssub.s32 %s47, %s54
      %p160 = scmp.eq.s32.totalorder %s159, 0
      %s162 = sadd.s32 %s161, 1
      %s163 = scalar_select %p160, %s161, %s162
      %p166 = pneg %p160
      %p167 = scmp.eq.s32.totalorder %s47, 1
      %p168 = por %p166, %p167
      %p169 = scmp.ne.s32.totalorder %s161, %s164
      %p170 = scmp.eq.s32.totalorder %s47, 0
      %p171 = por %p169, %p170
      %p172 = scmp.ne.s32.totalorder %s161, %s164
      %p173 = scmp.eq.s32.totalorder %s52, 1
      %p174 = por %p172, %p173
      %p175 = scmp.ne.s32.totalorder %s164, %s165
      %p176 = scmp.eq.s32.totalorder %s52, 0
      %p177 = por %p175, %p176
      %p178 = scmp.ne.s32.totalorder %s164, %s165
      %p179 = scmp.eq.s32.totalorder %s53, 1
      %p180 = por %p178, %p179
      %p182 = scmp.ne.s32.totalorder %s165, %s181
      %p183 = scmp.eq.s32.totalorder %s53, 0
      %p184 = por %p182, %p183
      %s186 = sadd.s32 %s185, 1
      %p189 = scmp.eq.s32.totalorder %s47, 1
      %p190 = scmp.ne.s32.totalorder %s185, %s187
      %p191 = scmp.eq.s32.totalorder %s47, 0
      %p192 = por %p190, %p191
      %p193 = scmp.ne.s32.totalorder %s185, %s187
      %p194 = scmp.eq.s32.totalorder %s52, 1
      %p195 = por %p193, %p194
      %p196 = scmp.ne.s32.totalorder %s187, %s188
      %p197 = scmp.eq.s32.totalorder %s52, 0
      %p198 = por %p196, %p197
      %p199 = scmp.ne.s32.totalorder %s187, %s188
      %p200 = scmp.eq.s32.totalorder %s53, 1
      %p201 = por %p199, %p200
      %p203 = scmp.ne.s32.totalorder %s188, %s202
      %p204 = scmp.eq.s32.totalorder %s53, 0
      %p205 = por %p203, %p204
      %s207 = sadd.s32 %s206, 1
      %p210 = scmp.eq.s32.totalorder %s47, 1
      %p211 = scmp.ne.s32.totalorder %s206, %s208
      %p212 = scmp.eq.s32.totalorder %s47, 0
      %p213 = por %p211, %p212
      %p214 = scmp.ne.s32.totalorder %s206, %s208
      %p215 = scmp.eq.s32.totalorder %s52, 1
      %p216 = por %p214, %p215
      %p217 = scmp.ne.s32.totalorder %s208, %s209
      %p218 = scmp.eq.s32.totalorder %s52, 0
      %p219 = por %p217, %p218
      %p220 = scmp.ne.s32.totalorder %s208, %s209
      %p221 = scmp.eq.s32.totalorder %s53, 1
      %p222 = por %p220, %p221
      %p224 = scmp.ne.s32.totalorder %s209, %s223
      %p225 = scmp.eq.s32.totalorder %s53, 0
      %p226 = por %p224, %p225
      %s228 = sadd.s32 %s227, 1
      %p231 = scmp.eq.s32.totalorder %s47, 1
      %p232 = scmp.ne.s32.totalorder %s227, %s229
      %p233 = scmp.eq.s32.totalorder %s47, 0
      %p234 = por %p232, %p233
      %p235 = scmp.ne.s32.totalorder %s227, %s229
      %p236 = scmp.eq.s32.totalorder %s52, 1
      %p237 = por %p235, %p236
      %p238 = scmp.ne.s32.totalorder %s229, %s230
      %p239 = scmp.eq.s32.totalorder %s52, 0
      %p240 = por %p238, %p239
      %p241 = scmp.ne.s32.totalorder %s229, %s230
      %p242 = scmp.eq.s32.totalorder %s53, 1
      %p243 = por %p241, %p242
      %p245 = scmp.ne.s32.totalorder %s230, %s244
      %p246 = scmp.eq.s32.totalorder %s53, 0
      %p247 = por %p245, %p246
      %s249 = sadd.s32 %s248, 1
      %p252 = scmp.eq.s32.totalorder %s47, 1
      %p253 = scmp.ne.s32.totalorder %s248, %s250
      %p254 = scmp.eq.s32.totalorder %s47, 0
      %p255 = por %p253, %p254
      %p256 = scmp.ne.s32.totalorder %s248, %s250
      %p257 = scmp.eq.s32.totalorder %s52, 1
      %p258 = por %p256, %p257
      %p259 = scmp.ne.s32.totalorder %s250, %s251
      %p260 = scmp.eq.s32.totalorder %s52, 0
      %p261 = por %p259, %p260
      %p262 = scmp.ne.s32.totalorder %s250, %s251
      %p263 = scmp.eq.s32.totalorder %s53, 1
      %p264 = por %p262, %p263
      %p266 = scmp.ne.s32.totalorder %s251, %s265
      %p267 = scmp.eq.s32.totalorder %s53, 0
      %p268 = por %p266, %p267
      %s270 = sadd.s32 %s269, 1
      %p273 = scmp.eq.s32.totalorder %s47, 1
      %p274 = scmp.ne.s32.totalorder %s269, %s271
      %p275 = scmp.eq.s32.totalorder %s47, 0
      %p276 = por %p274, %p275
      %p277 = scmp.ne.s32.totalorder %s269, %s271
      %p278 = scmp.eq.s32.totalorder %s52, 1
      %p279 = por %p277, %p278
      %p280 = scmp.ne.s32.totalorder %s271, %s272
      %p281 = scmp.eq.s32.totalorder %s52, 0
      %p282 = por %p280, %p281
      %p283 = scmp.ne.s32.totalorder %s271, %s272
      %p284 = scmp.eq.s32.totalorder %s53, 1
      %p285 = por %p283, %p284
      %p287 = scmp.ne.s32.totalorder %s272, %s286
      %p288 = scmp.eq.s32.totalorder %s53, 0
      %p289 = por %p287, %p288
      %s291 = sadd.s32 %s290, 1
      %p294 = scmp.eq.s32.totalorder %s47, 1
      %p295 = scmp.ne.s32.totalorder %s290, %s292
      %p296 = scmp.eq.s32.totalorder %s47, 0
      %p297 = por %p295, %p296
      %p298 = scmp.ne.s32.totalorder %s290, %s292
      %p299 = scmp.eq.s32.totalorder %s52, 1
      %p300 = por %p298, %p299
      %p301 = scmp.ne.s32.totalorder %s292, %s293
      %p302 = scmp.eq.s32.totalorder %s52, 0
      %p303 = por %p301, %p302
      %p304 = scmp.ne.s32.totalorder %s292, %s293
      %p305 = scmp.eq.s32.totalorder %s53, 1
      %p306 = por %p304, %p305
      %p308 = scmp.ne.s32.totalorder %s293, %s307
      %p309 = scmp.eq.s32.totalorder %s53, 0
      %p310 = por %p308, %p309
      %s312 = sadd.s32 %s311, 1
      %p315 = scmp.eq.s32.totalorder %s47, 1
      %p316 = scmp.ne.s32.totalorder %s311, %s313
      %p317 = scmp.eq.s32.totalorder %s47, 0
      %p318 = por %p316, %p317
      %p319 = scmp.ne.s32.totalorder %s311, %s313
      %p320 = scmp.eq.s32.totalorder %s52, 1
      %p321 = por %p319, %p320
      %p322 = scmp.ne.s32.totalorder %s313, %s314
      %p323 = scmp.eq.s32.totalorder %s52, 0
      %p324 = por %p322, %p323
      %p325 = scmp.ne.s32.totalorder %s313, %s314
      %p326 = scmp.eq.s32.totalorder %s53, 1
      %p327 = por %p325, %p326
      %p329 = scmp.ne.s32.totalorder %s314, %s328
      %p330 = scmp.eq.s32.totalorder %s53, 0
      %p331 = por %p329, %p330
      %s333 = sadd.s32 %s332, 1
      %p336 = scmp.eq.s32.totalorder %s47, 1
      %p337 = scmp.ne.s32.totalorder %s332, %s334
      %p338 = scmp.eq.s32.totalorder %s47, 0
      %p339 = por %p337, %p338
      %p340 = scmp.ne.s32.totalorder %s332, %s334
      %p341 = scmp.eq.s32.totalorder %s52, 1
      %p342 = por %p340, %p341
      %p343 = scmp.ne.s32.totalorder %s334, %s335
      %p344 = scmp.eq.s32.totalorder %s52, 0
      %p345 = por %p343, %p344
      %p346 = scmp.ne.s32.totalorder %s334, %s335
      %p347 = scmp.eq.s32.totalorder %s53, 1
      %p348 = por %p346, %p347
      %p350 = scmp.ne.s32.totalorder %s335, %s349
      %p351 = scmp.eq.s32.totalorder %s53, 0
      %p352 = por %p350, %p351
      %s354 = sadd.s32 %s353, 1
      %p357 = scmp.eq.s32.totalorder %s47, 1
      %p358 = scmp.ne.s32.totalorder %s353, %s355
      %p359 = scmp.eq.s32.totalorder %s47, 0
      %p360 = por %p358, %p359
      %p361 = scmp.ne.s32.totalorder %s353, %s355
      %p362 = scmp.eq.s32.totalorder %s52, 1
      %p363 = por %p361, %p362
      %p364 = scmp.ne.s32.totalorder %s355, %s356
      %p365 = scmp.eq.s32.totalorder %s52, 0
      %p366 = por %p364, %p365
      %p367 = scmp.ne.s32.totalorder %s355, %s356
      %p368 = scmp.eq.s32.totalorder %s53, 1
      %p369 = por %p367, %p368
      %p371 = scmp.ne.s32.totalorder %s356, %s370
      %p372 = scmp.eq.s32.totalorder %s53, 0
      %p373 = por %p371, %p372
      %s375 = sadd.s32 %s374, 1
      %p378 = scmp.eq.s32.totalorder %s47, 1
      %p379 = scmp.ne.s32.totalorder %s374, %s376
      %p380 = scmp.eq.s32.totalorder %s47, 0
      %p381 = por %p379, %p380
      %p382 = scmp.ne.s32.totalorder %s374, %s376
      %p383 = scmp.eq.s32.totalorder %s52, 1
      %p384 = por %p382, %p383
      %p385 = scmp.ne.s32.totalorder %s376, %s377
      %p386 = scmp.eq.s32.totalorder %s52, 0
      %p387 = por %p385, %p386
      %p388 = scmp.ne.s32.totalorder %s376, %s377
      %p389 = scmp.eq.s32.totalorder %s53, 1
      %p390 = por %p388, %p389
      %p392 = scmp.ne.s32.totalorder %s377, %s391
      %p393 = scmp.eq.s32.totalorder %s53, 0
      %p394 = por %p392, %p393
      %s396 = sadd.s32 %s395, 1
      %p399 = scmp.eq.s32.totalorder %s47, 1
      %p400 = scmp.ne.s32.totalorder %s395, %s397
      %p401 = scmp.eq.s32.totalorder %s47, 0
      %p402 = por %p400, %p401
      %p403 = scmp.ne.s32.totalorder %s395, %s397
      %p404 = scmp.eq.s32.totalorder %s52, 1
      %p405 = por %p403, %p404
      %p406 = scmp.ne.s32.totalorder %s397, %s398
      %p407 = scmp.eq.s32.totalorder %s52, 0
      %p408 = por %p406, %p407
      %p409 = scmp.ne.s32.totalorder %s397, %s398
      %p410 = scmp.eq.s32.totalorder %s53, 1
      %p411 = por %p409, %p410
      %p413 = scmp.ne.s32.totalorder %s398, %s412
      %p414 = scmp.eq.s32.totalorder %s53, 0
      %p415 = por %p413, %p414
      %s417 = sadd.s32 %s416, 1
      %p420 = scmp.eq.s32.totalorder %s47, 1
      %p421 = scmp.ne.s32.totalorder %s416, %s418
      %p422 = scmp.eq.s32.totalorder %s47, 0
      %p423 = por %p421, %p422
      %p424 = scmp.ne.s32.totalorder %s416, %s418
      %p425 = scmp.eq.s32.totalorder %s52, 1
      %p426 = por %p424, %p425
      %p427 = scmp.ne.s32.totalorder %s418, %s419
      %p428 = scmp.eq.s32.totalorder %s52, 0
      %p429 = por %p427, %p428
      %p430 = scmp.ne.s32.totalorder %s418, %s419
      %p431 = scmp.eq.s32.totalorder %s53, 1
      %p432 = por %p430, %p431
      %p434 = scmp.ne.s32.totalorder %s419, %s433
      %p435 = scmp.eq.s32.totalorder %s53, 0
      %p436 = por %p434, %p435
      %s438 = sadd.s32 %s437, 1
      %p441 = scmp.eq.s32.totalorder %s47, 1
      %p442 = scmp.ne.s32.totalorder %s437, %s439
      %p443 = scmp.eq.s32.totalorder %s47, 0
      %p444 = por %p442, %p443
      %p445 = scmp.ne.s32.totalorder %s437, %s439
      %p446 = scmp.eq.s32.totalorder %s52, 1
      %p447 = por %p445, %p446
      %p448 = scmp.ne.s32.totalorder %s439, %s440
      %p449 = scmp.eq.s32.totalorder %s52, 0
      %p450 = por %p448, %p449
      %p451 = scmp.ne.s32.totalorder %s439, %s440
      %p452 = scmp.eq.s32.totalorder %s53, 1
      %p453 = por %p451, %p452
      %p455 = scmp.ne.s32.totalorder %s440, %s454
      %p456 = scmp.eq.s32.totalorder %s53, 0
      %p457 = por %p455, %p456
      %s459 = sadd.s32 %s458, 1
      %p462 = scmp.eq.s32.totalorder %s47, 1
      %p463 = scmp.ne.s32.totalorder %s458, %s460
      %p464 = scmp.eq.s32.totalorder %s47, 0
      %p465 = por %p463, %p464
      %p466 = scmp.ne.s32.totalorder %s458, %s460
      %p467 = scmp.eq.s32.totalorder %s52, 1
      %p468 = por %p466, %p467
      %p469 = scmp.ne.s32.totalorder %s460, %s461
      %p470 = scmp.eq.s32.totalorder %s52, 0
      %p471 = por %p469, %p470
      %p472 = scmp.ne.s32.totalorder %s460, %s461
      %p473 = scmp.eq.s32.totalorder %s53, 1
      %p474 = por %p472, %p473
      %p476 = scmp.ne.s32.totalorder %s461, %s475
      %p477 = scmp.eq.s32.totalorder %s53, 0
      %p478 = por %p476, %p477
      %s480 = sadd.s32 %s479, 1
      %p483 = scmp.eq.s32.totalorder %s47, 1
      %p484 = scmp.ne.s32.totalorder %s479, %s481
      %p485 = scmp.eq.s32.totalorder %s47, 0
      %p486 = por %p484, %p485
      %p487 = scmp.ne.s32.totalorder %s479, %s481
      %p488 = scmp.eq.s32.totalorder %s52, 1
      %p489 = por %p487, %p488
      %p490 = scmp.ne.s32.totalorder %s481, %s482
      %p491 = scmp.eq.s32.totalorder %s52, 0
      %p492 = por %p490, %p491
      %p493 = scmp.ne.s32.totalorder %s481, %s482
      %p494 = scmp.eq.s32.totalorder %s53, 1
      %p495 = por %p493, %p494
      %p497 = scmp.ne.s32.totalorder %s482, %s496
      %p498 = scmp.eq.s32.totalorder %s53, 0
      %p499 = por %p497, %p498
      %s501 = sadd.s32 %s500, 1
      %p504 = scmp.eq.s32.totalorder %s47, 1
      %p505 = scmp.ne.s32.totalorder %s500, %s502
      %p506 = scmp.eq.s32.totalorder %s47, 0
      %p507 = por %p505, %p506
      %p508 = scmp.ne.s32.totalorder %s500, %s502
      %p509 = scmp.eq.s32.totalorder %s52, 1
      %p510 = por %p508, %p509
      %p511 = scmp.ne.s32.totalorder %s502, %s503
      %p512 = scmp.eq.s32.totalorder %s52, 0
      %p513 = por %p511, %p512
      %p514 = scmp.ne.s32.totalorder %s502, %s503
      %p515 = scmp.eq.s32.totalorder %s53, 1
      %p516 = por %p514, %p515
      %p518 = scmp.ne.s32.totalorder %s503, %s517
      %p519 = scmp.eq.s32.totalorder %s53, 0
      %p520 = por %p518, %p519
      %s522 = sadd.s32 %s521, 1
      %p525 = scmp.eq.s32.totalorder %s47, 1
      %p526 = scmp.ne.s32.totalorder %s521, %s523
      %p527 = scmp.eq.s32.totalorder %s47, 0
      %p528 = por %p526, %p527
      %p529 = scmp.ne.s32.totalorder %s521, %s523
      %p530 = scmp.eq.s32.totalorder %s52, 1
      %p531 = por %p529, %p530
      %p532 = scmp.ne.s32.totalorder %s523, %s524
      %p533 = scmp.eq.s32.totalorder %s52, 0
      %p534 = por %p532, %p533
      %p535 = scmp.ne.s32.totalorder %s523, %s524
      %p536 = scmp.eq.s32.totalorder %s53, 1
      %p537 = por %p535, %p536
      %p539 = scmp.ne.s32.totalorder %s524, %s538
      %p540 = scmp.eq.s32.totalorder %s53, 0
      %p541 = por %p539, %p540
      %s543 = sadd.s32 %s542, 1
      %p546 = scmp.eq.s32.totalorder %s47, 1
      %p547 = scmp.ne.s32.totalorder %s542, %s544
      %p548 = scmp.eq.s32.totalorder %s47, 0
      %p549 = por %p547, %p548
      %p550 = scmp.ne.s32.totalorder %s542, %s544
      %p551 = scmp.eq.s32.totalorder %s52, 1
      %p552 = por %p550, %p551
      %p553 = scmp.ne.s32.totalorder %s544, %s545
      %p554 = scmp.eq.s32.totalorder %s52, 0
      %p555 = por %p553, %p554
      %p556 = scmp.ne.s32.totalorder %s544, %s545
      %p557 = scmp.eq.s32.totalorder %s53, 1
      %p558 = por %p556, %p557
      %p560 = scmp.ne.s32.totalorder %s545, %s559
      %p561 = scmp.eq.s32.totalorder %s53, 0
      %p562 = por %p560, %p561
      %s564 = sadd.s32 %s563, 1
      %p567 = scmp.eq.s32.totalorder %s47, 1
      %p568 = scmp.ne.s32.totalorder %s563, %s565
      %p569 = scmp.eq.s32.totalorder %s47, 0
      %p570 = por %p568, %p569
      %p571 = scmp.ne.s32.totalorder %s563, %s565
      %p572 = scmp.eq.s32.totalorder %s52, 1
      %p573 = por %p571, %p572
      %p574 = scmp.ne.s32.totalorder %s565, %s566
      %p575 = scmp.eq.s32.totalorder %s52, 0
      %p576 = por %p574, %p575
      %p577 = scmp.ne.s32.totalorder %s565, %s566
      %p578 = scmp.eq.s32.totalorder %s53, 1
      %p579 = por %p577, %p578
      %p581 = scmp.ne.s32.totalorder %s566, %s580
      %p582 = scmp.eq.s32.totalorder %s53, 0
      %p583 = por %p581, %p582
      %s585 = sadd.s32 %s584, 1
      %p588 = scmp.eq.s32.totalorder %s47, 1
      %p589 = scmp.ne.s32.totalorder %s584, %s586
      %p590 = scmp.eq.s32.totalorder %s47, 0
      %p591 = por %p589, %p590
      %p592 = scmp.ne.s32.totalorder %s584, %s586
      %p593 = scmp.eq.s32.totalorder %s52, 1
      %p594 = por %p592, %p593
      %p595 = scmp.ne.s32.totalorder %s586, %s587
      %p596 = scmp.eq.s32.totalorder %s52, 0
      %p597 = por %p595, %p596
      %p598 = scmp.ne.s32.totalorder %s586, %s587
      %p599 = scmp.eq.s32.totalorder %s53, 1
      %p600 = por %p598, %p599
      %p602 = scmp.ne.s32.totalorder %s587, %s601
      %p603 = scmp.eq.s32.totalorder %s53, 0
      %p604 = por %p602, %p603
      %s606 = sadd.s32 %s605, 1
      %p609 = scmp.eq.s32.totalorder %s47, 1
      %p610 = scmp.ne.s32.totalorder %s605, %s607
      %p611 = scmp.eq.s32.totalorder %s47, 0
      %p612 = por %p610, %p611
      %p613 = scmp.ne.s32.totalorder %s605, %s607
      %p614 = scmp.eq.s32.totalorder %s52, 1
      %p615 = por %p613, %p614
      %p616 = scmp.ne.s32.totalorder %s607, %s608
      %p617 = scmp.eq.s32.totalorder %s52, 0
      %p618 = por %p616, %p617
      %p619 = scmp.ne.s32.totalorder %s607, %s608
      %p620 = scmp.eq.s32.totalorder %s53, 1
      %p621 = por %p619, %p620
      %p623 = scmp.ne.s32.totalorder %s608, %s622
      %p624 = scmp.eq.s32.totalorder %s53, 0
      %p625 = por %p623, %p624
      %s627 = sadd.s32 %s626, 1
      %p630 = scmp.eq.s32.totalorder %s47, 1
      %p631 = scmp.ne.s32.totalorder %s626, %s628
      %p632 = scmp.eq.s32.totalorder %s47, 0
      %p633 = por %p631, %p632
      %p634 = scmp.ne.s32.totalorder %s626, %s628
      %p635 = scmp.eq.s32.totalorder %s52, 1
      %p636 = por %p634, %p635
      %p637 = scmp.ne.s32.totalorder %s628, %s629
      %p638 = scmp.eq.s32.totalorder %s52, 0
      %p639 = por %p637, %p638
      %p640 = scmp.ne.s32.totalorder %s628, %s629
      %p641 = scmp.eq.s32.totalorder %s53, 1
      %p642 = por %p640, %p641
      %p644 = scmp.ne.s32.totalorder %s629, %s643
      %p645 = scmp.eq.s32.totalorder %s53, 0
      %p646 = por %p644, %p645
      %s647 = ssub.s32 %s47, %s54
      %p648 = scmp.eq.s32.totalorder %s647, 0
      %s650 = sadd.s32 %s649, 1
      %s651 = scalar_select %p648, %s649, %s650
      %p654 = pneg %p648
      %p655 = scmp.eq.s32.totalorder %s47, 1
      %p656 = por %p654, %p655
      %p657 = scmp.ne.s32.totalorder %s649, %s652
      %p658 = scmp.eq.s32.totalorder %s47, 0
      %p659 = por %p657, %p658
      %p660 = scmp.ne.s32.totalorder %s649, %s652
      %p661 = scmp.eq.s32.totalorder %s52, 1
      %p662 = por %p660, %p661
      %p663 = scmp.ne.s32.totalorder %s652, %s653
      %p664 = scmp.eq.s32.totalorder %s52, 0
      %p665 = por %p663, %p664
      %p666 = scmp.ne.s32.totalorder %s652, %s653
      %p667 = scmp.eq.s32.totalorder %s53, 1
      %p668 = por %p666, %p667
      %p670 = scmp.ne.s32.totalorder %s653, %s669
      %p671 = scmp.eq.s32.totalorder %s53, 0
      %p672 = por %p670, %p671
      %p673 = scmp.le.s32.totalorder 1, %s47
      %p674 = scmp.lt.s32.totalorder %s47, 3
      %p675 = pnand %p673, %p674
      %p676 = pneg %p675
      // Predicated region
      $region9: #{tpu_custom_call.1} parent=5 // pred_check
        _
      $region10: #{tpu_custom_call.1} parent=5 // pred_check_branch
        %678 = sbr.rel (%p675) target = $region12
      $region11: #{tpu_custom_call.1} parent=5 // pred_region
        %s679 = ssub.s32 %s47, 1
        // Predicated region
        $region13: #{tpu_custom_call.1} parent=11 // pred_check
          %p680 = pneg %p198
        $region14: #{tpu_custom_call.1} parent=11 // pred_check_branch
          %682 = sbr.rel (%p680) target = $region16
        $region15: #{tpu_custom_call.1} parent=11 // pred_region
          %s684 = ssub.s32 256, 256
          %685 = vsyncadd [#allocation7], %s684
          %s686 = sshll.u32 [#allocation8], 4
          %s687 = int_to_ptr.vmem [resolvable:$true] %s686
          %692 = dma.hbm_to_vmem [thread:$0]  %s5, 256, %s687, [#allocation7], 64, 64, 4
        $region16: #{tpu_custom_call.1} parent=11 // pred_fallthru
          _
        // Predicated region
        $region17: #{tpu_custom_call.1} parent=11 // pred_check
          %p693 = pneg %p219
        $region18: #{tpu_custom_call.1} parent=11 // pred_check_branch
          %695 = sbr.rel (%p693) target = $region20
        $region19: #{tpu_custom_call.1} parent=11 // pred_region
          %s697 = ssub.s32 16, 16
          %698 = vsyncadd [#allocation10], %s697
          %s700 = sshll.u32 [#allocation9], 4
          %s701 = int_to_ptr.vmem [resolvable:$true] %s700
          %703 = dma.hbm_to_vmem [thread:$0]  %s6, 16, %s701, [#allocation10]
        $region20: #{tpu_custom_call.1} parent=11 // pred_fallthru
          _
        // Predicated region
        $region21: #{tpu_custom_call.1} parent=11 // pred_check
          %p704 = pneg %p240
        $region22: #{tpu_custom_call.1} parent=11 // pred_check_branch
          %706 = sbr.rel (%p704) target = $region24
        $region23: #{tpu_custom_call.1} parent=11 // pred_region
          %s708 = ssub.s32 256, 256
          %709 = vsyncadd [#allocation10], %s708
          %s710 = sshll.u32 [#allocation11], 4
          %s711 = int_to_ptr.vmem [resolvable:$true] %s710
          %716 = dma.hbm_to_vmem [thread:$0]  %s7, 256, %s711, [#allocation10], 64, 64, 4
        $region24: #{tpu_custom_call.1} parent=11 // pred_fallthru
          _
        // Predicated region
        $region25: #{tpu_custom_call.1} parent=11 // pred_check
          %p717 = pneg %p261
        $region26: #{tpu_custom_call.1} parent=11 // pred_check_branch
          %719 = sbr.rel (%p717) target = $region28
        $region27: #{tpu_custom_call.1} parent=11 // pred_region
          %s721 = ssub.s32 16, 16
          %722 = vsyncadd [#allocation13], %s721
          %s724 = sshll.u32 [#allocation12], 4
          %s725 = int_to_ptr.vmem [resolvable:$true] %s724
          %727 = dma.hbm_to_vmem [thread:$0]  %s8, 16, %s725, [#allocation13]
        $region28: #{tpu_custom_call.1} parent=11 // pred_fallthru
          _
        // Predicated region
        $region29: #{tpu_custom_call.1} parent=11 // pred_check
          %p728 = pneg %p282
        $region30: #{tpu_custom_call.1} parent=11 // pred_check_branch
          %730 = sbr.rel (%p728) target = $region32
        $region31: #{tpu_custom_call.1} parent=11 // pred_region
          %s732 = ssub.s32 16, 16
          %733 = vsyncadd [#allocation13], %s732
          %s735 = sshll.u32 [#allocation14], 4
          %s736 = int_to_ptr.vmem [resolvable:$true] %s735
          %738 = dma.hbm_to_vmem [thread:$0]  %s9, 16, %s736, [#allocation13]
        $region32: #{tpu_custom_call.1} parent=11 // pred_fallthru
          _
        // Predicated region
        $region33: #{tpu_custom_call.1} parent=11 // pred_check
          %p739 = pneg %p303
        $region34: #{tpu_custom_call.1} parent=11 // pred_check_branch
          %741 = sbr.rel (%p739) target = $region36
        $region35: #{tpu_custom_call.1} parent=11 // pred_region
          %s743 = ssub.s32 16, 16
          %744 = vsyncadd [#allocation16], %s743
          %s746 = sshll.u32 [#allocation15], 4
          %s747 = int_to_ptr.vmem [resolvable:$true] %s746
          %749 = dma.hbm_to_vmem [thread:$0]  %s10, 16, %s747, [#allocation16]
        $region36: #{tpu_custom_call.1} parent=11 // pred_fallthru
          _
        // Predicated region
        $region37: #{tpu_custom_call.1} parent=11 // pred_check
          %p750 = pneg %p324
        $region38: #{tpu_custom_call.1} parent=11 // pred_check_branch
          %752 = sbr.rel (%p750) target = $region40
        $region39: #{tpu_custom_call.1} parent=11 // pred_region
          _
        $region40: #{tpu_custom_call.1} parent=11 // pred_fallthru
          _
        // Predicated region
        $region41: #{tpu_custom_call.1} parent=11 // pred_check
          %p753 = pneg %p345
        $region42: #{tpu_custom_call.1} parent=11 // pred_check_branch
          %755 = sbr.rel (%p753) target = $region44
        $region43: #{tpu_custom_call.1} parent=11 // pred_region
          %s757 = ssub.s32 16, 16
          %758 = vsyncadd [#allocation16], %s757
          %s760 = sshll.u32 [#allocation17], 4
          %s761 = int_to_ptr.vmem [resolvable:$true] %s760
          %763 = dma.hbm_to_vmem [thread:$0]  %s12, 16, %s761, [#allocation16]
        $region44: #{tpu_custom_call.1} parent=11 // pred_fallthru
          _
        // Predicated region
        $region45: #{tpu_custom_call.1} parent=11 // pred_check
          %p764 = pneg %p366
        $region46: #{tpu_custom_call.1} parent=11 // pred_check_branch
          %766 = sbr.rel (%p764) target = $region48
        $region47: #{tpu_custom_call.1} parent=11 // pred_region
          _
        $region48: #{tpu_custom_call.1} parent=11 // pred_fallthru
          _
        // Predicated region
        $region49: #{tpu_custom_call.1} parent=11 // pred_check
          %p767 = pneg %p387
        $region50: #{tpu_custom_call.1} parent=11 // pred_check_branch
          %769 = sbr.rel (%p767) target = $region52
        $region51: #{tpu_custom_call.1} parent=11 // pred_region
          %s771 = ssub.s32 16, 16
          %772 = vsyncadd [#allocation19], %s771
          %s774 = sshll.u32 [#allocation18], 4
          %s775 = int_to_ptr.vmem [resolvable:$true] %s774
          %777 = dma.hbm_to_vmem [thread:$0]  %s14, 16, %s775, [#allocation19]
        $region52: #{tpu_custom_call.1} parent=11 // pred_fallthru
          _
        // Predicated region
        $region53: #{tpu_custom_call.1} parent=11 // pred_check
          %p778 = pneg %p408
        $region54: #{tpu_custom_call.1} parent=11 // pred_check_branch
          %780 = sbr.rel (%p778) target = $region56
        $region55: #{tpu_custom_call.1} parent=11 // pred_region
          %s782 = ssub.s32 256, 256
          %783 = vsyncadd [#allocation19], %s782
          %s784 = sshll.u32 [#allocation20], 4
          %s785 = int_to_ptr.vmem [resolvable:$true] %s784
          %790 = dma.hbm_to_vmem [thread:$0]  %s15, 256, %s785, [#allocation19], 64, 64, 4
        $region56: #{tpu_custom_call.1} parent=11 // pred_fallthru
          _
        // Predicated region
        $region57: #{tpu_custom_call.1} parent=11 // pred_check
          %p791 = pneg %p429
        $region58: #{tpu_custom_call.1} parent=11 // pred_check_branch
          %793 = sbr.rel (%p791) target = $region60
        $region59: #{tpu_custom_call.1} parent=11 // pred_region
          %s795 = ssub.s32 16, 16
          %796 = vsyncadd [#allocation22], %s795
          %s798 = sshll.u32 [#allocation21], 4
          %s799 = int_to_ptr.vmem [resolvable:$true] %s798
          %801 = dma.hbm_to_vmem [thread:$0]  %s16, 16, %s799, [#allocation22]
        $region60: #{tpu_custom_call.1} parent=11 // pred_fallthru
          _
        // Predicated region
        $region61: #{tpu_custom_call.1} parent=11 // pred_check
          %p802 = pneg %p450
        $region62: #{tpu_custom_call.1} parent=11 // pred_check_branch
          %804 = sbr.rel (%p802) target = $region64
        $region63: #{tpu_custom_call.1} parent=11 // pred_region
          _
        $region64: #{tpu_custom_call.1} parent=11 // pred_fallthru
          _
        // Predicated region
        $region65: #{tpu_custom_call.1} parent=11 // pred_check
          %p805 = pneg %p471
        $region66: #{tpu_custom_call.1} parent=11 // pred_check_branch
          %807 = sbr.rel (%p805) target = $region68
        $region67: #{tpu_custom_call.1} parent=11 // pred_region
          _
        $region68: #{tpu_custom_call.1} parent=11 // pred_fallthru
          _
        // Predicated region
        $region69: #{tpu_custom_call.1} parent=11 // pred_check
          %p808 = pneg %p492
        $region70: #{tpu_custom_call.1} parent=11 // pred_check_branch
          %810 = sbr.rel (%p808) target = $region72
        $region71: #{tpu_custom_call.1} parent=11 // pred_region
          _
        $region72: #{tpu_custom_call.1} parent=11 // pred_fallthru
          _
        // Predicated region
        $region73: #{tpu_custom_call.1} parent=11 // pred_check
          %p811 = pneg %p513
        $region74: #{tpu_custom_call.1} parent=11 // pred_check_branch
          %813 = sbr.rel (%p811) target = $region76
        $region75: #{tpu_custom_call.1} parent=11 // pred_region
          _
        $region76: #{tpu_custom_call.1} parent=11 // pred_fallthru
          _
        // Predicated region
        $region77: #{tpu_custom_call.1} parent=11 // pred_check
          %p814 = pneg %p534
        $region78: #{tpu_custom_call.1} parent=11 // pred_check_branch
          %816 = sbr.rel (%p814) target = $region80
        $region79: #{tpu_custom_call.1} parent=11 // pred_region
          %s818 = ssub.s32 256, 256
          %819 = vsyncadd [#allocation22], %s818
          %s820 = sshll.u32 [#allocation23], 4
          %s821 = int_to_ptr.vmem [resolvable:$true] %s820
          %826 = dma.hbm_to_vmem [thread:$0]  %s21, 256, %s821, [#allocation22], 64, 64, 4
        $region80: #{tpu_custom_call.1} parent=11 // pred_fallthru
          _
        // Predicated region
        $region81: #{tpu_custom_call.1} parent=11 // pred_check
          %p827 = pneg %p555
        $region82: #{tpu_custom_call.1} parent=11 // pred_check_branch
          %829 = sbr.rel (%p827) target = $region84
        $region83: #{tpu_custom_call.1} parent=11 // pred_region
          _
        $region84: #{tpu_custom_call.1} parent=11 // pred_fallthru
          _
        // Predicated region
        $region85: #{tpu_custom_call.1} parent=11 // pred_check
          %p830 = pneg %p576
        $region86: #{tpu_custom_call.1} parent=11 // pred_check_branch
          %832 = sbr.rel (%p830) target = $region88
        $region87: #{tpu_custom_call.1} parent=11 // pred_region
          _
        $region88: #{tpu_custom_call.1} parent=11 // pred_fallthru
          _
        // Predicated region
        $region89: #{tpu_custom_call.1} parent=11 // pred_check
          %p833 = pneg %p597
        $region90: #{tpu_custom_call.1} parent=11 // pred_check_branch
          %835 = sbr.rel (%p833) target = $region92
        $region91: #{tpu_custom_call.1} parent=11 // pred_region
          _
        $region92: #{tpu_custom_call.1} parent=11 // pred_fallthru
          _
        // Predicated region
        $region93: #{tpu_custom_call.1} parent=11 // pred_check
          %p836 = pneg %p618
        $region94: #{tpu_custom_call.1} parent=11 // pred_check_branch
          %838 = sbr.rel (%p836) target = $region96
        $region95: #{tpu_custom_call.1} parent=11 // pred_region
          _
        $region96: #{tpu_custom_call.1} parent=11 // pred_fallthru
          _
        // Predicated region
        $region97: #{tpu_custom_call.1} parent=11 // pred_check
          %p839 = pneg %p639
        $region98: #{tpu_custom_call.1} parent=11 // pred_check_branch
          %841 = sbr.rel (%p839) target = $region100
        $region99: #{tpu_custom_call.1} parent=11 // pred_region
          _
        $region100: #{tpu_custom_call.1} parent=11 // pred_fallthru
          _
      $region12: #{tpu_custom_call.1} parent=5 // pred_fallthru
        _
      %p842 = scmp.lt.s32.totalorder %s47, 2
      // Predicated region
      $region101: #{tpu_custom_call.1} parent=5 // pred_check
        %p843 = pneg %p842
      $region102: #{tpu_custom_call.1} parent=5 // pred_check_branch
        %845 = sbr.rel (%p843) target = $region104
      $region103: #{tpu_custom_call.1} parent=5 // pred_region
        // Predicated region
        $region105: #{tpu_custom_call.1} parent=103 // pred_check
          %p846 = pneg %p67
        $region106: #{tpu_custom_call.1} parent=103 // pred_check_branch
          %848 = sbr.rel (%p846) target = $region108
        $region107: #{tpu_custom_call.1} parent=103 // pred_region
          %p849 = scmp.lt.s32.totalorder %s47, 1
          %s850 = scalar_select %p849, %s47, 1
          %s851 = smul.addr %s850, 8
          %s852 = scalar_lea.vmem %s0, %s851
        $region108: #{tpu_custom_call.1} parent=103 // pred_fallthru
          _
        // Predicated region
        $region109: #{tpu_custom_call.1} parent=103 // pred_check
          %p853 = pneg %p93
        $region110: #{tpu_custom_call.1} parent=103 // pred_check_branch
          %855 = sbr.rel (%p853) target = $region112
        $region111: #{tpu_custom_call.1} parent=103 // pred_region
          %p856 = scmp.lt.s32.totalorder %s47, 1
          %s857 = scalar_select %p856, %s47, 1
          %s858 = smul.addr %s857, 2
          %s859 = smul.addr %s858, 8
          %s860 = scalar_lea.vmem %s1, %s859
        $region112: #{tpu_custom_call.1} parent=103 // pred_fallthru
          _
        // Predicated region
        $region113: #{tpu_custom_call.1} parent=103 // pred_check
          %p861 = pneg %p119
        $region114: #{tpu_custom_call.1} parent=103 // pred_check_branch
          %863 = sbr.rel (%p861) target = $region116
        $region115: #{tpu_custom_call.1} parent=103 // pred_region
          %p864 = scmp.lt.s32.totalorder %s47, 1
          %s865 = scalar_select %p864, %s47, 1
          %s866 = smul.addr %s865, 2
          %s867 = smul.addr %s866, 8
          %s868 = scalar_lea.vmem %s2, %s867
        $region116: #{tpu_custom_call.1} parent=103 // pred_fallthru
          _
        // Predicated region
        $region117: #{tpu_custom_call.1} parent=103 // pred_check
          %p869 = pneg %p145
        $region118: #{tpu_custom_call.1} parent=103 // pred_check_branch
          %871 = sbr.rel (%p869) target = $region120
        $region119: #{tpu_custom_call.1} parent=103 // pred_region
          %s872 = sand.u32 %s135, 1
          %s873 = scalar_lea.sflag [#allocation4], %s872
          %s874 = sand.u32 %s135, 1
          %s875 = smul.addr %s874, 8
          %s876 = scalar_lea.vmem [#allocation3], %s875
          %s878 = ssub.s32 128, 128
          %879 = vsyncadd %s873, %s878
          %s880 = smul.addr %s47, 128
          %s881 = scalar_lea.hbm %s3, %s880
          %s883 = sshll.u32 %s876, 4
          %s884 = int_to_ptr.vmem [resolvable:$true] %s883
          %886 = dma.hbm_to_vmem [thread:$0]  %s881, 128, %s884, %s873
        $region120: #{tpu_custom_call.1} parent=103 // pred_fallthru
          _
        // Predicated region
        $region121: #{tpu_custom_call.1} parent=103 // pred_check
          %p887 = pneg %p171
        $region122: #{tpu_custom_call.1} parent=103 // pred_check_branch
          %889 = sbr.rel (%p887) target = $region124
        $region123: #{tpu_custom_call.1} parent=103 // pred_region
          %s890 = sand.u32 %s47, 1
          %s891 = scalar_lea.sflag [#allocation7], %s890
          %s892 = sand.u32 %s161, 1
          %s893 = smul.addr %s892, 8
          %s894 = scalar_lea.vmem [#allocation6], %s893
          %s896 = ssub.s32 128, 128
          %897 = vsyncadd %s891, %s896
          %s898 = smul.addr %s47, 128
          %s899 = scalar_lea.hbm %s4, %s898
          %s901 = sshll.u32 %s894, 4
          %s902 = int_to_ptr.vmem [resolvable:$true] %s901
          %904 = dma.hbm_to_vmem [thread:$0]  %s899, 128, %s902, %s891
        $region124: #{tpu_custom_call.1} parent=103 // pred_fallthru
          _
      $region104: #{tpu_custom_call.1} parent=5 // pred_fallthru
        _
      %p905 = scmp.le.s32.totalorder 1, %s47
      %p906 = scmp.lt.s32.totalorder %s47, 3
      %p907 = pnand %p905, %p906
      %p908 = pneg %p907
      // Predicated region
      $region125: #{tpu_custom_call.1} parent=5 // pred_check
        _
      $region126: #{tpu_custom_call.1} parent=5 // pred_check_branch
        %910 = sbr.rel (%p907) target = $region128
      $region127: #{tpu_custom_call.1} parent=5 // pred_region
        %s911 = ssub.s32 %s47, 1
        %s912 = sand.u32 %s138, 1
        %s913 = scalar_lea.sflag [#allocation4], %s912
        %s914 = sand.u32 %s138, 1
        %s915 = smul.addr %s914, 8
        %s916 = scalar_lea.vmem [#allocation3], %s915
        // Predicated region
        $region129: #{tpu_custom_call.1} parent=127 // pred_check
          %p917 = pneg %p151
        $region130: #{tpu_custom_call.1} parent=127 // pred_check_branch
          %919 = sbr.rel (%p917) target = $region132
        $region131: #{tpu_custom_call.1} parent=127 // pred_region
          %920 = dma.done %s913, 128
        $region132: #{tpu_custom_call.1} parent=127 // pred_fallthru
          _
        %s921 = sand.u32 %s52, 1
        %s922 = scalar_lea.sflag [#allocation7], %s921
        %s923 = sand.u32 %s164, 1
        %s924 = smul.addr %s923, 8
        %s925 = scalar_lea.vmem [#allocation6], %s924
        // Predicated region
        $region133: #{tpu_custom_call.1} parent=127 // pred_check
          %p926 = pneg %p177
        $region134: #{tpu_custom_call.1} parent=127 // pred_check_branch
          %928 = sbr.rel (%p926) target = $region136
        $region135: #{tpu_custom_call.1} parent=127 // pred_region
          %929 = dma.done %s922, 128
        $region136: #{tpu_custom_call.1} parent=127 // pred_fallthru
          _
        // Predicated region
        $region137: #{tpu_custom_call.1} parent=127 // pred_check
          %p930 = pneg %p198
        $region138: #{tpu_custom_call.1} parent=127 // pred_check_branch
          %932 = sbr.rel (%p930) target = $region140
        $region139: #{tpu_custom_call.1} parent=127 // pred_region
          %933 = dma.done [#allocation7], 256
        $region140: #{tpu_custom_call.1} parent=127 // pred_fallthru
          _
        // Predicated region
        $region141: #{tpu_custom_call.1} parent=127 // pred_check
          %p934 = pneg %p219
        $region142: #{tpu_custom_call.1} parent=127 // pred_check_branch
          %936 = sbr.rel (%p934) target = $region144
        $region143: #{tpu_custom_call.1} parent=127 // pred_region
          %937 = dma.done [#allocation10], 16
        $region144: #{tpu_custom_call.1} parent=127 // pred_fallthru
          _
        // Predicated region
        $region145: #{tpu_custom_call.1} parent=127 // pred_check
          %p938 = pneg %p240
        $region146: #{tpu_custom_call.1} parent=127 // pred_check_branch
          %940 = sbr.rel (%p938) target = $region148
        $region147: #{tpu_custom_call.1} parent=127 // pred_region
          %941 = dma.done [#allocation10], 256
        $region148: #{tpu_custom_call.1} parent=127 // pred_fallthru
          _
        // Predicated region
        $region149: #{tpu_custom_call.1} parent=127 // pred_check
          %p942 = pneg %p261
        $region150: #{tpu_custom_call.1} parent=127 // pred_check_branch
          %944 = sbr.rel (%p942) target = $region152
        $region151: #{tpu_custom_call.1} parent=127 // pred_region
          %945 = dma.done [#allocation13], 16
        $region152: #{tpu_custom_call.1} parent=127 // pred_fallthru
          _
        // Predicated region
        $region153: #{tpu_custom_call.1} parent=127 // pred_check
          %p946 = pneg %p282
        $region154: #{tpu_custom_call.1} parent=127 // pred_check_branch
          %948 = sbr.rel (%p946) target = $region156
        $region155: #{tpu_custom_call.1} parent=127 // pred_region
          %949 = dma.done [#allocation13], 16
        $region156: #{tpu_custom_call.1} parent=127 // pred_fallthru
          _
        // Predicated region
        $region157: #{tpu_custom_call.1} parent=127 // pred_check
          %p950 = pneg %p303
        $region158: #{tpu_custom_call.1} parent=127 // pred_check_branch
          %952 = sbr.rel (%p950) target = $region160
        $region159: #{tpu_custom_call.1} parent=127 // pred_region
          %953 = dma.done [#allocation16], 16
        $region160: #{tpu_custom_call.1} parent=127 // pred_fallthru
          _
        // Predicated region
        $region161: #{tpu_custom_call.1} parent=127 // pred_check
          %p954 = pneg %p345
        $region162: #{tpu_custom_call.1} parent=127 // pred_check_branch
          %956 = sbr.rel (%p954) target = $region164
        $region163: #{tpu_custom_call.1} parent=127 // pred_region
          %957 = dma.done [#allocation16], 16
        $region164: #{tpu_custom_call.1} parent=127 // pred_fallthru
          _
        // Predicated region
        $region165: #{tpu_custom_call.1} parent=127 // pred_check
          %p958 = pneg %p387
        $region166: #{tpu_custom_call.1} parent=127 // pred_check_branch
          %960 = sbr.rel (%p958) target = $region168
        $region167: #{tpu_custom_call.1} parent=127 // pred_region
          %961 = dma.done [#allocation19], 16
        $region168: #{tpu_custom_call.1} parent=127 // pred_fallthru
          _
        // Predicated region
        $region169: #{tpu_custom_call.1} parent=127 // pred_check
          %p962 = pneg %p408
        $region170: #{tpu_custom_call.1} parent=127 // pred_check_branch
          %964 = sbr.rel (%p962) target = $region172
        $region171: #{tpu_custom_call.1} parent=127 // pred_region
          %965 = dma.done [#allocation19], 256
        $region172: #{tpu_custom_call.1} parent=127 // pred_fallthru
          _
        // Predicated region
        $region173: #{tpu_custom_call.1} parent=127 // pred_check
          %p966 = pneg %p429
        $region174: #{tpu_custom_call.1} parent=127 // pred_check_branch
          %968 = sbr.rel (%p966) target = $region176
        $region175: #{tpu_custom_call.1} parent=127 // pred_region
          %969 = dma.done [#allocation22], 16
        $region176: #{tpu_custom_call.1} parent=127 // pred_fallthru
          _
        // Predicated region
        $region177: #{tpu_custom_call.1} parent=127 // pred_check
          %p970 = pneg %p534
        $region178: #{tpu_custom_call.1} parent=127 // pred_check_branch
          %972 = sbr.rel (%p970) target = $region180
        $region179: #{tpu_custom_call.1} parent=127 // pred_region
          %973 = dma.done [#allocation22], 256
        $region180: #{tpu_custom_call.1} parent=127 // pred_fallthru
          _
        %p974 = scmp.lt.s32.totalorder %s52, 1
        %s975 = scalar_select %p974, %s52, 1
        %s976 = smul.addr %s975, 8
        %s977 = scalar_lea.vmem %s0, %s976
        %p978 = pneg %p73
        %p979 = pneg %p70
        %p980 = scmp.lt.s32.totalorder %s52, 1
        %s981 = scalar_select %p980, %s52, 1
        %s982 = smul.addr %s981, 2
        %s983 = smul.addr %s982, 8
        %s984 = scalar_lea.vmem %s1, %s983
        %p985 = pneg %p99
        %p986 = pneg %p96
        %p987 = scmp.lt.s32.totalorder %s52, 1
        %s988 = scalar_select %p987, %s52, 1
        %s989 = smul.addr %s988, 2
        %s990 = smul.addr %s989, 8
        %s991 = scalar_lea.vmem %s2, %s990
        %p992 = pneg %p125
        %p993 = pneg %p122
        %s994 = sand.u32 %s138, 1
        %s995 = scalar_lea.sflag [#allocation4], %s994
        %s996 = sand.u32 %s138, 1
        %s997 = smul.addr %s996, 8
        %s998 = scalar_lea.vmem [#allocation3], %s997
        %p999 = pneg %p151
        %p1000 = pneg %p148
        %s1001 = sand.u32 %s52, 1
        %s1002 = scalar_lea.sflag [#allocation7], %s1001
        %s1003 = sand.u32 %s164, 1
        %s1004 = smul.addr %s1003, 8
        %s1005 = scalar_lea.vmem [#allocation6], %s1004
        %p1006 = pneg %p177
        %p1007 = pneg %p174
        %p1008 = pneg %p198
        %p1009 = pneg %p195
        %p1010 = pneg %p219
        %p1011 = pneg %p216
        %p1012 = pneg %p240
        %p1013 = pneg %p237
        %p1014 = pneg %p261
        %p1015 = pneg %p258
        %p1016 = pneg %p282
        %p1017 = pneg %p279
        %p1018 = pneg %p303
        %p1019 = pneg %p300
        %p1020 = pneg %p324
        %p1021 = pneg %p321
        %p1022 = pneg %p345
        %p1023 = pneg %p342
        %p1024 = pneg %p366
        %p1025 = pneg %p363
        %p1026 = pneg %p387
        %p1027 = pneg %p384
        %p1028 = pneg %p408
        %p1029 = pneg %p405
        %p1030 = pneg %p429
        %p1031 = pneg %p426
        %p1032 = pneg %p450
        %p1033 = pneg %p447
        %p1034 = pneg %p471
        %p1035 = pneg %p468
        %p1036 = pneg %p492
        %p1037 = pneg %p489
        %p1038 = pneg %p513
        %p1039 = pneg %p510
        %p1040 = pneg %p534
        %p1041 = pneg %p531
        %p1042 = pneg %p555
        %p1043 = pneg %p552
        %p1044 = pneg %p576
        %p1045 = pneg %p573
        %p1046 = pneg %p597
        %p1047 = pneg %p594
        %p1048 = pneg %p618
        %p1049 = pneg %p615
        %p1050 = pneg %p639
        %p1051 = pneg %p636
        %p1052 = pneg %p665
        %p1053 = pneg %p662
        %s1054 = sand.u32 %s652, 1
        %s1055 = scalar_lea.sflag [#allocation5], %s1054
        %s1056 = sand.u32 %s652, 1
        %s1057 = smul.addr %s1056, 8
        %s1058 = scalar_lea.vmem [#allocation24], %s1057
        %p1059 = scmp.lt.s32.totalorder %s52, 1
        %s1060 = scalar_select %p1059, %s52, 1
        %s1061 = smul.addr %s1060, 8
        %s1062 = scalar_lea.vmem %s0, %s1061
        %p1063 = scmp.lt.s32.totalorder %s52, 1
        %s1064 = scalar_select %p1063, %s52, 1
        %s1065 = smul.addr %s1064, 2
        %s1066 = smul.addr %s1065, 8
        %s1067 = scalar_lea.vmem %s1, %s1066
        %p1068 = scmp.lt.s32.totalorder %s52, 1
        %s1069 = scalar_select %p1068, %s52, 1
        %s1070 = smul.addr %s1069, 2
        %s1071 = smul.addr %s1070, 8
        %s1072 = scalar_lea.vmem %s2, %s1071
        %v1074 = vld [vmem:[%s1062] sm:$0xff]
        %v1075 = vld [vmem:[%s1067] sm:$0xff]
        %v1076 = vld [vmem:[%s1067 + $0x8] sm:$0xff]
        %v1077 = vld [vmem:[%s1072] sm:$0xff]
        %v1078 = vld [vmem:[%s1072 + $0x8] sm:$0xff]
        %v1079 = vpack.c.bf16 %v1074, %v1074
        %v1080 = vld [vmem:[#allocation8] sm:$0xf]
        %v1081 = vld [vmem:[#allocation8 + $0x4] sm:$0xf]
        %v1082 = vld [vmem:[#allocation8 + $0x8] sm:$0xf]
        %v1083 = vld [vmem:[#allocation8 + $0xc] sm:$0xf]
        %v1084 = vld [vmem:[#allocation9] sm:$0x1]
        %v1086 = vlaneseq
        %v1087 = vshrl.u32 %v1086, 7
        %v1088 = vsub.s32 0, %v1087
        %v1089 = vrot.slane %v1084, %v1088
        %v1095 = vunpack.c.l.b16 %v1080
        %v1096 = vunpack.c.l.b16 %v1081
        %v1097 = vunpack.c.l.b16 %v1082
        %v1098 = vunpack.c.l.b16 %v1083
        %v1099 = vpack.c.b16 %v1096, %v1095
        %v1100 = vpack.c.b16 %v1098, %v1097
        %vm1103 = vcmask 261120
        %v1105 = vsel %vm1103, %v1079, 0
        %1107 = vmatprep.subr.bf16.mxu0 0
        %1108 = vmatpush1.bf16.msra.mxu0 %v1099
        %1109 = vmatprep.subr.bf16.mxu0 0
        %1110 = vmatpush1.bf16.msra.mxu0 %v1100
        %1111 = vmatprep.subr.bf16.mxu0 0
        %1112 = vmatpush1.bf16.msra.mxu0 0
        %1113 = vmatprep.subr.bf16.mxu0 0
        %1114 = vmatpush1.bf16.msra.mxu0 0
        %1115 = vmatprep.subr.bf16.mxu0 0
        %1116 = vmatpush1.bf16.msra.mxu0 0
        %1117 = vmatprep.subr.bf16.mxu0 0
        %1118 = vmatpush1.bf16.msra.mxu0 0
        %1119 = vmatprep.subr.bf16.mxu0 0
        %1120 = vmatpush1.bf16.msra.mxu0 0
        %1121 = vmatprep.subr.bf16.mxu0 0
        %1122 = vmatpush1.bf16.msra.mxu0 0
        %1123 = vmatprep.subr.bf16.mxu0 0
        %1124 = vmatpush1.bf16.msra.mxu0 0
        %1125 = vmatprep.subr.bf16.mxu0 0
        %1126 = vmatpush1.bf16.msra.mxu0 0
        %1127 = vmatprep.subr.bf16.mxu0 0
        %1128 = vmatpush1.bf16.msra.mxu0 0
        %1129 = vmatprep.subr.bf16.mxu0 0
        %1130 = vmatpush1.bf16.msra.mxu0 0
        %1131 = vmatprep.subr.bf16.mxu0 0
        %1132 = vmatpush1.bf16.msra.mxu0 0
        %1133 = vmatprep.subr.bf16.mxu0 0
        %1134 = vmatpush1.bf16.msra.mxu0 0
        %1135 = vmatprep.subr.bf16.mxu0 0
        %1136 = vmatpush1.bf16.msra.mxu0 0
        %1137 = vmatprep.subr.bf16.mxu0 0
        %1138 = vmatpush1.bf16.msra.mxu0 0
        %1139 = vmatprep.mubr.bf16.mxu0 0
        %1140 = vmatmul.mubr.bf16.gmra.mrb[0].mxu0 %v1105
        %v1141 = vpop.f32.mrb[0].mxu0
        %v1142 = vadd.f32 %v1089, %v1141
        %v1143 = vpop.f32.mrb[0].mxu0
        %v1144 = vpop.f32.mrb[0].mxu0
        %v1145 = vpop.f32.mrb[0].mxu0
        %1146 = vdwg.mxu0
        %v1147 = vpack.c.bf16 %v1142, %v1142
        %v1148 = vld [vmem:[%s916] sm:$0xff]
        %1150 = vrot.lane.b32.xlu0 %v1147, 96
        %v1151 = vpop.permute.xlu0 %1150
        %vm1152 = vcmask 64512
        %v1154 = vsel %vm1152, %v1147, 0
        %v1157 = vsel %vm1152, %v1151, 0
        %1159 = vmatprep.subr.bf16.mxu0 0
        %1160 = vmatpush1.bf16.xpose.msra.mxu0 %v1157
        %1161 = vmatprep.subr.bf16.mxu0 0
        %1162 = vmatpush1.bf16.xpose.msra.mxu0 0
        %1163 = vmatprep.subr.bf16.mxu0 0
        %1164 = vmatpush1.bf16.xpose.msra.mxu0 0
        %1165 = vmatprep.subr.bf16.mxu0 0
        %1166 = vmatpush1.bf16.xpose.msra.mxu0 0
        %1167 = vmatprep.subr.bf16.mxu0 0
        %1168 = vmatpush1.bf16.xpose.msra.mxu0 0
        %1169 = vmatprep.subr.bf16.mxu0 0
        %1170 = vmatpush1.bf16.xpose.msra.mxu0 0
        %1171 = vmatprep.subr.bf16.mxu0 0
        %1172 = vmatpush1.bf16.xpose.msra.mxu0 0
        %1173 = vmatprep.subr.bf16.mxu0 0
        %1174 = vmatpush1.bf16.xpose.msra.mxu0 0
        %1175 = vmatprep.subr.bf16.mxu0 0
        %1176 = vmatpush1.bf16.xpose.msra.mxu0 0
        %1177 = vmatprep.subr.bf16.mxu0 0
        %1178 = vmatpush1.bf16.xpose.msra.mxu0 0
        %1179 = vmatprep.subr.bf16.mxu0 0
        %1180 = vmatpush1.bf16.xpose.msra.mxu0 0
        %1181 = vmatprep.subr.bf16.mxu0 0
        %1182 = vmatpush1.bf16.xpose.msra.mxu0 0
        %1183 = vmatprep.subr.bf16.mxu0 0
        %1184 = vmatpush1.bf16.xpose.msra.mxu0 0
        %1185 = vmatprep.subr.bf16.mxu0 0
        %1186 = vmatpush1.bf16.xpose.msra.mxu0 0
        %1187 = vmatprep.subr.bf16.mxu0 0
        %1188 = vmatpush1.bf16.xpose.msra.mxu0 0
        %1189 = vmatprep.subr.bf16.mxu0 0
        %1190 = vmatpush1.bf16.xpose.msra.mxu0 0
        %1191 = vmatprep.mubr.bf16.mxu0 0
        %1192 = vmatmul.mubr.bf16.gmra.mrb[0].mxu0 %v1154
        %v1193 = vpop.f32.mrb[0].mxu0
        %v1194 = vadd.f32 0.0, %v1193
        %v1195 = vpop.f32.mrb[0].mxu0
        %v1196 = vpop.f32.mrb[0].mxu0
        %v1197 = vpop.f32.mrb[0].mxu0
        %1198 = vdwg.mxu0
        %v1199 = vmul.f32 %v1194, 0.17677669
        %v1200 = vadd.f32 %v1199, %v1148
        %v1201 = vsel %vm1152, %v1200, -inf
        %1202 = vmax.xlane.f32.xlu0 %v1201
        %v1203 = vpop.xlane.xlu0 %1202
        %v1204 = vsub.f32 %v1200, %v1203
        %v1205 = vmul.f32 %v1204, 1.442695
        %v1206 = vpow.pop %v1205
        %v1207 = vsel %vm1152, %v1206, 0.0
        %1208 = vadd.xlane.f32.xlu0 %v1207
        %v1209 = vpop.xlane.xlu0 %1208
        %v1210 = vrcp.pop %v1209
        %v1211 = vmul.f32 %v1206, %v1210
        %v1212 = vpack.c.bf16 %v1211, %v1211
        %1213 = vrot.lane.b32.xlu0 %v1147, 64
        %v1214 = vpop.permute.xlu0 %1213
        %v1216 = vsel %vm1152, %v1212, 0
        %vm1218 = vcmask 1043456
        %v1220 = vsel %vm1218, %v1214, 0
        %1222 = vmatprep.subr.bf16.mxu0 0
        %1223 = vmatpush1.bf16.msra.mxu0 %v1220
        %1224 = vmatprep.subr.bf16.mxu0 0
        %1225 = vmatpush1.bf16.msra.mxu0 0
        %1226 = vmatprep.subr.bf16.mxu0 0
        %1227 = vmatpush1.bf16.msra.mxu0 0
        %1228 = vmatprep.subr.bf16.mxu0 0
        %1229 = vmatpush1.bf16.msra.mxu0 0
        %1230 = vmatprep.subr.bf16.mxu0 0
        %1231 = vmatpush1.bf16.msra.mxu0 0
        %1232 = vmatprep.subr.bf16.mxu0 0
        %1233 = vmatpush1.bf16.msra.mxu0 0
        %1234 = vmatprep.subr.bf16.mxu0 0
        %1235 = vmatpush1.bf16.msra.mxu0 0
        %1236 = vmatprep.subr.bf16.mxu0 0
        %1237 = vmatpush1.bf16.msra.mxu0 0
        %1238 = vmatprep.subr.bf16.mxu0 0
        %1239 = vmatpush1.bf16.msra.mxu0 0
        %1240 = vmatprep.subr.bf16.mxu0 0
        %1241 = vmatpush1.bf16.msra.mxu0 0
        %1242 = vmatprep.subr.bf16.mxu0 0
        %1243 = vmatpush1.bf16.msra.mxu0 0
        %1244 = vmatprep.subr.bf16.mxu0 0
        %1245 = vmatpush1.bf16.msra.mxu0 0
        %1246 = vmatprep.subr.bf16.mxu0 0
        %1247 = vmatpush1.bf16.msra.mxu0 0
        %1248 = vmatprep.subr.bf16.mxu0 0
        %1249 = vmatpush1.bf16.msra.mxu0 0
        %1250 = vmatprep.subr.bf16.mxu0 0
        %1251 = vmatpush1.bf16.msra.mxu0 0
        %1252 = vmatprep.subr.bf16.mxu0 0
        %1253 = vmatpush1.bf16.msra.mxu0 0
        %1254 = vmatprep.mubr.bf16.mxu0 0
        %1255 = vmatmul.mubr.bf16.gmra.mrb[0].mxu0 %v1216
        %v1256 = vpop.f32.mrb[0].mxu0
        %v1257 = vadd.f32 0.0, %v1256
        %v1258 = vpop.f32.mrb[0].mxu0
        %v1259 = vpop.f32.mrb[0].mxu0
        %v1260 = vpop.f32.mrb[0].mxu0
        %1261 = vdwg.mxu0
        %1262 = vst.msk [vmem:[#allocation2] sm:$0xff] %vm1152, %v1257
        %1263 = vrot.lane.b32.xlu0 %v1147, 120
        %v1264 = vpop.permute.xlu0 %1263
        %1265 = vrot.lane.b32.xlu0 %v1147, 88
        %v1266 = vpop.permute.xlu0 %1265
        %v1268 = vsel %vm1152, %v1264, 0
        %v1271 = vsel %vm1152, %v1266, 0
        %1273 = vmatprep.subr.bf16.mxu0 0
        %1274 = vmatpush1.bf16.xpose.msra.mxu0 %v1271
        %1275 = vmatprep.subr.bf16.mxu0 0
        %1276 = vmatpush1.bf16.xpose.msra.mxu0 0
        %1277 = vmatprep.subr.bf16.mxu0 0
        %1278 = vmatpush1.bf16.xpose.msra.mxu0 0
        %1279 = vmatprep.subr.bf16.mxu0 0
        %1280 = vmatpush1.bf16.xpose.msra.mxu0 0
        %1281 = vmatprep.subr.bf16.mxu0 0
        %1282 = vmatpush1.bf16.xpose.msra.mxu0 0
        %1283 = vmatprep.subr.bf16.mxu0 0
        %1284 = vmatpush1.bf16.xpose.msra.mxu0 0
        %1285 = vmatprep.subr.bf16.mxu0 0
        %1286 = vmatpush1.bf16.xpose.msra.mxu0 0
        %1287 = vmatprep.subr.bf16.mxu0 0
        %1288 = vmatpush1.bf16.xpose.msra.mxu0 0
        %1289 = vmatprep.subr.bf16.mxu0 0
        %1290 = vmatpush1.bf16.xpose.msra.mxu0 0
        %1291 = vmatprep.subr.bf16.mxu0 0
        %1292 = vmatpush1.bf16.xpose.msra.mxu0 0
        %1293 = vmatprep.subr.bf16.mxu0 0
        %1294 = vmatpush1.bf16.xpose.msra.mxu0 0
        %1295 = vmatprep.subr.bf16.mxu0 0
        %1296 = vmatpush1.bf16.xpose.msra.mxu0 0
        %1297 = vmatprep.subr.bf16.mxu0 0
        %1298 = vmatpush1.bf16.xpose.msra.mxu0 0
        %1299 = vmatprep.subr.bf16.mxu0 0
        %1300 = vmatpush1.bf16.xpose.msra.mxu0 0
        %1301 = vmatprep.subr.bf16.mxu0 0
        %1302 = vmatpush1.bf16.xpose.msra.mxu0 0
        %1303 = vmatprep.subr.bf16.mxu0 0
        %1304 = vmatpush1.bf16.xpose.msra.mxu0 0
        %1305 = vmatprep.mubr.bf16.mxu0 0
        %1306 = vmatmul.mubr.bf16.gmra.mrb[0].mxu0 %v1268
        %v1307 = vpop.f32.mrb[0].mxu0
        %v1308 = vadd.f32 0.0, %v1307
        %v1309 = vpop.f32.mrb[0].mxu0
        %v1310 = vpop.f32.mrb[0].mxu0
        %v1311 = vpop.f32.mrb[0].mxu0
        %1312 = vdwg.mxu0
        %v1313 = vmul.f32 %v1308, 0.17677669
        %v1314 = vadd.f32 %v1313, %v1148
        %v1315 = vsel %vm1152, %v1314, -inf
        %1316 = vmax.xlane.f32.xlu0 %v1315
        %v1317 = vpop.xlane.xlu0 %1316
        %v1318 = vsub.f32 %v1314, %v1317
        %v1319 = vmul.f32 %v1318, 1.442695
        %v1320 = vpow.pop %v1319
        %v1321 = vsel %vm1152, %v1320, 0.0
        %1322 = vadd.xlane.f32.xlu0 %v1321
        %v1323 = vpop.xlane.xlu0 %1322
        %v1324 = vrcp.pop %v1323
        %v1325 = vmul.f32 %v1320, %v1324
        %v1326 = vpack.c.bf16 %v1325, %v1325
        %1327 = vrot.lane.b32.xlu0 %v1147, 56
        %v1328 = vpop.permute.xlu0 %1327
        %v1330 = vsel %vm1152, %v1326, 0
        %v1333 = vsel %vm1218, %v1328, 0
        %1335 = vmatprep.subr.bf16.mxu0 0
        %1336 = vmatpush1.bf16.msra.mxu0 %v1333
        %1337 = vmatprep.subr.bf16.mxu0 0
        %1338 = vmatpush1.bf16.msra.mxu0 0
        %1339 = vmatprep.subr.bf16.mxu0 0
        %1340 = vmatpush1.bf16.msra.mxu0 0
        %1341 = vmatprep.subr.bf16.mxu0 0
        %1342 = vmatpush1.bf16.msra.mxu0 0
        %1343 = vmatprep.subr.bf16.mxu0 0
        %1344 = vmatpush1.bf16.msra.mxu0 0
        %1345 = vmatprep.subr.bf16.mxu0 0
        %1346 = vmatpush1.bf16.msra.mxu0 0
        %1347 = vmatprep.subr.bf16.mxu0 0
        %1348 = vmatpush1.bf16.msra.mxu0 0
        %1349 = vmatprep.subr.bf16.mxu0 0
        %1350 = vmatpush1.bf16.msra.mxu0 0
        %1351 = vmatprep.subr.bf16.mxu0 0
        %1352 = vmatpush1.bf16.msra.mxu0 0
        %1353 = vmatprep.subr.bf16.mxu0 0
        %1354 = vmatpush1.bf16.msra.mxu0 0
        %1355 = vmatprep.subr.bf16.mxu0 0
        %1356 = vmatpush1.bf16.msra.mxu0 0
        %1357 = vmatprep.subr.bf16.mxu0 0
        %1358 = vmatpush1.bf16.msra.mxu0 0
        %1359 = vmatprep.subr.bf16.mxu0 0
        %1360 = vmatpush1.bf16.msra.mxu0 0
        %1361 = vmatprep.subr.bf16.mxu0 0
        %1362 = vmatpush1.bf16.msra.mxu0 0
        %1363 = vmatprep.subr.bf16.mxu0 0
        %1364 = vmatpush1.bf16.msra.mxu0 0
        %1365 = vmatprep.subr.bf16.mxu0 0
        %1366 = vmatpush1.bf16.msra.mxu0 0
        %1367 = vmatprep.mubr.bf16.mxu0 0
        %1368 = vmatmul.mubr.bf16.gmra.mrb[0].mxu0 %v1330
        %v1369 = vpop.f32.mrb[0].mxu0
        %v1370 = vadd.f32 0.0, %v1369
        %v1371 = vpop.f32.mrb[0].mxu0
        %v1372 = vpop.f32.mrb[0].mxu0
        %v1373 = vpop.f32.mrb[0].mxu0
        %1374 = vdwg.mxu0
        %1376 = vrot.lane.b32.xlu0 %v1370, 8
        %v1377 = vpop.permute.xlu0 %1376
        %vm1379 = vcmask 130112
        %1380 = vst.msk [vmem:[#allocation2] sm:$0xff] %vm1379, %v1377
        %1381 = vrot.lane.b32.xlu0 %v1147, 112
        %v1382 = vpop.permute.xlu0 %1381
        %1383 = vrot.lane.b32.xlu0 %v1147, 80
        %v1384 = vpop.permute.xlu0 %1383
        %v1386 = vsel %vm1152, %v1382, 0
        %v1389 = vsel %vm1152, %v1384, 0
        %1391 = vmatprep.subr.bf16.mxu0 0
        %1392 = vmatpush1.bf16.xpose.msra.mxu0 %v1389
        %1393 = vmatprep.subr.bf16.mxu0 0
        %1394 = vmatpush1.bf16.xpose.msra.mxu0 0
        %1395 = vmatprep.subr.bf16.mxu0 0
        %1396 = vmatpush1.bf16.xpose.msra.mxu0 0
        %1397 = vmatprep.subr.bf16.mxu0 0
        %1398 = vmatpush1.bf16.xpose.msra.mxu0 0
        %1399 = vmatprep.subr.bf16.mxu0 0
        %1400 = vmatpush1.bf16.xpose.msra.mxu0 0
        %1401 = vmatprep.subr.bf16.mxu0 0
        %1402 = vmatpush1.bf16.xpose.msra.mxu0 0
        %1403 = vmatprep.subr.bf16.mxu0 0
        %1404 = vmatpush1.bf16.xpose.msra.mxu0 0
        %1405 = vmatprep.subr.bf16.mxu0 0
        %1406 = vmatpush1.bf16.xpose.msra.mxu0 0
        %1407 = vmatprep.subr.bf16.mxu0 0
        %1408 = vmatpush1.bf16.xpose.msra.mxu0 0
        %1409 = vmatprep.subr.bf16.mxu0 0
        %1410 = vmatpush1.bf16.xpose.msra.mxu0 0
        %1411 = vmatprep.subr.bf16.mxu0 0
        %1412 = vmatpush1.bf16.xpose.msra.mxu0 0
        %1413 = vmatprep.subr.bf16.mxu0 0
        %1414 = vmatpush1.bf16.xpose.msra.mxu0 0
        %1415 = vmatprep.subr.bf16.mxu0 0
        %1416 = vmatpush1.bf16.xpose.msra.mxu0 0
        %1417 = vmatprep.subr.bf16.mxu0 0
        %1418 = vmatpush1.bf16.xpose.msra.mxu0 0
        %1419 = vmatprep.subr.bf16.mxu0 0
        %1420 = vmatpush1.bf16.xpose.msra.mxu0 0
        %1421 = vmatprep.subr.bf16.mxu0 0
        %1422 = vmatpush1.bf16.xpose.msra.mxu0 0
        %1423 = vmatprep.mubr.bf16.mxu0 0
        %1424 = vmatmul.mubr.bf16.gmra.mrb[0].mxu0 %v1386
        %v1425 = vpop.f32.mrb[0].mxu0
        %v1426 = vadd.f32 0.0, %v1425
        %v1427 = vpop.f32.mrb[0].mxu0
        %v1428 = vpop.f32.mrb[0].mxu0
        %v1429 = vpop.f32.mrb[0].mxu0
        %1430 = vdwg.mxu0
        %v1431 = vmul.f32 %v1426, 0.17677669
        %v1432 = vadd.f32 %v1431, %v1148
        %v1433 = vsel %vm1152, %v1432, -inf
        %1434 = vmax.xlane.f32.xlu0 %v1433
        %v1435 = vpop.xlane.xlu0 %1434
        %v1436 = vsub.f32 %v1432, %v1435
        %v1437 = vmul.f32 %v1436, 1.442695
        %v1438 = vpow.pop %v1437
        %v1439 = vsel %vm1152, %v1438, 0.0
        %1440 = vadd.xlane.f32.xlu0 %v1439
        %v1441 = vpop.xlane.xlu0 %1440
        %v1442 = vrcp.pop %v1441
        %v1443 = vmul.f32 %v1438, %v1442
        %v1444 = vpack.c.bf16 %v1443, %v1443
        %1445 = vrot.lane.b32.xlu0 %v1147, 48
        %v1446 = vpop.permute.xlu0 %1445
        %v1448 = vsel %vm1152, %v1444, 0
        %v1451 = vsel %vm1218, %v1446, 0
        %1453 = vmatprep.subr.bf16.mxu0 0
        %1454 = vmatpush1.bf16.msra.mxu0 %v1451
        %1455 = vmatprep.subr.bf16.mxu0 0
        %1456 = vmatpush1.bf16.msra.mxu0 0
        %1457 = vmatprep.subr.bf16.mxu0 0
        %1458 = vmatpush1.bf16.msra.mxu0 0
        %1459 = vmatprep.subr.bf16.mxu0 0
        %1460 = vmatpush1.bf16.msra.mxu0 0
        %1461 = vmatprep.subr.bf16.mxu0 0
        %1462 = vmatpush1.bf16.msra.mxu0 0
        %1463 = vmatprep.subr.bf16.mxu0 0
        %1464 = vmatpush1.bf16.msra.mxu0 0
        %1465 = vmatprep.subr.bf16.mxu0 0
        %1466 = vmatpush1.bf16.msra.mxu0 0
        %1467 = vmatprep.subr.bf16.mxu0 0
        %1468 = vmatpush1.bf16.msra.mxu0 0
        %1469 = vmatprep.subr.bf16.mxu0 0
        %1470 = vmatpush1.bf16.msra.mxu0 0
        %1471 = vmatprep.subr.bf16.mxu0 0
        %1472 = vmatpush1.bf16.msra.mxu0 0
        %1473 = vmatprep.subr.bf16.mxu0 0
        %1474 = vmatpush1.bf16.msra.mxu0 0
        %1475 = vmatprep.subr.bf16.mxu0 0
        %1476 = vmatpush1.bf16.msra.mxu0 0
        %1477 = vmatprep.subr.bf16.mxu0 0
        %1478 = vmatpush1.bf16.msra.mxu0 0
        %1479 = vmatprep.subr.bf16.mxu0 0
        %1480 = vmatpush1.bf16.msra.mxu0 0
        %1481 = vmatprep.subr.bf16.mxu0 0
        %1482 = vmatpush1.bf16.msra.mxu0 0
        %1483 = vmatprep.subr.bf16.mxu0 0
        %1484 = vmatpush1.bf16.msra.mxu0 0
        %1485 = vmatprep.mubr.bf16.mxu0 0
        %1486 = vmatmul.mubr.bf16.gmra.mrb[0].mxu0 %v1448
        %v1487 = vpop.f32.mrb[0].mxu0
        %v1488 = vadd.f32 0.0, %v1487
        %v1489 = vpop.f32.mrb[0].mxu0
        %v1490 = vpop.f32.mrb[0].mxu0
        %v1491 = vpop.f32.mrb[0].mxu0
        %1492 = vdwg.mxu0
        %1494 = vrot.lane.b32.xlu0 %v1488, 16
        %v1495 = vpop.permute.xlu0 %1494
        %vm1497 = vcmask 195712
        %1498 = vst.msk [vmem:[#allocation2] sm:$0xff] %vm1497, %v1495
        %1499 = vrot.lane.b32.xlu0 %v1147, 104
        %v1500 = vpop.permute.xlu0 %1499
        %1501 = vrot.lane.b32.xlu0 %v1147, 72
        %v1502 = vpop.permute.xlu0 %1501
        %v1504 = vsel %vm1152, %v1500, 0
        %v1507 = vsel %vm1152, %v1502, 0
        %1509 = vmatprep.subr.bf16.mxu0 0
        %1510 = vmatpush1.bf16.xpose.msra.mxu0 %v1507
        %1511 = vmatprep.subr.bf16.mxu0 0
        %1512 = vmatpush1.bf16.xpose.msra.mxu0 0
        %1513 = vmatprep.subr.bf16.mxu0 0
        %1514 = vmatpush1.bf16.xpose.msra.mxu0 0
        %1515 = vmatprep.subr.bf16.mxu0 0
        %1516 = vmatpush1.bf16.xpose.msra.mxu0 0
        %1517 = vmatprep.subr.bf16.mxu0 0
        %1518 = vmatpush1.bf16.xpose.msra.mxu0 0
        %1519 = vmatprep.subr.bf16.mxu0 0
        %1520 = vmatpush1.bf16.xpose.msra.mxu0 0
        %1521 = vmatprep.subr.bf16.mxu0 0
        %1522 = vmatpush1.bf16.xpose.msra.mxu0 0
        %1523 = vmatprep.subr.bf16.mxu0 0
        %1524 = vmatpush1.bf16.xpose.msra.mxu0 0
        %1525 = vmatprep.subr.bf16.mxu0 0
        %1526 = vmatpush1.bf16.xpose.msra.mxu0 0
        %1527 = vmatprep.subr.bf16.mxu0 0
        %1528 = vmatpush1.bf16.xpose.msra.mxu0 0
        %1529 = vmatprep.subr.bf16.mxu0 0
        %1530 = vmatpush1.bf16.xpose.msra.mxu0 0
        %1531 = vmatprep.subr.bf16.mxu0 0
        %1532 = vmatpush1.bf16.xpose.msra.mxu0 0
        %1533 = vmatprep.subr.bf16.mxu0 0
        %1534 = vmatpush1.bf16.xpose.msra.mxu0 0
        %1535 = vmatprep.subr.bf16.mxu0 0
        %1536 = vmatpush1.bf16.xpose.msra.mxu0 0
        %1537 = vmatprep.subr.bf16.mxu0 0
        %1538 = vmatpush1.bf16.xpose.msra.mxu0 0
        %1539 = vmatprep.subr.bf16.mxu0 0
        %1540 = vmatpush1.bf16.xpose.msra.mxu0 0
        %1541 = vmatprep.mubr.bf16.mxu0 0
        %1542 = vmatmul.mubr.bf16.gmra.mrb[0].mxu0 %v1504
        %v1543 = vpop.f32.mrb[0].mxu0
        %v1544 = vadd.f32 0.0, %v1543
        %v1545 = vpop.f32.mrb[0].mxu0
        %v1546 = vpop.f32.mrb[0].mxu0
        %v1547 = vpop.f32.mrb[0].mxu0
        %1548 = vdwg.mxu0
        %v1549 = vmul.f32 %v1544, 0.17677669
        %v1550 = vadd.f32 %v1549, %v1148
        %v1551 = vsel %vm1152, %v1550, -inf
        %1552 = vmax.xlane.f32.xlu0 %v1551
        %v1553 = vpop.xlane.xlu0 %1552
        %v1554 = vsub.f32 %v1550, %v1553
        %v1555 = vmul.f32 %v1554, 1.442695
        %v1556 = vpow.pop %v1555
        %v1557 = vsel %vm1152, %v1556, 0.0
        %1558 = vadd.xlane.f32.xlu0 %v1557
        %v1559 = vpop.xlane.xlu0 %1558
        %v1560 = vrcp.pop %v1559
        %v1561 = vmul.f32 %v1556, %v1560
        %v1562 = vpack.c.bf16 %v1561, %v1561
        %1563 = vrot.lane.b32.xlu0 %v1147, 40
        %v1564 = vpop.permute.xlu0 %1563
        %v1566 = vsel %vm1152, %v1562, 0
        %v1569 = vsel %vm1218, %v1564, 0
        %1571 = vmatprep.subr.bf16.mxu0 0
        %1572 = vmatpush1.bf16.msra.mxu0 %v1569
        %1573 = vmatprep.subr.bf16.mxu0 0
        %1574 = vmatpush1.bf16.msra.mxu0 0
        %1575 = vmatprep.subr.bf16.mxu0 0
        %1576 = vmatpush1.bf16.msra.mxu0 0
        %1577 = vmatprep.subr.bf16.mxu0 0
        %1578 = vmatpush1.bf16.msra.mxu0 0
        %1579 = vmatprep.subr.bf16.mxu0 0
        %1580 = vmatpush1.bf16.msra.mxu0 0
        %1581 = vmatprep.subr.bf16.mxu0 0
        %1582 = vmatpush1.bf16.msra.mxu0 0
        %1583 = vmatprep.subr.bf16.mxu0 0
        %1584 = vmatpush1.bf16.msra.mxu0 0
        %1585 = vmatprep.subr.bf16.mxu0 0
        %1586 = vmatpush1.bf16.msra.mxu0 0
        %1587 = vmatprep.subr.bf16.mxu0 0
        %1588 = vmatpush1.bf16.msra.mxu0 0
        %1589 = vmatprep.subr.bf16.mxu0 0
        %1590 = vmatpush1.bf16.msra.mxu0 0
        %1591 = vmatprep.subr.bf16.mxu0 0
        %1592 = vmatpush1.bf16.msra.mxu0 0
        %1593 = vmatprep.subr.bf16.mxu0 0
        %1594 = vmatpush1.bf16.msra.mxu0 0
        %1595 = vmatprep.subr.bf16.mxu0 0
        %1596 = vmatpush1.bf16.msra.mxu0 0
        %1597 = vmatprep.subr.bf16.mxu0 0
        %1598 = vmatpush1.bf16.msra.mxu0 0
        %1599 = vmatprep.subr.bf16.mxu0 0
        %1600 = vmatpush1.bf16.msra.mxu0 0
        %1601 = vmatprep.subr.bf16.mxu0 0
        %1602 = vmatpush1.bf16.msra.mxu0 0
        %1603 = vmatprep.mubr.bf16.mxu0 0
        %1604 = vmatmul.mubr.bf16.gmra.mrb[0].mxu0 %v1566
        %v1605 = vpop.f32.mrb[0].mxu0
        %v1606 = vadd.f32 0.0, %v1605
        %v1607 = vpop.f32.mrb[0].mxu0
        %v1608 = vpop.f32.mrb[0].mxu0
        %v1609 = vpop.f32.mrb[0].mxu0
        %1610 = vdwg.mxu0
        %1612 = vrot.lane.b32.xlu0 %v1606, 24
        %v1613 = vpop.permute.xlu0 %1612
        %vm1615 = vcmask 261312
        %1616 = vst.msk [vmem:[#allocation2] sm:$0xff] %vm1615, %v1613
        %v1617 = vld [vmem:[#allocation2] sm:$0xff]
        %v1618 = vpack.c.bf16 %v1617, %v1617
        %v1619 = vld [vmem:[#allocation11] sm:$0xf]
        %v1620 = vld [vmem:[#allocation11 + $0x4] sm:$0xf]
        %v1621 = vld [vmem:[#allocation11 + $0x8] sm:$0xf]
        %v1622 = vld [vmem:[#allocation11 + $0xc] sm:$0xf]
        %v1623 = vld [vmem:[#allocation12] sm:$0x1]
        %v1625 = vlaneseq
        %v1626 = vshrl.u32 %v1625, 7
        %v1627 = vsub.s32 0, %v1626
        %v1628 = vrot.slane %v1623, %v1627
        %v1634 = vunpack.c.l.b16 %v1619
        %v1635 = vunpack.c.l.b16 %v1620
        %v1636 = vunpack.c.l.b16 %v1621
        %v1637 = vunpack.c.l.b16 %v1622
        %v1638 = vpack.c.b16 %v1635, %v1634
        %v1639 = vpack.c.b16 %v1637, %v1636
        %v1643 = vsel %vm1103, %v1618, 0
        %1645 = vmatprep.subr.bf16.mxu0 0
        %1646 = vmatpush1.bf16.msra.mxu0 %v1638
        %1647 = vmatprep.subr.bf16.mxu0 0
        %1648 = vmatpush1.bf16.msra.mxu0 %v1639
        %1649 = vmatprep.subr.bf16.mxu0 0
        %1650 = vmatpush1.bf16.msra.mxu0 0
        %1651 = vmatprep.subr.bf16.mxu0 0
        %1652 = vmatpush1.bf16.msra.mxu0 0
        %1653 = vmatprep.subr.bf16.mxu0 0
        %1654 = vmatpush1.bf16.msra.mxu0 0
        %1655 = vmatprep.subr.bf16.mxu0 0
        %1656 = vmatpush1.bf16.msra.mxu0 0
        %1657 = vmatprep.subr.bf16.mxu0 0
        %1658 = vmatpush1.bf16.msra.mxu0 0
        %1659 = vmatprep.subr.bf16.mxu0 0
        %1660 = vmatpush1.bf16.msra.mxu0 0
        %1661 = vmatprep.subr.bf16.mxu0 0
        %1662 = vmatpush1.bf16.msra.mxu0 0
        %1663 = vmatprep.subr.bf16.mxu0 0
        %1664 = vmatpush1.bf16.msra.mxu0 0
        %1665 = vmatprep.subr.bf16.mxu0 0
        %1666 = vmatpush1.bf16.msra.mxu0 0
        %1667 = vmatprep.subr.bf16.mxu0 0
        %1668 = vmatpush1.bf16.msra.mxu0 0
        %1669 = vmatprep.subr.bf16.mxu0 0
        %1670 = vmatpush1.bf16.msra.mxu0 0
        %1671 = vmatprep.subr.bf16.mxu0 0
        %1672 = vmatpush1.bf16.msra.mxu0 0
        %1673 = vmatprep.subr.bf16.mxu0 0
        %1674 = vmatpush1.bf16.msra.mxu0 0
        %1675 = vmatprep.subr.bf16.mxu0 0
        %1676 = vmatpush1.bf16.msra.mxu0 0
        %1677 = vmatprep.mubr.bf16.mxu0 0
        %1678 = vmatmul.mubr.bf16.gmra.mrb[0].mxu0 %v1643
        %v1679 = vpop.f32.mrb[0].mxu0
        %v1680 = vadd.f32 %v1628, %v1679
        %v1681 = vpop.f32.mrb[0].mxu0
        %v1682 = vpop.f32.mrb[0].mxu0
        %v1683 = vpop.f32.mrb[0].mxu0
        %1684 = vdwg.mxu0
        %v1685 = vadd.f32 %v1680, %v1074
        %v1686 = vsel %vm1103, %v1685, 0.0
        %1687 = vadd.xlane.f32.xlu0 %v1686
        %v1688 = vpop.xlane.xlu0 %1687
        %v1689 = vrcp.pop 32.0
        %v1690 = vmul.f32 %v1688, %v1689
        %v1691 = vsub.f32 %v1685, %v1690
        %v1692 = vmul.f32 %v1691, %v1691
        %v1693 = vsel %vm1103, %v1692, 0.0
        %1694 = vadd.xlane.f32.xlu0 %v1693
        %v1695 = vpop.xlane.xlu0 %1694
        %v1696 = vmul.f32 %v1695, %v1689
        %v1697 = vadd.f32 %v1696, 1e-05
        %v1698 = vrsqrt.pop %v1697
        %v1699 = vmul.f32 %v1691, %v1698
        %v1700 = vld [vmem:[#allocation14] sm:$0x1]
        %v1702 = vlaneseq
        %v1703 = vshrl.u32 %v1702, 7
        %v1704 = vsub.s32 0, %v1703
        %v1705 = vrot.slane %v1700, %v1704
        %v1707 = vmul.f32 %v1699, %v1705
        %v1708 = vld [vmem:[#allocation15] sm:$0x1]
        %v1710 = vlaneseq
        %v1711 = vshrl.u32 %v1710, 7
        %v1712 = vsub.s32 0, %v1711
        %v1713 = vrot.slane %v1708, %v1712
        %v1715 = vadd.f32 %v1707, %v1713
        %v1716 = vpack.c.bf16 %v1715, %v1715
        %v1717 = vld [vmem:[%s11] sm:$0xf]
        %v1718 = vld [vmem:[%s11 + $0x4] sm:$0xf]
        %v1719 = vld [vmem:[%s11 + $0x8] sm:$0xf]
        %v1720 = vld [vmem:[%s11 + $0xc] sm:$0xf]
        %v1721 = vld [vmem:[#allocation17] sm:$0x1]
        %v1723 = vlaneseq
        %v1724 = vshrl.u32 %v1723, 7
        %v1725 = vsub.s32 0, %v1724
        %v1726 = vrot.slane %v1721, %v1725
        %v1732 = vunpack.c.l.b16 %v1717
        %v1733 = vunpack.c.l.b16 %v1718
        %v1734 = vunpack.c.l.b16 %v1719
        %v1735 = vunpack.c.l.b16 %v1720
        %v1736 = vpack.c.b16 %v1733, %v1732
        %v1737 = vpack.c.b16 %v1735, %v1734
        %v1741 = vsel %vm1103, %v1716, 0
        %1743 = vmatprep.subr.bf16.mxu0 0
        %1744 = vmatpush1.bf16.msra.mxu0 %v1736
        %1745 = vmatprep.subr.bf16.mxu0 0
        %1746 = vmatpush1.bf16.msra.mxu0 %v1737
        %1747 = vmatprep.subr.bf16.mxu0 0
        %1748 = vmatpush1.bf16.msra.mxu0 0
        %1749 = vmatprep.subr.bf16.mxu0 0
        %1750 = vmatpush1.bf16.msra.mxu0 0
        %1751 = vmatprep.subr.bf16.mxu0 0
        %1752 = vmatpush1.bf16.msra.mxu0 0
        %1753 = vmatprep.subr.bf16.mxu0 0
        %1754 = vmatpush1.bf16.msra.mxu0 0
        %1755 = vmatprep.subr.bf16.mxu0 0
        %1756 = vmatpush1.bf16.msra.mxu0 0
        %1757 = vmatprep.subr.bf16.mxu0 0
        %1758 = vmatpush1.bf16.msra.mxu0 0
        %1759 = vmatprep.subr.bf16.mxu0 0
        %1760 = vmatpush1.bf16.msra.mxu0 0
        %1761 = vmatprep.subr.bf16.mxu0 0
        %1762 = vmatpush1.bf16.msra.mxu0 0
        %1763 = vmatprep.subr.bf16.mxu0 0
        %1764 = vmatpush1.bf16.msra.mxu0 0
        %1765 = vmatprep.subr.bf16.mxu0 0
        %1766 = vmatpush1.bf16.msra.mxu0 0
        %1767 = vmatprep.subr.bf16.mxu0 0
        %1768 = vmatpush1.bf16.msra.mxu0 0
        %1769 = vmatprep.subr.bf16.mxu0 0
        %1770 = vmatpush1.bf16.msra.mxu0 0
        %1771 = vmatprep.subr.bf16.mxu0 0
        %1772 = vmatpush1.bf16.msra.mxu0 0
        %1773 = vmatprep.subr.bf16.mxu0 0
        %1774 = vmatpush1.bf16.msra.mxu0 0
        %1775 = vmatprep.mubr.bf16.mxu0 0
        %1776 = vmatmul.mubr.bf16.gmra.mrb[0].mxu0 %v1741
        %v1777 = vpop.f32.mrb[0].mxu0
        %v1778 = vadd.f32 %v1726, %v1777
        %v1779 = vpop.f32.mrb[0].mxu0
        %v1780 = vpop.f32.mrb[0].mxu0
        %v1781 = vpop.f32.mrb[0].mxu0
        %1782 = vdwg.mxu0
        %v1783 = vpack.c.bf16 %v1076, %v1075
        %v1784 = vld [vmem:[%s13] sm:$0xf]
        %v1785 = vld [vmem:[%s13 + $0x4] sm:$0xf]
        %v1786 = vld [vmem:[%s13 + $0x8] sm:$0xf]
        %v1787 = vld [vmem:[%s13 + $0xc] sm:$0xf]
        %v1788 = vld [vmem:[#allocation18] sm:$0x1]
        %v1790 = vlaneseq
        %v1791 = vshrl.u32 %v1790, 7
        %v1792 = vsub.s32 0, %v1791
        %v1793 = vrot.slane %v1788, %v1792
        %v1799 = vunpack.c.l.b16 %v1784
        %v1800 = vunpack.c.l.b16 %v1785
        %v1801 = vunpack.c.l.b16 %v1786
        %v1802 = vunpack.c.l.b16 %v1787
        %v1803 = vpack.c.b16 %v1800, %v1799
        %v1804 = vpack.c.b16 %v1802, %v1801
        %v1808 = vsel %vm1103, %v1783, 0
        %1810 = vmatprep.subr.bf16.mxu0 0
        %1811 = vmatpush1.bf16.msra.mxu0 %v1803
        %1812 = vmatprep.subr.bf16.mxu0 0
        %1813 = vmatpush1.bf16.msra.mxu0 %v1804
        %1814 = vmatprep.subr.bf16.mxu0 0
        %1815 = vmatpush1.bf16.msra.mxu0 0
        %1816 = vmatprep.subr.bf16.mxu0 0
        %1817 = vmatpush1.bf16.msra.mxu0 0
        %1818 = vmatprep.subr.bf16.mxu0 0
        %1819 = vmatpush1.bf16.msra.mxu0 0
        %1820 = vmatprep.subr.bf16.mxu0 0
        %1821 = vmatpush1.bf16.msra.mxu0 0
        %1822 = vmatprep.subr.bf16.mxu0 0
        %1823 = vmatpush1.bf16.msra.mxu0 0
        %1824 = vmatprep.subr.bf16.mxu0 0
        %1825 = vmatpush1.bf16.msra.mxu0 0
        %1826 = vmatprep.subr.bf16.mxu0 0
        %1827 = vmatpush1.bf16.msra.mxu0 0
        %1828 = vmatprep.subr.bf16.mxu0 0
        %1829 = vmatpush1.bf16.msra.mxu0 0
        %1830 = vmatprep.subr.bf16.mxu0 0
        %1831 = vmatpush1.bf16.msra.mxu0 0
        %1832 = vmatprep.subr.bf16.mxu0 0
        %1833 = vmatpush1.bf16.msra.mxu0 0
        %1834 = vmatprep.subr.bf16.mxu0 0
        %1835 = vmatpush1.bf16.msra.mxu0 0
        %1836 = vmatprep.subr.bf16.mxu0 0
        %1837 = vmatpush1.bf16.msra.mxu0 0
        %1838 = vmatprep.subr.bf16.mxu0 0
        %1839 = vmatpush1.bf16.msra.mxu0 0
        %1840 = vmatprep.subr.bf16.mxu0 0
        %1841 = vmatpush1.bf16.msra.mxu0 0
        %1842 = vmatprep.mubr.bf16.mxu0 0
        %1843 = vmatmul.mubr.bf16.gmra.mrb[0].mxu0 %v1808
        %v1844 = vpop.f32.mrb[0].mxu0
        %v1845 = vadd.f32 %v1793, %v1844
        %v1846 = vpop.f32.mrb[0].mxu0
        %v1847 = vpop.f32.mrb[0].mxu0
        %v1848 = vadd.f32 %v1793, %v1847
        %v1849 = vpop.f32.mrb[0].mxu0
        %1850 = vdwg.mxu0
        %v1851 = vpack.c.bf16 %v1078, %v1077
        %v1852 = vld [vmem:[#allocation20] sm:$0xf]
        %v1853 = vld [vmem:[#allocation20 + $0x4] sm:$0xf]
        %v1854 = vld [vmem:[#allocation20 + $0x8] sm:$0xf]
        %v1855 = vld [vmem:[#allocation20 + $0xc] sm:$0xf]
        %v1856 = vld [vmem:[#allocation21] sm:$0x1]
        %v1858 = vlaneseq
        %v1859 = vshrl.u32 %v1858, 7
        %v1860 = vsub.s32 0, %v1859
        %v1861 = vrot.slane %v1856, %v1860
        %v1867 = vunpack.c.l.b16 %v1852
        %v1868 = vunpack.c.l.b16 %v1853
        %v1869 = vunpack.c.l.b16 %v1854
        %v1870 = vunpack.c.l.b16 %v1855
        %v1871 = vpack.c.b16 %v1868, %v1867
        %v1872 = vpack.c.b16 %v1870, %v1869
        %v1876 = vsel %vm1103, %v1851, 0
        %1878 = vmatprep.subr.bf16.mxu0 0
        %1879 = vmatpush1.bf16.msra.mxu0 %v1871
        %1880 = vmatprep.subr.bf16.mxu0 0
        %1881 = vmatpush1.bf16.msra.mxu0 %v1872
        %1882 = vmatprep.subr.bf16.mxu0 0
        %1883 = vmatpush1.bf16.msra.mxu0 0
        %1884 = vmatprep.subr.bf16.mxu0 0
        %1885 = vmatpush1.bf16.msra.mxu0 0
        %1886 = vmatprep.subr.bf16.mxu0 0
        %1887 = vmatpush1.bf16.msra.mxu0 0
        %1888 = vmatprep.subr.bf16.mxu0 0
        %1889 = vmatpush1.bf16.msra.mxu0 0
        %1890 = vmatprep.subr.bf16.mxu0 0
        %1891 = vmatpush1.bf16.msra.mxu0 0
        %1892 = vmatprep.subr.bf16.mxu0 0
        %1893 = vmatpush1.bf16.msra.mxu0 0
        %1894 = vmatprep.subr.bf16.mxu0 0
        %1895 = vmatpush1.bf16.msra.mxu0 0
        %1896 = vmatprep.subr.bf16.mxu0 0
        %1897 = vmatpush1.bf16.msra.mxu0 0
        %1898 = vmatprep.subr.bf16.mxu0 0
        %1899 = vmatpush1.bf16.msra.mxu0 0
        %1900 = vmatprep.subr.bf16.mxu0 0
        %1901 = vmatpush1.bf16.msra.mxu0 0
        %1902 = vmatprep.subr.bf16.mxu0 0
        %1903 = vmatpush1.bf16.msra.mxu0 0
        %1904 = vmatprep.subr.bf16.mxu0 0
        %1905 = vmatpush1.bf16.msra.mxu0 0
        %1906 = vmatprep.subr.bf16.mxu0 0
        %1907 = vmatpush1.bf16.msra.mxu0 0
        %1908 = vmatprep.subr.bf16.mxu0 0
        %1909 = vmatpush1.bf16.msra.mxu0 0
        %1910 = vmatprep.mubr.bf16.mxu0 0
        %1911 = vmatmul.mubr.bf16.gmra.mrb[0].mxu0 %v1876
        %v1912 = vpop.f32.mrb[0].mxu0
        %v1913 = vadd.f32 %v1861, %v1912
        %v1914 = vpop.f32.mrb[0].mxu0
        %v1915 = vpop.f32.mrb[0].mxu0
        %v1916 = vadd.f32 %v1861, %v1915
        %v1917 = vpop.f32.mrb[0].mxu0
        %1918 = vdwg.mxu0
        %v1919 = vpack.c.bf16 %v1778, %v1778
        %v1920 = vpack.c.bf16 %v1848, %v1845
        %v1921 = vpack.c.bf16 %v1916, %v1913
        %v1922 = vld [vmem:[%s925] sm:$0xff]
        %v1924 = vsel %vm1152, %v1919, 0
        %v1927 = vsel %vm1152, %v1920, 0
        %1929 = vmatprep.subr.bf16.mxu0 0
        %1930 = vmatpush1.bf16.xpose.msra.mxu0 %v1927
        %1931 = vmatprep.subr.bf16.mxu0 0
        %1932 = vmatpush1.bf16.xpose.msra.mxu0 0
        %1933 = vmatprep.subr.bf16.mxu0 0
        %1934 = vmatpush1.bf16.xpose.msra.mxu0 0
        %1935 = vmatprep.subr.bf16.mxu0 0
        %1936 = vmatpush1.bf16.xpose.msra.mxu0 0
        %1937 = vmatprep.subr.bf16.mxu0 0
        %1938 = vmatpush1.bf16.xpose.msra.mxu0 0
        %1939 = vmatprep.subr.bf16.mxu0 0
        %1940 = vmatpush1.bf16.xpose.msra.mxu0 0
        %1941 = vmatprep.subr.bf16.mxu0 0
        %1942 = vmatpush1.bf16.xpose.msra.mxu0 0
        %1943 = vmatprep.subr.bf16.mxu0 0
        %1944 = vmatpush1.bf16.xpose.msra.mxu0 0
        %1945 = vmatprep.subr.bf16.mxu0 0
        %1946 = vmatpush1.bf16.xpose.msra.mxu0 0
        %1947 = vmatprep.subr.bf16.mxu0 0
        %1948 = vmatpush1.bf16.xpose.msra.mxu0 0
        %1949 = vmatprep.subr.bf16.mxu0 0
        %1950 = vmatpush1.bf16.xpose.msra.mxu0 0
        %1951 = vmatprep.subr.bf16.mxu0 0
        %1952 = vmatpush1.bf16.xpose.msra.mxu0 0
        %1953 = vmatprep.subr.bf16.mxu0 0
        %1954 = vmatpush1.bf16.xpose.msra.mxu0 0
        %1955 = vmatprep.subr.bf16.mxu0 0
        %1956 = vmatpush1.bf16.xpose.msra.mxu0 0
        %1957 = vmatprep.subr.bf16.mxu0 0
        %1958 = vmatpush1.bf16.xpose.msra.mxu0 0
        %1959 = vmatprep.subr.bf16.mxu0 0
        %1960 = vmatpush1.bf16.xpose.msra.mxu0 0
        %1961 = vmatprep.mubr.bf16.mxu0 0
        %1962 = vmatmul.mubr.bf16.gmra.mrb[0].mxu0 %v1924
        %v1963 = vpop.f32.mrb[0].mxu0
        %v1964 = vadd.f32 0.0, %v1963
        %v1965 = vpop.f32.mrb[0].mxu0
        %v1966 = vpop.f32.mrb[0].mxu0
        %v1967 = vpop.f32.mrb[0].mxu0
        %1968 = vdwg.mxu0
        %v1969 = vmul.f32 %v1964, 0.17677669
        %v1970 = vadd.f32 %v1969, %v1922
        %vm1971 = vcmask 130048
        %v1972 = vsel %vm1971, %v1970, -inf
        %1973 = vmax.xlane.f32.xlu0 %v1972
        %v1974 = vpop.xlane.xlu0 %1973
        %v1975 = vsub.f32 %v1970, %v1974
        %v1976 = vmul.f32 %v1975, 1.442695
        %v1977 = vpow.pop %v1976
        %v1978 = vsel %vm1971, %v1977, 0.0
        %1979 = vadd.xlane.f32.xlu0 %v1978
        %v1980 = vpop.xlane.xlu0 %1979
        %v1981 = vrcp.pop %v1980
        %v1982 = vmul.f32 %v1977, %v1981
        %v1983 = vpack.c.bf16 %v1982, %v1982
        %v1985 = vsel %vm1971, %v1983, 0
        %1987 = vmatprep.subr.bf16.mxu0 0
        %1988 = vmatpush1.bf16.msra.mxu0 %v1921
        %1989 = vmatprep.subr.bf16.mxu0 0
        %1990 = vmatpush1.bf16.msra.mxu0 0
        %1991 = vmatprep.subr.bf16.mxu0 0
        %1992 = vmatpush1.bf16.msra.mxu0 0
        %1993 = vmatprep.subr.bf16.mxu0 0
        %1994 = vmatpush1.bf16.msra.mxu0 0
        %1995 = vmatprep.subr.bf16.mxu0 0
        %1996 = vmatpush1.bf16.msra.mxu0 0
        %1997 = vmatprep.subr.bf16.mxu0 0
        %1998 = vmatpush1.bf16.msra.mxu0 0
        %1999 = vmatprep.subr.bf16.mxu0 0
        %2000 = vmatpush1.bf16.msra.mxu0 0
        %2001 = vmatprep.subr.bf16.mxu0 0
        %2002 = vmatpush1.bf16.msra.mxu0 0
        %2003 = vmatprep.subr.bf16.mxu0 0
        %2004 = vmatpush1.bf16.msra.mxu0 0
        %2005 = vmatprep.subr.bf16.mxu0 0
        %2006 = vmatpush1.bf16.msra.mxu0 0
        %2007 = vmatprep.subr.bf16.mxu0 0
        %2008 = vmatpush1.bf16.msra.mxu0 0
        %2009 = vmatprep.subr.bf16.mxu0 0
        %2010 = vmatpush1.bf16.msra.mxu0 0
        %2011 = vmatprep.subr.bf16.mxu0 0
        %2012 = vmatpush1.bf16.msra.mxu0 0
        %2013 = vmatprep.subr.bf16.mxu0 0
        %2014 = vmatpush1.bf16.msra.mxu0 0
        %2015 = vmatprep.subr.bf16.mxu0 0
        %2016 = vmatpush1.bf16.msra.mxu0 0
        %2017 = vmatprep.subr.bf16.mxu0 0
        %2018 = vmatpush1.bf16.msra.mxu0 0
        %2019 = vmatprep.mubr.bf16.mxu0 0
        %2020 = vmatmul.mubr.bf16.gmra.mrb[0].mxu0 %v1985
        %v2021 = vpop.f32.mrb[0].mxu0
        %v2022 = vadd.f32 0.0, %v2021
        %v2023 = vpop.f32.mrb[0].mxu0
        %v2024 = vpop.f32.mrb[0].mxu0
        %v2025 = vpop.f32.mrb[0].mxu0
        %2026 = vdwg.mxu0
        %2027 = vst.msk [vmem:[#allocation2] sm:$0xff] %vm1152, %v2022
        %2029 = vrot.lane.b32.xlu0 %v1919, 120
        %v2030 = vpop.permute.xlu0 %2029
        %2032 = vrot.lane.b32.xlu0 %v1920, 120
        %v2033 = vpop.permute.xlu0 %2032
        %v2035 = vsel %vm1152, %v2030, 0
        %v2038 = vsel %vm1152, %v2033, 0
        %2040 = vmatprep.subr.bf16.mxu0 0
        %2041 = vmatpush1.bf16.xpose.msra.mxu0 %v2038
        %2042 = vmatprep.subr.bf16.mxu0 0
        %2043 = vmatpush1.bf16.xpose.msra.mxu0 0
        %2044 = vmatprep.subr.bf16.mxu0 0
        %2045 = vmatpush1.bf16.xpose.msra.mxu0 0
        %2046 = vmatprep.subr.bf16.mxu0 0
        %2047 = vmatpush1.bf16.xpose.msra.mxu0 0
        %2048 = vmatprep.subr.bf16.mxu0 0
        %2049 = vmatpush1.bf16.xpose.msra.mxu0 0
        %2050 = vmatprep.subr.bf16.mxu0 0
        %2051 = vmatpush1.bf16.xpose.msra.mxu0 0
        %2052 = vmatprep.subr.bf16.mxu0 0
        %2053 = vmatpush1.bf16.xpose.msra.mxu0 0
        %2054 = vmatprep.subr.bf16.mxu0 0
        %2055 = vmatpush1.bf16.xpose.msra.mxu0 0
        %2056 = vmatprep.subr.bf16.mxu0 0
        %2057 = vmatpush1.bf16.xpose.msra.mxu0 0
        %2058 = vmatprep.subr.bf16.mxu0 0
        %2059 = vmatpush1.bf16.xpose.msra.mxu0 0
        %2060 = vmatprep.subr.bf16.mxu0 0
        %2061 = vmatpush1.bf16.xpose.msra.mxu0 0
        %2062 = vmatprep.subr.bf16.mxu0 0
        %2063 = vmatpush1.bf16.xpose.msra.mxu0 0
        %2064 = vmatprep.subr.bf16.mxu0 0
        %2065 = vmatpush1.bf16.xpose.msra.mxu0 0
        %2066 = vmatprep.subr.bf16.mxu0 0
        %2067 = vmatpush1.bf16.xpose.msra.mxu0 0
        %2068 = vmatprep.subr.bf16.mxu0 0
        %2069 = vmatpush1.bf16.xpose.msra.mxu0 0
        %2070 = vmatprep.subr.bf16.mxu0 0
        %2071 = vmatpush1.bf16.xpose.msra.mxu0 0
        %2072 = vmatprep.mubr.bf16.mxu0 0
        %2073 = vmatmul.mubr.bf16.gmra.mrb[0].mxu0 %v2035
        %v2074 = vpop.f32.mrb[0].mxu0
        %v2075 = vadd.f32 0.0, %v2074
        %v2076 = vpop.f32.mrb[0].mxu0
        %v2077 = vpop.f32.mrb[0].mxu0
        %v2078 = vpop.f32.mrb[0].mxu0
        %2079 = vdwg.mxu0
        %v2080 = vmul.f32 %v2075, 0.17677669
        %v2081 = vadd.f32 %v2080, %v1922
        %v2082 = vsel %vm1971, %v2081, -inf
        %2083 = vmax.xlane.f32.xlu0 %v2082
        %v2084 = vpop.xlane.xlu0 %2083
        %v2085 = vsub.f32 %v2081, %v2084
        %v2086 = vmul.f32 %v2085, 1.442695
        %v2087 = vpow.pop %v2086
        %v2088 = vsel %vm1971, %v2087, 0.0
        %2089 = vadd.xlane.f32.xlu0 %v2088
        %v2090 = vpop.xlane.xlu0 %2089
        %v2091 = vrcp.pop %v2090
        %v2092 = vmul.f32 %v2087, %v2091
        %v2093 = vpack.c.bf16 %v2092, %v2092
        %2095 = vrot.lane.b32.xlu0 %v1921, 120
        %v2096 = vpop.permute.xlu0 %2095
        %v2099 = vsel %vm1971, %v2093, 0
        %2101 = vmatprep.subr.bf16.mxu0 0
        %2102 = vmatpush1.bf16.msra.mxu0 %v2096
        %2103 = vmatprep.subr.bf16.mxu0 0
        %2104 = vmatpush1.bf16.msra.mxu0 0
        %2105 = vmatprep.subr.bf16.mxu0 0
        %2106 = vmatpush1.bf16.msra.mxu0 0
        %2107 = vmatprep.subr.bf16.mxu0 0
        %2108 = vmatpush1.bf16.msra.mxu0 0
        %2109 = vmatprep.subr.bf16.mxu0 0
        %2110 = vmatpush1.bf16.msra.mxu0 0
        %2111 = vmatprep.subr.bf16.mxu0 0
        %2112 = vmatpush1.bf16.msra.mxu0 0
        %2113 = vmatprep.subr.bf16.mxu0 0
        %2114 = vmatpush1.bf16.msra.mxu0 0
        %2115 = vmatprep.subr.bf16.mxu0 0
        %2116 = vmatpush1.bf16.msra.mxu0 0
        %2117 = vmatprep.subr.bf16.mxu0 0
        %2118 = vmatpush1.bf16.msra.mxu0 0
        %2119 = vmatprep.subr.bf16.mxu0 0
        %2120 = vmatpush1.bf16.msra.mxu0 0
        %2121 = vmatprep.subr.bf16.mxu0 0
        %2122 = vmatpush1.bf16.msra.mxu0 0
        %2123 = vmatprep.subr.bf16.mxu0 0
        %2124 = vmatpush1.bf16.msra.mxu0 0
        %2125 = vmatprep.subr.bf16.mxu0 0
        %2126 = vmatpush1.bf16.msra.mxu0 0
        %2127 = vmatprep.subr.bf16.mxu0 0
        %2128 = vmatpush1.bf16.msra.mxu0 0
        %2129 = vmatprep.subr.bf16.mxu0 0
        %2130 = vmatpush1.bf16.msra.mxu0 0
        %2131 = vmatprep.subr.bf16.mxu0 0
        %2132 = vmatpush1.bf16.msra.mxu0 0
        %2133 = vmatprep.mubr.bf16.mxu0 0
        %2134 = vmatmul.mubr.bf16.gmra.mrb[0].mxu0 %v2099
        %v2135 = vpop.f32.mrb[0].mxu0
        %v2136 = vadd.f32 0.0, %v2135
        %v2137 = vpop.f32.mrb[0].mxu0
        %v2138 = vpop.f32.mrb[0].mxu0
        %v2139 = vpop.f32.mrb[0].mxu0
        %2140 = vdwg.mxu0
        %2142 = vrot.lane.b32.xlu0 %v2136, 8
        %v2143 = vpop.permute.xlu0 %2142
        %2145 = vst.msk [vmem:[#allocation2] sm:$0xff] %vm1379, %v2143
        %2146 = vrot.lane.b32.xlu0 %v1919, 112
        %v2147 = vpop.permute.xlu0 %2146
        %2148 = vrot.lane.b32.xlu0 %v1920, 112
        %v2149 = vpop.permute.xlu0 %2148
        %v2151 = vsel %vm1152, %v2147, 0
        %v2154 = vsel %vm1152, %v2149, 0
        %2156 = vmatprep.subr.bf16.mxu0 0
        %2157 = vmatpush1.bf16.xpose.msra.mxu0 %v2154
        %2158 = vmatprep.subr.bf16.mxu0 0
        %2159 = vmatpush1.bf16.xpose.msra.mxu0 0
        %2160 = vmatprep.subr.bf16.mxu0 0
        %2161 = vmatpush1.bf16.xpose.msra.mxu0 0
        %2162 = vmatprep.subr.bf16.mxu0 0
        %2163 = vmatpush1.bf16.xpose.msra.mxu0 0
        %2164 = vmatprep.subr.bf16.mxu0 0
        %2165 = vmatpush1.bf16.xpose.msra.mxu0 0
        %2166 = vmatprep.subr.bf16.mxu0 0
        %2167 = vmatpush1.bf16.xpose.msra.mxu0 0
        %2168 = vmatprep.subr.bf16.mxu0 0
        %2169 = vmatpush1.bf16.xpose.msra.mxu0 0
        %2170 = vmatprep.subr.bf16.mxu0 0
        %2171 = vmatpush1.bf16.xpose.msra.mxu0 0
        %2172 = vmatprep.subr.bf16.mxu0 0
        %2173 = vmatpush1.bf16.xpose.msra.mxu0 0
        %2174 = vmatprep.subr.bf16.mxu0 0
        %2175 = vmatpush1.bf16.xpose.msra.mxu0 0
        %2176 = vmatprep.subr.bf16.mxu0 0
        %2177 = vmatpush1.bf16.xpose.msra.mxu0 0
        %2178 = vmatprep.subr.bf16.mxu0 0
        %2179 = vmatpush1.bf16.xpose.msra.mxu0 0
        %2180 = vmatprep.subr.bf16.mxu0 0
        %2181 = vmatpush1.bf16.xpose.msra.mxu0 0
        %2182 = vmatprep.subr.bf16.mxu0 0
        %2183 = vmatpush1.bf16.xpose.msra.mxu0 0
        %2184 = vmatprep.subr.bf16.mxu0 0
        %2185 = vmatpush1.bf16.xpose.msra.mxu0 0
        %2186 = vmatprep.subr.bf16.mxu0 0
        %2187 = vmatpush1.bf16.xpose.msra.mxu0 0
        %2188 = vmatprep.mubr.bf16.mxu0 0
        %2189 = vmatmul.mubr.bf16.gmra.mrb[0].mxu0 %v2151
        %v2190 = vpop.f32.mrb[0].mxu0
        %v2191 = vadd.f32 0.0, %v2190
        %v2192 = vpop.f32.mrb[0].mxu0
        %v2193 = vpop.f32.mrb[0].mxu0
        %v2194 = vpop.f32.mrb[0].mxu0
        %2195 = vdwg.mxu0
        %v2196 = vmul.f32 %v2191, 0.17677669
        %v2197 = vadd.f32 %v2196, %v1922
        %v2198 = vsel %vm1971, %v2197, -inf
        %2199 = vmax.xlane.f32.xlu0 %v2198
        %v2200 = vpop.xlane.xlu0 %2199
        %v2201 = vsub.f32 %v2197, %v2200
        %v2202 = vmul.f32 %v2201, 1.442695
        %v2203 = vpow.pop %v2202
        %v2204 = vsel %vm1971, %v2203, 0.0
        %2205 = vadd.xlane.f32.xlu0 %v2204
        %v2206 = vpop.xlane.xlu0 %2205
        %v2207 = vrcp.pop %v2206
        %v2208 = vmul.f32 %v2203, %v2207
        %v2209 = vpack.c.bf16 %v2208, %v2208
        %2210 = vrot.lane.b32.xlu0 %v1921, 112
        %v2211 = vpop.permute.xlu0 %2210
        %v2214 = vsel %vm1971, %v2209, 0
        %2216 = vmatprep.subr.bf16.mxu0 0
        %2217 = vmatpush1.bf16.msra.mxu0 %v2211
        %2218 = vmatprep.subr.bf16.mxu0 0
        %2219 = vmatpush1.bf16.msra.mxu0 0
        %2220 = vmatprep.subr.bf16.mxu0 0
        %2221 = vmatpush1.bf16.msra.mxu0 0
        %2222 = vmatprep.subr.bf16.mxu0 0
        %2223 = vmatpush1.bf16.msra.mxu0 0
        %2224 = vmatprep.subr.bf16.mxu0 0
        %2225 = vmatpush1.bf16.msra.mxu0 0
        %2226 = vmatprep.subr.bf16.mxu0 0
        %2227 = vmatpush1.bf16.msra.mxu0 0
        %2228 = vmatprep.subr.bf16.mxu0 0
        %2229 = vmatpush1.bf16.msra.mxu0 0
        %2230 = vmatprep.subr.bf16.mxu0 0
        %2231 = vmatpush1.bf16.msra.mxu0 0
        %2232 = vmatprep.subr.bf16.mxu0 0
        %2233 = vmatpush1.bf16.msra.mxu0 0
        %2234 = vmatprep.subr.bf16.mxu0 0
        %2235 = vmatpush1.bf16.msra.mxu0 0
        %2236 = vmatprep.subr.bf16.mxu0 0
        %2237 = vmatpush1.bf16.msra.mxu0 0
        %2238 = vmatprep.subr.bf16.mxu0 0
        %2239 = vmatpush1.bf16.msra.mxu0 0
        %2240 = vmatprep.subr.bf16.mxu0 0
        %2241 = vmatpush1.bf16.msra.mxu0 0
        %2242 = vmatprep.subr.bf16.mxu0 0
        %2243 = vmatpush1.bf16.msra.mxu0 0
        %2244 = vmatprep.subr.bf16.mxu0 0
        %2245 = vmatpush1.bf16.msra.mxu0 0
        %2246 = vmatprep.subr.bf16.mxu0 0
        %2247 = vmatpush1.bf16.msra.mxu0 0
        %2248 = vmatprep.mubr.bf16.mxu0 0
        %2249 = vmatmul.mubr.bf16.gmra.mrb[0].mxu0 %v2214
        %v2250 = vpop.f32.mrb[0].mxu0
        %v2251 = vadd.f32 0.0, %v2250
        %v2252 = vpop.f32.mrb[0].mxu0
        %v2253 = vpop.f32.mrb[0].mxu0
        %v2254 = vpop.f32.mrb[0].mxu0
        %2255 = vdwg.mxu0
        %2257 = vrot.lane.b32.xlu0 %v2251, 16
        %v2258 = vpop.permute.xlu0 %2257
        %2260 = vst.msk [vmem:[#allocation2] sm:$0xff] %vm1497, %v2258
        %2261 = vrot.lane.b32.xlu0 %v1919, 104
        %v2262 = vpop.permute.xlu0 %2261
        %2263 = vrot.lane.b32.xlu0 %v1920, 104
        %v2264 = vpop.permute.xlu0 %2263
        %v2266 = vsel %vm1152, %v2262, 0
        %v2269 = vsel %vm1152, %v2264, 0
        %2271 = vmatprep.subr.bf16.mxu0 0
        %2272 = vmatpush1.bf16.xpose.msra.mxu0 %v2269
        %2273 = vmatprep.subr.bf16.mxu0 0
        %2274 = vmatpush1.bf16.xpose.msra.mxu0 0
        %2275 = vmatprep.subr.bf16.mxu0 0
        %2276 = vmatpush1.bf16.xpose.msra.mxu0 0
        %2277 = vmatprep.subr.bf16.mxu0 0
        %2278 = vmatpush1.bf16.xpose.msra.mxu0 0
        %2279 = vmatprep.subr.bf16.mxu0 0
        %2280 = vmatpush1.bf16.xpose.msra.mxu0 0
        %2281 = vmatprep.subr.bf16.mxu0 0
        %2282 = vmatpush1.bf16.xpose.msra.mxu0 0
        %2283 = vmatprep.subr.bf16.mxu0 0
        %2284 = vmatpush1.bf16.xpose.msra.mxu0 0
        %2285 = vmatprep.subr.bf16.mxu0 0
        %2286 = vmatpush1.bf16.xpose.msra.mxu0 0
        %2287 = vmatprep.subr.bf16.mxu0 0
        %2288 = vmatpush1.bf16.xpose.msra.mxu0 0
        %2289 = vmatprep.subr.bf16.mxu0 0
        %2290 = vmatpush1.bf16.xpose.msra.mxu0 0
        %2291 = vmatprep.subr.bf16.mxu0 0
        %2292 = vmatpush1.bf16.xpose.msra.mxu0 0
        %2293 = vmatprep.subr.bf16.mxu0 0
        %2294 = vmatpush1.bf16.xpose.msra.mxu0 0
        %2295 = vmatprep.subr.bf16.mxu0 0
        %2296 = vmatpush1.bf16.xpose.msra.mxu0 0
        %2297 = vmatprep.subr.bf16.mxu0 0
        %2298 = vmatpush1.bf16.xpose.msra.mxu0 0
        %2299 = vmatprep.subr.bf16.mxu0 0
        %2300 = vmatpush1.bf16.xpose.msra.mxu0 0
        %2301 = vmatprep.subr.bf16.mxu0 0
        %2302 = vmatpush1.bf16.xpose.msra.mxu0 0
        %2303 = vmatprep.mubr.bf16.mxu0 0
        %2304 = vmatmul.mubr.bf16.gmra.mrb[0].mxu0 %v2266
        %v2305 = vpop.f32.mrb[0].mxu0
        %v2306 = vadd.f32 0.0, %v2305
        %v2307 = vpop.f32.mrb[0].mxu0
        %v2308 = vpop.f32.mrb[0].mxu0
        %v2309 = vpop.f32.mrb[0].mxu0
        %2310 = vdwg.mxu0
        %v2311 = vmul.f32 %v2306, 0.17677669
        %v2312 = vadd.f32 %v2311, %v1922
        %v2313 = vsel %vm1971, %v2312, -inf
        %2314 = vmax.xlane.f32.xlu0 %v2313
        %v2315 = vpop.xlane.xlu0 %2314
        %v2316 = vsub.f32 %v2312, %v2315
        %v2317 = vmul.f32 %v2316, 1.442695
        %v2318 = vpow.pop %v2317
        %v2319 = vsel %vm1971, %v2318, 0.0
        %2320 = vadd.xlane.f32.xlu0 %v2319
        %v2321 = vpop.xlane.xlu0 %2320
        %v2322 = vrcp.pop %v2321
        %v2323 = vmul.f32 %v2318, %v2322
        %v2324 = vpack.c.bf16 %v2323, %v2323
        %2325 = vrot.lane.b32.xlu0 %v1921, 104
        %v2326 = vpop.permute.xlu0 %2325
        %v2329 = vsel %vm1971, %v2324, 0
        %2331 = vmatprep.subr.bf16.mxu0 0
        %2332 = vmatpush1.bf16.msra.mxu0 %v2326
        %2333 = vmatprep.subr.bf16.mxu0 0
        %2334 = vmatpush1.bf16.msra.mxu0 0
        %2335 = vmatprep.subr.bf16.mxu0 0
        %2336 = vmatpush1.bf16.msra.mxu0 0
        %2337 = vmatprep.subr.bf16.mxu0 0
        %2338 = vmatpush1.bf16.msra.mxu0 0
        %2339 = vmatprep.subr.bf16.mxu0 0
        %2340 = vmatpush1.bf16.msra.mxu0 0
        %2341 = vmatprep.subr.bf16.mxu0 0
        %2342 = vmatpush1.bf16.msra.mxu0 0
        %2343 = vmatprep.subr.bf16.mxu0 0
        %2344 = vmatpush1.bf16.msra.mxu0 0
        %2345 = vmatprep.subr.bf16.mxu0 0
        %2346 = vmatpush1.bf16.msra.mxu0 0
        %2347 = vmatprep.subr.bf16.mxu0 0
        %2348 = vmatpush1.bf16.msra.mxu0 0
        %2349 = vmatprep.subr.bf16.mxu0 0
        %2350 = vmatpush1.bf16.msra.mxu0 0
        %2351 = vmatprep.subr.bf16.mxu0 0
        %2352 = vmatpush1.bf16.msra.mxu0 0
        %2353 = vmatprep.subr.bf16.mxu0 0
        %2354 = vmatpush1.bf16.msra.mxu0 0
        %2355 = vmatprep.subr.bf16.mxu0 0
        %2356 = vmatpush1.bf16.msra.mxu0 0
        %2357 = vmatprep.subr.bf16.mxu0 0
        %2358 = vmatpush1.bf16.msra.mxu0 0
        %2359 = vmatprep.subr.bf16.mxu0 0
        %2360 = vmatpush1.bf16.msra.mxu0 0
        %2361 = vmatprep.subr.bf16.mxu0 0
        %2362 = vmatpush1.bf16.msra.mxu0 0
        %2363 = vmatprep.mubr.bf16.mxu0 0
        %2364 = vmatmul.mubr.bf16.gmra.mrb[0].mxu0 %v2329
        %v2365 = vpop.f32.mrb[0].mxu0
        %v2366 = vadd.f32 0.0, %v2365
        %v2367 = vpop.f32.mrb[0].mxu0
        %v2368 = vpop.f32.mrb[0].mxu0
        %v2369 = vpop.f32.mrb[0].mxu0
        %2370 = vdwg.mxu0
        %2372 = vrot.lane.b32.xlu0 %v2366, 24
        %v2373 = vpop.permute.xlu0 %2372
        %2375 = vst.msk [vmem:[#allocation2] sm:$0xff] %vm1615, %v2373
        %v2376 = vld [vmem:[#allocation2] sm:$0xff]
        %v2377 = vpack.c.bf16 %v2376, %v2376
        %v2378 = vld [vmem:[%s17] sm:$0xf]
        %v2379 = vld [vmem:[%s17 + $0x4] sm:$0xf]
        %v2380 = vld [vmem:[%s17 + $0x8] sm:$0xf]
        %v2381 = vld [vmem:[%s17 + $0xc] sm:$0xf]
        %v2382 = vld [vmem:[%s18] sm:$0x1]
        %v2384 = vlaneseq
        %v2385 = vshrl.u32 %v2384, 7
        %v2386 = vsub.s32 0, %v2385
        %v2387 = vrot.slane %v2382, %v2386
        %v2393 = vunpack.c.l.b16 %v2378
        %v2394 = vunpack.c.l.b16 %v2379
        %v2395 = vunpack.c.l.b16 %v2380
        %v2396 = vunpack.c.l.b16 %v2381
        %v2397 = vpack.c.b16 %v2394, %v2393
        %v2398 = vpack.c.b16 %v2396, %v2395
        %v2402 = vsel %vm1103, %v2377, 0
        %2404 = vmatprep.subr.bf16.mxu0 0
        %2405 = vmatpush1.bf16.msra.mxu0 %v2397
        %2406 = vmatprep.subr.bf16.mxu0 0
        %2407 = vmatpush1.bf16.msra.mxu0 %v2398
        %2408 = vmatprep.subr.bf16.mxu0 0
        %2409 = vmatpush1.bf16.msra.mxu0 0
        %2410 = vmatprep.subr.bf16.mxu0 0
        %2411 = vmatpush1.bf16.msra.mxu0 0
        %2412 = vmatprep.subr.bf16.mxu0 0
        %2413 = vmatpush1.bf16.msra.mxu0 0
        %2414 = vmatprep.subr.bf16.mxu0 0
        %2415 = vmatpush1.bf16.msra.mxu0 0
        %2416 = vmatprep.subr.bf16.mxu0 0
        %2417 = vmatpush1.bf16.msra.mxu0 0
        %2418 = vmatprep.subr.bf16.mxu0 0
        %2419 = vmatpush1.bf16.msra.mxu0 0
        %2420 = vmatprep.subr.bf16.mxu0 0
        %2421 = vmatpush1.bf16.msra.mxu0 0
        %2422 = vmatprep.subr.bf16.mxu0 0
        %2423 = vmatpush1.bf16.msra.mxu0 0
        %2424 = vmatprep.subr.bf16.mxu0 0
        %2425 = vmatpush1.bf16.msra.mxu0 0
        %2426 = vmatprep.subr.bf16.mxu0 0
        %2427 = vmatpush1.bf16.msra.mxu0 0
        %2428 = vmatprep.subr.bf16.mxu0 0
        %2429 = vmatpush1.bf16.msra.mxu0 0
        %2430 = vmatprep.subr.bf16.mxu0 0
        %2431 = vmatpush1.bf16.msra.mxu0 0
        %2432 = vmatprep.subr.bf16.mxu0 0
        %2433 = vmatpush1.bf16.msra.mxu0 0
        %2434 = vmatprep.subr.bf16.mxu0 0
        %2435 = vmatpush1.bf16.msra.mxu0 0
        %2436 = vmatprep.mubr.bf16.mxu0 0
        %2437 = vmatmul.mubr.bf16.gmra.mrb[0].mxu0 %v2402
        %v2438 = vpop.f32.mrb[0].mxu0
        %v2439 = vadd.f32 %v2387, %v2438
        %v2440 = vpop.f32.mrb[0].mxu0
        %v2441 = vpop.f32.mrb[0].mxu0
        %v2442 = vpop.f32.mrb[0].mxu0
        %2443 = vdwg.mxu0
        %v2444 = vadd.f32 %v2439, %v1715
        %v2445 = vsel %vm1103, %v2444, 0.0
        %2446 = vadd.xlane.f32.xlu0 %v2445
        %v2447 = vpop.xlane.xlu0 %2446
        %v2448 = vmul.f32 %v2447, %v1689
        %v2449 = vsub.f32 %v2444, %v2448
        %v2450 = vmul.f32 %v2449, %v2449
        %v2451 = vsel %vm1103, %v2450, 0.0
        %2452 = vadd.xlane.f32.xlu0 %v2451
        %v2453 = vpop.xlane.xlu0 %2452
        %v2454 = vmul.f32 %v2453, %v1689
        %v2455 = vadd.f32 %v2454, 1e-05
        %v2456 = vrsqrt.pop %v2455
        %v2457 = vmul.f32 %v2449, %v2456
        %v2458 = vld [vmem:[%s19] sm:$0x1]
        %v2460 = vlaneseq
        %v2461 = vshrl.u32 %v2460, 7
        %v2462 = vsub.s32 0, %v2461
        %v2463 = vrot.slane %v2458, %v2462
        %v2465 = vmul.f32 %v2457, %v2463
        %v2466 = vld [vmem:[%s20] sm:$0x1]
        %v2468 = vlaneseq
        %v2469 = vshrl.u32 %v2468, 7
        %v2470 = vsub.s32 0, %v2469
        %v2471 = vrot.slane %v2466, %v2470
        %v2473 = vadd.f32 %v2465, %v2471
        %v2474 = vpack.c.bf16 %v2473, %v2473
        %v2475 = vld [vmem:[#allocation23] sm:$0xf]
        %v2476 = vld [vmem:[#allocation23 + $0x4] sm:$0xf]
        %v2477 = vld [vmem:[#allocation23 + $0x8] sm:$0xf]
        %v2478 = vld [vmem:[#allocation23 + $0xc] sm:$0xf]
        %v2479 = vld [vmem:[%s22] sm:$0x1]
        %v2481 = vlaneseq
        %v2482 = vshrl.u32 %v2481, 7
        %v2483 = vsub.s32 0, %v2482
        %v2484 = vrot.slane %v2479, %v2483
        %v2490 = vunpack.c.l.b16 %v2475
        %v2491 = vunpack.c.l.b16 %v2476
        %v2492 = vunpack.c.l.b16 %v2477
        %v2493 = vunpack.c.l.b16 %v2478
        %v2494 = vpack.c.b16 %v2491, %v2490
        %v2495 = vpack.c.b16 %v2493, %v2492
        %v2499 = vsel %vm1103, %v2474, 0
        %2501 = vmatprep.subr.bf16.mxu0 0
        %2502 = vmatpush1.bf16.msra.mxu0 %v2494
        %2503 = vmatprep.subr.bf16.mxu0 0
        %2504 = vmatpush1.bf16.msra.mxu0 %v2495
        %2505 = vmatprep.subr.bf16.mxu0 0
        %2506 = vmatpush1.bf16.msra.mxu0 0
        %2507 = vmatprep.subr.bf16.mxu0 0
        %2508 = vmatpush1.bf16.msra.mxu0 0
        %2509 = vmatprep.subr.bf16.mxu0 0
        %2510 = vmatpush1.bf16.msra.mxu0 0
        %2511 = vmatprep.subr.bf16.mxu0 0
        %2512 = vmatpush1.bf16.msra.mxu0 0
        %2513 = vmatprep.subr.bf16.mxu0 0
        %2514 = vmatpush1.bf16.msra.mxu0 0
        %2515 = vmatprep.subr.bf16.mxu0 0
        %2516 = vmatpush1.bf16.msra.mxu0 0
        %2517 = vmatprep.subr.bf16.mxu0 0
        %2518 = vmatpush1.bf16.msra.mxu0 0
        %2519 = vmatprep.subr.bf16.mxu0 0
        %2520 = vmatpush1.bf16.msra.mxu0 0
        %2521 = vmatprep.subr.bf16.mxu0 0
        %2522 = vmatpush1.bf16.msra.mxu0 0
        %2523 = vmatprep.subr.bf16.mxu0 0
        %2524 = vmatpush1.bf16.msra.mxu0 0
        %2525 = vmatprep.subr.bf16.mxu0 0
        %2526 = vmatpush1.bf16.msra.mxu0 0
        %2527 = vmatprep.subr.bf16.mxu0 0
        %2528 = vmatpush1.bf16.msra.mxu0 0
        %2529 = vmatprep.subr.bf16.mxu0 0
        %2530 = vmatpush1.bf16.msra.mxu0 0
        %2531 = vmatprep.subr.bf16.mxu0 0
        %2532 = vmatpush1.bf16.msra.mxu0 0
        %2533 = vmatprep.mubr.bf16.mxu0 0
        %2534 = vmatmul.mubr.bf16.gmra.mrb[0].mxu0 %v2499
        %v2535 = vpop.f32.mrb[0].mxu0
        %v2536 = vadd.f32 %v2484, %v2535
        %v2537 = vpop.f32.mrb[0].mxu0
        %v2538 = vpop.f32.mrb[0].mxu0
        %v2539 = vpop.f32.mrb[0].mxu0
        %2540 = vdwg.mxu0
        %v2541 = vmax.f32 %v2536, 0.0
        %v2542 = vpack.c.bf16 %v2541, %v2541
        %v2543 = vld [vmem:[%s23] sm:$0xf]
        %v2544 = vld [vmem:[%s23 + $0x4] sm:$0xf]
        %v2545 = vld [vmem:[%s23 + $0x8] sm:$0xf]
        %v2546 = vld [vmem:[%s23 + $0xc] sm:$0xf]
        %v2547 = vld [vmem:[%s23 + $0x10] sm:$0xf]
        %v2548 = vld [vmem:[%s23 + $0x14] sm:$0xf]
        %v2549 = vld [vmem:[%s23 + $0x18] sm:$0xf]
        %v2550 = vld [vmem:[%s23 + $0x1c] sm:$0xf]
        %v2551 = vld [vmem:[%s23 + $0x20] sm:$0xf]
        %v2552 = vld [vmem:[%s23 + $0x24] sm:$0xf]
        %v2553 = vld [vmem:[%s23 + $0x28] sm:$0xf]
        %v2554 = vld [vmem:[%s23 + $0x2c] sm:$0xf]
        %v2555 = vld [vmem:[%s23 + $0x30] sm:$0xf]
        %v2556 = vld [vmem:[%s23 + $0x34] sm:$0xf]
        %v2557 = vld [vmem:[%s23 + $0x38] sm:$0xf]
        %v2558 = vld [vmem:[%s23 + $0x3c] sm:$0xf]
        %v2559 = vld [vmem:[%s24] sm:$0x1]
        %v2561 = vlaneseq
        %v2562 = vshrl.u32 %v2561, 7
        %v2563 = vsub.s32 0, %v2562
        %v2564 = vrot.slane %v2559, %v2563
        %v2582 = vunpack.c.l.b16 %v2543
        %v2583 = vunpack.c.l.b16 %v2544
        %v2584 = vunpack.c.l.b16 %v2545
        %v2585 = vunpack.c.l.b16 %v2546
        %v2586 = vunpack.c.l.b16 %v2547
        %v2587 = vunpack.c.l.b16 %v2548
        %v2588 = vunpack.c.l.b16 %v2549
        %v2589 = vunpack.c.l.b16 %v2550
        %v2590 = vunpack.c.l.b16 %v2551
        %v2591 = vunpack.c.l.b16 %v2552
        %v2592 = vunpack.c.l.b16 %v2553
        %v2593 = vunpack.c.l.b16 %v2554
        %v2594 = vunpack.c.l.b16 %v2555
        %v2595 = vunpack.c.l.b16 %v2556
        %v2596 = vunpack.c.l.b16 %v2557
        %v2597 = vunpack.c.l.b16 %v2558
        %v2598 = vpack.c.b16 %v2583, %v2582
        %v2599 = vpack.c.b16 %v2585, %v2584
        %v2600 = vpack.c.b16 %v2587, %v2586
        %v2601 = vpack.c.b16 %v2589, %v2588
        %v2602 = vpack.c.b16 %v2591, %v2590
        %v2603 = vpack.c.b16 %v2593, %v2592
        %v2604 = vpack.c.b16 %v2595, %v2594
        %v2605 = vpack.c.b16 %v2597, %v2596
        %2614 = vmatprep.subr.bf16.mxu0 0
        %2615 = vmatpush1.bf16.msra.mxu0 %v2598
        %2616 = vmatprep.subr.bf16.mxu0 0
        %2617 = vmatpush1.bf16.msra.mxu0 %v2599
        %2618 = vmatprep.subr.bf16.mxu0 0
        %2619 = vmatpush1.bf16.msra.mxu0 %v2600
        %2620 = vmatprep.subr.bf16.mxu0 0
        %2621 = vmatpush1.bf16.msra.mxu0 %v2601
        %2622 = vmatprep.subr.bf16.mxu0 0
        %2623 = vmatpush1.bf16.msra.mxu0 %v2602
        %2624 = vmatprep.subr.bf16.mxu0 0
        %2625 = vmatpush1.bf16.msra.mxu0 %v2603
        %2626 = vmatprep.subr.bf16.mxu0 0
        %2627 = vmatpush1.bf16.msra.mxu0 %v2604
        %2628 = vmatprep.subr.bf16.mxu0 0
        %2629 = vmatpush1.bf16.msra.mxu0 %v2605
        %2630 = vmatprep.subr.bf16.mxu0 0
        %2631 = vmatpush1.bf16.msra.mxu0 0
        %2632 = vmatprep.subr.bf16.mxu0 0
        %2633 = vmatpush1.bf16.msra.mxu0 0
        %2634 = vmatprep.subr.bf16.mxu0 0
        %2635 = vmatpush1.bf16.msra.mxu0 0
        %2636 = vmatprep.subr.bf16.mxu0 0
        %2637 = vmatpush1.bf16.msra.mxu0 0
        %2638 = vmatprep.subr.bf16.mxu0 0
        %2639 = vmatpush1.bf16.msra.mxu0 0
        %2640 = vmatprep.subr.bf16.mxu0 0
        %2641 = vmatpush1.bf16.msra.mxu0 0
        %2642 = vmatprep.subr.bf16.mxu0 0
        %2643 = vmatpush1.bf16.msra.mxu0 0
        %2644 = vmatprep.subr.bf16.mxu0 0
        %2645 = vmatpush1.bf16.msra.mxu0 0
        %2646 = vmatprep.mubr.bf16.mxu0 0
        %2647 = vmatmul.mubr.bf16.gmra.mrb[0].mxu0 %v2542
        %v2648 = vpop.f32.mrb[0].mxu0
        %v2649 = vadd.f32 %v2564, %v2648
        %v2650 = vpop.f32.mrb[0].mxu0
        %v2651 = vpop.f32.mrb[0].mxu0
        %v2652 = vpop.f32.mrb[0].mxu0
        %2653 = vdwg.mxu0
        %v2654 = vadd.f32 %v2649, %v2473
        %v2655 = vsel %vm1103, %v2654, 0.0
        %2656 = vadd.xlane.f32.xlu0 %v2655
        %v2657 = vpop.xlane.xlu0 %2656
        %v2658 = vmul.f32 %v2657, %v1689
        %v2659 = vsub.f32 %v2654, %v2658
        %v2660 = vmul.f32 %v2659, %v2659
        %v2661 = vsel %vm1103, %v2660, 0.0
        %2662 = vadd.xlane.f32.xlu0 %v2661
        %v2663 = vpop.xlane.xlu0 %2662
        %v2664 = vmul.f32 %v2663, %v1689
        %v2665 = vadd.f32 %v2664, 1e-05
        %v2666 = vrsqrt.pop %v2665
        %v2667 = vmul.f32 %v2659, %v2666
        %v2668 = vld [vmem:[%s25] sm:$0x1]
        %v2670 = vlaneseq
        %v2671 = vshrl.u32 %v2670, 7
        %v2672 = vsub.s32 0, %v2671
        %v2673 = vrot.slane %v2668, %v2672
        %v2675 = vmul.f32 %v2667, %v2673
        %v2676 = vld [vmem:[%s26] sm:$0x1]
        %v2678 = vlaneseq
        %v2679 = vshrl.u32 %v2678, 7
        %v2680 = vsub.s32 0, %v2679
        %v2681 = vrot.slane %v2676, %v2680
        %v2683 = vadd.f32 %v2675, %v2681
        %2684 = vst.msk [vmem:[%s1058] sm:$0xff] %vm1103, %v2683
        %s2685 = sand.u32 %s652, 1
        %s2686 = scalar_lea.sflag [#allocation5], %s2685
        %s2687 = sand.u32 %s652, 1
        %s2688 = smul.addr %s2687, 8
        %s2689 = scalar_lea.vmem [#allocation24], %s2688
        // Predicated region
        $region181: #{tpu_custom_call.1} parent=127 // pred_check
          %p2690 = pneg %p662
        $region182: #{tpu_custom_call.1} parent=127 // pred_check_branch
          %2692 = sbr.rel (%p2690) target = $region184
        $region183: #{tpu_custom_call.1} parent=127 // pred_region
          %s2694 = ssub.s32 128, 128
          %2695 = vsyncadd %s2686, %s2694
          %s2696 = smul.addr %s52, 128
          %s2697 = scalar_lea.hbm %s27, %s2696
          %s2699 = sshll.u32 %s2689, 4
          %s2700 = int_to_ptr.vmem [resolvable:$true] %s2699
          %2702 = dma.vmem_to_hbm [thread:$0]  %s2700, 128, %s2697, %s2686
        $region184: #{tpu_custom_call.1} parent=127 // pred_fallthru
          _
      $region128: #{tpu_custom_call.1} parent=5 // pred_fallthru
        _
      %p2703 = scmp.le.s32.totalorder 2, %s47
      // Predicated region
      $region185: #{tpu_custom_call.1} parent=5 // pred_check
        %p2704 = pneg %p2703
      $region186: #{tpu_custom_call.1} parent=5 // pred_check_branch
        %2706 = sbr.rel (%p2704) target = $region188
      $region187: #{tpu_custom_call.1} parent=5 // pred_region
        %s2707 = ssub.s32 %s47, 2
        // Predicated region
        $region189: #{tpu_custom_call.1} parent=187 // pred_check
          %p2708 = pneg %p668
        $region190: #{tpu_custom_call.1} parent=187 // pred_check_branch
          %2710 = sbr.rel (%p2708) target = $region192
        $region191: #{tpu_custom_call.1} parent=187 // pred_region
          %s2711 = sand.u32 %s653, 1
          %s2712 = scalar_lea.sflag [#allocation5], %s2711
          %s2713 = sand.u32 %s653, 1
          %s2714 = smul.addr %s2713, 8
          %s2715 = scalar_lea.vmem [#allocation24], %s2714
          %2716 = dma.done %s2712, 128
        $region192: #{tpu_custom_call.1} parent=187 // pred_fallthru
          _
      $region188: #{tpu_custom_call.1} parent=5 // pred_fallthru
        _
    $region6: #{tpu_custom_call.1} parent=1 // loop_footer
      %s51 = sadd.s32 1, %s47
    $region7: #{tpu_custom_call.1} parent=1 // loop_footer_branch
      %46 = sbr.rel target = $region3
    $region8: #{tpu_custom_call.1} parent=1 // loop_exit
      _
    %2717 = vsyncpa [#allocation4], 1
    %s2718 = scalar_lea.sflag [#allocation4], 1
    %2719 = vsyncpa %s2718, 1
    %2720 = vsyncpa [#allocation7], 1
    %s2721 = scalar_lea.sflag [#allocation7], 1
    %2722 = vsyncpa %s2721, 1
    %2723 = vsyncpa [#allocation10], 1
    %2724 = vsyncpa [#allocation13], 1
    %2725 = vsyncpa [#allocation16], 1
    %2726 = vsyncpa [#allocation19], 1
    %2727 = vsyncpa [#allocation22], 1
    %2728 = vsyncpa [#allocation5], 1
    %s2729 = scalar_lea.sflag [#allocation5], 1
    %2730 = vsyncpa %s2729, 1

// kernel: tpu_custom_call.1
$region0: #{tpu_custom_call.1}
  #allocation0 [shape = 'u32[]', space=smem, size = 0x4, offset = 0x4, fixed_abs, tag = 'smem constant byte address 0x4 - core index']
  #allocation1 [shape = 'u32[144,128]{1,0:T(1,128)}', space=vmem, size = 0x12000, scoped, tag = 'internal scratch']
  #allocation2 [shape = 'f32[8,32]{1,0:T(8,128)}', space=vmem, size = 0x1000, scoped, tag = 'scratch operand']
  %s0 = inlined_call_operand.vmem [shape: f32[2,8,32], index: 0, kind: input, shape index: {}]
  %s1 = inlined_call_operand.vmem [shape: f32[2,16,32], index: 1, kind: input, shape index: {}]
  %s2 = inlined_call_operand.vmem [shape: f32[2,16,32], index: 2, kind: input, shape index: {}]
  %s3 = inlined_call_operand.hbm [shape: f32[2,8,8], index: 3, kind: input, shape index: {}]
  %s4 = inlined_call_operand.hbm [shape: f32[2,8,16], index: 4, kind: input, shape index: {}]
  %s5 = inlined_call_operand.hbm [shape: bf16[32,96], index: 5, kind: input, shape index: {}]
  %s6 = inlined_call_operand.hbm [shape: f32[1,96], index: 6, kind: input, shape index: {}]
  %s7 = inlined_call_operand.hbm [shape: bf16[32,32], index: 7, kind: input, shape index: {}]
  %s8 = inlined_call_operand.hbm [shape: f32[1,32], index: 8, kind: input, shape index: {}]
  %s9 = inlined_call_operand.hbm [shape: f32[1,32], index: 9, kind: input, shape index: {}]
  %s10 = inlined_call_operand.hbm [shape: f32[1,32], index: 10, kind: input, shape index: {}]
  %s11 = inlined_call_operand.vmem [shape: bf16[32,32], index: 11, kind: input, shape index: {}]
  %s12 = inlined_call_operand.hbm [shape: f32[1,32], index: 12, kind: input, shape index: {}]
  %s13 = inlined_call_operand.vmem [shape: bf16[32,32], index: 13, kind: input, shape index: {}]
  %s14 = inlined_call_operand.hbm [shape: f32[1,32], index: 14, kind: input, shape index: {}]
  %s15 = inlined_call_operand.hbm [shape: bf16[32,32], index: 15, kind: input, shape index: {}]
  %s16 = inlined_call_operand.hbm [shape: f32[1,32], index: 16, kind: input, shape index: {}]
  %s17 = inlined_call_operand.vmem [shape: bf16[32,32], index: 17, kind: input, shape index: {}]
  %s18 = inlined_call_operand.vmem [shape: f32[1,32], index: 18, kind: input, shape index: {}]
  %s19 = inlined_call_operand.vmem [shape: f32[1,32], index: 19, kind: input, shape index: {}]
  %s20 = inlined_call_operand.vmem [shape: f32[1,32], index: 20, kind: input, shape index: {}]
  %s21 = inlined_call_operand.hbm [shape: bf16[32,128], index: 21, kind: input, shape index: {}]
  %s22 = inlined_call_operand.vmem [shape: f32[1,128], index: 22, kind: input, shape index: {}]
  %s23 = inlined_call_operand.vmem [shape: bf16[128,32], index: 23, kind: input, shape index: {}]
  %s24 = inlined_call_operand.vmem [shape: f32[1,32], index: 24, kind: input, shape index: {}]
  %s25 = inlined_call_operand.vmem [shape: f32[1,32], index: 25, kind: input, shape index: {}]
  %s26 = inlined_call_operand.vmem [shape: f32[1,32], index: 26, kind: input, shape index: {}]
  %s27 = inlined_call_operand.hbm [shape: f32[2,8,32], index: 27, kind: output, shape index: {}]
  %s28 = sld [smem:[#allocation0]]
  $region193: #{tpu_custom_call.1} parent=0
    _
  %s30 = ssub.s32 1, %s28
  %s31 = scalar_select 0, %s30, %s28
  $region1: #{tpu_custom_call.1} parent=0
    #allocation3 [shape = 'u8[8192]{0}', space=vmem, size = 0x2000, scoped, tag = 'input window, operand 3']
    #allocation4 [shape = 's32[2]{0}', space=sflag, size = 0x8, scoped, tag = 'scoped memory for tpu_custom_call.1']
    #allocation5 [shape = 's32[2]{0}', space=sflag, size = 0x8, scoped, tag = 'scoped memory for tpu_custom_call.1']
    #allocation6 [shape = 'u8[8192]{0}', space=vmem, size = 0x2000, scoped, tag = 'input window, operand 4']
    #allocation7 [shape = 's32[2]{0}', space=sflag, size = 0x8, scoped, tag = 'scoped memory for tpu_custom_call.1']
    #allocation8 [shape = 'u8[8192]{0}', space=vmem, size = 0x2000, scoped, tag = 'input window, operand 5, single buffered']
    #allocation9 [shape = 'u8[512]{0}', space=vmem, size = 0x400, scoped, tag = 'input window, operand 6, single buffered']
    #allocation10 [shape = 's32[1]{0}', space=sflag, size = 0x4, scoped, tag = 'scoped memory for tpu_custom_call.1']
    #allocation11 [shape = 'u8[8192]{0}', space=vmem, size = 0x2000, scoped, tag = 'input window, operand 7, single buffered']
    #allocation12 [shape = 'u8[512]{0}', space=vmem, size = 0x400, scoped, tag = 'input window, operand 8, single buffered']
    #allocation13 [shape = 's32[1]{0}', space=sflag, size = 0x4, scoped, tag = 'scoped memory for tpu_custom_call.1']
    #allocation14 [shape = 'u8[512]{0}', space=vmem, size = 0x400, scoped, tag = 'input window, operand 9, single buffered']
    #allocation15 [shape = 'u8[512]{0}', space=vmem, size = 0x400, scoped, tag = 'input window, operand 10, single buffered']
    #allocation16 [shape = 's32[1]{0}', space=sflag, size = 0x4, scoped, tag = 'scoped memory for tpu_custom_call.1']
    #allocation17 [shape = 'u8[512]{0}', space=vmem, size = 0x400, scoped, tag = 'input window, operand 12, single buffered']
    #allocation18 [shape = 'u8[512]{0}', space=vmem, size = 0x400, scoped, tag = 'input window, operand 14, single buffered']
    #allocation19 [shape = 's32[1]{0}', space=sflag, size = 0x4, scoped, tag = 'scoped memory for tpu_custom_call.1']
    #allocation20 [shape = 'u8[8192]{0}', space=vmem, size = 0x2000, scoped, tag = 'input window, operand 15, single buffered']
    #allocation21 [shape = 'u8[512]{0}', space=vmem, size = 0x400, scoped, tag = 'input window, operand 16, single buffered']
    #allocation22 [shape = 's32[1]{0}', space=sflag, size = 0x4, scoped, tag = 'scoped memory for tpu_custom_call.1']
    #allocation23 [shape = 'u8[8192]{0}', space=vmem, size = 0x2000, scoped, tag = 'input window, operand 21, single buffered']
    #allocation24 [shape = 'u8[8192]{0}', space=vmem, size = 0x2000, scoped, tag = 'output window, operand 0']
    %32 = vsyncpa [#allocation4], 0
    %s33 = scalar_lea.sflag [#allocation4], 1
    %34 = vsyncpa %s33, 0
    %35 = vsyncpa [#allocation7], 0
    %s36 = scalar_lea.sflag [#allocation7], 1
    %37 = vsyncpa %s36, 0
    %38 = vsyncpa [#allocation10], 0
    %39 = vsyncpa [#allocation13], 0
    %40 = vsyncpa [#allocation16], 0
    %41 = vsyncpa [#allocation19], 0
    %42 = vsyncpa [#allocation22], 0
    %43 = vsyncpa [#allocation5], 0
    %s44 = scalar_lea.sflag [#allocation5], 1
    %45 = vsyncpa %s44, 0
    loop: start=0, step=1, limit=4
    $region2: #{tpu_custom_call.1} parent=1 // loop_pre_header
      _
    $region3: #{tpu_custom_call.1} parent=1 // loop_header
      %s47 = sphi 0, %s51
      %p48 = scmp.ge.s32.totalorder %s47, 4
      %s57 = sphi 0, %s59
      %s60 = sphi 0, %s57
      %s61 = sphi 0, %s60
      %s77 = sphi 0, %s61
      %s83 = sphi 0, %s85
      %s86 = sphi 0, %s83
      %s87 = sphi 0, %s86
      %s103 = sphi 0, %s87
      %s109 = sphi 0, %s111
      %s112 = sphi 0, %s109
      %s113 = sphi 0, %s112
      %s129 = sphi 0, %s113
      %s135 = sphi 0, %s137
      %s138 = sphi 0, %s135
      %s139 = sphi 0, %s138
      %s155 = sphi 0, %s139
      %s161 = sphi 0, %s163
      %s164 = sphi 0, %s161
      %s165 = sphi 0, %s164
      %s181 = sphi 0, %s165
      %s185 = sphi 0, %s185
      %s187 = sphi 0, %s185
      %s188 = sphi 0, %s187
      %s202 = sphi 0, %s188
      %s206 = sphi 0, %s206
      %s208 = sphi 0, %s206
      %s209 = sphi 0, %s208
      %s223 = sphi 0, %s209
      %s227 = sphi 0, %s227
      %s229 = sphi 0, %s227
      %s230 = sphi 0, %s229
      %s244 = sphi 0, %s230
      %s248 = sphi 0, %s248
      %s250 = sphi 0, %s248
      %s251 = sphi 0, %s250
      %s265 = sphi 0, %s251
      %s269 = sphi 0, %s269
      %s271 = sphi 0, %s269
      %s272 = sphi 0, %s271
      %s286 = sphi 0, %s272
      %s290 = sphi 0, %s290
      %s292 = sphi 0, %s290
      %s293 = sphi 0, %s292
      %s307 = sphi 0, %s293
      %s311 = sphi 0, %s311
      %s313 = sphi 0, %s311
      %s314 = sphi 0, %s313
      %s328 = sphi 0, %s314
      %s332 = sphi 0, %s332
      %s334 = sphi 0, %s332
      %s335 = sphi 0, %s334
      %s349 = sphi 0, %s335
      %s353 = sphi 0, %s353
      %s355 = sphi 0, %s353
      %s356 = sphi 0, %s355
      %s370 = sphi 0, %s356
      %s374 = sphi 0, %s374
      %s376 = sphi 0, %s374
      %s377 = sphi 0, %s376
      %s391 = sphi 0, %s377
      %s395 = sphi 0, %s395
      %s397 = sphi 0, %s395
      %s398 = sphi 0, %s397
      %s412 = sphi 0, %s398
      %s416 = sphi 0, %s416
      %s418 = sphi 0, %s416
      %s419 = sphi 0, %s418
      %s433 = sphi 0, %s419
      %s437 = sphi 0, %s437
      %s439 = sphi 0, %s437
      %s440 = sphi 0, %s439
      %s454 = sphi 0, %s440
      %s458 = sphi 0, %s458
      %s460 = sphi 0, %s458
      %s461 = sphi 0, %s460
      %s475 = sphi 0, %s461
      %s479 = sphi 0, %s479
      %s481 = sphi 0, %s479
      %s482 = sphi 0, %s481
      %s496 = sphi 0, %s482
      %s500 = sphi 0, %s500
      %s502 = sphi 0, %s500
      %s503 = sphi 0, %s502
      %s517 = sphi 0, %s503
      %s521 = sphi 0, %s521
      %s523 = sphi 0, %s521
      %s524 = sphi 0, %s523
      %s538 = sphi 0, %s524
      %s542 = sphi 0, %s542
      %s544 = sphi 0, %s542
      %s545 = sphi 0, %s544
      %s559 = sphi 0, %s545
      %s563 = sphi 0, %s563
      %s565 = sphi 0, %s563
      %s566 = sphi 0, %s565
      %s580 = sphi 0, %s566
      %s584 = sphi 0, %s584
      %s586 = sphi 0, %s584
      %s587 = sphi 0, %s586
      %s601 = sphi 0, %s587
      %s605 = sphi 0, %s605
      %s607 = sphi 0, %s605
      %s608 = sphi 0, %s607
      %s622 = sphi 0, %s608
      %s626 = sphi 0, %s626
      %s628 = sphi 0, %s626
      %s629 = sphi 0, %s628
      %s643 = sphi 0, %s629
      %s649 = sphi 0, %s651
      %s652 = sphi 0, %s649
      %s653 = sphi 0, %s652
      %s669 = sphi 0, %s653
    $region4: #{tpu_custom_call.1} parent=1 // loop_header_branch
      %50 = sbr.rel (%p48) target = $region8
    $region5: #{tpu_custom_call.1} parent=1 // loop_body
      %s52 = ssub.s32 %s47, 1
      %s53 = ssub.s32 %s47, 2
      %s54 = sadd.s32 %s47, 1
      %s55 = ssub.s32 %s47, %s54
      %p56 = scmp.eq.s32.totalorder %s55, 0
      %s58 = sadd.s32 %s57, 1
      %s59 = scalar_select %p56, %s57, %s58
      %p62 = pneg %p56
      %p63 = scmp.eq.s32.totalorder %s47, 1
      %p64 = por %p62, %p63
      %p65 = scmp.ne.s32.totalorder %s57, %s60
      %p66 = scmp.eq.s32.totalorder %s47, 0
      %p67 = por %p65, %p66
      %p68 = scmp.ne.s32.totalorder %s57, %s60
      %p69 = scmp.eq.s32.totalorder %s52, 1
      %p70 = por %p68, %p69
      %p71 = scmp.ne.s32.totalorder %s60, %s61
      %p72 = scmp.eq.s32.totalorder %s52, 0
      %p73 = por %p71, %p72
      %p74 = scmp.ne.s32.totalorder %s60, %s61
      %p75 = scmp.eq.s32.totalorder %s53, 1
      %p76 = por %p74, %p75
      %p78 = scmp.ne.s32.totalorder %s61, %s77
      %p79 = scmp.eq.s32.totalorder %s53, 0
      %p80 = por %p78, %p79
      %s81 = ssub.s32 %s47, %s54
      %p82 = scmp.eq.s32.totalorder %s81, 0
      %s84 = sadd.s32 %s83, 1
      %s85 = scalar_select %p82, %s83, %s84
      %p88 = pneg %p82
      %p89 = scmp.eq.s32.totalorder %s47, 1
      %p90 = por %p88, %p89
      %p91 = scmp.ne.s32.totalorder %s83, %s86
      %p92 = scmp.eq.s32.totalorder %s47, 0
      %p93 = por %p91, %p92
      %p94 = scmp.ne.s32.totalorder %s83, %s86
      %p95 = scmp.eq.s32.totalorder %s52, 1
      %p96 = por %p94, %p95
      %p97 = scmp.ne.s32.totalorder %s86, %s87
      %p98 = scmp.eq.s32.totalorder %s52, 0
      %p99 = por %p97, %p98
      %p100 = scmp.ne.s32.totalorder %s86, %s87
      %p101 = scmp.eq.s32.totalorder %s53, 1
      %p102 = por %p100, %p101
      %p104 = scmp.ne.s32.totalorder %s87, %s103
      %p105 = scmp.eq.s32.totalorder %s53, 0
      %p106 = por %p104, %p105
      %s107 = ssub.s32 %s47, %s54
      %p108 = scmp.eq.s32.totalorder %s107, 0
      %s110 = sadd.s32 %s109, 1
      %s111 = scalar_select %p108, %s109, %s110
      %p114 = pneg %p108
      %p115 = scmp.eq.s32.totalorder %s47, 1
      %p116 = por %p114, %p115
      %p117 = scmp.ne.s32.totalorder %s109, %s112
      %p118 = scmp.eq.s32.totalorder %s47, 0
      %p119 = por %p117, %p118
      %p120 = scmp.ne.s32.totalorder %s109, %s112
      %p121 = scmp.eq.s32.totalorder %s52, 1
      %p122 = por %p120, %p121
      %p123 = scmp.ne.s32.totalorder %s112, %s113
      %p124 = scmp.eq.s32.totalorder %s52, 0
      %p125 = por %p123, %p124
      %p126 = scmp.ne.s32.totalorder %s112, %s113
      %p127 = scmp.eq.s32.totalorder %s53, 1
      %p128 = por %p126, %p127
      %p130 = scmp.ne.s32.totalorder %s113, %s129
      %p131 = scmp.eq.s32.totalorder %s53, 0
      %p132 = por %p130, %p131
      %s133 = ssub.s32 %s47, %s54
      %p134 = scmp.eq.s32.totalorder %s133, 0
      %s136 = sadd.s32 %s135, 1
      %s137 = scalar_select %p134, %s135, %s136
      %p140 = pneg %p134
      %p141 = scmp.eq.s32.totalorder %s47, 1
      %p142 = por %p140, %p141
      %p143 = scmp.ne.s32.totalorder %s135, %s138
      %p144 = scmp.eq.s32.totalorder %s47, 0
      %p145 = por %p143, %p144
      %p146 = scmp.ne.s32.totalorder %s135, %s138
      %p147 = scmp.eq.s32.totalorder %s52, 1
      %p148 = por %p146, %p147
      %p149 = scmp.ne.s32.totalorder %s138, %s139
      %p150 = scmp.eq.s32.totalorder %s52, 0
      %p151 = por %p149, %p150
      %p152 = scmp.ne.s32.totalorder %s138, %s139
      %p153 = scmp.eq.s32.totalorder %s53, 1
      %p154 = por %p152, %p153
      %p156 = scmp.ne.s32.totalorder %s139, %s155
      %p157 = scmp.eq.s32.totalorder %s53, 0
      %p158 = por %p156, %p157
      %s159 = ssub.s32 %s47, %s54
      %p160 = scmp.eq.s32.totalorder %s159, 0
      %s162 = sadd.s32 %s161, 1
      %s163 = scalar_select %p160, %s161, %s162
      %p166 = pneg %p160
      %p167 = scmp.eq.s32.totalorder %s47, 1
      %p168 = por %p166, %p167
      %p169 = scmp.ne.s32.totalorder %s161, %s164
      %p170 = scmp.eq.s32.totalorder %s47, 0
      %p171 = por %p169, %p170
      %p172 = scmp.ne.s32.totalorder %s161, %s164
      %p173 = scmp.eq.s32.totalorder %s52, 1
      %p174 = por %p172, %p173
      %p175 = scmp.ne.s32.totalorder %s164, %s165
      %p176 = scmp.eq.s32.totalorder %s52, 0
      %p177 = por %p175, %p176
      %p178 = scmp.ne.s32.totalorder %s164, %s165
      %p179 = scmp.eq.s32.totalorder %s53, 1
      %p180 = por %p178, %p179
      %p182 = scmp.ne.s32.totalorder %s165, %s181
      %p183 = scmp.eq.s32.totalorder %s53, 0
      %p184 = por %p182, %p183
      %s186 = sadd.s32 %s185, 1
      %p189 = scmp.eq.s32.totalorder %s47, 1
      %p190 = scmp.ne.s32.totalorder %s185, %s187
      %p191 = scmp.eq.s32.totalorder %s47, 0
      %p192 = por %p190, %p191
      %p193 = scmp.ne.s32.totalorder %s185, %s187
      %p194 = scmp.eq.s32.totalorder %s52, 1
      %p195 = por %p193, %p194
      %p196 = scmp.ne.s32.totalorder %s187, %s188
      %p197 = scmp.eq.s32.totalorder %s52, 0
      %p198 = por %p196, %p197
      %p199 = scmp.ne.s32.totalorder %s187, %s188
      %p200 = scmp.eq.s32.totalorder %s53, 1
      %p201 = por %p199, %p200
      %p203 = scmp.ne.s32.totalorder %s188, %s202
      %p204 = scmp.eq.s32.totalorder %s53, 0
      %p205 = por %p203, %p204
      %s207 = sadd.s32 %s206, 1
      %p210 = scmp.eq.s32.totalorder %s47, 1
      %p211 = scmp.ne.s32.totalorder %s206, %s208
      %p212 = scmp.eq.s32.totalorder %s47, 0
      %p213 = por %p211, %p212
      %p214 = scmp.ne.s32.totalorder %s206, %s208
      %p215 = scmp.eq.s32.totalorder %s52, 1
      %p216 = por %p214, %p215
      %p217 = scmp.ne.s32.totalorder %s208, %s209
      %p218 = scmp.eq.s32.totalorder %s52, 0
      %p219 = por %p217, %p218
      %p220 = scmp.ne.s32.totalorder %s208, %s209
      %p221 = scmp.eq.s32.totalorder %s53, 1
      %p222 = por %p220, %p221
      %p224 = scmp.ne.s32.totalorder %s209, %s223
      %p225 = scmp.eq.s32.totalorder %s53, 0
      %p226 = por %p224, %p225
      %s228 = sadd.s32 %s227, 1
      %p231 = scmp.eq.s32.totalorder %s47, 1
      %p232 = scmp.ne.s32.totalorder %s227, %s229
      %p233 = scmp.eq.s32.totalorder %s47, 0
      %p234 = por %p232, %p233
      %p235 = scmp.ne.s32.totalorder %s227, %s229
      %p236 = scmp.eq.s32.totalorder %s52, 1
      %p237 = por %p235, %p236
      %p238 = scmp.ne.s32.totalorder %s229, %s230
      %p239 = scmp.eq.s32.totalorder %s52, 0
      %p240 = por %p238, %p239
      %p241 = scmp.ne.s32.totalorder %s229, %s230
      %p242 = scmp.eq.s32.totalorder %s53, 1
      %p243 = por %p241, %p242
      %p245 = scmp.ne.s32.totalorder %s230, %s244
      %p246 = scmp.eq.s32.totalorder %s53, 0
      %p247 = por %p245, %p246
      %s249 = sadd.s32 %s248, 1
      %p252 = scmp.eq.s32.totalorder %s47, 1
      %p253 = scmp.ne.s32.totalorder %s248, %s250
      %p254 = scmp.eq.s32.totalorder %s47, 0
      %p255 = por %p253, %p254
      %p256 = scmp.ne.s32.totalorder %s248, %s250
      %p257 = scmp.eq.s32.totalorder %s52, 1
      %p258 = por %p256, %p257
      %p259 = scmp.ne.s32.totalorder %s250, %s251
      %p260 = scmp.eq.s32.totalorder %s52, 0
      %p261 = por %p259, %p260
      %p262 = scmp.ne.s32.totalorder %s250, %s251
      %p263 = scmp.eq.s32.totalorder %s53, 1
      %p264 = por %p262, %p263
      %p266 = scmp.ne.s32.totalorder %s251, %s265
      %p267 = scmp.eq.s32.totalorder %s53, 0
      %p268 = por %p266, %p267
      %s270 = sadd.s32 %s269, 1
      %p273 = scmp.eq.s32.totalorder %s47, 1
      %p274 = scmp.ne.s32.totalorder %s269, %s271
      %p275 = scmp.eq.s32.totalorder %s47, 0
      %p276 = por %p274, %p275
      %p277 = scmp.ne.s32.totalorder %s269, %s271
      %p278 = scmp.eq.s32.totalorder %s52, 1
      %p279 = por %p277, %p278
      %p280 = scmp.ne.s32.totalorder %s271, %s272
      %p281 = scmp.eq.s32.totalorder %s52, 0
      %p282 = por %p280, %p281
      %p283 = scmp.ne.s32.totalorder %s271, %s272
      %p284 = scmp.eq.s32.totalorder %s53, 1
      %p285 = por %p283, %p284
      %p287 = scmp.ne.s32.totalorder %s272, %s286
      %p288 = scmp.eq.s32.totalorder %s53, 0
      %p289 = por %p287, %p288
      %s291 = sadd.s32 %s290, 1
      %p294 = scmp.eq.s32.totalorder %s47, 1
      %p295 = scmp.ne.s32.totalorder %s290, %s292
      %p296 = scmp.eq.s32.totalorder %s47, 0
      %p297 = por %p295, %p296
      %p298 = scmp.ne.s32.totalorder %s290, %s292
      %p299 = scmp.eq.s32.totalorder %s52, 1
      %p300 = por %p298, %p299
      %p301 = scmp.ne.s32.totalorder %s292, %s293
      %p302 = scmp.eq.s32.totalorder %s52, 0
      %p303 = por %p301, %p302
      %p304 = scmp.ne.s32.totalorder %s292, %s293
      %p305 = scmp.eq.s32.totalorder %s53, 1
      %p306 = por %p304, %p305
      %p308 = scmp.ne.s32.totalorder %s293, %s307
      %p309 = scmp.eq.s32.totalorder %s53, 0
      %p310 = por %p308, %p309
      %s312 = sadd.s32 %s311, 1
      %p315 = scmp.eq.s32.totalorder %s47, 1
      %p316 = scmp.ne.s32.totalorder %s311, %s313
      %p317 = scmp.eq.s32.totalorder %s47, 0
      %p318 = por %p316, %p317
      %p319 = scmp.ne.s32.totalorder %s311, %s313
      %p320 = scmp.eq.s32.totalorder %s52, 1
      %p321 = por %p319, %p320
      %p322 = scmp.ne.s32.totalorder %s313, %s314
      %p323 = scmp.eq.s32.totalorder %s52, 0
      %p324 = por %p322, %p323
      %p325 = scmp.ne.s32.totalorder %s313, %s314
      %p326 = scmp.eq.s32.totalorder %s53, 1
      %p327 = por %p325, %p326
      %p329 = scmp.ne.s32.totalorder %s314, %s328
      %p330 = scmp.eq.s32.totalorder %s53, 0
      %p331 = por %p329, %p330
      %s333 = sadd.s32 %s332, 1
      %p336 = scmp.eq.s32.totalorder %s47, 1
      %p337 = scmp.ne.s32.totalorder %s332, %s334
      %p338 = scmp.eq.s32.totalorder %s47, 0
      %p339 = por %p337, %p338
      %p340 = scmp.ne.s32.totalorder %s332, %s334
      %p341 = scmp.eq.s32.totalorder %s52, 1
      %p342 = por %p340, %p341
      %p343 = scmp.ne.s32.totalorder %s334, %s335
      %p344 = scmp.eq.s32.totalorder %s52, 0
      %p345 = por %p343, %p344
      %p346 = scmp.ne.s32.totalorder %s334, %s335
      %p347 = scmp.eq.s32.totalorder %s53, 1
      %p348 = por %p346, %p347
      %p350 = scmp.ne.s32.totalorder %s335, %s349
      %p351 = scmp.eq.s32.totalorder %s53, 0
      %p352 = por %p350, %p351
      %s354 = sadd.s32 %s353, 1
      %p357 = scmp.eq.s32.totalorder %s47, 1
      %p358 = scmp.ne.s32.totalorder %s353, %s355
      %p359 = scmp.eq.s32.totalorder %s47, 0
      %p360 = por %p358, %p359
      %p361 = scmp.ne.s32.totalorder %s353, %s355
      %p362 = scmp.eq.s32.totalorder %s52, 1
      %p363 = por %p361, %p362
      %p364 = scmp.ne.s32.totalorder %s355, %s356
      %p365 = scmp.eq.s32.totalorder %s52, 0
      %p366 = por %p364, %p365
      %p367 = scmp.ne.s32.totalorder %s355, %s356
      %p368 = scmp.eq.s32.totalorder %s53, 1
      %p369 = por %p367, %p368
      %p371 = scmp.ne.s32.totalorder %s356, %s370
      %p372 = scmp.eq.s32.totalorder %s53, 0
      %p373 = por %p371, %p372
      %s375 = sadd.s32 %s374, 1
      %p378 = scmp.eq.s32.totalorder %s47, 1
      %p379 = scmp.ne.s32.totalorder %s374, %s376
      %p380 = scmp.eq.s32.totalorder %s47, 0
      %p381 = por %p379, %p380
      %p382 = scmp.ne.s32.totalorder %s374, %s376
      %p383 = scmp.eq.s32.totalorder %s52, 1
      %p384 = por %p382, %p383
      %p385 = scmp.ne.s32.totalorder %s376, %s377
      %p386 = scmp.eq.s32.totalorder %s52, 0
      %p387 = por %p385, %p386
      %p388 = scmp.ne.s32.totalorder %s376, %s377
      %p389 = scmp.eq.s32.totalorder %s53, 1
      %p390 = por %p388, %p389
      %p392 = scmp.ne.s32.totalorder %s377, %s391
      %p393 = scmp.eq.s32.totalorder %s53, 0
      %p394 = por %p392, %p393
      %s396 = sadd.s32 %s395, 1
      %p399 = scmp.eq.s32.totalorder %s47, 1
      %p400 = scmp.ne.s32.totalorder %s395, %s397
      %p401 = scmp.eq.s32.totalorder %s47, 0
      %p402 = por %p400, %p401
      %p403 = scmp.ne.s32.totalorder %s395, %s397
      %p404 = scmp.eq.s32.totalorder %s52, 1
      %p405 = por %p403, %p404
      %p406 = scmp.ne.s32.totalorder %s397, %s398
      %p407 = scmp.eq.s32.totalorder %s52, 0
      %p408 = por %p406, %p407
      %p409 = scmp.ne.s32.totalorder %s397, %s398
      %p410 = scmp.eq.s32.totalorder %s53, 1
      %p411 = por %p409, %p410
      %p413 = scmp.ne.s32.totalorder %s398, %s412
      %p414 = scmp.eq.s32.totalorder %s53, 0
      %p415 = por %p413, %p414
      %s417 = sadd.s32 %s416, 1
      %p420 = scmp.eq.s32.totalorder %s47, 1
      %p421 = scmp.ne.s32.totalorder %s416, %s418
      %p422 = scmp.eq.s32.totalorder %s47, 0
      %p423 = por %p421, %p422
      %p424 = scmp.ne.s32.totalorder %s416, %s418
      %p425 = scmp.eq.s32.totalorder %s52, 1
      %p426 = por %p424, %p425
      %p427 = scmp.ne.s32.totalorder %s418, %s419
      %p428 = scmp.eq.s32.totalorder %s52, 0
      %p429 = por %p427, %p428
      %p430 = scmp.ne.s32.totalorder %s418, %s419
      %p431 = scmp.eq.s32.totalorder %s53, 1
      %p432 = por %p430, %p431
      %p434 = scmp.ne.s32.totalorder %s419, %s433
      %p435 = scmp.eq.s32.totalorder %s53, 0
      %p436 = por %p434, %p435
      %s438 = sadd.s32 %s437, 1
      %p441 = scmp.eq.s32.totalorder %s47, 1
      %p442 = scmp.ne.s32.totalorder %s437, %s439
      %p443 = scmp.eq.s32.totalorder %s47, 0
      %p444 = por %p442, %p443
      %p445 = scmp.ne.s32.totalorder %s437, %s439
      %p446 = scmp.eq.s32.totalorder %s52, 1
      %p447 = por %p445, %p446
      %p448 = scmp.ne.s32.totalorder %s439, %s440
      %p449 = scmp.eq.s32.totalorder %s52, 0
      %p450 = por %p448, %p449
      %p451 = scmp.ne.s32.totalorder %s439, %s440
      %p452 = scmp.eq.s32.totalorder %s53, 1
      %p453 = por %p451, %p452
      %p455 = scmp.ne.s32.totalorder %s440, %s454
      %p456 = scmp.eq.s32.totalorder %s53, 0
      %p457 = por %p455, %p456
      %s459 = sadd.s32 %s458, 1
      %p462 = scmp.eq.s32.totalorder %s47, 1
      %p463 = scmp.ne.s32.totalorder %s458, %s460
      %p464 = scmp.eq.s32.totalorder %s47, 0
      %p465 = por %p463, %p464
      %p466 = scmp.ne.s32.totalorder %s458, %s460
      %p467 = scmp.eq.s32.totalorder %s52, 1
      %p468 = por %p466, %p467
      %p469 = scmp.ne.s32.totalorder %s460, %s461
      %p470 = scmp.eq.s32.totalorder %s52, 0
      %p471 = por %p469, %p470
      %p472 = scmp.ne.s32.totalorder %s460, %s461
      %p473 = scmp.eq.s32.totalorder %s53, 1
      %p474 = por %p472, %p473
      %p476 = scmp.ne.s32.totalorder %s461, %s475
      %p477 = scmp.eq.s32.totalorder %s53, 0
      %p478 = por %p476, %p477
      %s480 = sadd.s32 %s479, 1
      %p483 = scmp.eq.s32.totalorder %s47, 1
      %p484 = scmp.ne.s32.totalorder %s479, %s481
      %p485 = scmp.eq.s32.totalorder %s47, 0
      %p486 = por %p484, %p485
      %p487 = scmp.ne.s32.totalorder %s479, %s481
      %p488 = scmp.eq.s32.totalorder %s52, 1
      %p489 = por %p487, %p488
      %p490 = scmp.ne.s32.totalorder %s481, %s482
      %p491 = scmp.eq.s32.totalorder %s52, 0
      %p492 = por %p490, %p491
      %p493 = scmp.ne.s32.totalorder %s481, %s482
      %p494 = scmp.eq.s32.totalorder %s53, 1
      %p495 = por %p493, %p494
      %p497 = scmp.ne.s32.totalorder %s482, %s496
      %p498 = scmp.eq.s32.totalorder %s53, 0
      %p499 = por %p497, %p498
      %s501 = sadd.s32 %s500, 1
      %p504 = scmp.eq.s32.totalorder %s47, 1
      %p505 = scmp.ne.s32.totalorder %s500, %s502
      %p506 = scmp.eq.s32.totalorder %s47, 0
      %p507 = por %p505, %p506
      %p508 = scmp.ne.s32.totalorder %s500, %s502
      %p509 = scmp.eq.s32.totalorder %s52, 1
      %p510 = por %p508, %p509
      %p511 = scmp.ne.s32.totalorder %s502, %s503
      %p512 = scmp.eq.s32.totalorder %s52, 0
      %p513 = por %p511, %p512
      %p514 = scmp.ne.s32.totalorder %s502, %s503
      %p515 = scmp.eq.s32.totalorder %s53, 1
      %p516 = por %p514, %p515
      %p518 = scmp.ne.s32.totalorder %s503, %s517
      %p519 = scmp.eq.s32.totalorder %s53, 0
      %p520 = por %p518, %p519
      %s522 = sadd.s32 %s521, 1
      %p525 = scmp.eq.s32.totalorder %s47, 1
      %p526 = scmp.ne.s32.totalorder %s521, %s523
      %p527 = scmp.eq.s32.totalorder %s47, 0
      %p528 = por %p526, %p527
      %p529 = scmp.ne.s32.totalorder %s521, %s523
      %p530 = scmp.eq.s32.totalorder %s52, 1
      %p531 = por %p529, %p530
      %p532 = scmp.ne.s32.totalorder %s523, %s524
      %p533 = scmp.eq.s32.totalorder %s52, 0
      %p534 = por %p532, %p533
      %p535 = scmp.ne.s32.totalorder %s523, %s524
      %p536 = scmp.eq.s32.totalorder %s53, 1
      %p537 = por %p535, %p536
      %p539 = scmp.ne.s32.totalorder %s524, %s538
      %p540 = scmp.eq.s32.totalorder %s53, 0
      %p541 = por %p539, %p540
      %s543 = sadd.s32 %s542, 1
      %p546 = scmp.eq.s32.totalorder %s47, 1
      %p547 = scmp.ne.s32.totalorder %s542, %s544
      %p548 = scmp.eq.s32.totalorder %s47, 0
      %p549 = por %p547, %p548
      %p550 = scmp.ne.s32.totalorder %s542, %s544
      %p551 = scmp.eq.s32.totalorder %s52, 1
      %p552 = por %p550, %p551
      %p553 = scmp.ne.s32.totalorder %s544, %s545
      %p554 = scmp.eq.s32.totalorder %s52, 0
      %p555 = por %p553, %p554
      %p556 = scmp.ne.s32.totalorder %s544, %s545
      %p557 = scmp.eq.s32.totalorder %s53, 1
      %p558 = por %p556, %p557
      %p560 = scmp.ne.s32.totalorder %s545, %s559
      %p561 = scmp.eq.s32.totalorder %s53, 0
      %p562 = por %p560, %p561
      %s564 = sadd.s32 %s563, 1
      %p567 = scmp.eq.s32.totalorder %s47, 1
      %p568 = scmp.ne.s32.totalorder %s563, %s565
      %p569 = scmp.eq.s32.totalorder %s47, 0
      %p570 = por %p568, %p569
      %p571 = scmp.ne.s32.totalorder %s563, %s565
      %p572 = scmp.eq.s32.totalorder %s52, 1
      %p573 = por %p571, %p572
      %p574 = scmp.ne.s32.totalorder %s565, %s566
      %p575 = scmp.eq.s32.totalorder %s52, 0
      %p576 = por %p574, %p575
      %p577 = scmp.ne.s32.totalorder %s565, %s566
      %p578 = scmp.eq.s32.totalorder %s53, 1
      %p579 = por %p577, %p578
      %p581 = scmp.ne.s32.totalorder %s566, %s580
      %p582 = scmp.eq.s32.totalorder %s53, 0
      %p583 = por %p581, %p582
      %s585 = sadd.s32 %s584, 1
      %p588 = scmp.eq.s32.totalorder %s47, 1
      %p589 = scmp.ne.s32.totalorder %s584, %s586
      %p590 = scmp.eq.s32.totalorder %s47, 0
      %p591 = por %p589, %p590
      %p592 = scmp.ne.s32.totalorder %s584, %s586
      %p593 = scmp.eq.s32.totalorder %s52, 1
      %p594 = por %p592, %p593
      %p595 = scmp.ne.s32.totalorder %s586, %s587
      %p596 = scmp.eq.s32.totalorder %s52, 0
      %p597 = por %p595, %p596
      %p598 = scmp.ne.s32.totalorder %s586, %s587
      %p599 = scmp.eq.s32.totalorder %s53, 1
      %p600 = por %p598, %p599
      %p602 = scmp.ne.s32.totalorder %s587, %s601
      %p603 = scmp.eq.s32.totalorder %s53, 0
      %p604 = por %p602, %p603
      %s606 = sadd.s32 %s605, 1
      %p609 = scmp.eq.s32.totalorder %s47, 1
      %p610 = scmp.ne.s32.totalorder %s605, %s607
      %p611 = scmp.eq.s32.totalorder %s47, 0
      %p612 = por %p610, %p611
      %p613 = scmp.ne.s32.totalorder %s605, %s607
      %p614 = scmp.eq.s32.totalorder %s52, 1
      %p615 = por %p613, %p614
      %p616 = scmp.ne.s32.totalorder %s607, %s608
      %p617 = scmp.eq.s32.totalorder %s52, 0
      %p618 = por %p616, %p617
      %p619 = scmp.ne.s32.totalorder %s607, %s608
      %p620 = scmp.eq.s32.totalorder %s53, 1
      %p621 = por %p619, %p620
      %p623 = scmp.ne.s32.totalorder %s608, %s622
      %p624 = scmp.eq.s32.totalorder %s53, 0
      %p625 = por %p623, %p624
      %s627 = sadd.s32 %s626, 1
      %p630 = scmp.eq.s32.totalorder %s47, 1
      %p631 = scmp.ne.s32.totalorder %s626, %s628
      %p632 = scmp.eq.s32.totalorder %s47, 0
      %p633 = por %p631, %p632
      %p634 = scmp.ne.s32.totalorder %s626, %s628
      %p635 = scmp.eq.s32.totalorder %s52, 1
      %p636 = por %p634, %p635
      %p637 = scmp.ne.s32.totalorder %s628, %s629
      %p638 = scmp.eq.s32.totalorder %s52, 0
      %p639 = por %p637, %p638
      %p640 = scmp.ne.s32.totalorder %s628, %s629
      %p641 = scmp.eq.s32.totalorder %s53, 1
      %p642 = por %p640, %p641
      %p644 = scmp.ne.s32.totalorder %s629, %s643
      %p645 = scmp.eq.s32.totalorder %s53, 0
      %p646 = por %p644, %p645
      %s647 = ssub.s32 %s47, %s54
      %p648 = scmp.eq.s32.totalorder %s647, 0
      %s650 = sadd.s32 %s649, 1
      %s651 = scalar_select %p648, %s649, %s650
      %p654 = pneg %p648
      %p655 = scmp.eq.s32.totalorder %s47, 1
      %p656 = por %p654, %p655
      %p657 = scmp.ne.s32.totalorder %s649, %s652
      %p658 = scmp.eq.s32.totalorder %s47, 0
      %p659 = por %p657, %p658
      %p660 = scmp.ne.s32.totalorder %s649, %s652
      %p661 = scmp.eq.s32.totalorder %s52, 1
      %p662 = por %p660, %p661
      %p663 = scmp.ne.s32.totalorder %s652, %s653
      %p664 = scmp.eq.s32.totalorder %s52, 0
      %p665 = por %p663, %p664
      %p666 = scmp.ne.s32.totalorder %s652, %s653
      %p667 = scmp.eq.s32.totalorder %s53, 1
      %p668 = por %p666, %p667
      %p670 = scmp.ne.s32.totalorder %s653, %s669
      %p671 = scmp.eq.s32.totalorder %s53, 0
      %p672 = por %p670, %p671
      %p673 = scmp.le.s32.totalorder 1, %s47
      %p674 = scmp.lt.s32.totalorder %s47, 3
      %p675 = pnand %p673, %p674
      %p676 = pneg %p675
      // Predicated region
      $region9: #{tpu_custom_call.1} parent=5 // pred_check
        _
      $region10: #{tpu_custom_call.1} parent=5 // pred_check_branch
        %678 = sbr.rel (%p675) target = $region12
      $region11: #{tpu_custom_call.1} parent=5 // pred_region
        %s679 = ssub.s32 %s47, 1
        // Predicated region
        $region13: #{tpu_custom_call.1} parent=11 // pred_check
          %p680 = pneg %p198
        $region14: #{tpu_custom_call.1} parent=11 // pred_check_branch
          %682 = sbr.rel (%p680) target = $region16
        $region15: #{tpu_custom_call.1} parent=11 // pred_region
          %s684 = ssub.s32 256, 256
          %685 = vsyncadd [#allocation7], %s684
          %s686 = sshll.u32 [#allocation8], 4
          %s687 = int_to_ptr.vmem [resolvable:$true] %s686
          %692 = dma.hbm_to_vmem [thread:$0]  %s5, 256, %s687, [#allocation7], 64, 64, 4
        $region16: #{tpu_custom_call.1} parent=11 // pred_fallthru
          _
        // Predicated region
        $region17: #{tpu_custom_call.1} parent=11 // pred_check
          %p693 = pneg %p219
        $region18: #{tpu_custom_call.1} parent=11 // pred_check_branch
          %695 = sbr.rel (%p693) target = $region20
        $region19: #{tpu_custom_call.1} parent=11 // pred_region
          %s697 = ssub.s32 16, 16
          %698 = vsyncadd [#allocation10], %s697
          %s700 = sshll.u32 [#allocation9], 4
          %s701 = int_to_ptr.vmem [resolvable:$true] %s700
          %703 = dma.hbm_to_vmem [thread:$0]  %s6, 16, %s701, [#allocation10]
        $region20: #{tpu_custom_call.1} parent=11 // pred_fallthru
          _
        // Predicated region
        $region21: #{tpu_custom_call.1} parent=11 // pred_check
          %p704 = pneg %p240
        $region22: #{tpu_custom_call.1} parent=11 // pred_check_branch
          %706 = sbr.rel (%p704) target = $region24
        $region23: #{tpu_custom_call.1} parent=11 // pred_region
          %s708 = ssub.s32 256, 256
          %709 = vsyncadd [#allocation10], %s708
          %s710 = sshll.u32 [#allocation11], 4
          %s711 = int_to_ptr.vmem [resolvable:$true] %s710
          %716 = dma.hbm_to_vmem [thread:$0]  %s7, 256, %s711, [#allocation10], 64, 64, 4
        $region24: #{tpu_custom_call.1} parent=11 // pred_fallthru
          _
        // Predicated region
        $region25: #{tpu_custom_call.1} parent=11 // pred_check
          %p717 = pneg %p261
        $region26: #{tpu_custom_call.1} parent=11 // pred_check_branch
          %719 = sbr.rel (%p717) target = $region28
        $region27: #{tpu_custom_call.1} parent=11 // pred_region
          %s721 = ssub.s32 16, 16
          %722 = vsyncadd [#allocation13], %s721
          %s724 = sshll.u32 [#allocation12], 4
          %s725 = int_to_ptr.vmem [resolvable:$true] %s724
          %727 = dma.hbm_to_vmem [thread:$0]  %s8, 16, %s725, [#allocation13]
        $region28: #{tpu_custom_call.1} parent=11 // pred_fallthru
          _
        // Predicated region
        $region29: #{tpu_custom_call.1} parent=11 // pred_check
          %p728 = pneg %p282
        $region30: #{tpu_custom_call.1} parent=11 // pred_check_branch
          %730 = sbr.rel (%p728) target = $region32
        $region31: #{tpu_custom_call.1} parent=11 // pred_region
          %s732 = ssub.s32 16, 16
          %733 = vsyncadd [#allocation13], %s732
          %s735 = sshll.u32 [#allocation14], 4
          %s736 = int_to_ptr.vmem [resolvable:$true] %s735
          %738 = dma.hbm_to_vmem [thread:$0]  %s9, 16, %s736, [#allocation13]
        $region32: #{tpu_custom_call.1} parent=11 // pred_fallthru
          _
        // Predicated region
        $region33: #{tpu_custom_call.1} parent=11 // pred_check
          %p739 = pneg %p303
        $region34: #{tpu_custom_call.1} parent=11 // pred_check_branch
          %741 = sbr.rel (%p739) target = $region36
        $region35: #{tpu_custom_call.1} parent=11 // pred_region
          %s743 = ssub.s32 16, 16
          %744 = vsyncadd [#allocation16], %s743
          %s746 = sshll.u32 [#allocation15], 4
          %s747 = int_to_ptr.vmem [resolvable:$true] %s746
          %749 = dma.hbm_to_vmem [thread:$0]  %s10, 16, %s747, [#allocation16]
        $region36: #{tpu_custom_call.1} parent=11 // pred_fallthru
          _
        // Predicated region
        $region37: #{tpu_custom_call.1} parent=11 // pred_check
          %p750 = pneg %p324
        $region38: #{tpu_custom_call.1} parent=11 // pred_check_branch
          %752 = sbr.rel (%p750) target = $region40
        $region39: #{tpu_custom_call.1} parent=11 // pred_region
          _
        $region40: #{tpu_custom_call.1} parent=11 // pred_fallthru
          _
        // Predicated region
        $region41: #{tpu_custom_call.1} parent=11 // pred_check
          %p753 = pneg %p345
        $region42: #{tpu_custom_call.1} parent=11 // pred_check_branch
          %755 = sbr.rel (%p753) target = $region44
        $region43: #{tpu_custom_call.1} parent=11 // pred_region
          %s757 = ssub.s32 16, 16
          %758 = vsyncadd [#allocation16], %s757
          %s760 = sshll.u32 [#allocation17], 4
          %s761 = int_to_ptr.vmem [resolvable:$true] %s760
          %763 = dma.hbm_to_vmem [thread:$0]  %s12, 16, %s761, [#allocation16]
        $region44: #{tpu_custom_call.1} parent=11 // pred_fallthru
          _
        // Predicated region
        $region45: #{tpu_custom_call.1} parent=11 // pred_check
          %p764 = pneg %p366
        $region46: #{tpu_custom_call.1} parent=11 // pred_check_branch
          %766 = sbr.rel (%p764) target = $region48
        $region47: #{tpu_custom_call.1} parent=11 // pred_region
          _
        $region48: #{tpu_custom_call.1} parent=11 // pred_fallthru
          _
        // Predicated region
        $region49: #{tpu_custom_call.1} parent=11 // pred_check
          %p767 = pneg %p387
        $region50: #{tpu_custom_call.1} parent=11 // pred_check_branch
          %769 = sbr.rel (%p767) target = $region52
        $region51: #{tpu_custom_call.1} parent=11 // pred_region
          %s771 = ssub.s32 16, 16
          %772 = vsyncadd [#allocation19], %s771
          %s774 = sshll.u32 [#allocation18], 4
          %s775 = int_to_ptr.vmem [resolvable:$true] %s774
          %777 = dma.hbm_to_vmem [thread:$0]  %s14, 16, %s775, [#allocation19]
        $region52: #{tpu_custom_call.1} parent=11 // pred_fallthru
          _
        // Predicated region
        $region53: #{tpu_custom_call.1} parent=11 // pred_check
          %p778 = pneg %p408
        $region54: #{tpu_custom_call.1} parent=11 // pred_check_branch
          %780 = sbr.rel (%p778) target = $region56
        $region55: #{tpu_custom_call.1} parent=11 // pred_region
          %s782 = ssub.s32 256, 256
          %783 = vsyncadd [#allocation19], %s782
          %s784 = sshll.u32 [#allocation20], 4
          %s785 = int_to_ptr.vmem [resolvable:$true] %s784
          %790 = dma.hbm_to_vmem [thread:$0]  %s15, 256, %s785, [#allocation19], 64, 64, 4
        $region56: #{tpu_custom_call.1} parent=11 // pred_fallthru
          _
        // Predicated region
        $region57: #{tpu_custom_call.1} parent=11 // pred_check
          %p791 = pneg %p429
        $region58: #{tpu_custom_call.1} parent=11 // pred_check_branch
          %793 = sbr.rel (%p791) target = $region60
        $region59: #{tpu_custom_call.1} parent=11 // pred_region
          %s795 = ssub.s32 16, 16
          %796 = vsyncadd [#allocation22], %s795
          %s798 = sshll.u32 [#allocation21], 4
          %s799 = int_to_ptr.vmem [resolvable:$true] %s798
          %801 = dma.hbm_to_vmem [thread:$0]  %s16, 16, %s799, [#allocation22]
        $region60: #{tpu_custom_call.1} parent=11 // pred_fallthru
          _
        // Predicated region
        $region61: #{tpu_custom_call.1} parent=11 // pred_check
          %p802 = pneg %p450
        $region62: #{tpu_custom_call.1} parent=11 // pred_check_branch
          %804 = sbr.rel (%p802) target = $region64
        $region63: #{tpu_custom_call.1} parent=11 // pred_region
          _
        $region64: #{tpu_custom_call.1} parent=11 // pred_fallthru
          _
        // Predicated region
        $region65: #{tpu_custom_call.1} parent=11 // pred_check
          %p805 = pneg %p471
        $region66: #{tpu_custom_call.1} parent=11 // pred_check_branch
          %807 = sbr.rel (%p805) target = $region68
        $region67: #{tpu_custom_call.1} parent=11 // pred_region
          _
        $region68: #{tpu_custom_call.1} parent=11 // pred_fallthru
          _
        // Predicated region
        $region69: #{tpu_custom_call.1} parent=11 // pred_check
          %p808 = pneg %p492
        $region70: #{tpu_custom_call.1} parent=11 // pred_check_branch
          %810 = sbr.rel (%p808) target = $region72
        $region71: #{tpu_custom_call.1} parent=11 // pred_region
          _
        $region72: #{tpu_custom_call.1} parent=11 // pred_fallthru
          _
        // Predicated region
        $region73: #{tpu_custom_call.1} parent=11 // pred_check
          %p811 = pneg %p513
        $region74: #{tpu_custom_call.1} parent=11 // pred_check_branch
          %813 = sbr.rel (%p811) target = $region76
        $region75: #{tpu_custom_call.1} parent=11 // pred_region
          _
        $region76: #{tpu_custom_call.1} parent=11 // pred_fallthru
          _
        // Predicated region
        $region77: #{tpu_custom_call.1} parent=11 // pred_check
          %p814 = pneg %p534
        $region78: #{tpu_custom_call.1} parent=11 // pred_check_branch
          %816 = sbr.rel (%p814) target = $region80
        $region79: #{tpu_custom_call.1} parent=11 // pred_region
          %s818 = ssub.s32 256, 256
          %819 = vsyncadd [#allocation22], %s818
          %s820 = sshll.u32 [#allocation23], 4
          %s821 = int_to_ptr.vmem [resolvable:$true] %s820
          %826 = dma.hbm_to_vmem [thread:$0]  %s21, 256, %s821, [#allocation22], 64, 64, 4
        $region80: #{tpu_custom_call.1} parent=11 // pred_fallthru
          _
        // Predicated region
        $region81: #{tpu_custom_call.1} parent=11 // pred_check
          %p827 = pneg %p555
        $region82: #{tpu_custom_call.1} parent=11 // pred_check_branch
          %829 = sbr.rel (%p827) target = $region84
        $region83: #{tpu_custom_call.1} parent=11 // pred_region
          _
        $region84: #{tpu_custom_call.1} parent=11 // pred_fallthru
          _
        // Predicated region
        $region85: #{tpu_custom_call.1} parent=11 // pred_check
          %p830 = pneg %p576
        $region86: #{tpu_custom_call.1} parent=11 // pred_check_branch
          %832 = sbr.rel (%p830) target = $region88
        $region87: #{tpu_custom_call.1} parent=11 // pred_region
          _
        $region88: #{tpu_custom_call.1} parent=11 // pred_fallthru
          _
        // Predicated region
        $region89: #{tpu_custom_call.1} parent=11 // pred_check
          %p833 = pneg %p597
        $region90: #{tpu_custom_call.1} parent=11 // pred_check_branch
          %835 = sbr.rel (%p833) target = $region92
        $region91: #{tpu_custom_call.1} parent=11 // pred_region
          _
        $region92: #{tpu_custom_call.1} parent=11 // pred_fallthru
          _
        // Predicated region
        $region93: #{tpu_custom_call.1} parent=11 // pred_check
          %p836 = pneg %p618
        $region94: #{tpu_custom_call.1} parent=11 // pred_check_branch
          %838 = sbr.rel (%p836) target = $region96
        $region95: #{tpu_custom_call.1} parent=11 // pred_region
          _
        $region96: #{tpu_custom_call.1} parent=11 // pred_fallthru
          _
        // Predicated region
        $region97: #{tpu_custom_call.1} parent=11 // pred_check
          %p839 = pneg %p639
        $region98: #{tpu_custom_call.1} parent=11 // pred_check_branch
          %841 = sbr.rel (%p839) target = $region100
        $region99: #{tpu_custom_call.1} parent=11 // pred_region
          _
        $region100: #{tpu_custom_call.1} parent=11 // pred_fallthru
          _
      $region12: #{tpu_custom_call.1} parent=5 // pred_fallthru
        _
      %p842 = scmp.lt.s32.totalorder %s47, 2
      // Predicated region
      $region101: #{tpu_custom_call.1} parent=5 // pred_check
        %p843 = pneg %p842
      $region102: #{tpu_custom_call.1} parent=5 // pred_check_branch
        %845 = sbr.rel (%p843) target = $region104
      $region103: #{tpu_custom_call.1} parent=5 // pred_region
        // Predicated region
        $region105: #{tpu_custom_call.1} parent=103 // pred_check
          %p846 = pneg %p67
        $region106: #{tpu_custom_call.1} parent=103 // pred_check_branch
          %848 = sbr.rel (%p846) target = $region108
        $region107: #{tpu_custom_call.1} parent=103 // pred_region
          %p849 = scmp.lt.s32.totalorder %s47, 1
          %s850 = scalar_select %p849, %s47, 1
          %s851 = smul.addr %s850, 8
          %s852 = scalar_lea.vmem %s0, %s851
        $region108: #{tpu_custom_call.1} parent=103 // pred_fallthru
          _
        // Predicated region
        $region109: #{tpu_custom_call.1} parent=103 // pred_check
          %p853 = pneg %p93
        $region110: #{tpu_custom_call.1} parent=103 // pred_check_branch
          %855 = sbr.rel (%p853) target = $region112
        $region111: #{tpu_custom_call.1} parent=103 // pred_region
          %p856 = scmp.lt.s32.totalorder %s47, 1
          %s857 = scalar_select %p856, %s47, 1
          %s858 = smul.addr %s857, 2
          %s859 = smul.addr %s858, 8
          %s860 = scalar_lea.vmem %s1, %s859
        $region112: #{tpu_custom_call.1} parent=103 // pred_fallthru
          _
        // Predicated region
        $region113: #{tpu_custom_call.1} parent=103 // pred_check
          %p861 = pneg %p119
        $region114: #{tpu_custom_call.1} parent=103 // pred_check_branch
          %863 = sbr.rel (%p861) target = $region116
        $region115: #{tpu_custom_call.1} parent=103 // pred_region
          %p864 = scmp.lt.s32.totalorder %s47, 1
          %s865 = scalar_select %p864, %s47, 1
          %s866 = smul.addr %s865, 2
          %s867 = smul.addr %s866, 8
          %s868 = scalar_lea.vmem %s2, %s867
        $region116: #{tpu_custom_call.1} parent=103 // pred_fallthru
          _
        // Predicated region
        $region117: #{tpu_custom_call.1} parent=103 // pred_check
          %p869 = pneg %p145
        $region118: #{tpu_custom_call.1} parent=103 // pred_check_branch
          %871 = sbr.rel (%p869) target = $region120
        $region119: #{tpu_custom_call.1} parent=103 // pred_region
          %s872 = sand.u32 %s135, 1
          %s873 = scalar_lea.sflag [#allocation4], %s872
          %s874 = sand.u32 %s135, 1
          %s875 = smul.addr %s874, 8
          %s876 = scalar_lea.vmem [#allocation3], %s875
          %s878 = ssub.s32 128, 128
          %879 = vsyncadd %s873, %s878
          %s880 = smul.addr %s47, 128
          %s881 = scalar_lea.hbm %s3, %s880
          %s883 = sshll.u32 %s876, 4
          %s884 = int_to_ptr.vmem [resolvable:$true] %s883
          %886 = dma.hbm_to_vmem [thread:$0]  %s881, 128, %s884, %s873
        $region120: #{tpu_custom_call.1} parent=103 // pred_fallthru
          _
        // Predicated region
        $region121: #{tpu_custom_call.1} parent=103 // pred_check
          %p887 = pneg %p171
        $region122: #{tpu_custom_call.1} parent=103 // pred_check_branch
          %889 = sbr.rel (%p887) target = $region124
        $region123: #{tpu_custom_call.1} parent=103 // pred_region
          %s890 = sand.u32 %s47, 1
          %s891 = scalar_lea.sflag [#allocation7], %s890
          %s892 = sand.u32 %s161, 1
          %s893 = smul.addr %s892, 8
          %s894 = scalar_lea.vmem [#allocation6], %s893
          %s896 = ssub.s32 128, 128
          %897 = vsyncadd %s891, %s896
          %s898 = smul.addr %s47, 128
          %s899 = scalar_lea.hbm %s4, %s898
          %s901 = sshll.u32 %s894, 4
          %s902 = int_to_ptr.vmem [resolvable:$true] %s901
          %904 = dma.hbm_to_vmem [thread:$0]  %s899, 128, %s902, %s891
        $region124: #{tpu_custom_call.1} parent=103 // pred_fallthru
          _
      $region104: #{tpu_custom_call.1} parent=5 // pred_fallthru
        _
      %p905 = scmp.le.s32.totalorder 1, %s47
      %p906 = scmp.lt.s32.totalorder %s47, 3
      %p907 = pnand %p905, %p906
      %p908 = pneg %p907
      // Predicated region
      $region125: #{tpu_custom_call.1} parent=5 // pred_check
        _
      $region126: #{tpu_custom_call.1} parent=5 // pred_check_branch
        %910 = sbr.rel (%p907) target = $region128
      $region127: #{tpu_custom_call.1} parent=5 // pred_region
        %s911 = ssub.s32 %s47, 1
        %s912 = sand.u32 %s138, 1
        %s913 = scalar_lea.sflag [#allocation4], %s912
        %s914 = sand.u32 %s138, 1
        %s915 = smul.addr %s914, 8
        %s916 = scalar_lea.vmem [#allocation3], %s915
        // Predicated region
        $region129: #{tpu_custom_call.1} parent=127 // pred_check
          %p917 = pneg %p151
        $region130: #{tpu_custom_call.1} parent=127 // pred_check_branch
          %919 = sbr.rel (%p917) target = $region132
        $region131: #{tpu_custom_call.1} parent=127 // pred_region
          %920 = dma.done %s913, 128
        $region132: #{tpu_custom_call.1} parent=127 // pred_fallthru
          _
        %s921 = sand.u32 %s52, 1
        %s922 = scalar_lea.sflag [#allocation7], %s921
        %s923 = sand.u32 %s164, 1
        %s924 = smul.addr %s923, 8
        %s925 = scalar_lea.vmem [#allocation6], %s924
        // Predicated region
        $region133: #{tpu_custom_call.1} parent=127 // pred_check
          %p926 = pneg %p177
        $region134: #{tpu_custom_call.1} parent=127 // pred_check_branch
          %928 = sbr.rel (%p926) target = $region136
        $region135: #{tpu_custom_call.1} parent=127 // pred_region
          %929 = dma.done %s922, 128
        $region136: #{tpu_custom_call.1} parent=127 // pred_fallthru
          _
        // Predicated region
        $region137: #{tpu_custom_call.1} parent=127 // pred_check
          %p930 = pneg %p198
        $region138: #{tpu_custom_call.1} parent=127 // pred_check_branch
          %932 = sbr.rel (%p930) target = $region140
        $region139: #{tpu_custom_call.1} parent=127 // pred_region
          %933 = dma.done [#allocation7], 256
        $region140: #{tpu_custom_call.1} parent=127 // pred_fallthru
          _
        // Predicated region
        $region141: #{tpu_custom_call.1} parent=127 // pred_check
          %p934 = pneg %p219
        $region142: #{tpu_custom_call.1} parent=127 // pred_check_branch
          %936 = sbr.rel (%p934) target = $region144
        $region143: #{tpu_custom_call.1} parent=127 // pred_region
          %937 = dma.done [#allocation10], 16
        $region144: #{tpu_custom_call.1} parent=127 // pred_fallthru
          _
        // Predicated region
        $region145: #{tpu_custom_call.1} parent=127 // pred_check
          %p938 = pneg %p240
        $region146: #{tpu_custom_call.1} parent=127 // pred_check_branch
          %940 = sbr.rel (%p938) target = $region148
        $region147: #{tpu_custom_call.1} parent=127 // pred_region
          %941 = dma.done [#allocation10], 256
        $region148: #{tpu_custom_call.1} parent=127 // pred_fallthru
          _
        // Predicated region
        $region149: #{tpu_custom_call.1} parent=127 // pred_check
          %p942 = pneg %p261
        $region150: #{tpu_custom_call.1} parent=127 // pred_check_branch
          %944 = sbr.rel (%p942) target = $region152
        $region151: #{tpu_custom_call.1} parent=127 // pred_region
          %945 = dma.done [#allocation13], 16
        $region152: #{tpu_custom_call.1} parent=127 // pred_fallthru
          _
        // Predicated region
        $region153: #{tpu_custom_call.1} parent=127 // pred_check
          %p946 = pneg %p282
        $region154: #{tpu_custom_call.1} parent=127 // pred_check_branch
          %948 = sbr.rel (%p946) target = $region156
        $region155: #{tpu_custom_call.1} parent=127 // pred_region
          %949 = dma.done [#allocation13], 16
        $region156: #{tpu_custom_call.1} parent=127 // pred_fallthru
          _
        // Predicated region
        $region157: #{tpu_custom_call.1} parent=127 // pred_check
          %p950 = pneg %p303
        $region158: #{tpu_custom_call.1} parent=127 // pred_check_branch
          %952 = sbr.rel (%p950) target = $region160
        $region159: #{tpu_custom_call.1} parent=127 // pred_region
          %953 = dma.done [#allocation16], 16
        $region160: #{tpu_custom_call.1} parent=127 // pred_fallthru
          _
        // Predicated region
        $region161: #{tpu_custom_call.1} parent=127 // pred_check
          %p954 = pneg %p345
        $region162: #{tpu_custom_call.1} parent=127 // pred_check_branch
          %956 = sbr.rel (%p954) target = $region164
        $region163: #{tpu_custom_call.1} parent=127 // pred_region
          %957 = dma.done [#allocation16], 16
        $region164: #{tpu_custom_call.1} parent=127 // pred_fallthru
          _
        // Predicated region
        $region165: #{tpu_custom_call.1} parent=127 // pred_check
          %p958 = pneg %p387
        $region166: #{tpu_custom_call.1} parent=127 // pred_check_branch
          %960 = sbr.rel (%p958) target = $region168
        $region167: #{tpu_custom_call.1} parent=127 // pred_region
          %961 = dma.done [#allocation19], 16
        $region168: #{tpu_custom_call.1} parent=127 // pred_fallthru
          _
        // Predicated region
        $region169: #{tpu_custom_call.1} parent=127 // pred_check
          %p962 = pneg %p408
        $region170: #{tpu_custom_call.1} parent=127 // pred_check_branch
          %964 = sbr.rel (%p962) target = $region172
        $region171: #{tpu_custom_call.1} parent=127 // pred_region
          %965 = dma.done [#allocation19], 256
        $region172: #{tpu_custom_call.1} parent=127 // pred_fallthru
          _
        // Predicated region
        $region173: #{tpu_custom_call.1} parent=127 // pred_check
          %p966 = pneg %p429
        $region174: #{tpu_custom_call.1} parent=127 // pred_check_branch
          %968 = sbr.rel (%p966) target = $region176
        $region175: #{tpu_custom_call.1} parent=127 // pred_region
          %969 = dma.done [#allocation22], 16
        $region176: #{tpu_custom_call.1} parent=127 // pred_fallthru
          _
        // Predicated region
        $region177: #{tpu_custom_call.1} parent=127 // pred_check
          %p970 = pneg %p534
        $region178: #{tpu_custom_call.1} parent=127 // pred_check_branch
          %972 = sbr.rel (%p970) target = $region180
        $region179: #{tpu_custom_call.1} parent=127 // pred_region
          %973 = dma.done [#allocation22], 256
        $region180: #{tpu_custom_call.1} parent=127 // pred_fallthru
          _
        %p974 = scmp.lt.s32.totalorder %s52, 1
        %s975 = scalar_select %p974, %s52, 1
        %s976 = smul.addr %s975, 8
        %s977 = scalar_lea.vmem %s0, %s976
        %p978 = pneg %p73
        %p979 = pneg %p70
        %p980 = scmp.lt.s32.totalorder %s52, 1
        %s981 = scalar_select %p980, %s52, 1
        %s982 = smul.addr %s981, 2
        %s983 = smul.addr %s982, 8
        %s984 = scalar_lea.vmem %s1, %s983
        %p985 = pneg %p99
        %p986 = pneg %p96
        %p987 = scmp.lt.s32.totalorder %s52, 1
        %s988 = scalar_select %p987, %s52, 1
        %s989 = smul.addr %s988, 2
        %s990 = smul.addr %s989, 8
        %s991 = scalar_lea.vmem %s2, %s990
        %p992 = pneg %p125
        %p993 = pneg %p122
        %s994 = sand.u32 %s138, 1
        %s995 = scalar_lea.sflag [#allocation4], %s994
        %s996 = sand.u32 %s138, 1
        %s997 = smul.addr %s996, 8
        %s998 = scalar_lea.vmem [#allocation3], %s997
        %p999 = pneg %p151
        %p1000 = pneg %p148
        %s1001 = sand.u32 %s52, 1
        %s1002 = scalar_lea.sflag [#allocation7], %s1001
        %s1003 = sand.u32 %s164, 1
        %s1004 = smul.addr %s1003, 8
        %s1005 = scalar_lea.vmem [#allocation6], %s1004
        %p1006 = pneg %p177
        %p1007 = pneg %p174
        %p1008 = pneg %p198
        %p1009 = pneg %p195
        %p1010 = pneg %p219
        %p1011 = pneg %p216
        %p1012 = pneg %p240
        %p1013 = pneg %p237
        %p1014 = pneg %p261
        %p1015 = pneg %p258
        %p1016 = pneg %p282
        %p1017 = pneg %p279
        %p1018 = pneg %p303
        %p1019 = pneg %p300
        %p1020 = pneg %p324
        %p1021 = pneg %p321
        %p1022 = pneg %p345
        %p1023 = pneg %p342
        %p1024 = pneg %p366
        %p1025 = pneg %p363
        %p1026 = pneg %p387
        %p1027 = pneg %p384
        %p1028 = pneg %p408
        %p1029 = pneg %p405
        %p1030 = pneg %p429
        %p1031 = pneg %p426
        %p1032 = pneg %p450
        %p1033 = pneg %p447
        %p1034 = pneg %p471
        %p1035 = pneg %p468
        %p1036 = pneg %p492
        %p1037 = pneg %p489
        %p1038 = pneg %p513
        %p1039 = pneg %p510
        %p1040 = pneg %p534
        %p1041 = pneg %p531
        %p1042 = pneg %p555
        %p1043 = pneg %p552
        %p1044 = pneg %p576
        %p1045 = pneg %p573
        %p1046 = pneg %p597
        %p1047 = pneg %p594
        %p1048 = pneg %p618
        %p1049 = pneg %p615
        %p1050 = pneg %p639
        %p1051 = pneg %p636
        %p1052 = pneg %p665
        %p1053 = pneg %p662
        %s1054 = sand.u32 %s652, 1
        %s1055 = scalar_lea.sflag [#allocation5], %s1054
        %s1056 = sand.u32 %s652, 1
        %s1057 = smul.addr %s1056, 8
        %s1058 = scalar_lea.vmem [#allocation24], %s1057
        %p1059 = scmp.lt.s32.totalorder %s52, 1
        %s1060 = scalar_select %p1059, %s52, 1
        %s1061 = smul.addr %s1060, 8
        %s1062 = scalar_lea.vmem %s0, %s1061
        %p1063 = scmp.lt.s32.totalorder %s52, 1
        %s1064 = scalar_select %p1063, %s52, 1
        %s1065 = smul.addr %s1064, 2
        %s1066 = smul.addr %s1065, 8
        %s1067 = scalar_lea.vmem %s1, %s1066
        %p1068 = scmp.lt.s32.totalorder %s52, 1
        %s1069 = scalar_select %p1068, %s52, 1
        %s1070 = smul.addr %s1069, 2
        %s1071 = smul.addr %s1070, 8
        %s1072 = scalar_lea.vmem %s2, %s1071
        %v1074 = vld [vmem:[%s1062] sm:$0xff]
        %v1075 = vld [vmem:[%s1067] sm:$0xff]
        %v1076 = vld [vmem:[%s1067 + $0x8] sm:$0xff]
        %v1077 = vld [vmem:[%s1072] sm:$0xff]
        %v1078 = vld [vmem:[%s1072 + $0x8] sm:$0xff]
        %v1079 = vpack.c.bf16 %v1074, %v1074
        %v1080 = vld [vmem:[#allocation8] sm:$0xf]
        %v1081 = vld [vmem:[#allocation8 + $0x4] sm:$0xf]
        %v1082 = vld [vmem:[#allocation8 + $0x8] sm:$0xf]
        %v1083 = vld [vmem:[#allocation8 + $0xc] sm:$0xf]
        %v1084 = vld [vmem:[#allocation9] sm:$0x1]
        %v1086 = vlaneseq
        %v1087 = vshrl.u32 %v1086, 7
        %v1088 = vsub.s32 0, %v1087
        %v1089 = vrot.slane %v1084, %v1088
        %v1095 = vunpack.c.l.b16 %v1080
        %v1096 = vunpack.c.l.b16 %v1081
        %v1097 = vunpack.c.l.b16 %v1082
        %v1098 = vunpack.c.l.b16 %v1083
        %v1099 = vpack.c.b16 %v1096, %v1095
        %v1100 = vpack.c.b16 %v1098, %v1097
        %vm1103 = vcmask 261120
        %v1105 = vsel %vm1103, %v1079, 0
        %1107 = vmatprep.subr.bf16.mxu0 0
        %1108 = vmatpush1.bf16.msra.mxu0 %v1099
        %1109 = vmatprep.subr.bf16.mxu0 0
        %1110 = vmatpush1.bf16.msra.mxu0 %v1100
        %1111 = vmatprep.subr.bf16.mxu0 0
        %1112 = vmatpush1.bf16.msra.mxu0 0
        %1113 = vmatprep.subr.bf16.mxu0 0
        %1114 = vmatpush1.bf16.msra.mxu0 0
        %1115 = vmatprep.subr.bf16.mxu0 0
        %1116 = vmatpush1.bf16.msra.mxu0 0
        %1117 = vmatprep.subr.bf16.mxu0 0
        %1118 = vmatpush1.bf16.msra.mxu0 0
        %1119 = vmatprep.subr.bf16.mxu0 0
        %1120 = vmatpush1.bf16.msra.mxu0 0
        %1121 = vmatprep.subr.bf16.mxu0 0
        %1122 = vmatpush1.bf16.msra.mxu0 0
        %1123 = vmatprep.subr.bf16.mxu0 0
        %1124 = vmatpush1.bf16.msra.mxu0 0
        %1125 = vmatprep.subr.bf16.mxu0 0
        %1126 = vmatpush1.bf16.msra.mxu0 0
        %1127 = vmatprep.subr.bf16.mxu0 0
        %1128 = vmatpush1.bf16.msra.mxu0 0
        %1129 = vmatprep.subr.bf16.mxu0 0
        %1130 = vmatpush1.bf16.msra.mxu0 0
        %1131 = vmatprep.subr.bf16.mxu0 0
        %1132 = vmatpush1.bf16.msra.mxu0 0
        %1133 = vmatprep.subr.bf16.mxu0 0
        %1134 = vmatpush1.bf16.msra.mxu0 0
        %1135 = vmatprep.subr.bf16.mxu0 0
        %1136 = vmatpush1.bf16.msra.mxu0 0
        %1137 = vmatprep.subr.bf16.mxu0 0
        %1138 = vmatpush1.bf16.msra.mxu0 0
        %1139 = vmatprep.mubr.bf16.mxu0 0
        %1140 = vmatmul.mubr.bf16.gmra.mrb[0].mxu0 %v1105
        %v1141 = vpop.f32.mrb[0].mxu0
        %v1142 = vadd.f32 %v1089, %v1141
        %v1143 = vpop.f32.mrb[0].mxu0
        %v1144 = vpop.f32.mrb[0].mxu0
        %v1145 = vpop.f32.mrb[0].mxu0
        %1146 = vdwg.mxu0
        %v1147 = vpack.c.bf16 %v1142, %v1142
        %v1148 = vld [vmem:[%s916] sm:$0xff]
        %1150 = vrot.lane.b32.xlu0 %v1147, 96
        %v1151 = vpop.permute.xlu0 %1150
        %vm1152 = vcmask 64512
        %v1154 = vsel %vm1152, %v1147, 0
        %v1157 = vsel %vm1152, %v1151, 0
        %1159 = vmatprep.subr.bf16.mxu0 0
        %1160 = vmatpush1.bf16.xpose.msra.mxu0 %v1157
        %1161 = vmatprep.subr.bf16.mxu0 0
        %1162 = vmatpush1.bf16.xpose.msra.mxu0 0
        %1163 = vmatprep.subr.bf16.mxu0 0
        %1164 = vmatpush1.bf16.xpose.msra.mxu0 0
        %1165 = vmatprep.subr.bf16.mxu0 0
        %1166 = vmatpush1.bf16.xpose.msra.mxu0 0
        %1167 = vmatprep.subr.bf16.mxu0 0
        %1168 = vmatpush1.bf16.xpose.msra.mxu0 0
        %1169 = vmatprep.subr.bf16.mxu0 0
        %1170 = vmatpush1.bf16.xpose.msra.mxu0 0
        %1171 = vmatprep.subr.bf16.mxu0 0
        %1172 = vmatpush1.bf16.xpose.msra.mxu0 0
        %1173 = vmatprep.subr.bf16.mxu0 0
        %1174 = vmatpush1.bf16.xpose.msra.mxu0 0
        %1175 = vmatprep.subr.bf16.mxu0 0
        %1176 = vmatpush1.bf16.xpose.msra.mxu0 0
        %1177 = vmatprep.subr.bf16.mxu0 0
        %1178 = vmatpush1.bf16.xpose.msra.mxu0 0
        %1179 = vmatprep.subr.bf16.mxu0 0
        %1180 = vmatpush1.bf16.xpose.msra.mxu0 0
        %1181 = vmatprep.subr.bf16.mxu0 0
        %1182 = vmatpush1.bf16.xpose.msra.mxu0 0
        %1183 = vmatprep.subr.bf16.mxu0 0
        %1184 = vmatpush1.bf16.xpose.msra.mxu0 0
        %1185 = vmatprep.subr.bf16.mxu0 0
        %1186 = vmatpush1.bf16.xpose.msra.mxu0 0
        %1187 = vmatprep.subr.bf16.mxu0 0
        %1188 = vmatpush1.bf16.xpose.msra.mxu0 0
        %1189 = vmatprep.subr.bf16.mxu0 0
        %1190 = vmatpush1.bf16.xpose.msra.mxu0 0
        %1191 = vmatprep.mubr.bf16.mxu0 0
        %1192 = vmatmul.mubr.bf16.gmra.mrb[0].mxu0 %v1154
        %v1193 = vpop.f32.mrb[0].mxu0
        %v1194 = vadd.f32 0.0, %v1193
        %v1195 = vpop.f32.mrb[0].mxu0
        %v1196 = vpop.f32.mrb[0].mxu0
        %v1197 = vpop.f32.mrb[0].mxu0
        %1198 = vdwg.mxu0
        %v1199 = vmul.f32 %v1194, 0.17677669
        %v1200 = vadd.f32 %v1199, %v1148
        %v1201 = vsel %vm1152, %v1200, -inf
        %1202 = vmax.xlane.f32.xlu0 %v1201
        %v1203 = vpop.xlane.xlu0 %1202
        %v1204 = vsub.f32 %v1200, %v1203
        %v1205 = vmul.f32 %v1204, 1.442695
        %v1206 = vpow.pop %v1205
        %v1207 = vsel %vm1152, %v1206, 0.0
        %1208 = vadd.xlane.f32.xlu0 %v1207
        %v1209 = vpop.xlane.xlu0 %1208
        %v1210 = vrcp.pop %v1209
        %v1211 = vmul.f32 %v1206, %v1210
        %v1212 = vpack.c.bf16 %v1211, %v1211
        %1213 = vrot.lane.b32.xlu0 %v1147, 64
        %v1214 = vpop.permute.xlu0 %1213
        %v1216 = vsel %vm1152, %v1212, 0
        %vm1218 = vcmask 1043456
        %v1220 = vsel %vm1218, %v1214, 0
        %1222 = vmatprep.subr.bf16.mxu0 0
        %1223 = vmatpush1.bf16.msra.mxu0 %v1220
        %1224 = vmatprep.subr.bf16.mxu0 0
        %1225 = vmatpush1.bf16.msra.mxu0 0
        %1226 = vmatprep.subr.bf16.mxu0 0
        %1227 = vmatpush1.bf16.msra.mxu0 0
        %1228 = vmatprep.subr.bf16.mxu0 0
        %1229 = vmatpush1.bf16.msra.mxu0 0
        %1230 = vmatprep.subr.bf16.mxu0 0
        %1231 = vmatpush1.bf16.msra.mxu0 0
        %1232 = vmatprep.subr.bf16.mxu0 0
        %1233 = vmatpush1.bf16.msra.mxu0 0
        %1234 = vmatprep.subr.bf16.mxu0 0
        %1235 = vmatpush1.bf16.msra.mxu0 0
        %1236 = vmatprep.subr.bf16.mxu0 0
        %1237 = vmatpush1.bf16.msra.mxu0 0
        %1238 = vmatprep.subr.bf16.mxu0 0
        %1239 = vmatpush1.bf16.msra.mxu0 0
        %1240 = vmatprep.subr.bf16.mxu0 0
        %1241 = vmatpush1.bf16.msra.mxu0 0
        %1242 = vmatprep.subr.bf16.mxu0 0
        %1243 = vmatpush1.bf16.msra.mxu0 0
        %1244 = vmatprep.subr.bf16.mxu0 0
        %1245 = vmatpush1.bf16.msra.mxu0 0
        %1246 = vmatprep.subr.bf16.mxu0 0
        %1247 = vmatpush1.bf16.msra.mxu0 0
        %1248 = vmatprep.subr.bf16.mxu0 0
        %1249 = vmatpush1.bf16.msra.mxu0 0
        %1250 = vmatprep.subr.bf16.mxu0 0
        %1251 = vmatpush1.bf16.msra.mxu0 0
        %1252 = vmatprep.subr.bf16.mxu0 0
        %1253 = vmatpush1.bf16.msra.mxu0 0
        %1254 = vmatprep.mubr.bf16.mxu0 0
        %1255 = vmatmul.mubr.bf16.gmra.mrb[0].mxu0 %v1216
        %v1256 = vpop.f32.mrb[0].mxu0
        %v1257 = vadd.f32 0.0, %v1256
        %v1258 = vpop.f32.mrb[0].mxu0
        %v1259 = vpop.f32.mrb[0].mxu0
        %v1260 = vpop.f32.mrb[0].mxu0
        %1261 = vdwg.mxu0
        %1262 = vst.msk [vmem:[#allocation2] sm:$0xff] %vm1152, %v1257
        %1263 = vrot.lane.b32.xlu0 %v1147, 120
        %v1264 = vpop.permute.xlu0 %1263
        %1265 = vrot.lane.b32.xlu0 %v1147, 88
        %v1266 = vpop.permute.xlu0 %1265
        %v1268 = vsel %vm1152, %v1264, 0
        %v1271 = vsel %vm1152, %v1266, 0
        %1273 = vmatprep.subr.bf16.mxu0 0
        %1274 = vmatpush1.bf16.xpose.msra.mxu0 %v1271
        %1275 = vmatprep.subr.bf16.mxu0 0
        %1276 = vmatpush1.bf16.xpose.msra.mxu0 0
        %1277 = vmatprep.subr.bf16.mxu0 0
        %1278 = vmatpush1.bf16.xpose.msra.mxu0 0
        %1279 = vmatprep.subr.bf16.mxu0 0
        %1280 = vmatpush1.bf16.xpose.msra.mxu0 0
        %1281 = vmatprep.subr.bf16.mxu0 0
        %1282 = vmatpush1.bf16.xpose.msra.mxu0 0
        %1283 = vmatprep.subr.bf16.mxu0 0
        %1284 = vmatpush1.bf16.xpose.msra.mxu0 0
        %1285 = vmatprep.subr.bf16.mxu0 0
        %1286 = vmatpush1.bf16.xpose.msra.mxu0 0
        %1287 = vmatprep.subr.bf16.mxu0 0
        %1288 = vmatpush1.bf16.xpose.msra.mxu0 0
        %1289 = vmatprep.subr.bf16.mxu0 0
        %1290 = vmatpush1.bf16.xpose.msra.mxu0 0
        %1291 = vmatprep.subr.bf16.mxu0 0
        %1292 = vmatpush1.bf16.xpose.msra.mxu0 0
        %1293 = vmatprep.subr.bf16.mxu0 0
        %1294 = vmatpush1.bf16.xpose.msra.mxu0 0
        %1295 = vmatprep.subr.bf16.mxu0 0
        %1296 = vmatpush1.bf16.xpose.msra.mxu0 0
        %1297 = vmatprep.subr.bf16.mxu0 0
        %1298 = vmatpush1.bf16.xpose.msra.mxu0 0
        %1299 = vmatprep.subr.bf16.mxu0 0
        %1300 = vmatpush1.bf16.xpose.msra.mxu0 0
        %1301 = vmatprep.subr.bf16.mxu0 0
        %1302 = vmatpush1.bf16.xpose.msra.mxu0 0
        %1303 = vmatprep.subr.bf16.mxu0 0
        %1304 = vmatpush1.bf16.xpose.msra.mxu0 0
        %1305 = vmatprep.mubr.bf16.mxu0 0
        %1306 = vmatmul.mubr.bf16.gmra.mrb[0].mxu0 %v1268
        %v1307 = vpop.f32.mrb[0].mxu0
        %v1308 = vadd.f32 0.0, %v1307
        %v1309 = vpop.f32.mrb[0].mxu0
        %v1310 = vpop.f32.mrb[0].mxu0
        %v1311 = vpop.f32.mrb[0].mxu0
        %1312 = vdwg.mxu0
        %v1313 = vmul.f32 %v1308, 0.17677669
        %v1314 = vadd.f32 %v1313, %v1148
        %v1315 = vsel %vm1152, %v1314, -inf
        %1316 = vmax.xlane.f32.xlu0 %v1315
        %v1317 = vpop.xlane.xlu0 %1316
        %v1318 = vsub.f32 %v1314, %v1317
        %v1319 = vmul.f32 %v1318, 1.442695
        %v1320 = vpow.pop %v1319
        %v1321 = vsel %vm1152, %v1320, 0.0
        %1322 = vadd.xlane.f32.xlu0 %v1321
        %v1323 = vpop.xlane.xlu0 %1322
        %v1324 = vrcp.pop %v1323
        %v1325 = vmul.f32 %v1320, %v1324
        %v1326 = vpack.c.bf16 %v1325, %v1325
        %1327 = vrot.lane.b32.xlu0 %v1147, 56
        %v1328 = vpop.permute.xlu0 %1327
        %v1330 = vsel %vm1152, %v1326, 0
        %v1333 = vsel %vm1218, %v1328, 0
        %1335 = vmatprep.subr.bf16.mxu0 0
        %1336 = vmatpush1.bf16.msra.mxu0 %v1333
        %1337 = vmatprep.subr.bf16.mxu0 0
        %1338 = vmatpush1.bf16.msra.mxu0 0
        %1339 = vmatprep.subr.bf16.mxu0 0
        %1340 = vmatpush1.bf16.msra.mxu0 0
        %1341 = vmatprep.subr.bf16.mxu0 0
        %1342 = vmatpush1.bf16.msra.mxu0 0
        %1343 = vmatprep.subr.bf16.mxu0 0
        %1344 = vmatpush1.bf16.msra.mxu0 0
        %1345 = vmatprep.subr.bf16.mxu0 0
        %1346 = vmatpush1.bf16.msra.mxu0 0
        %1347 = vmatprep.subr.bf16.mxu0 0
        %1348 = vmatpush1.bf16.msra.mxu0 0
        %1349 = vmatprep.subr.bf16.mxu0 0
        %1350 = vmatpush1.bf16.msra.mxu0 0
        %1351 = vmatprep.subr.bf16.mxu0 0
        %1352 = vmatpush1.bf16.msra.mxu0 0
        %1353 = vmatprep.subr.bf16.mxu0 0
        %1354 = vmatpush1.bf16.msra.mxu0 0
        %1355 = vmatprep.subr.bf16.mxu0 0
        %1356 = vmatpush1.bf16.msra.mxu0 0
        %1357 = vmatprep.subr.bf16.mxu0 0
        %1358 = vmatpush1.bf16.msra.mxu0 0
        %1359 = vmatprep.subr.bf16.mxu0 0
        %1360 = vmatpush1.bf16.msra.mxu0 0
        %1361 = vmatprep.subr.bf16.mxu0 0
        %1362 = vmatpush1.bf16.msra.mxu0 0
        %1363 = vmatprep.subr.bf16.mxu0 0
        %1364 = vmatpush1.bf16.msra.mxu0 0
        %1365 = vmatprep.subr.bf16.mxu0 0
        %1366 = vmatpush1.bf16.msra.mxu0 0
        %1367 = vmatprep.mubr.bf16.mxu0 0
        %1368 = vmatmul.mubr.bf16.gmra.mrb[0].mxu0 %v1330
        %v1369 = vpop.f32.mrb[0].mxu0
        %v1370 = vadd.f32 0.0, %v1369
        %v1371 = vpop.f32.mrb[0].mxu0
        %v1372 = vpop.f32.mrb[0].mxu0
        %v1373 = vpop.f32.mrb[0].mxu0
        %1374 = vdwg.mxu0
        %1376 = vrot.lane.b32.xlu0 %v1370, 8
        %v1377 = vpop.permute.xlu0 %1376
        %vm1379 = vcmask 130112
        %1380 = vst.msk [vmem:[#allocation2] sm:$0xff] %vm1379, %v1377
        %1381 = vrot.lane.b32.xlu0 %v1147, 112
        %v1382 = vpop.permute.xlu0 %1381
        %1383 = vrot.lane.b32.xlu0 %v1147, 80
        %v1384 = vpop.permute.xlu0 %1383
        %v1386 = vsel %vm1152, %v1382, 0
        %v1389 = vsel %vm1152, %v1384, 0
        %1391 = vmatprep.subr.bf16.mxu0 0
        %1392 = vmatpush1.bf16.xpose.msra.mxu0 %v1389
        %1393 = vmatprep.subr.bf16.mxu0 0
        %1394 = vmatpush1.bf16.xpose.msra.mxu0 0
        %1395 = vmatprep.subr.bf16.mxu0 0
        %1396 = vmatpush1.bf16.xpose.msra.mxu0 0
        %1397 = vmatprep.subr.bf16.mxu0 0
        %1398 = vmatpush1.bf16.xpose.msra.mxu0 0
        %1399 = vmatprep.subr.bf16.mxu0 0
        %1400 = vmatpush1.bf16.xpose.msra.mxu0 0
        %1401 = vmatprep.subr.bf16.mxu0 0
        %1402 = vmatpush1.bf16.xpose.msra.mxu0 0
        %1403 = vmatprep.subr.bf16.mxu0 0
        %1404 = vmatpush1.bf16.xpose.msra.mxu0 0
        %1405 = vmatprep.subr.bf16.mxu0 0
        %1406 = vmatpush1.bf16.xpose.msra.mxu0 0
        %1407 = vmatprep.subr.bf16.mxu0 0
        %1408 = vmatpush1.bf16.xpose.msra.mxu0 0
        %1409 = vmatprep.subr.bf16.mxu0 0
        %1410 = vmatpush1.bf16.xpose.msra.mxu0 0
        %1411 = vmatprep.subr.bf16.mxu0 0
        %1412 = vmatpush1.bf16.xpose.msra.mxu0 0
        %1413 = vmatprep.subr.bf16.mxu0 0
        %1414 = vmatpush1.bf16.xpose.msra.mxu0 0
        %1415 = vmatprep.subr.bf16.mxu0 0
        %1416 = vmatpush1.bf16.xpose.msra.mxu0 0
        %1417 = vmatprep.subr.bf16.mxu0 0
        %1418 = vmatpush1.bf16.xpose.msra.mxu0 0
        %1419 = vmatprep.subr.bf16.mxu0 0
        %1420 = vmatpush1.bf16.xpose.msra.mxu0 0
        %1421 = vmatprep.subr.bf16.mxu0 0
        %1422 = vmatpush1.bf16.xpose.msra.mxu0 0
        %1423 = vmatprep.mubr.bf16.mxu0 0
        %1424 = vmatmul.mubr.bf16.gmra.mrb[0].mxu0 %v1386
        %v1425 = vpop.f32.mrb[0].mxu0
        %v1426 = vadd.f32 0.0, %v1425
        %v1427 = vpop.f32.mrb[0].mxu0
        %v1428 = vpop.f32.mrb[0].mxu0
        %v1429 = vpop.f32.mrb[0].mxu0
        %1430 = vdwg.mxu0
        %v1431 = vmul.f32 %v1426, 0.17677669
        %v1432 = vadd.f32 %v1431, %v1148
        %v1433 = vsel %vm1152, %v1432, -inf
        %1434 = vmax.xlane.f32.xlu0 %v1433
        %v1435 = vpop.xlane.xlu0 %1434
        %v1436 = vsub.f32 %v1432, %v1435
        %v1437 = vmul.f32 %v1436, 1.442695
        %v1438 = vpow.pop %v1437
        %v1439 = vsel %vm1152, %v1438, 0.0
        %1440 = vadd.xlane.f32.xlu0 %v1439
        %v1441 = vpop.xlane.xlu0 %1440
        %v1442 = vrcp.pop %v1441
        %v1443 = vmul.f32 %v1438, %v1442
        %v1444 = vpack.c.bf16 %v1443, %v1443
        %1445 = vrot.lane.b32.xlu0 %v1147, 48
        %v1446 = vpop.permute.xlu0 %1445
        %v1448 = vsel %vm1152, %v1444, 0
        %v1451 = vsel %vm1218, %v1446, 0
        %1453 = vmatprep.subr.bf16.mxu0 0
        %1454 = vmatpush1.bf16.msra.mxu0 %v1451
        %1455 = vmatprep.subr.bf16.mxu0 0
        %1456 = vmatpush1.bf16.msra.mxu0 0
        %1457 = vmatprep.subr.bf16.mxu0 0
        %1458 = vmatpush1.bf16.msra.mxu0 0
        %1459 = vmatprep.subr.bf16.mxu0 0
        %1460 = vmatpush1.bf16.msra.mxu0 0
        %1461 = vmatprep.subr.bf16.mxu0 0
        %1462 = vmatpush1.bf16.msra.mxu0 0
        %1463 = vmatprep.subr.bf16.mxu0 0
        %1464 = vmatpush1.bf16.msra.mxu0 0
        %1465 = vmatprep.subr.bf16.mxu0 0
        %1466 = vmatpush1.bf16.msra.mxu0 0
        %1467 = vmatprep.subr.bf16.mxu0 0
        %1468 = vmatpush1.bf16.msra.mxu0 0
        %1469 = vmatprep.subr.bf16.mxu0 0
        %1470 = vmatpush1.bf16.msra.mxu0 0
        %1471 = vmatprep.subr.bf16.mxu0 0
        %1472 = vmatpush1.bf16.msra.mxu0 0
        %1473 = vmatprep.subr.bf16.mxu0 0
        %1474 = vmatpush1.bf16.msra.mxu0 0
        %1475 = vmatprep.subr.bf16.mxu0 0
        %1476 = vmatpush1.bf16.msra.mxu0 0
        %1477 = vmatprep.subr.bf16.mxu0 0
        %1478 = vmatpush1.bf16.msra.mxu0 0
        %1479 = vmatprep.subr.bf16.mxu0 0
        %1480 = vmatpush1.bf16.msra.mxu0 0
        %1481 = vmatprep.subr.bf16.mxu0 0
        %1482 = vmatpush1.bf16.msra.mxu0 0
        %1483 = vmatprep.subr.bf16.mxu0 0
        %1484 = vmatpush1.bf16.msra.mxu0 0
        %1485 = vmatprep.mubr.bf16.mxu0 0
        %1486 = vmatmul.mubr.bf16.gmra.mrb[0].mxu0 %v1448
        %v1487 = vpop.f32.mrb[0].mxu0
        %v1488 = vadd.f32 0.0, %v1487
        %v1489 = vpop.f32.mrb[0].mxu0
        %v1490 = vpop.f32.mrb[0].mxu0
        %v1491 = vpop.f32.mrb[0].mxu0
        %1492 = vdwg.mxu0
        %1494 = vrot.lane.b32.xlu0 %v1488, 16
        %v1495 = vpop.permute.xlu0 %1494
        %vm1497 = vcmask 195712
        %1498 = vst.msk [vmem:[#allocation2] sm:$0xff] %vm1497, %v1495
        %1499 = vrot.lane.b32.xlu0 %v1147, 104
        %v1500 = vpop.permute.xlu0 %1499
        %1501 = vrot.lane.b32.xlu0 %v1147, 72
        %v1502 = vpop.permute.xlu0 %1501
        %v1504 = vsel %vm1152, %v1500, 0
        %v1507 = vsel %vm1152, %v1502, 0
        %1509 = vmatprep.subr.bf16.mxu0 0
        %1510 = vmatpush1.bf16.xpose.msra.mxu0 %v1507
        %1511 = vmatprep.subr.bf16.mxu0 0
        %1512 = vmatpush1.bf16.xpose.msra.mxu0 0
        %1513 = vmatprep.subr.bf16.mxu0 0
        %1514 = vmatpush1.bf16.xpose.msra.mxu0 0
        %1515 = vmatprep.subr.bf16.mxu0 0
        %1516 = vmatpush1.bf16.xpose.msra.mxu0 0
        %1517 = vmatprep.subr.bf16.mxu0 0
        %1518 = vmatpush1.bf16.xpose.msra.mxu0 0
        %1519 = vmatprep.subr.bf16.mxu0 0
        %1520 = vmatpush1.bf16.xpose.msra.mxu0 0
        %1521 = vmatprep.subr.bf16.mxu0 0
        %1522 = vmatpush1.bf16.xpose.msra.mxu0 0
        %1523 = vmatprep.subr.bf16.mxu0 0
        %1524 = vmatpush1.bf16.xpose.msra.mxu0 0
        %1525 = vmatprep.subr.bf16.mxu0 0
        %1526 = vmatpush1.bf16.xpose.msra.mxu0 0
        %1527 = vmatprep.subr.bf16.mxu0 0
        %1528 = vmatpush1.bf16.xpose.msra.mxu0 0
        %1529 = vmatprep.subr.bf16.mxu0 0
        %1530 = vmatpush1.bf16.xpose.msra.mxu0 0
        %1531 = vmatprep.subr.bf16.mxu0 0
        %1532 = vmatpush1.bf16.xpose.msra.mxu0 0
        %1533 = vmatprep.subr.bf16.mxu0 0
        %1534 = vmatpush1.bf16.xpose.msra.mxu0 0
        %1535 = vmatprep.subr.bf16.mxu0 0
        %1536 = vmatpush1.bf16.xpose.msra.mxu0 0
        %1537 = vmatprep.subr.bf16.mxu0 0
        %1538 = vmatpush1.bf16.xpose.msra.mxu0 0
        %1539 = vmatprep.subr.bf16.mxu0 0
        %1540 = vmatpush1.bf16.xpose.msra.mxu0 0
        %1541 = vmatprep.mubr.bf16.mxu0 0
        %1542 = vmatmul.mubr.bf16.gmra.mrb[0].mxu0 %v1504
        %v1543 = vpop.f32.mrb[0].mxu0
        %v1544 = vadd.f32 0.0, %v1543
        %v1545 = vpop.f32.mrb[0].mxu0
        %v1546 = vpop.f32.mrb[0].mxu0
        %v1547 = vpop.f32.mrb[0].mxu0
        %1548 = vdwg.mxu0
        %v1549 = vmul.f32 %v1544, 0.17677669
        %v1550 = vadd.f32 %v1549, %v1148
        %v1551 = vsel %vm1152, %v1550, -inf
        %1552 = vmax.xlane.f32.xlu0 %v1551
        %v1553 = vpop.xlane.xlu0 %1552
        %v1554 = vsub.f32 %v1550, %v1553
        %v1555 = vmul.f32 %v1554, 1.442695
        %v1556 = vpow.pop %v1555
        %v1557 = vsel %vm1152, %v1556, 0.0
        %1558 = vadd.xlane.f32.xlu0 %v1557
        %v1559 = vpop.xlane.xlu0 %1558
        %v1560 = vrcp.pop %v1559
        %v1561 = vmul.f32 %v1556, %v1560
        %v1562 = vpack.c.bf16 %v1561, %v1561
        %1563 = vrot.lane.b32.xlu0 %v1147, 40
        %v1564 = vpop.permute.xlu0 %1563
        %v1566 = vsel %vm1152, %v1562, 0
        %v1569 = vsel %vm1218, %v1564, 0
        %1571 = vmatprep.subr.bf16.mxu0 0
        %1572 = vmatpush1.bf16.msra.mxu0 %v1569
        %1573 = vmatprep.subr.bf16.mxu0 0
        %1574 = vmatpush1.bf16.msra.mxu0 0
        %1575 = vmatprep.subr.bf16.mxu0 0
        %1576 = vmatpush1.bf16.msra.mxu0 0
        %1577 = vmatprep.subr.bf16.mxu0 0
        %1578 = vmatpush1.bf16.msra.mxu0 0
        %1579 = vmatprep.subr.bf16.mxu0 0
        %1580 = vmatpush1.bf16.msra.mxu0 0
        %1581 = vmatprep.subr.bf16.mxu0 0
        %1582 = vmatpush1.bf16.msra.mxu0 0
        %1583 = vmatprep.subr.bf16.mxu0 0
        %1584 = vmatpush1.bf16.msra.mxu0 0
        %1585 = vmatprep.subr.bf16.mxu0 0
        %1586 = vmatpush1.bf16.msra.mxu0 0
        %1587 = vmatprep.subr.bf16.mxu0 0
        %1588 = vmatpush1.bf16.msra.mxu0 0
        %1589 = vmatprep.subr.bf16.mxu0 0
        %1590 = vmatpush1.bf16.msra.mxu0 0
        %1591 = vmatprep.subr.bf16.mxu0 0
        %1592 = vmatpush1.bf16.msra.mxu0 0
        %1593 = vmatprep.subr.bf16.mxu0 0
        %1594 = vmatpush1.bf16.msra.mxu0 0
        %1595 = vmatprep.subr.bf16.mxu0 0
        %1596 = vmatpush1.bf16.msra.mxu0 0
        %1597 = vmatprep.subr.bf16.mxu0 0
        %1598 = vmatpush1.bf16.msra.mxu0 0
        %1599 = vmatprep.subr.bf16.mxu0 0
        %1600 = vmatpush1.bf16.msra.mxu0 0
        %1601 = vmatprep.subr.bf16.mxu0 0
        %1602 = vmatpush1.bf16.msra.mxu0 0
        %1603 = vmatprep.mubr.bf16.mxu0 0
        %1604 = vmatmul.mubr.bf16.gmra.mrb[0].mxu0 %v1566
        %v1605 = vpop.f32.mrb[0].mxu0
        %v1606 = vadd.f32 0.0, %v1605
        %v1607 = vpop.f32.mrb[0].mxu0
        %v1608 = vpop.f32.mrb[0].mxu0
        %v1609 = vpop.f32.mrb[0].mxu0
        %1610 = vdwg.mxu0
        %1612 = vrot.lane.b32.xlu0 %v1606, 24
        %v1613 = vpop.permute.xlu0 %1612
        %vm1615 = vcmask 261312
        %1616 = vst.msk [vmem:[#allocation2] sm:$0xff] %vm1615, %v1613
        %v1617 = vld [vmem:[#allocation2] sm:$0xff]
        %v1618 = vpack.c.bf16 %v1617, %v1617
        %v1619 = vld [vmem:[#allocation11] sm:$0xf]
        %v1620 = vld [vmem:[#allocation11 + $0x4] sm:$0xf]
        %v1621 = vld [vmem:[#allocation11 + $0x8] sm:$0xf]
        %v1622 = vld [vmem:[#allocation11 + $0xc] sm:$0xf]
        %v1623 = vld [vmem:[#allocation12] sm:$0x1]
        %v1625 = vlaneseq
        %v1626 = vshrl.u32 %v1625, 7
        %v1627 = vsub.s32 0, %v1626
        %v1628 = vrot.slane %v1623, %v1627
        %v1634 = vunpack.c.l.b16 %v1619
        %v1635 = vunpack.c.l.b16 %v1620
        %v1636 = vunpack.c.l.b16 %v1621
        %v1637 = vunpack.c.l.b16 %v1622
        %v1638 = vpack.c.b16 %v1635, %v1634
        %v1639 = vpack.c.b16 %v1637, %v1636
        %v1643 = vsel %vm1103, %v1618, 0
        %1645 = vmatprep.subr.bf16.mxu0 0
        %1646 = vmatpush1.bf16.msra.mxu0 %v1638
        %1647 = vmatprep.subr.bf16.mxu0 0
        %1648 = vmatpush1.bf16.msra.mxu0 %v1639
        %1649 = vmatprep.subr.bf16.mxu0 0
        %1650 = vmatpush1.bf16.msra.mxu0 0
        %1651 = vmatprep.subr.bf16.mxu0 0
        %1652 = vmatpush1.bf16.msra.mxu0 0
        %1653 = vmatprep.subr.bf16.mxu0 0
        %1654 = vmatpush1.bf16.msra.mxu0 0
        %1655 = vmatprep.subr.bf16.mxu0 0
        %1656 = vmatpush1.bf16.msra.mxu0 0
        %1657 = vmatprep.subr.bf16.mxu0 0
        %1658 = vmatpush1.bf16.msra.mxu0 0
        %1659 = vmatprep.subr.bf16.mxu0 0
        %1660 = vmatpush1.bf16.msra.mxu0 0
        %1661 = vmatprep.subr.bf16.mxu0 0
        %1662 = vmatpush1.bf16.msra.mxu0 0
        %1663 = vmatprep.subr.bf16.mxu0 0
        %1664 = vmatpush1.bf16.msra.mxu0 0
        %1665 = vmatprep.subr.bf16.mxu0 0
        %1666 = vmatpush1.bf16.msra.mxu0 0
        %1667 = vmatprep.subr.bf16.mxu0 0
        %1668 = vmatpush1.bf16.msra.mxu0 0
        %1669 = vmatprep.subr.bf16.mxu0 0
        %1670 = vmatpush1.bf16.msra.mxu0 0
        %1671 = vmatprep.subr.bf16.mxu0 0
        %1672 = vmatpush1.bf16.msra.mxu0 0
        %1673 = vmatprep.subr.bf16.mxu0 0
        %1674 = vmatpush1.bf16.msra.mxu0 0
        %1675 = vmatprep.subr.bf16.mxu0 0
        %1676 = vmatpush1.bf16.msra.mxu0 0
        %1677 = vmatprep.mubr.bf16.mxu0 0
        %1678 = vmatmul.mubr.bf16.gmra.mrb[0].mxu0 %v1643
        %v1679 = vpop.f32.mrb[0].mxu0
        %v1680 = vadd.f32 %v1628, %v1679
        %v1681 = vpop.f32.mrb[0].mxu0
        %v1682 = vpop.f32.mrb[0].mxu0
        %v1683 = vpop.f32.mrb[0].mxu0
        %1684 = vdwg.mxu0
        %v1685 = vadd.f32 %v1680, %v1074
        %v1686 = vsel %vm1103, %v1685, 0.0
        %1687 = vadd.xlane.f32.xlu0 %v1686
        %v1688 = vpop.xlane.xlu0 %1687
        %v1689 = vrcp.pop 32.0
        %v1690 = vmul.f32 %v1688, %v1689
        %v1691 = vsub.f32 %v1685, %v1690
        %v1692 = vmul.f32 %v1691, %v1691
        %v1693 = vsel %vm1103, %v1692, 0.0
        %1694 = vadd.xlane.f32.xlu0 %v1693
        %v1695 = vpop.xlane.xlu0 %1694
        %v1696 = vmul.f32 %v1695, %v1689
        %v1697 = vadd.f32 %v1696, 1e-05
        %v1698 = vrsqrt.pop %v1697
        %v1699 = vmul.f32 %v1691, %v1698
        %v1700 = vld [vmem:[#allocation14] sm:$0x1]
        %v1702 = vlaneseq
        %v1703 = vshrl.u32 %v1702, 7
        %v1704 = vsub.s32 0, %v1703
        %v1705 = vrot.slane %v1700, %v1704
        %v1707 = vmul.f32 %v1699, %v1705
        %v1708 = vld [vmem:[#allocation15] sm:$0x1]
        %v1710 = vlaneseq
        %v1711 = vshrl.u32 %v1710, 7
        %v1712 = vsub.s32 0, %v1711
        %v1713 = vrot.slane %v1708, %v1712
        %v1715 = vadd.f32 %v1707, %v1713
        %v1716 = vpack.c.bf16 %v1715, %v1715
        %v1717 = vld [vmem:[%s11] sm:$0xf]
        %v1718 = vld [vmem:[%s11 + $0x4] sm:$0xf]
        %v1719 = vld [vmem:[%s11 + $0x8] sm:$0xf]
        %v1720 = vld [vmem:[%s11 + $0xc] sm:$0xf]
        %v1721 = vld [vmem:[#allocation17] sm:$0x1]
        %v1723 = vlaneseq
        %v1724 = vshrl.u32 %v1723, 7
        %v1725 = vsub.s32 0, %v1724
        %v1726 = vrot.slane %v1721, %v1725
        %v1732 = vunpack.c.l.b16 %v1717
        %v1733 = vunpack.c.l.b16 %v1718
        %v1734 = vunpack.c.l.b16 %v1719
        %v1735 = vunpack.c.l.b16 %v1720
        %v1736 = vpack.c.b16 %v1733, %v1732
        %v1737 = vpack.c.b16 %v1735, %v1734
        %v1741 = vsel %vm1103, %v1716, 0
        %1743 = vmatprep.subr.bf16.mxu0 0
        %1744 = vmatpush1.bf16.msra.mxu0 %v1736
        %1745 = vmatprep.subr.bf16.mxu0 0
        %1746 = vmatpush1.bf16.msra.mxu0 %v1737
        %1747 = vmatprep.subr.bf16.mxu0 0
        %1748 = vmatpush1.bf16.msra.mxu0 0
        %1749 = vmatprep.subr.bf16.mxu0 0
        %1750 = vmatpush1.bf16.msra.mxu0 0
        %1751 = vmatprep.subr.bf16.mxu0 0
        %1752 = vmatpush1.bf16.msra.mxu0 0
        %1753 = vmatprep.subr.bf16.mxu0 0
        %1754 = vmatpush1.bf16.msra.mxu0 0
        %1755 = vmatprep.subr.bf16.mxu0 0
        %1756 = vmatpush1.bf16.msra.mxu0 0
        %1757 = vmatprep.subr.bf16.mxu0 0
        %1758 = vmatpush1.bf16.msra.mxu0 0
        %1759 = vmatprep.subr.bf16.mxu0 0
        %1760 = vmatpush1.bf16.msra.mxu0 0
        %1761 = vmatprep.subr.bf16.mxu0 0
        %1762 = vmatpush1.bf16.msra.mxu0 0
        %1763 = vmatprep.subr.bf16.mxu0 0
        %1764 = vmatpush1.bf16.msra.mxu0 0
        %1765 = vmatprep.subr.bf16.mxu0 0
        %1766 = vmatpush1.bf16.msra.mxu0 0
        %1767 = vmatprep.subr.bf16.mxu0 0
        %1768 = vmatpush1.bf16.msra.mxu0 0
        %1769 = vmatprep.subr.bf16.mxu0 0
        %1770 = vmatpush1.bf16.msra.mxu0 0
        %1771 = vmatprep.subr.bf16.mxu0 0
        %1772 = vmatpush1.bf16.msra.mxu0 0
        %1773 = vmatprep.subr.bf16.mxu0 0
        %1774 = vmatpush1.bf16.msra.mxu0 0
        %1775 = vmatprep.mubr.bf16.mxu0 0
        %1776 = vmatmul.mubr.bf16.gmra.mrb[0].mxu0 %v1741
        %v1777 = vpop.f32.mrb[0].mxu0
        %v1778 = vadd.f32 %v1726, %v1777
        %v1779 = vpop.f32.mrb[0].mxu0
        %v1780 = vpop.f32.mrb[0].mxu0
        %v1781 = vpop.f32.mrb[0].mxu0
        %1782 = vdwg.mxu0
        %v1783 = vpack.c.bf16 %v1076, %v1075
        %v1784 = vld [vmem:[%s13] sm:$0xf]
        %v1785 = vld [vmem:[%s13 + $0x4] sm:$0xf]
        %v1786 = vld [vmem:[%s13 + $0x8] sm:$0xf]
        %v1787 = vld [vmem:[%s13 + $0xc] sm:$0xf]
        %v1788 = vld [vmem:[#allocation18] sm:$0x1]
        %v1790 = vlaneseq
        %v1791 = vshrl.u32 %v1790, 7
        %v1792 = vsub.s32 0, %v1791
        %v1793 = vrot.slane %v1788, %v1792
        %v1799 = vunpack.c.l.b16 %v1784
        %v1800 = vunpack.c.l.b16 %v1785
        %v1801 = vunpack.c.l.b16 %v1786
        %v1802 = vunpack.c.l.b16 %v1787
        %v1803 = vpack.c.b16 %v1800, %v1799
        %v1804 = vpack.c.b16 %v1802, %v1801
        %v1808 = vsel %vm1103, %v1783, 0
        %1810 = vmatprep.subr.bf16.mxu0 0
        %1811 = vmatpush1.bf16.msra.mxu0 %v1803
        %1812 = vmatprep.subr.bf16.mxu0 0
        %1813 = vmatpush1.bf16.msra.mxu0 %v1804
        %1814 = vmatprep.subr.bf16.mxu0 0
        %1815 = vmatpush1.bf16.msra.mxu0 0
        %1816 = vmatprep.subr.bf16.mxu0 0
        %1817 = vmatpush1.bf16.msra.mxu0 0
        %1818 = vmatprep.subr.bf16.mxu0 0
        %1819 = vmatpush1.bf16.msra.mxu0 0
        %1820 = vmatprep.subr.bf16.mxu0 0
        %1821 = vmatpush1.bf16.msra.mxu0 0
        %1822 = vmatprep.subr.bf16.mxu0 0
        %1823 = vmatpush1.bf16.msra.mxu0 0
        %1824 = vmatprep.subr.bf16.mxu0 0
        %1825 = vmatpush1.bf16.msra.mxu0 0
        %1826 = vmatprep.subr.bf16.mxu0 0
        %1827 = vmatpush1.bf16.msra.mxu0 0
        %1828 = vmatprep.subr.bf16.mxu0 0
        %1829 = vmatpush1.bf16.msra.mxu0 0
        %1830 = vmatprep.subr.bf16.mxu0 0
        %1831 = vmatpush1.bf16.msra.mxu0 0
        %1832 = vmatprep.subr.bf16.mxu0 0
        %1833 = vmatpush1.bf16.msra.mxu0 0
        %1834 = vmatprep.subr.bf16.mxu0 0
        %1835 = vmatpush1.bf16.msra.mxu0 0
        %1836 = vmatprep.subr.bf16.mxu0 0
        %1837 = vmatpush1.bf16.msra.mxu0 0
        %1838 = vmatprep.subr.bf16.mxu0 0
        %1839 = vmatpush1.bf16.msra.mxu0 0
        %1840 = vmatprep.subr.bf16.mxu0 0
        %1841 = vmatpush1.bf16.msra.mxu0 0
        %1842 = vmatprep.mubr.bf16.mxu0 0
        %1843 = vmatmul.mubr.bf16.gmra.mrb[0].mxu0 %v1808
        %v1844 = vpop.f32.mrb[0].mxu0
        %v1845 = vadd.f32 %v1793, %v1844
        %v1846 = vpop.f32.mrb[0].mxu0
        %v1847 = vpop.f32.mrb[0].mxu0
        %v1848 = vadd.f32 %v1793, %v1847
        %v1849 = vpop.f32.mrb[0].mxu0
        %1850 = vdwg.mxu0
        %v1851 = vpack.c.bf16 %v1078, %v1077
        %v1852 = vld [vmem:[#allocation20] sm:$0xf]
        %v1853 = vld [vmem:[#allocation20 + $0x4] sm:$0xf]
        %v1854 = vld [vmem:[#allocation20 + $0x8] sm:$0xf]
        %v1855 = vld [vmem:[#allocation20 + $0xc] sm:$0xf]
        %v1856 = vld [vmem:[#allocation21] sm:$0x1]
        %v1858 = vlaneseq
        %v1859 = vshrl.u32 %v1858, 7
        %v1860 = vsub.s32 0, %v1859
        %v1861 = vrot.slane %v1856, %v1860
        %v1867 = vunpack.c.l.b16 %v1852
        %v1868 = vunpack.c.l.b16 %v1853
        %v1869 = vunpack.c.l.b16 %v1854
        %v1870 = vunpack.c.l.b16 %v1855
        %v1871 = vpack.c.b16 %v1868, %v1867
        %v1872 = vpack.c.b16 %v1870, %v1869
        %v1876 = vsel %vm1103, %v1851, 0
        %1878 = vmatprep.subr.bf16.mxu0 0
        %1879 = vmatpush1.bf16.msra.mxu0 %v1871
        %1880 = vmatprep.subr.bf16.mxu0 0
        %1881 = vmatpush1.bf16.msra.mxu0 %v1872
        %1882 = vmatprep.subr.bf16.mxu0 0
        %1883 = vmatpush1.bf16.msra.mxu0 0
        %1884 = vmatprep.subr.bf16.mxu0 0
        %1885 = vmatpush1.bf16.msra.mxu0 0
        %1886 = vmatprep.subr.bf16.mxu0 0
        %1887 = vmatpush1.bf16.msra.mxu0 0
        %1888 = vmatprep.subr.bf16.mxu0 0
        %1889 = vmatpush1.bf16.msra.mxu0 0
        %1890 = vmatprep.subr.bf16.mxu0 0
        %1891 = vmatpush1.bf16.msra.mxu0 0
        %1892 = vmatprep.subr.bf16.mxu0 0
        %1893 = vmatpush1.bf16.msra.mxu0 0
        %1894 = vmatprep.subr.bf16.mxu0 0
        %1895 = vmatpush1.bf16.msra.mxu0 0
        %1896 = vmatprep.subr.bf16.mxu0 0
        %1897 = vmatpush1.bf16.msra.mxu0 0
        %1898 = vmatprep.subr.bf16.mxu0 0
        %1899 = vmatpush1.bf16.msra.mxu0 0
        %1900 = vmatprep.subr.bf16.mxu0 0
        %1901 = vmatpush1.bf16.msra.mxu0 0
        %1902 = vmatprep.subr.bf16.mxu0 0
        %1903 = vmatpush1.bf16.msra.mxu0 0
        %1904 = vmatprep.subr.bf16.mxu0 0
        %1905 = vmatpush1.bf16.msra.mxu0 0
        %1906 = vmatprep.subr.bf16.mxu0 0
        %1907 = vmatpush1.bf16.msra.mxu0 0
        %1908 = vmatprep.subr.bf16.mxu0 0
        %1909 = vmatpush1.bf16.msra.mxu0 0
        %1910 = vmatprep.mubr.bf16.mxu0 0
        %1911 = vmatmul.mubr.bf16.gmra.mrb[0].mxu0 %v1876
        %v1912 = vpop.f32.mrb[0].mxu0
        %v1913 = vadd.f32 %v1861, %v1912
        %v1914 = vpop.f32.mrb[0].mxu0
        %v1915 = vpop.f32.mrb[0].mxu0
        %v1916 = vadd.f32 %v1861, %v1915
        %v1917 = vpop.f32.mrb[0].mxu0
        %1918 = vdwg.mxu0
        %v1919 = vpack.c.bf16 %v1778, %v1778
        %v1920 = vpack.c.bf16 %v1848, %v1845
        %v1921 = vpack.c.bf16 %v1916, %v1913
        %v1922 = vld [vmem:[%s925] sm:$0xff]
        %v1924 = vsel %vm1152, %v1919, 0
        %v1927 = vsel %vm1152, %v1920, 0
        %1929 = vmatprep.subr.bf16.mxu0 0
        %1930 = vmatpush1.bf16.xpose.msra.mxu0 %v1927
        %1931 = vmatprep.subr.bf16.mxu0 0
        %1932 = vmatpush1.bf16.xpose.msra.mxu0 0
        %1933 = vmatprep.subr.bf16.mxu0 0
        %1934 = vmatpush1.bf16.xpose.msra.mxu0 0
        %1935 = vmatprep.subr.bf16.mxu0 0
        %1936 = vmatpush1.bf16.xpose.msra.mxu0 0
        %1937 = vmatprep.subr.bf16.mxu0 0
        %1938 = vmatpush1.bf16.xpose.msra.mxu0 0
        %1939 = vmatprep.subr.bf16.mxu0 0
        %1940 = vmatpush1.bf16.xpose.msra.mxu0 0
        %1941 = vmatprep.subr.bf16.mxu0 0
        %1942 = vmatpush1.bf16.xpose.msra.mxu0 0
        %1943 = vmatprep.subr.bf16.mxu0 0
        %1944 = vmatpush1.bf16.xpose.msra.mxu0 0
        %1945 = vmatprep.subr.bf16.mxu0 0
        %1946 = vmatpush1.bf16.xpose.msra.mxu0 0
        %1947 = vmatprep.subr.bf16.mxu0 0
        %1948 = vmatpush1.bf16.xpose.msra.mxu0 0
        %1949 = vmatprep.subr.bf16.mxu0 0
        %1950 = vmatpush1.bf16.xpose.msra.mxu0 0
        %1951 = vmatprep.subr.bf16.mxu0 0
        %1952 = vmatpush1.bf16.xpose.msra.mxu0 0
        %1953 = vmatprep.subr.bf16.mxu0 0
        %1954 = vmatpush1.bf16.xpose.msra.mxu0 0
        %1955 = vmatprep.subr.bf16.mxu0 0
        %1956 = vmatpush1.bf16.xpose.msra.mxu0 0
        %1957 = vmatprep.subr.bf16.mxu0 0
        %1958 = vmatpush1.bf16.xpose.msra.mxu0 0
        %1959 = vmatprep.subr.bf16.mxu0 0
        %1960 = vmatpush1.bf16.xpose.msra.mxu0 0
        %1961 = vmatprep.mubr.bf16.mxu0 0
        %1962 = vmatmul.mubr.bf16.gmra.mrb[0].mxu0 %v1924
        %v1963 = vpop.f32.mrb[0].mxu0
        %v1964 = vadd.f32 0.0, %v1963
        %v1965 = vpop.f32.mrb[0].mxu0
        %v1966 = vpop.f32.mrb[0].mxu0
        %v1967 = vpop.f32.mrb[0].mxu0
        %1968 = vdwg.mxu0
        %v1969 = vmul.f32 %v1964, 0.17677669
        %v1970 = vadd.f32 %v1969, %v1922
        %vm1971 = vcmask 130048
        %v1972 = vsel %vm1971, %v1970, -inf
        %1973 = vmax.xlane.f32.xlu0 %v1972
        %v1974 = vpop.xlane.xlu0 %1973
        %v1975 = vsub.f32 %v1970, %v1974
        %v1976 = vmul.f32 %v1975, 1.442695
        %v1977 = vpow.pop %v1976
        %v1978 = vsel %vm1971, %v1977, 0.0
        %1979 = vadd.xlane.f32.xlu0 %v1978
        %v1980 = vpop.xlane.xlu0 %1979
        %v1981 = vrcp.pop %v1980
        %v1982 = vmul.f32 %v1977, %v1981
        %v1983 = vpack.c.bf16 %v1982, %v1982
        %v1985 = vsel %vm1971, %v1983, 0
        %1987 = vmatprep.subr.bf16.mxu0 0
        %1988 = vmatpush1.bf16.msra.mxu0 %v1921
        %1989 = vmatprep.subr.bf16.mxu0 0
        %1990 = vmatpush1.bf16.msra.mxu0 0
        %1991 = vmatprep.subr.bf16.mxu0 0
        %1992 = vmatpush1.bf16.msra.mxu0 0
        %1993 = vmatprep.subr.bf16.mxu0 0
        %1994 = vmatpush1.bf16.msra.mxu0 0
        %1995 = vmatprep.subr.bf16.mxu0 0
        %1996 = vmatpush1.bf16.msra.mxu0 0
        %1997 = vmatprep.subr.bf16.mxu0 0
        %1998 = vmatpush1.bf16.msra.mxu0 0
        %1999 = vmatprep.subr.bf16.mxu0 0
        %2000 = vmatpush1.bf16.msra.mxu0 0
        %2001 = vmatprep.subr.bf16.mxu0 0
        %2002 = vmatpush1.bf16.msra.mxu0 0
        %2003 = vmatprep.subr.bf16.mxu0 0
        %2004 = vmatpush1.bf16.msra.mxu0 0
        %2005 = vmatprep.subr.bf16.mxu0 0
        %2006 = vmatpush1.bf16.msra.mxu0 0
        %2007 = vmatprep.subr.bf16.mxu0 0
        %2008 = vmatpush1.bf16.msra.mxu0 0
        %2009 = vmatprep.subr.bf16.mxu0 0
        %2010 = vmatpush1.bf16.msra.mxu0 0
        %2011 = vmatprep.subr.bf16.mxu0 0
        %2012 = vmatpush1.bf16.msra.mxu0 0
        %2013 = vmatprep.subr.bf16.mxu0 0
        %2014 = vmatpush1.bf16.msra.mxu0 0
        %2015 = vmatprep.subr.bf16.mxu0 0
        %2016 = vmatpush1.bf16.msra.mxu0 0
        %2017 = vmatprep.subr.bf16.mxu0 0
        %2018 = vmatpush1.bf16.msra.mxu0 0
        %2019 = vmatprep.mubr.bf16.mxu0 0
        %2020 = vmatmul.mubr.bf16.gmra.mrb[0].mxu0 %v1985
        %v2021 = vpop.f32.mrb[0].mxu0
        %v2022 = vadd.f32 0.0, %v2021
        %v2023 = vpop.f32.mrb[0].mxu0
        %v2024 = vpop.f32.mrb[0].mxu0
        %v2025 = vpop.f32.mrb[0].mxu0
        %2026 = vdwg.mxu0
        %2027 = vst.msk [vmem:[#allocation2] sm:$0xff] %vm1152, %v2022
        %2029 = vrot.lane.b32.xlu0 %v1919, 120
        %v2030 = vpop.permute.xlu0 %2029
        %2032 = vrot.lane.b32.xlu0 %v1920, 120
        %v2033 = vpop.permute.xlu0 %2032
        %v2035 = vsel %vm1152, %v2030, 0
        %v2038 = vsel %vm1152, %v2033, 0
        %2040 = vmatprep.subr.bf16.mxu0 0
        %2041 = vmatpush1.bf16.xpose.msra.mxu0 %v2038
        %2042 = vmatprep.subr.bf16.mxu0 0
        %2043 = vmatpush1.bf16.xpose.msra.mxu0 0
        %2044 = vmatprep.subr.bf16.mxu0 0
        %2045 = vmatpush1.bf16.xpose.msra.mxu0 0
        %2046 = vmatprep.subr.bf16.mxu0 0
        %2047 = vmatpush1.bf16.xpose.msra.mxu0 0
        %2048 = vmatprep.subr.bf16.mxu0 0
        %2049 = vmatpush1.bf16.xpose.msra.mxu0 0
        %2050 = vmatprep.subr.bf16.mxu0 0
        %2051 = vmatpush1.bf16.xpose.msra.mxu0 0
        %2052 = vmatprep.subr.bf16.mxu0 0
        %2053 = vmatpush1.bf16.xpose.msra.mxu0 0
        %2054 = vmatprep.subr.bf16.mxu0 0
        %2055 = vmatpush1.bf16.xpose.msra.mxu0 0
        %2056 = vmatprep.subr.bf16.mxu0 0
        %2057 = vmatpush1.bf16.xpose.msra.mxu0 0
        %2058 = vmatprep.subr.bf16.mxu0 0
        %2059 = vmatpush1.bf16.xpose.msra.mxu0 0
        %2060 = vmatprep.subr.bf16.mxu0 0
        %2061 = vmatpush1.bf16.xpose.msra.mxu0 0
        %2062 = vmatprep.subr.bf16.mxu0 0
        %2063 = vmatpush1.bf16.xpose.msra.mxu0 0
        %2064 = vmatprep.subr.bf16.mxu0 0
        %2065 = vmatpush1.bf16.xpose.msra.mxu0 0
        %2066 = vmatprep.subr.bf16.mxu0 0
        %2067 = vmatpush1.bf16.xpose.msra.mxu0 0
        %2068 = vmatprep.subr.bf16.mxu0 0
        %2069 = vmatpush1.bf16.xpose.msra.mxu0 0
        %2070 = vmatprep.subr.bf16.mxu0 0
        %2071 = vmatpush1.bf16.xpose.msra.mxu0 0
        %2072 = vmatprep.mubr.bf16.mxu0 0
        %2073 = vmatmul.mubr.bf16.gmra.mrb[0].mxu0 %v2035
        %v2074 = vpop.f32.mrb[0].mxu0
        %v2075 = vadd.f32 0.0, %v2074
        %v2076 = vpop.f32.mrb[0].mxu0
        %v2077 = vpop.f32.mrb[0].mxu0
        %v2078 = vpop.f32.mrb[0].mxu0
        %2079 = vdwg.mxu0
        %v2080 = vmul.f32 %v2075, 0.17677669
        %v2081 = vadd.f32 %v2080, %v1922
        %v2082 = vsel %vm1971, %v2081, -inf
        %2083 = vmax.xlane.f32.xlu0 %v2082
        %v2084 = vpop.xlane.xlu0 %2083
        %v2085 = vsub.f32 %v2081, %v2084
        %v2086 = vmul.f32 %v2085, 1.442695
        %v2087 = vpow.pop %v2086
        %v2088 = vsel %vm1971, %v2087, 0.0
        %2089 = vadd.xlane.f32.xlu0 %v2088
        %v2090 = vpop.xlane.xlu0 %2089
        %v2091 = vrcp.pop %v2090
        %v2092 = vmul.f32 %v2087, %v2091
        %v2093 = vpack.c.bf16 %v2092, %v2092
        %2095 = vrot.lane.b32.xlu0 %v1921, 120
        %v2096 = vpop.permute.xlu0 %2095
        %v2099 = vsel %vm1971, %v2093, 0
        %2101 = vmatprep.subr.bf16.mxu0 0
        %2102 = vmatpush1.bf16.msra.mxu0 %v2096
        %2103 = vmatprep.subr.bf16.mxu0 0
        %2104 = vmatpush1.bf16.msra.mxu0 0
        %2105 = vmatprep.subr.bf16.mxu0 0
        %2106 = vmatpush1.bf16.msra.mxu0 0
        %2107 = vmatprep.subr.bf16.mxu0 0
        %2108 = vmatpush1.bf16.msra.mxu0 0
        %2109 = vmatprep.subr.bf16.mxu0 0
        %2110 = vmatpush1.bf16.msra.mxu0 0
        %2111 = vmatprep.subr.bf16.mxu0 0
        %2112 = vmatpush1.bf16.msra.mxu0 0
        %2113 = vmatprep.subr.bf16.mxu0 0
        %2114 = vmatpush1.bf16.msra.mxu0 0
        %2115 = vmatprep.subr.bf16.mxu0 0
        %2116 = vmatpush1.bf16.msra.mxu0 0
        %2117 = vmatprep.subr.bf16.mxu0 0
        %2118 = vmatpush1.bf16.msra.mxu0 0
        %2119 = vmatprep.subr.bf16.mxu0 0
        %2120 = vmatpush1.bf16.msra.mxu0 0
        %2121 = vmatprep.subr.bf16.mxu0 0
        %2122 = vmatpush1.bf16.msra.mxu0 0
        %2123 = vmatprep.subr.bf16.mxu0 0
        %2124 = vmatpush1.bf16.msra.mxu0 0
        %2125 = vmatprep.subr.bf16.mxu0 0
        %2126 = vmatpush1.bf16.msra.mxu0 0
        %2127 = vmatprep.subr.bf16.mxu0 0
        %2128 = vmatpush1.bf16.msra.mxu0 0
        %2129 = vmatprep.subr.bf16.mxu0 0
        %2130 = vmatpush1.bf16.msra.mxu0 0
        %2131 = vmatprep.subr.bf16.mxu0 0
        %2132 = vmatpush1.bf16.msra.mxu0 0
        %2133 = vmatprep.mubr.bf16.mxu0 0
        %2134 = vmatmul.mubr.bf16.gmra.mrb[0].mxu0 %v2099
        %v2135 = vpop.f32.mrb[0].mxu0
        %v2136 = vadd.f32 0.0, %v2135
        %v2137 = vpop.f32.mrb[0].mxu0
        %v2138 = vpop.f32.mrb[0].mxu0
        %v2139 = vpop.f32.mrb[0].mxu0
        %2140 = vdwg.mxu0
        %2142 = vrot.lane.b32.xlu0 %v2136, 8
        %v2143 = vpop.permute.xlu0 %2142
        %2145 = vst.msk [vmem:[#allocation2] sm:$0xff] %vm1379, %v2143
        %2146 = vrot.lane.b32.xlu0 %v1919, 112
        %v2147 = vpop.permute.xlu0 %2146
        %2148 = vrot.lane.b32.xlu0 %v1920, 112
        %v2149 = vpop.permute.xlu0 %2148
        %v2151 = vsel %vm1152, %v2147, 0
        %v2154 = vsel %vm1152, %v2149, 0
        %2156 = vmatprep.subr.bf16.mxu0 0
        %2157 = vmatpush1.bf16.xpose.msra.mxu0 %v2154
        %2158 = vmatprep.subr.bf16.mxu0 0
        %2159 = vmatpush1.bf16.xpose.msra.mxu0 0
        %2160 = vmatprep.subr.bf16.mxu0 0
        %2161 = vmatpush1.bf16.xpose.msra.mxu0 0
        %2162 = vmatprep.subr.bf16.mxu0 0
        %2163 = vmatpush1.bf16.xpose.msra.mxu0 0
        %2164 = vmatprep.subr.bf16.mxu0 0
        %2165 = vmatpush1.bf16.xpose.msra.mxu0 0
        %2166 = vmatprep.subr.bf16.mxu0 0
        %2167 = vmatpush1.bf16.xpose.msra.mxu0 0
        %2168 = vmatprep.subr.bf16.mxu0 0
        %2169 = vmatpush1.bf16.xpose.msra.mxu0 0
        %2170 = vmatprep.subr.bf16.mxu0 0
        %2171 = vmatpush1.bf16.xpose.msra.mxu0 0
        %2172 = vmatprep.subr.bf16.mxu0 0
        %2173 = vmatpush1.bf16.xpose.msra.mxu0 0
        %2174 = vmatprep.subr.bf16.mxu0 0
        %2175 = vmatpush1.bf16.xpose.msra.mxu0 0
        %2176 = vmatprep.subr.bf16.mxu0 0
        %2177 = vmatpush1.bf16.xpose.msra.mxu0 0
        %2178 = vmatprep.subr.bf16.mxu0 0
        %2179 = vmatpush1.bf16.xpose.msra.mxu0 0
        %2180 = vmatprep.subr.bf16.mxu0 0
        %2181 = vmatpush1.bf16.xpose.msra.mxu0 0
        %2182 = vmatprep.subr.bf16.mxu0 0
        %2183 = vmatpush1.bf16.xpose.msra.mxu0 0
        %2184 = vmatprep.subr.bf16.mxu0 0
        %2185 = vmatpush1.bf16.xpose.msra.mxu0 0
        %2186 = vmatprep.subr.bf16.mxu0 0
        %2187 = vmatpush1.bf16.xpose.msra.mxu0 0
        %2188 = vmatprep.mubr.bf16.mxu0 0
        %2189 = vmatmul.mubr.bf16.gmra.mrb[0].mxu0 %v2151
        %v2190 = vpop.f32.mrb[0].mxu0
        %v2191 = vadd.f32 0.0, %v2190
        %v2192 = vpop.f32.mrb[0].mxu0
        %v2193 = vpop.f32.mrb[0].mxu0
        %v2194 = vpop.f32.mrb[0].mxu0
        %2195 = vdwg.mxu0
        %v2196 = vmul.f32 %v2191, 0.17677669
        %v2197 = vadd.f32 %v2196, %v1922
        %v2198 = vsel %vm1971, %v2197, -inf
        %2199 = vmax.xlane.f32.xlu0 %v2198
        %v2200 = vpop.xlane.xlu0 %2199
        %v2201 = vsub.f32 %v2197, %v2200
        %v2202 = vmul.f32 %v2201, 1.442695
        %v2203 = vpow.pop %v2202
        %v2204 = vsel %vm1971, %v2203, 0.0
        %2205 = vadd.xlane.f32.xlu0 %v2204
        %v2206 = vpop.xlane.xlu0 %2205
        %v2207 = vrcp.pop %v2206
        %v2208 = vmul.f32 %v2203, %v2207
        %v2209 = vpack.c.bf16 %v2208, %v2208
        %2210 = vrot.lane.b32.xlu0 %v1921, 112
        %v2211 = vpop.permute.xlu0 %2210
        %v2214 = vsel %vm1971, %v2209, 0
        %2216 = vmatprep.subr.bf16.mxu0 0
        %2217 = vmatpush1.bf16.msra.mxu0 %v2211
        %2218 = vmatprep.subr.bf16.mxu0 0
        %2219 = vmatpush1.bf16.msra.mxu0 0
        %2220 = vmatprep.subr.bf16.mxu0 0
        %2221 = vmatpush1.bf16.msra.mxu0 0
        %2222 = vmatprep.subr.bf16.mxu0 0
        %2223 = vmatpush1.bf16.msra.mxu0 0
        %2224 = vmatprep.subr.bf16.mxu0 0
        %2225 = vmatpush1.bf16.msra.mxu0 0
        %2226 = vmatprep.subr.bf16.mxu0 0
        %2227 = vmatpush1.bf16.msra.mxu0 0
        %2228 = vmatprep.subr.bf16.mxu0 0
        %2229 = vmatpush1.bf16.msra.mxu0 0
        %2230 = vmatprep.subr.bf16.mxu0 0
        %2231 = vmatpush1.bf16.msra.mxu0 0
        %2232 = vmatprep.subr.bf16.mxu0 0
        %2233 = vmatpush1.bf16.msra.mxu0 0
        %2234 = vmatprep.subr.bf16.mxu0 0
        %2235 = vmatpush1.bf16.msra.mxu0 0
        %2236 = vmatprep.subr.bf16.mxu0 0
        %2237 = vmatpush1.bf16.msra.mxu0 0
        %2238 = vmatprep.subr.bf16.mxu0 0
        %2239 = vmatpush1.bf16.msra.mxu0 0
        %2240 = vmatprep.subr.bf16.mxu0 0
        %2241 = vmatpush1.bf16.msra.mxu0 0
        %2242 = vmatprep.subr.bf16.mxu0 0
        %2243 = vmatpush1.bf16.msra.mxu0 0
        %2244 = vmatprep.subr.bf16.mxu0 0
        %2245 = vmatpush1.bf16.msra.mxu0 0
        %2246 = vmatprep.subr.bf16.mxu0 0
        %2247 = vmatpush1.bf16.msra.mxu0 0
        %2248 = vmatprep.mubr.bf16.mxu0 0
        %2249 = vmatmul.mubr.bf16.gmra.mrb[0].mxu0 %v2214
        %v2250 = vpop.f32.mrb[0].mxu0
        %v2251 = vadd.f32 0.0, %v2250
        %v2252 = vpop.f32.mrb[0].mxu0
        %v2253 = vpop.f32.mrb[0].mxu0
        %v2254 = vpop.f32.mrb[0].mxu0
        %2255 = vdwg.mxu0
        %2257 = vrot.lane.b32.xlu0 %v2251, 16
        %v2258 = vpop.permute.xlu0 %2257
        %2260 = vst.msk [vmem:[#allocation2] sm:$0xff] %vm1497, %v2258
        %2261 = vrot.lane.b32.xlu0 %v1919, 104
        %v2262 = vpop.permute.xlu0 %2261
        %2263 = vrot.lane.b32.xlu0 %v1920, 104
        %v2264 = vpop.permute.xlu0 %2263
        %v2266 = vsel %vm1152, %v2262, 0
        %v2269 = vsel %vm1152, %v2264, 0
        %2271 = vmatprep.subr.bf16.mxu0 0
        %2272 = vmatpush1.bf16.xpose.msra.mxu0 %v2269
        %2273 = vmatprep.subr.bf16.mxu0 0
        %2274 = vmatpush1.bf16.xpose.msra.mxu0 0
        %2275 = vmatprep.subr.bf16.mxu0 0
        %2276 = vmatpush1.bf16.xpose.msra.mxu0 0
        %2277 = vmatprep.subr.bf16.mxu0 0
        %2278 = vmatpush1.bf16.xpose.msra.mxu0 0
        %2279 = vmatprep.subr.bf16.mxu0 0
        %2280 = vmatpush1.bf16.xpose.msra.mxu0 0
        %2281 = vmatprep.subr.bf16.mxu0 0
        %2282 = vmatpush1.bf16.xpose.msra.mxu0 0
        %2283 = vmatprep.subr.bf16.mxu0 0
        %2284 = vmatpush1.bf16.xpose.msra.mxu0 0
        %2285 = vmatprep.subr.bf16.mxu0 0
        %2286 = vmatpush1.bf16.xpose.msra.mxu0 0
        %2287 = vmatprep.subr.bf16.mxu0 0
        %2288 = vmatpush1.bf16.xpose.msra.mxu0 0
        %2289 = vmatprep.subr.bf16.mxu0 0
        %2290 = vmatpush1.bf16.xpose.msra.mxu0 0
        %2291 = vmatprep.subr.bf16.mxu0 0
        %2292 = vmatpush1.bf16.xpose.msra.mxu0 0
        %2293 = vmatprep.subr.bf16.mxu0 0
        %2294 = vmatpush1.bf16.xpose.msra.mxu0 0
        %2295 = vmatprep.subr.bf16.mxu0 0
        %2296 = vmatpush1.bf16.xpose.msra.mxu0 0
        %2297 = vmatprep.subr.bf16.mxu0 0
        %2298 = vmatpush1.bf16.xpose.msra.mxu0 0
        %2299 = vmatprep.subr.bf16.mxu0 0
        %2300 = vmatpush1.bf16.xpose.msra.mxu0 0
        %2301 = vmatprep.subr.bf16.mxu0 0
        %2302 = vmatpush1.bf16.xpose.msra.mxu0 0
        %2303 = vmatprep.mubr.bf16.mxu0 0
        %2304 = vmatmul.mubr.bf16.gmra.mrb[0].mxu0 %v2266
        %v2305 = vpop.f32.mrb[0].mxu0
        %v2306 = vadd.f32 0.0, %v2305
        %v2307 = vpop.f32.mrb[0].mxu0
        %v2308 = vpop.f32.mrb[0].mxu0
        %v2309 = vpop.f32.mrb[0].mxu0
        %2310 = vdwg.mxu0
        %v2311 = vmul.f32 %v2306, 0.17677669
        %v2312 = vadd.f32 %v2311, %v1922
        %v2313 = vsel %vm1971, %v2312, -inf
        %2314 = vmax.xlane.f32.xlu0 %v2313
        %v2315 = vpop.xlane.xlu0 %2314
        %v2316 = vsub.f32 %v2312, %v2315
        %v2317 = vmul.f32 %v2316, 1.442695
        %v2318 = vpow.pop %v2317
        %v2319 = vsel %vm1971, %v2318, 0.0
        %2320 = vadd.xlane.f32.xlu0 %v2319
        %v2321 = vpop.xlane.xlu0 %2320
        %v2322 = vrcp.pop %v2321
        %v2323 = vmul.f32 %v2318, %v2322
        %v2324 = vpack.c.bf16 %v2323, %v2323
        %2325 = vrot.lane.b32.xlu0 %v1921, 104
        %v2326 = vpop.permute.xlu0 %2325
        %v2329 = vsel %vm1971, %v2324, 0
        %2331 = vmatprep.subr.bf16.mxu0 0
        %2332 = vmatpush1.bf16.msra.mxu0 %v2326
        %2333 = vmatprep.subr.bf16.mxu0 0
        %2334 = vmatpush1.bf16.msra.mxu0 0
        %2335 = vmatprep.subr.bf16.mxu0 0
        %2336 = vmatpush1.bf16.msra.mxu0 0
        %2337 = vmatprep.subr.bf16.mxu0 0
        %2338 = vmatpush1.bf16.msra.mxu0 0
        %2339 = vmatprep.subr.bf16.mxu0 0
        %2340 = vmatpush1.bf16.msra.mxu0 0
        %2341 = vmatprep.subr.bf16.mxu0 0
        %2342 = vmatpush1.bf16.msra.mxu0 0
        %2343 = vmatprep.subr.bf16.mxu0 0
        %2344 = vmatpush1.bf16.msra.mxu0 0
        %2345 = vmatprep.subr.bf16.mxu0 0
        %2346 = vmatpush1.bf16.msra.mxu0 0
        %2347 = vmatprep.subr.bf16.mxu0 0
        %2348 = vmatpush1.bf16.msra.mxu0 0
        %2349 = vmatprep.subr.bf16.mxu0 0
        %2350 = vmatpush1.bf16.msra.mxu0 0
        %2351 = vmatprep.subr.bf16.mxu0 0
        %2352 = vmatpush1.bf16.msra.mxu0 0
        %2353 = vmatprep.subr.bf16.mxu0 0
        %2354 = vmatpush1.bf16.msra.mxu0 0
        %2355 = vmatprep.subr.bf16.mxu0 0
        %2356 = vmatpush1.bf16.msra.mxu0 0
        %2357 = vmatprep.subr.bf16.mxu0 0
        %2358 = vmatpush1.bf16.msra.mxu0 0
        %2359 = vmatprep.subr.bf16.mxu0 0
        %2360 = vmatpush1.bf16.msra.mxu0 0
        %2361 = vmatprep.subr.bf16.mxu0 0
        %2362 = vmatpush1.bf16.msra.mxu0 0
        %2363 = vmatprep.mubr.bf16.mxu0 0
        %2364 = vmatmul.mubr.bf16.gmra.mrb[0].mxu0 %v2329
        %v2365 = vpop.f32.mrb[0].mxu0
        %v2366 = vadd.f32 0.0, %v2365
        %v2367 = vpop.f32.mrb[0].mxu0
        %v2368 = vpop.f32.mrb[0].mxu0
        %v2369 = vpop.f32.mrb[0].mxu0
        %2370 = vdwg.mxu0
        %2372 = vrot.lane.b32.xlu0 %v2366, 24
        %v2373 = vpop.permute.xlu0 %2372
        %2375 = vst.msk [vmem:[#allocation2] sm:$0xff] %vm1615, %v2373
        %v2376 = vld [vmem:[#allocation2] sm:$0xff]
        %v2377 = vpack.c.bf16 %v2376, %v2376
        %v2378 = vld [vmem:[%s17] sm:$0xf]
        %v2379 = vld [vmem:[%s17 + $0x4] sm:$0xf]
        %v2380 = vld [vmem:[%s17 + $0x8] sm:$0xf]
        %v2381 = vld [vmem:[%s17 + $0xc] sm:$0xf]
        %v2382 = vld [vmem:[%s18] sm:$0x1]
        %v2384 = vlaneseq
        %v2385 = vshrl.u32 %v2384, 7
        %v2386 = vsub.s32 0, %v2385
        %v2387 = vrot.slane %v2382, %v2386
        %v2393 = vunpack.c.l.b16 %v2378
        %v2394 = vunpack.c.l.b16 %v2379
        %v2395 = vunpack.c.l.b16 %v2380
        %v2396 = vunpack.c.l.b16 %v2381
        %v2397 = vpack.c.b16 %v2394, %v2393
        %v2398 = vpack.c.b16 %v2396, %v2395
        %v2402 = vsel %vm1103, %v2377, 0
        %2404 = vmatprep.subr.bf16.mxu0 0
        %2405 = vmatpush1.bf16.msra.mxu0 %v2397
        %2406 = vmatprep.subr.bf16.mxu0 0
        %2407 = vmatpush1.bf16.msra.mxu0 %v2398
        %2408 = vmatprep.subr.bf16.mxu0 0
        %2409 = vmatpush1.bf16.msra.mxu0 0
        %2410 = vmatprep.subr.bf16.mxu0 0
        %2411 = vmatpush1.bf16.msra.mxu0 0
        %2412 = vmatprep.subr.bf16.mxu0 0
        %2413 = vmatpush1.bf16.msra.mxu0 0
        %2414 = vmatprep.subr.bf16.mxu0 0
        %2415 = vmatpush1.bf16.msra.mxu0 0
        %2416 = vmatprep.subr.bf16.mxu0 0
        %2417 = vmatpush1.bf16.msra.mxu0 0
        %2418 = vmatprep.subr.bf16.mxu0 0
        %2419 = vmatpush1.bf16.msra.mxu0 0
        %2420 = vmatprep.subr.bf16.mxu0 0
        %2421 = vmatpush1.bf16.msra.mxu0 0
        %2422 = vmatprep.subr.bf16.mxu0 0
        %2423 = vmatpush1.bf16.msra.mxu0 0
        %2424 = vmatprep.subr.bf16.mxu0 0
        %2425 = vmatpush1.bf16.msra.mxu0 0
        %2426 = vmatprep.subr.bf16.mxu0 0
        %2427 = vmatpush1.bf16.msra.mxu0 0
        %2428 = vmatprep.subr.bf16.mxu0 0
        %2429 = vmatpush1.bf16.msra.mxu0 0
        %2430 = vmatprep.subr.bf16.mxu0 0
        %2431 = vmatpush1.bf16.msra.mxu0 0
        %2432 = vmatprep.subr.bf16.mxu0 0
        %2433 = vmatpush1.bf16.msra.mxu0 0
        %2434 = vmatprep.subr.bf16.mxu0 0
        %2435 = vmatpush1.bf16.msra.mxu0 0
        %2436 = vmatprep.mubr.bf16.mxu0 0
        %2437 = vmatmul.mubr.bf16.gmra.mrb[0].mxu0 %v2402
        %v2438 = vpop.f32.mrb[0].mxu0
        %v2439 = vadd.f32 %v2387, %v2438
        %v2440 = vpop.f32.mrb[0].mxu0
        %v2441 = vpop.f32.mrb[0].mxu0
        %v2442 = vpop.f32.mrb[0].mxu0
        %2443 = vdwg.mxu0
        %v2444 = vadd.f32 %v2439, %v1715
        %v2445 = vsel %vm1103, %v2444, 0.0
        %2446 = vadd.xlane.f32.xlu0 %v2445
        %v2447 = vpop.xlane.xlu0 %2446
        %v2448 = vmul.f32 %v2447, %v1689
        %v2449 = vsub.f32 %v2444, %v2448
        %v2450 = vmul.f32 %v2449, %v2449
        %v2451 = vsel %vm1103, %v2450, 0.0
        %2452 = vadd.xlane.f32.xlu0 %v2451
        %v2453 = vpop.xlane.xlu0 %2452
        %v2454 = vmul.f32 %v2453, %v1689
        %v2455 = vadd.f32 %v2454, 1e-05
        %v2456 = vrsqrt.pop %v2455
        %v2457 = vmul.f32 %v2449, %v2456
        %v2458 = vld [vmem:[%s19] sm:$0x1]
        %v2460 = vlaneseq
        %v2461 = vshrl.u32 %v2460, 7
        %v2462 = vsub.s32 0, %v2461
        %v2463 = vrot.slane %v2458, %v2462
        %v2465 = vmul.f32 %v2457, %v2463
        %v2466 = vld [vmem:[%s20] sm:$0x1]
        %v2468 = vlaneseq
        %v2469 = vshrl.u32 %v2468, 7
        %v2470 = vsub.s32 0, %v2469
        %v2471 = vrot.slane %v2466, %v2470
        %v2473 = vadd.f32 %v2465, %v2471
        %v2474 = vpack.c.bf16 %v2473, %v2473
        %v2475 = vld [vmem:[#allocation23] sm:$0xf]
        %v2476 = vld [vmem:[#allocation23 + $0x4] sm:$0xf]
        %v2477 = vld [vmem:[#allocation23 + $0x8] sm:$0xf]
        %v2478 = vld [vmem:[#allocation23 + $0xc] sm:$0xf]
        %v2479 = vld [vmem:[%s22] sm:$0x1]
        %v2481 = vlaneseq
        %v2482 = vshrl.u32 %v2481, 7
        %v2483 = vsub.s32 0, %v2482
        %v2484 = vrot.slane %v2479, %v2483
        %v2490 = vunpack.c.l.b16 %v2475
        %v2491 = vunpack.c.l.b16 %v2476
        %v2492 = vunpack.c.l.b16 %v2477
        %v2493 = vunpack.c.l.b16 %v2478
        %v2494 = vpack.c.b16 %v2491, %v2490
        %v2495 = vpack.c.b16 %v2493, %v2492
        %v2499 = vsel %vm1103, %v2474, 0
        %2501 = vmatprep.subr.bf16.mxu0 0
        %2502 = vmatpush1.bf16.msra.mxu0 %v2494
        %2503 = vmatprep.subr.bf16.mxu0 0
        %2504 = vmatpush1.bf16.msra.mxu0 %v2495
        %2505 = vmatprep.subr.bf16.mxu0 0
        %2506 = vmatpush1.bf16.msra.mxu0 0
        %2507 = vmatprep.subr.bf16.mxu0 0
        %2508 = vmatpush1.bf16.msra.mxu0 0
        %2509 = vmatprep.subr.bf16.mxu0 0
        %2510 = vmatpush1.bf16.msra.mxu0 0
        %2511 = vmatprep.subr.bf16.mxu0 0
        %2512 = vmatpush1.bf16.msra.mxu0 0
        %2513 = vmatprep.subr.bf16.mxu0 0
        %2514 = vmatpush1.bf16.msra.mxu0 0
        %2515 = vmatprep.subr.bf16.mxu0 0
        %2516 = vmatpush1.bf16.msra.mxu0 0
        %2517 = vmatprep.subr.bf16.mxu0 0
        %2518 = vmatpush1.bf16.msra.mxu0 0
        %2519 = vmatprep.subr.bf16.mxu0 0
        %2520 = vmatpush1.bf16.msra.mxu0 0
        %2521 = vmatprep.subr.bf16.mxu0 0
        %2522 = vmatpush1.bf16.msra.mxu0 0
        %2523 = vmatprep.subr.bf16.mxu0 0
        %2524 = vmatpush1.bf16.msra.mxu0 0
        %2525 = vmatprep.subr.bf16.mxu0 0
        %2526 = vmatpush1.bf16.msra.mxu0 0
        %2527 = vmatprep.subr.bf16.mxu0 0
        %2528 = vmatpush1.bf16.msra.mxu0 0
        %2529 = vmatprep.subr.bf16.mxu0 0
        %2530 = vmatpush1.bf16.msra.mxu0 0
        %2531 = vmatprep.subr.bf16.mxu0 0
        %2532 = vmatpush1.bf16.msra.mxu0 0
        %2533 = vmatprep.mubr.bf16.mxu0 0
        %2534 = vmatmul.mubr.bf16.gmra.mrb[0].mxu0 %v2499
        %v2535 = vpop.f32.mrb[0].mxu0
        %v2536 = vadd.f32 %v2484, %v2535
        %v2537 = vpop.f32.mrb[0].mxu0
        %v2538 = vpop.f32.mrb[0].mxu0
        %v2539 = vpop.f32.mrb[0].mxu0
        %2540 = vdwg.mxu0
        %v2541 = vmax.f32 %v2536, 0.0
        %v2542 = vpack.c.bf16 %v2541, %v2541
        %v2543 = vld [vmem:[%s23] sm:$0xf]
        %v2544 = vld [vmem:[%s23 + $0x4] sm:$0xf]
        %v2545 = vld [vmem:[%s23 + $0x8] sm:$0xf]
        %v2546 = vld [vmem:[%s23 + $0xc] sm:$0xf]
        %v2547 = vld [vmem:[%s23 + $0x10] sm:$0xf]
        %v2548 = vld [vmem:[%s23 + $0x14] sm:$0xf]
        %v2549 = vld [vmem:[%s23 + $0x18] sm:$0xf]
        %v2550 = vld [vmem:[%s23 + $0x1c] sm:$0xf]
        %v2551 = vld [vmem:[%s23 + $0x20] sm:$0xf]
        %v2552 = vld [vmem:[%s23 + $0x24] sm:$0xf]
        %v2553 = vld [vmem:[%s23 + $0x28] sm:$0xf]
        %v2554 = vld [vmem:[%s23 + $0x2c] sm:$0xf]
        %v2555 = vld [vmem:[%s23 + $0x30] sm:$0xf]
        %v2556 = vld [vmem:[%s23 + $0x34] sm:$0xf]
        %v2557 = vld [vmem:[%s23 + $0x38] sm:$0xf]
        %v2558 = vld [vmem:[%s23 + $0x3c] sm:$0xf]
        %v2559 = vld [vmem:[%s24] sm:$0x1]
        %v2561 = vlaneseq
        %v2562 = vshrl.u32 %v2561, 7
        %v2563 = vsub.s32 0, %v2562
        %v2564 = vrot.slane %v2559, %v2563
        %v2582 = vunpack.c.l.b16 %v2543
        %v2583 = vunpack.c.l.b16 %v2544
        %v2584 = vunpack.c.l.b16 %v2545
        %v2585 = vunpack.c.l.b16 %v2546
        %v2586 = vunpack.c.l.b16 %v2547
        %v2587 = vunpack.c.l.b16 %v2548
        %v2588 = vunpack.c.l.b16 %v2549
        %v2589 = vunpack.c.l.b16 %v2550
        %v2590 = vunpack.c.l.b16 %v2551
        %v2591 = vunpack.c.l.b16 %v2552
        %v2592 = vunpack.c.l.b16 %v2553
        %v2593 = vunpack.c.l.b16 %v2554
        %v2594 = vunpack.c.l.b16 %v2555
        %v2595 = vunpack.c.l.b16 %v2556
        %v2596 = vunpack.c.l.b16 %v2557
        %v2597 = vunpack.c.l.b16 %v2558
        %v2598 = vpack.c.b16 %v2583, %v2582
        %v2599 = vpack.c.b16 %v2585, %v2584
        %v2600 = vpack.c.b16 %v2587, %v2586
        %v2601 = vpack.c.b16 %v2589, %v2588
        %v2602 = vpack.c.b16 %v2591, %v2590
        %v2603 = vpack.c.b16 %v2593, %v2592
        %v2604 = vpack.c.b16 %v2595, %v2594
        %v2605 = vpack.c.b16 %v2597, %v2596
        %2614 = vmatprep.subr.bf16.mxu0 0
        %2615 = vmatpush1.bf16.msra.mxu0 %v2598
        %2616 = vmatprep.subr.bf16.mxu0 0
        %2617 = vmatpush1.bf16.msra.mxu0 %v2599
        %2618 = vmatprep.subr.bf16.mxu0 0
        %2619 = vmatpush1.bf16.msra.mxu0 %v2600
        %2620 = vmatprep.subr.bf16.mxu0 0
        %2621 = vmatpush1.bf16.msra.mxu0 %v2601
        %2622 = vmatprep.subr.bf16.mxu0 0
        %2623 = vmatpush1.bf16.msra.mxu0 %v2602
        %2624 = vmatprep.subr.bf16.mxu0 0
        %2625 = vmatpush1.bf16.msra.mxu0 %v2603
        %2626 = vmatprep.subr.bf16.mxu0 0
        %2627 = vmatpush1.bf16.msra.mxu0 %v2604
        %2628 = vmatprep.subr.bf16.mxu0 0
        %2629 = vmatpush1.bf16.msra.mxu0 %v2605
        %2630 = vmatprep.subr.bf16.mxu0 0
        %2631 = vmatpush1.bf16.msra.mxu0 0
        %2632 = vmatprep.subr.bf16.mxu0 0
        %2633 = vmatpush1.bf16.msra.mxu0 0
        %2634 = vmatprep.subr.bf16.mxu0 0
        %2635 = vmatpush1.bf16.msra.mxu0 0
        %2636 = vmatprep.subr.bf16.mxu0 0
        %2637 = vmatpush1.bf16.msra.mxu0 0
        %2638 = vmatprep.subr.bf16.mxu0 0
        %2639 = vmatpush1.bf16.msra.mxu0 0
        %2640 = vmatprep.subr.bf16.mxu0 0
        %2641 = vmatpush1.bf16.msra.mxu0 0
        %2642 = vmatprep.subr.bf16.mxu0 0
        %2643 = vmatpush1.bf16.msra.mxu0 0
        %2644 = vmatprep.subr.bf16.mxu0 0
        %2645 = vmatpush1.bf16.msra.mxu0 0
        %2646 = vmatprep.mubr.bf16.mxu0 0
        %2647 = vmatmul.mubr.bf16.gmra.mrb[0].mxu0 %v2542
        %v2648 = vpop.f32.mrb[0].mxu0
        %v2649 = vadd.f32 %v2564, %v2648
        %v2650 = vpop.f32.mrb[0].mxu0
        %v2651 = vpop.f32.mrb[0].mxu0
        %v2652 = vpop.f32.mrb[0].mxu0
        %2653 = vdwg.mxu0
        %v2654 = vadd.f32 %v2649, %v2473
        %v2655 = vsel %vm1103, %v2654, 0.0
        %2656 = vadd.xlane.f32.xlu0 %v2655
        %v2657 = vpop.xlane.xlu0 %2656
        %v2658 = vmul.f32 %v2657, %v1689
        %v2659 = vsub.f32 %v2654, %v2658
        %v2660 = vmul.f32 %v2659, %v2659
        %v2661 = vsel %vm1103, %v2660, 0.0
        %2662 = vadd.xlane.f32.xlu0 %v2661
        %v2663 = vpop.xlane.xlu0 %2662
        %v2664 = vmul.f32 %v2663, %v1689
        %v2665 = vadd.f32 %v2664, 1e-05
        %v2666 = vrsqrt.pop %v2665
        %v2667 = vmul.f32 %v2659, %v2666
        %v2668 = vld [vmem:[%s25] sm:$0x1]
        %v2670 = vlaneseq
        %v2671 = vshrl.u32 %v2670, 7
        %v2672 = vsub.s32 0, %v2671
        %v2673 = vrot.slane %v2668, %v2672
        %v2675 = vmul.f32 %v2667, %v2673
        %v2676 = vld [vmem:[%s26] sm:$0x1]
        %v2678 = vlaneseq
        %v2679 = vshrl.u32 %v2678, 7
        %v2680 = vsub.s32 0, %v2679
        %v2681 = vrot.slane %v2676, %v2680
        %v2683 = vadd.f32 %v2675, %v2681
        %2684 = vst.msk [vmem:[%s1058] sm:$0xff] %vm1103, %v2683
        %s2685 = sand.u32 %s652, 1
        %s2686 = scalar_lea.sflag [#allocation5], %s2685
        %s2687 = sand.u32 %s652, 1
        %s2688 = smul.addr %s2687, 8
        %s2689 = scalar_lea.vmem [#allocation24], %s2688
        // Predicated region
        $region181: #{tpu_custom_call.1} parent=127 // pred_check
          %p2690 = pneg %p662
        $region182: #{tpu_custom_call.1} parent=127 // pred_check_branch
          %2692 = sbr.rel (%p2690) target = $region184
        $region183: #{tpu_custom_call.1} parent=127 // pred_region
          %s2694 = ssub.s32 128, 128
          %2695 = vsyncadd %s2686, %s2694
          %s2696 = smul.addr %s52, 128
          %s2697 = scalar_lea.hbm %s27, %s2696
          %s2699 = sshll.u32 %s2689, 4
          %s2700 = int_to_ptr.vmem [resolvable:$true] %s2699
          %2702 = dma.vmem_to_hbm [thread:$0]  %s2700, 128, %s2697, %s2686
        $region184: #{tpu_custom_call.1} parent=127 // pred_fallthru
          _
      $region128: #{tpu_custom_call.1} parent=5 // pred_fallthru
        _
      %p2703 = scmp.le.s32.totalorder 2, %s47
      // Predicated region
      $region185: #{tpu_custom_call.1} parent=5 // pred_check
        %p2704 = pneg %p2703
      $region186: #{tpu_custom_call.1} parent=5 // pred_check_branch
        %2706 = sbr.rel (%p2704) target = $region188
      $region187: #{tpu_custom_call.1} parent=5 // pred_region
        %s2707 = ssub.s32 %s47, 2
        // Predicated region
        $region189: #{tpu_custom_call.1} parent=187 // pred_check
          %p2708 = pneg %p668
        $region190: #{tpu_custom_call.1} parent=187 // pred_check_branch
          %2710 = sbr.rel (%p2708) target = $region192
        $region191: #{tpu_custom_call.1} parent=187 // pred_region
          %s2711 = sand.u32 %s653, 1
          %s2712 = scalar_lea.sflag [#allocation5], %s2711
          %s2713 = sand.u32 %s653, 1
          %s2714 = smul.addr %s2713, 8
          %s2715 = scalar_lea.vmem [#allocation24], %s2714
          %2716 = dma.done %s2712, 128
        $region192: #{tpu_custom_call.1} parent=187 // pred_fallthru
          _
      $region188: #{tpu_custom_call.1} parent=5 // pred_fallthru
        _
    $region6: #{tpu_custom_call.1} parent=1 // loop_footer
      %s51 = sadd.s32 1, %s47
    $region7: #{tpu_custom_call.1} parent=1 // loop_footer_branch
      %46 = sbr.rel target = $region3
    $region8: #{tpu_custom_call.1} parent=1 // loop_exit
      _
    %2717 = vsyncpa [#allocation4], 1
    %s2718 = scalar_lea.sflag [#allocation4], 1
    %2719 = vsyncpa %s2718, 1
    %2720 = vsyncpa [#allocation7], 1
    %s2721 = scalar_lea.sflag [#allocation7], 1
    %2722 = vsyncpa %s2721, 1
    %2723 = vsyncpa [#allocation10], 1
    %2724 = vsyncpa [#allocation13], 1
    %2725 = vsyncpa [#allocation16], 1
    %2726 = vsyncpa [#allocation19], 1
    %2727 = vsyncpa [#allocation22], 1
    %2728 = vsyncpa [#allocation5], 1
    %s2729 = scalar_lea.sflag [#allocation5], 1
    %2730 = vsyncpa %s2729, 1

</llo_original>
